<compile_context>
chip_gen: v5e
topology: v5e:2x2
jax: 0.10.0
libtpu: 0.0.40
codegen_flags: <defaults>
</compile_context>

<pallas_src>
import math

import jax
import jax.numpy as jnp
from jax.experimental import pallas as pl
from jax.experimental.pallas import tpu as pltpu

# ----- hyper-parameters implied by the module's forward ---------------------
INPUT_DIM = 16                 # D (freq bins); 4x (2,1) pools -> D' = 1
T_LEN     = 8                  # T (time)
SEQ       = T_LEN + 1          # cls token + T frames
TPAD      = T_LEN + 4          # "same" padding of 2 on each side of time
HIDDEN    = 32
DEPTH     = 2
NUM_HEADS = 4
HEAD_DIM  = HIDDEN // NUM_HEADS
FFN_DIM   = int(HIDDEN * 4.0)
CONV_CH   = (1, 32, 64, 64, 64)
CONV_D    = (16, 8, 4, 2)      # freq extent at the input of conv1..conv4
POOL_HALF = tuple((CONV_D[i] // 2) * CONV_CH[i + 1] for i in range(4))  # 256,256,128,64


# ------------------------------------------------------------- in-kernel math
def _gelu(x):
    # exact (erf) GELU, matching F.gelu default
    return 0.5 * x * (1.0 + jax.lax.erf(x * (1.0 / math.sqrt(2.0))))


def _layernorm(x, g, b):
    mu = jnp.mean(x, axis=-1, keepdims=True)
    xc = x - mu
    var = jnp.mean(xc * xc, axis=-1, keepdims=True)
    return xc * jax.lax.rsqrt(var + 1e-5) * g + b


def _dot(a, b):
    return jnp.dot(a, b, preferred_element_type=jnp.float32)


def _dot_nt(a, b):
    # a @ b.T without materializing the transpose (MXU-native form)
    return jax.lax.dot_general(a, b, (((1,), (1,)), ((), ())),
                               preferred_element_type=jnp.float32)


# ------------------------------------------------------ fused forward kernel
def _vit_kernel(x_ref, cw1, cb1, cw2, cb2, cw3, cb3, cw4, cb4,
                pw, pb, cls_ref,
                wqk, bqk, wvo, battn, g1, be1, fw1, fb1, fw2, fb2, g2, be2,
                out_ref, buf2, buf3, buf4):
    # x_ref : (1, TPAD, 16)  time-padded input rows; cols = (d, ci=1)
    # cw_l  : (5, D_l*Cin_l, D_l*Cout_l)  per-time-tap band matrices, output
    #         columns permuted to [even-d | odd-d] for the aligned pool
    # buf_l : (TPAD, D_l*C_l) scratch holding the time-padded input of layer l
    # out_ref: (1, T_LEN, DEPTH*HIDDEN)  cls-stripped per-layer frames, packed

    # Zero only the 4 time-padding rows; interior rows are fully rewritten
    # every grid step (no program_id guard: each v7x core has its own scratch).
    for buf in (buf2, buf3, buf4):
        w = buf.shape[1]
        buf[0:2, :] = jnp.zeros((2, w), jnp.float32)
        buf[2 + T_LEN:TPAD, :] = jnp.zeros((2, w), jnp.float32)

    def conv_gelu_pool(cur, w_ref, bias_ref, half):
        # 5x5 "same" conv as 5 accumulating matmuls over the time taps.
        acc = _dot(cur[0:T_LEN, :], w_ref[0])
        for kt in range(1, 5):
            acc = acc + _dot(cur[kt:kt + T_LEN, :], w_ref[kt])
        acc = _gelu(acc + bias_ref[...])
        # (2,1) freq max-pool: weight columns were permuted offline to
        # [even-d | odd-d], so the pool is one lane-aligned split + max.
        return jnp.maximum(acc[:, :half], acc[:, half:])

    buf2[2:2 + T_LEN, :] = conv_gelu_pool(x_ref[0], cw1, cb1, POOL_HALF[0])
    buf3[2:2 + T_LEN, :] = conv_gelu_pool(buf2[...], cw2, cb2, POOL_HALF[1])
    buf4[2:2 + T_LEN, :] = conv_gelu_pool(buf3[...], cw3, cb3, POOL_HALF[2])
    feats = conv_gelu_pool(buf4[...], cw4, cb4, POOL_HALF[3])        # (T, 64)

    # input projection + cls token; sequence stays a VMEM value
    proj = _dot(feats, pw[...]) + pb[...]
    x = jnp.concatenate([cls_ref[...], proj], axis=0)                # (SEQ, HIDDEN)

    # TODO(synk): CustomEncoderBlock source (relative positional encoding) was
    # not provided; using a standard post-LN MHA + GELU-FFN block instead.
    layer_feats = []
    for l in range(DEPTH):
        head_sum = None
        for h in range(NUM_HEADS):
            qa = _dot(x, wqk[l, h]) + bqk[l, h]          # (SEQ, HIDDEN)
            s = _dot_nt(qa, x)                           # (SEQ, SEQ)
            s = s - jnp.max(s, axis=-1, keepdims=True)
            p = jnp.exp(s)
            p = p * pl.reciprocal(jnp.sum(p, axis=-1, keepdims=True), approx=True)
            c = _dot(_dot(p, x), wvo[l, h])              # (SEQ, HIDDEN)
            head_sum = c if head_sum is None else head_sum + c
        y = _layernorm(x + head_sum + battn[l], g1[l], be1[l])
        hdn = _gelu(_dot(y, fw1[l]) + fb1[l])
        x = _layernorm(y + _dot(hdn, fw2[l]) + fb2[l], g2[l], be2[l])
        layer_feats.append(x[1:SEQ, :])                  # cls-stripped frames
    out_ref[0] = jnp.concatenate(layer_feats, axis=-1)   # (T_LEN, DEPTH*HIDDEN)


_WEIGHT_NAMES = ("cw1", "cb1", "cw2", "cb2", "cw3", "cb3", "cw4", "cb4",
                 "proj_w", "proj_b", "cls",
                 "wqk", "bqk", "wvo", "battn", "ln1_g", "ln1_b",
                 "ffn_w1", "ffn_b1", "ffn_w2", "ffn_b2", "ln2_g", "ln2_b")


def vit_pallas(x_rows, kp):
    B = x_rows.shape[0]

    def full(a):
        return pl.BlockSpec(a.shape, lambda b, _nd=a.ndim: (0,) * _nd)

    return pl.pallas_call(
        _vit_kernel,
        out_shape=jax.ShapeDtypeStruct((B, T_LEN, DEPTH * HIDDEN), jnp.float32),
        grid=(B,),
        in_specs=[pl.BlockSpec((1, TPAD, INPUT_DIM), lambda b: (b, 0, 0))]
                 + [full(kp[n]) for n in _WEIGHT_NAMES],
        out_specs=pl.BlockSpec((1, T_LEN, DEPTH * HIDDEN), lambda b: (b, 0, 0)),
        scratch_shapes=[pltpu.VMEM((TPAD, 8 * 32), jnp.float32),
                        pltpu.VMEM((TPAD, 4 * 64), jnp.float32),
                        pltpu.VMEM((TPAD, 2 * 64), jnp.float32)],
        compiler_params=pltpu.CompilerParams(dimension_semantics=("parallel",)),
    )(x_rows, *[kp[n] for n in _WEIGHT_NAMES])


# ------------------------------------------------------------- forward (glue)
def vit_forward(x, kp):
    """x: (B, 1, D, T) or (B, D, T). Returns (x_no_cls, [per-layer x_no_cls])."""
    if x.ndim == 3:
        x = x[:, None]
    # time-padded, channel-last rows layout for the fused kernel (tiny XLA glue)
    xr = jnp.pad(jnp.swapaxes(x[:, 0], 1, 2), ((0, 0), (2, 2), (0, 0)))  # (B, TPAD, D)
    packed = vit_pallas(xr, kp)                     # (B, T_LEN, DEPTH*HIDDEN)
    # nn.Dropout: identity at inference.  Tiny last-dim split per layer.
    layer_outputs = [packed[:, :, l * HIDDEN:(l + 1) * HIDDEN] for l in range(DEPTH)]
    return layer_outputs[-1], layer_outputs


# ------------------------------------------------------------- parameters
def init_params(key):
    keys = iter(jax.random.split(key, 64))

    def nrm(shape, scale):
        return jax.random.normal(next(keys), shape, jnp.float32) * scale

    p = {}
    for i in range(1, 5):
        cin, cout = CONV_CH[i - 1], CONV_CH[i]
        p[f"conv{i}_w"] = nrm((cout, cin, 5, 5), 1.0 / math.sqrt(cin * 25))
        p[f"conv{i}_b"] = nrm((cout,), 0.01)
    conv_out = CONV_CH[4] * (INPUT_DIM // 16)
    p["proj_w"] = nrm((conv_out, HIDDEN), 1.0 / math.sqrt(conv_out))
    p["proj_b"] = nrm((HIDDEN,), 0.01)
    p["cls"] = nrm((1, 1, HIDDEN), 1.0)
    layers = []
    for _ in range(DEPTH):
        layers.append({
            "wq": nrm((HIDDEN, HIDDEN), 1.0 / math.sqrt(HIDDEN)), "bq": nrm((HIDDEN,), 0.01),
            "wk": nrm((HIDDEN, HIDDEN), 1.0 / math.sqrt(HIDDEN)), "bk": nrm((HIDDEN,), 0.01),
            "wv": nrm((HIDDEN, HIDDEN), 1.0 / math.sqrt(HIDDEN)), "bv": nrm((HIDDEN,), 0.01),
            "wo": nrm((HIDDEN, HIDDEN), 1.0 / math.sqrt(HIDDEN)), "bo": nrm((HIDDEN,), 0.01),
            "ln1_g": jnp.ones((HIDDEN,), jnp.float32), "ln1_b": jnp.zeros((HIDDEN,), jnp.float32),
            "w1": nrm((HIDDEN, FFN_DIM), 1.0 / math.sqrt(HIDDEN)), "b1": nrm((FFN_DIM,), 0.01),
            "w2": nrm((FFN_DIM, HIDDEN), 1.0 / math.sqrt(FFN_DIM)), "b2": nrm((HIDDEN,), 0.01),
            "ln2_g": jnp.ones((HIDDEN,), jnp.float32), "ln2_b": jnp.zeros((HIDDEN,), jnp.float32),
        })
    p["layers"] = layers
    return p


def _band_conv_weights(w, d_in):
    """Conv2d weight (Cout, Cin, 5, 5) -> per-time-tap band matrices
    (5, d_in*Cin, d_in*Cout), with output columns permuted to [even-d | odd-d].

    W[kt, d2*Cin+ci, col(d,co)] = w[co, ci, kd, kt] with d2 = d + kd - 2 (dropped
    when out of range, matching zero padding over freq), so that
        y[t, col(d,co)] = sum_kt rows[t+kt, :] @ W[kt]
    reproduces the 5x5 stride-1 padding-2 convolution.  The column permutation
    makes the (2,1) freq max-pool a single lane-aligned split in the kernel;
    the pooled output then lands back in natural (dp, co) order, so the next
    layer's band-weight rows need no permutation.
    """
    cout, cin = w.shape[0], w.shape[1]
    mats = []
    for kt in range(5):
        m = jnp.zeros((d_in, cin, d_in, cout), jnp.float32)
        for kd in range(5):
            shift = jnp.eye(d_in, d_in, k=2 - kd, dtype=jnp.float32)  # [d2,d]=1 iff d2=d+kd-2
            m = m + jnp.einsum("pq,oi->piqo", shift, w[:, :, kd, kt])
        mats.append(m.reshape(d_in * cin, d_in * cout))
    W = jnp.stack(mats, axis=0)
    d_order = jnp.concatenate([jnp.arange(0, d_in, 2), jnp.arange(1, d_in, 2)])
    perm = (d_order[:, None] * cout + jnp.arange(cout)[None, :]).reshape(-1)
    return W[:, :, perm]


def prepare_params(p):
    """One-time weight preprocessing into kernel-friendly layouts (outside the forward)."""
    kp = {}
    for i in range(1, 5):
        d_in, cout = CONV_D[i - 1], CONV_CH[i]
        kp[f"cw{i}"] = _band_conv_weights(p[f"conv{i}_w"], d_in)
        # bias is independent of d, so it is unaffected by the column permutation
        kp[f"cb{i}"] = jnp.tile(p[f"conv{i}_b"], d_in).reshape(1, d_in * cout)
    kp["proj_w"] = p["proj_w"]
    kp["proj_b"] = p["proj_b"].reshape(1, HIDDEN)
    kp["cls"] = p["cls"].reshape(1, HIDDEN)

    # ---- attention head-fold: Wqk_h, bqk_h (scale + q/k bias folded), Wvo_h,
    #      battn = bo + bv@wo (v-bias folded through the output projection).
    scale = 1.0 / math.sqrt(HEAD_DIM)
    wqk_l, bqk_l, wvo_l, battn_l = [], [], [], []
    for lp in p["layers"]:
        wq, wk, wv, wo = lp["wq"], lp["wk"], lp["wv"], lp["wo"]
        bq, bv, bo = lp["bq"], lp["bv"], lp["bo"]
        wqk_h, bqk_h, wvo_h = [], [], []
        for h in range(NUM_HEADS):
            c = slice(h * HEAD_DIM, (h + 1) * HEAD_DIM)
            wqk_h.append(scale * (wq[:, c] @ wk[:, c].T))           # (H, H)
            bqk_h.append(scale * (bq[c][None, :] @ wk[:, c].T))     # (1, H)
            wvo_h.append(wv[:, c] @ wo[c, :])                       # (H, H)
        wqk_l.append(jnp.stack(wqk_h))
        bqk_l.append(jnp.stack(bqk_h))
        wvo_l.append(jnp.stack(wvo_h))
        battn_l.append((bo + bv @ wo)[None, :])
    kp["wqk"] = jnp.stack(wqk_l)                    # (DEPTH, NH, H, H)
    kp["bqk"] = jnp.stack(bqk_l)                    # (DEPTH, NH, 1, H)
    kp["wvo"] = jnp.stack(wvo_l)                    # (DEPTH, NH, H, H)
    kp["battn"] = jnp.stack(battn_l)                # (DEPTH, 1, H)

    def stack(name):
        return jnp.stack([lp[name] for lp in p["layers"]], axis=0)

    kp["ln1_g"] = stack("ln1_g").reshape(DEPTH, 1, HIDDEN)
    kp["ln1_b"] = stack("ln1_b").reshape(DEPTH, 1, HIDDEN)
    kp["ffn_w1"] = stack("w1")
    kp["ffn_b1"] = stack("b1").reshape(DEPTH, 1, FFN_DIM)
    kp["ffn_w2"] = stack("w2")
    kp["ffn_b2"] = stack("b2").reshape(DEPTH, 1, HIDDEN)
    kp["ln2_g"] = stack("ln2_g").reshape(DEPTH, 1, HIDDEN)
    kp["ln2_b"] = stack("ln2_b").reshape(DEPTH, 1, HIDDEN)
    return kp


# ------------------------------------------------------------- main
if __name__ == "__main__":
    key = jax.random.PRNGKey(0)
    k_param, k_x = jax.random.split(key)
    params = init_params(k_param)
    kparams = prepare_params(params)            # one-time weight preprocessing
    x = jax.random.normal(k_x, (2, 1, INPUT_DIM, T_LEN), jnp.float32)

    fwd = jax.jit(vit_forward)
    out, layer_outs = fwd(x, kparams)
    jax.block_until_ready((out, layer_outs))

    assert out.shape == (2, T_LEN, HIDDEN)
    assert len(layer_outs) == DEPTH
    assert all(lo.shape == (2, T_LEN, HIDDEN) for lo in layer_outs)
    print("KERNEL_OK")
</pallas_src>

<mosaic_0001>
module attributes {stable_mosaic.version = 11 : i64} {
  func.func @_vit_kernel(%arg0: i32, %arg1: memref<1x12x16xf32, #tpu.memory_space<vmem>>, %arg2: memref<5x16x512xf32, #tpu.memory_space<vmem>>, %arg3: memref<1x512xf32, #tpu.memory_space<vmem>>, %arg4: memref<5x256x512xf32, #tpu.memory_space<vmem>>, %arg5: memref<1x512xf32, #tpu.memory_space<vmem>>, %arg6: memref<5x256x256xf32, #tpu.memory_space<vmem>>, %arg7: memref<1x256xf32, #tpu.memory_space<vmem>>, %arg8: memref<5x128x128xf32, #tpu.memory_space<vmem>>, %arg9: memref<1x128xf32, #tpu.memory_space<vmem>>, %arg10: memref<64x32xf32, #tpu.memory_space<vmem>>, %arg11: memref<1x32xf32, #tpu.memory_space<vmem>>, %arg12: memref<1x32xf32, #tpu.memory_space<vmem>>, %arg13: memref<2x4x32x32xf32, #tpu.memory_space<vmem>>, %arg14: memref<2x4x1x32xf32, #tpu.memory_space<vmem>>, %arg15: memref<2x4x32x32xf32, #tpu.memory_space<vmem>>, %arg16: memref<2x1x32xf32, #tpu.memory_space<vmem>>, %arg17: memref<2x1x32xf32, #tpu.memory_space<vmem>>, %arg18: memref<2x1x32xf32, #tpu.memory_space<vmem>>, %arg19: memref<2x32x128xf32, #tpu.memory_space<vmem>>, %arg20: memref<2x1x128xf32, #tpu.memory_space<vmem>>, %arg21: memref<2x128x32xf32, #tpu.memory_space<vmem>>, %arg22: memref<2x1x32xf32, #tpu.memory_space<vmem>>, %arg23: memref<2x1x32xf32, #tpu.memory_space<vmem>>, %arg24: memref<2x1x32xf32, #tpu.memory_space<vmem>>, %arg25: memref<1x8x64xf32, #tpu.memory_space<vmem>>, %arg26: memref<12x256xf32, #tpu.memory_space<vmem>>, %arg27: memref<12x256xf32, #tpu.memory_space<vmem>>, %arg28: memref<12x128xf32, #tpu.memory_space<vmem>>) attributes {dimension_semantics = [#tpu.dimension_semantics<parallel>], iteration_bounds = array<i64: 2>, scalar_prefetch = 0 : i64, scratch_operands = 3 : i64, tpu.core_type = #tpu.core_type<tc>, window_params = [{transform_indices = @transform_0, window_bounds = array<i64: 1, 12, 16>}, {pipeline_mode = #tpu.pipeline_mode<synchronous>, transform_indices = @transform_1, window_bounds = array<i64: 5, 16, 512>}, {pipeline_mode = #tpu.pipeline_mode<synchronous>, transform_indices = @transform_2, window_bounds = array<i64: 1, 512>}, {pipeline_mode = #tpu.pipeline_mode<synchronous>, transform_indices = @transform_3, window_bounds = array<i64: 5, 256, 512>}, {pipeline_mode = #tpu.pipeline_mode<synchronous>, transform_indices = @transform_4, window_bounds = array<i64: 1, 512>}, {pipeline_mode = #tpu.pipeline_mode<synchronous>, transform_indices = @transform_5, window_bounds = array<i64: 5, 256, 256>}, {pipeline_mode = #tpu.pipeline_mode<synchronous>, transform_indices = @transform_6, window_bounds = array<i64: 1, 256>}, {pipeline_mode = #tpu.pipeline_mode<synchronous>, transform_indices = @transform_7, window_bounds = array<i64: 5, 128, 128>}, {pipeline_mode = #tpu.pipeline_mode<synchronous>, transform_indices = @transform_8, window_bounds = array<i64: 1, 128>}, {pipeline_mode = #tpu.pipeline_mode<synchronous>, transform_indices = @transform_9, window_bounds = array<i64: 64, 32>}, {pipeline_mode = #tpu.pipeline_mode<synchronous>, transform_indices = @transform_10, window_bounds = array<i64: 1, 32>}, {pipeline_mode = #tpu.pipeline_mode<synchronous>, transform_indices = @transform_11, window_bounds = array<i64: 1, 32>}, {pipeline_mode = #tpu.pipeline_mode<synchronous>, transform_indices = @transform_12, window_bounds = array<i64: 2, 4, 32, 32>}, {pipeline_mode = #tpu.pipeline_mode<synchronous>, transform_indices = @transform_13, window_bounds = array<i64: 2, 4, 1, 32>}, {pipeline_mode = #tpu.pipeline_mode<synchronous>, transform_indices = @transform_14, window_bounds = array<i64: 2, 4, 32, 32>}, {pipeline_mode = #tpu.pipeline_mode<synchronous>, transform_indices = @transform_15, window_bounds = array<i64: 2, 1, 32>}, {pipeline_mode = #tpu.pipeline_mode<synchronous>, transform_indices = @transform_16, window_bounds = array<i64: 2, 1, 32>}, {pipeline_mode = #tpu.pipeline_mode<synchronous>, transform_indices = @transform_17, window_bounds = array<i64: 2, 1, 32>}, {pipeline_mode = #tpu.pipeline_mode<synchronous>, transform_indices = @transform_18, window_bounds = array<i64: 2, 32, 128>}, {pipeline_mode = #tpu.pipeline_mode<synchronous>, transform_indices = @transform_19, window_bounds = array<i64: 2, 1, 128>}, {pipeline_mode = #tpu.pipeline_mode<synchronous>, transform_indices = @transform_20, window_bounds = array<i64: 2, 128, 32>}, {pipeline_mode = #tpu.pipeline_mode<synchronous>, transform_indices = @transform_21, window_bounds = array<i64: 2, 1, 32>}, {pipeline_mode = #tpu.pipeline_mode<synchronous>, transform_indices = @transform_22, window_bounds = array<i64: 2, 1, 32>}, {pipeline_mode = #tpu.pipeline_mode<synchronous>, transform_indices = @transform_23, window_bounds = array<i64: 2, 1, 32>}, {transform_indices = @transform_24, window_bounds = array<i64: 1, 8, 64>}]} {
    %cst = arith.constant 0.000000e+00 : f32
    %0 = vector.broadcast %cst : f32 to vector<2x256xf32>
    %c0 = arith.constant 0 : index
    %c0_0 = arith.constant 0 : index
    %1 = vector.load %arg26[%c0, %c0_0] : memref<12x256xf32, #tpu.memory_space<vmem>>, vector<2x256xf32>
    tpu.vector_store %arg26[%c0, %c0_0], %0 {strides = array<i32>} : memref<12x256xf32, #tpu.memory_space<vmem>>, vector<2x256xf32>,
    %cst_1 = arith.constant 0.000000e+00 : f32
    %2 = vector.broadcast %cst_1 : f32 to vector<2x256xf32>
    %c10 = arith.constant 10 : index
    %c0_2 = arith.constant 0 : index
    %3 = vector.load %arg26[%c10, %c0_2] : memref<12x256xf32, #tpu.memory_space<vmem>>, vector<2x256xf32>
    tpu.vector_store %arg26[%c10, %c0_2], %2 {strides = array<i32>} : memref<12x256xf32, #tpu.memory_space<vmem>>, vector<2x256xf32>,
    %cst_3 = arith.constant 0.000000e+00 : f32
    %4 = vector.broadcast %cst_3 : f32 to vector<2x256xf32>
    %c0_4 = arith.constant 0 : index
    %c0_5 = arith.constant 0 : index
    %5 = vector.load %arg27[%c0_4, %c0_5] : memref<12x256xf32, #tpu.memory_space<vmem>>, vector<2x256xf32>
    tpu.vector_store %arg27[%c0_4, %c0_5], %4 {strides = array<i32>} : memref<12x256xf32, #tpu.memory_space<vmem>>, vector<2x256xf32>,
    %cst_6 = arith.constant 0.000000e+00 : f32
    %6 = vector.broadcast %cst_6 : f32 to vector<2x256xf32>
    %c10_7 = arith.constant 10 : index
    %c0_8 = arith.constant 0 : index
    %7 = vector.load %arg27[%c10_7, %c0_8] : memref<12x256xf32, #tpu.memory_space<vmem>>, vector<2x256xf32>
    tpu.vector_store %arg27[%c10_7, %c0_8], %6 {strides = array<i32>} : memref<12x256xf32, #tpu.memory_space<vmem>>, vector<2x256xf32>,
    %cst_9 = arith.constant 0.000000e+00 : f32
    %8 = vector.broadcast %cst_9 : f32 to vector<2x128xf32>
    %c0_10 = arith.constant 0 : index
    %c0_11 = arith.constant 0 : index
    %9 = vector.load %arg28[%c0_10, %c0_11] : memref<12x128xf32, #tpu.memory_space<vmem>>, vector<2x128xf32>
    tpu.vector_store %arg28[%c0_10, %c0_11], %8 {strides = array<i32>} : memref<12x128xf32, #tpu.memory_space<vmem>>, vector<2x128xf32>,
    %cst_12 = arith.constant 0.000000e+00 : f32
    %10 = vector.broadcast %cst_12 : f32 to vector<2x128xf32>
    %c10_13 = arith.constant 10 : index
    %c0_14 = arith.constant 0 : index
    %11 = vector.load %arg28[%c10_13, %c0_14] : memref<12x128xf32, #tpu.memory_space<vmem>>, vector<2x128xf32>
    tpu.vector_store %arg28[%c10_13, %c0_14], %10 {strides = array<i32>} : memref<12x128xf32, #tpu.memory_space<vmem>>, vector<2x128xf32>,
    %c0_15 = arith.constant 0 : index
    %c0_16 = arith.constant 0 : index
    %c0_17 = arith.constant 0 : index
    %12 = vector.load %arg1[%c0_15, %c0_16, %c0_17] : memref<1x12x16xf32, #tpu.memory_space<vmem>>, vector<1x12x16xf32>
    %13 = vector.shape_cast %12 : vector<1x12x16xf32> to vector<12x16xf32>
    %14 = vector.extract_strided_slice %13 {offsets = [0, 0], sizes = [8, 16], strides = [1, 1]} : vector<12x16xf32> to vector<8x16xf32>
    %c0_18 = arith.constant 0 : index
    %c0_19 = arith.constant 0 : index
    %c0_20 = arith.constant 0 : index
    %15 = vector.load %arg2[%c0_18, %c0_19, %c0_20] : memref<5x16x512xf32, #tpu.memory_space<vmem>>, vector<1x16x512xf32>
    %16 = vector.shape_cast %15 : vector<1x16x512xf32> to vector<16x512xf32>
    %cst_21 = arith.constant dense<0.000000e+00> : vector<8x512xf32>
    %17 = tpu.matmul %14, %16, %cst_21 {dimension_numbers = #tpu.dot_dimension_numbers<[1], [0], [0], [1], [0, 0, 1, 1], [], []>} : vector<8x16xf32>, vector<16x512xf32>, vector<8x512xf32> -> vector<8x512xf32>
    %18 = vector.extract_strided_slice %13 {offsets = [1, 0], sizes = [8, 16], strides = [1, 1]} : vector<12x16xf32> to vector<8x16xf32>
    %c1 = arith.constant 1 : index
    %c0_22 = arith.constant 0 : index
    %c0_23 = arith.constant 0 : index
    %19 = vector.load %arg2[%c1, %c0_22, %c0_23] : memref<5x16x512xf32, #tpu.memory_space<vmem>>, vector<1x16x512xf32>
    %20 = vector.shape_cast %19 : vector<1x16x512xf32> to vector<16x512xf32>
    %cst_24 = arith.constant dense<0.000000e+00> : vector<8x512xf32>
    %21 = tpu.matmul %18, %20, %cst_24 {dimension_numbers = #tpu.dot_dimension_numbers<[1], [0], [0], [1], [0, 0, 1, 1], [], []>} : vector<8x16xf32>, vector<16x512xf32>, vector<8x512xf32> -> vector<8x512xf32>
    %22 = arith.addf %17, %21 : vector<8x512xf32>
    %23 = vector.extract_strided_slice %13 {offsets = [2, 0], sizes = [8, 16], strides = [1, 1]} : vector<12x16xf32> to vector<8x16xf32>
    %c2 = arith.constant 2 : index
    %c0_25 = arith.constant 0 : index
    %c0_26 = arith.constant 0 : index
    %24 = vector.load %arg2[%c2, %c0_25, %c0_26] : memref<5x16x512xf32, #tpu.memory_space<vmem>>, vector<1x16x512xf32>
    %25 = vector.shape_cast %24 : vector<1x16x512xf32> to vector<16x512xf32>
    %cst_27 = arith.constant dense<0.000000e+00> : vector<8x512xf32>
    %26 = tpu.matmul %23, %25, %cst_27 {dimension_numbers = #tpu.dot_dimension_numbers<[1], [0], [0], [1], [0, 0, 1, 1], [], []>} : vector<8x16xf32>, vector<16x512xf32>, vector<8x512xf32> -> vector<8x512xf32>
    %27 = arith.addf %22, %26 : vector<8x512xf32>
    %28 = vector.extract_strided_slice %13 {offsets = [3, 0], sizes = [8, 16], strides = [1, 1]} : vector<12x16xf32> to vector<8x16xf32>
    %c3 = arith.constant 3 : index
    %c0_28 = arith.constant 0 : index
    %c0_29 = arith.constant 0 : index
    %29 = vector.load %arg2[%c3, %c0_28, %c0_29] : memref<5x16x512xf32, #tpu.memory_space<vmem>>, vector<1x16x512xf32>
    %30 = vector.shape_cast %29 : vector<1x16x512xf32> to vector<16x512xf32>
    %cst_30 = arith.constant dense<0.000000e+00> : vector<8x512xf32>
    %31 = tpu.matmul %28, %30, %cst_30 {dimension_numbers = #tpu.dot_dimension_numbers<[1], [0], [0], [1], [0, 0, 1, 1], [], []>} : vector<8x16xf32>, vector<16x512xf32>, vector<8x512xf32> -> vector<8x512xf32>
    %32 = arith.addf %27, %31 : vector<8x512xf32>
    %33 = vector.extract_strided_slice %13 {offsets = [4, 0], sizes = [8, 16], strides = [1, 1]} : vector<12x16xf32> to vector<8x16xf32>
    %c4 = arith.constant 4 : index
    %c0_31 = arith.constant 0 : index
    %c0_32 = arith.constant 0 : index
    %34 = vector.load %arg2[%c4, %c0_31, %c0_32] : memref<5x16x512xf32, #tpu.memory_space<vmem>>, vector<1x16x512xf32>
    %35 = vector.shape_cast %34 : vector<1x16x512xf32> to vector<16x512xf32>
    %cst_33 = arith.constant dense<0.000000e+00> : vector<8x512xf32>
    %36 = tpu.matmul %33, %35, %cst_33 {dimension_numbers = #tpu.dot_dimension_numbers<[1], [0], [0], [1], [0, 0, 1, 1], [], []>} : vector<8x16xf32>, vector<16x512xf32>, vector<8x512xf32> -> vector<8x512xf32>
    %37 = arith.addf %32, %36 : vector<8x512xf32>
    %c0_34 = arith.constant 0 : index
    %c0_35 = arith.constant 0 : index
    %38 = vector.load %arg3[%c0_34, %c0_35] : memref<1x512xf32, #tpu.memory_space<vmem>>, vector<1x512xf32>
    %39 = vector.broadcast %38 : vector<1x512xf32> to vector<8x512xf32>
    %40 = arith.addf %37, %39 : vector<8x512xf32>
    %cst_36 = arith.constant 5.000000e-01 : f32
    %41 = vector.broadcast %cst_36 : f32 to vector<8x512xf32>
    %42 = arith.mulf %41, %40 : vector<8x512xf32>
    %cst_37 = arith.constant 0.707106769 : f32
    %43 = vector.broadcast %cst_37 : f32 to vector<8x512xf32>
    %44 = arith.mulf %40, %43 : vector<8x512xf32>
    %45 = math.erf %44 : vector<8x512xf32>
    %cst_38 = arith.constant 1.000000e+00 : f32
    %46 = vector.broadcast %cst_38 : f32 to vector<8x512xf32>
    %47 = arith.addf %46, %45 : vector<8x512xf32>
    %48 = arith.mulf %42, %47 : vector<8x512xf32>
    %49 = vector.extract_strided_slice %48 {offsets = [0, 0], sizes = [8, 256], strides = [1, 1]} : vector<8x512xf32> to vector<8x256xf32>
    %50 = vector.extract_strided_slice %48 {offsets = [0, 256], sizes = [8, 256], strides = [1, 1]} : vector<8x512xf32> to vector<8x256xf32>
    %51 = arith.maximumf %49, %50 : vector<8x256xf32>
    %c2_39 = arith.constant 2 : index
    %c0_40 = arith.constant 0 : index
    %52 = vector.load %arg26[%c2_39, %c0_40] : memref<12x256xf32, #tpu.memory_space<vmem>>, vector<8x256xf32>
    tpu.vector_store %arg26[%c2_39, %c0_40], %51 {strides = array<i32>} : memref<12x256xf32, #tpu.memory_space<vmem>>, vector<8x256xf32>,
    %c0_41 = arith.constant 0 : index
    %c0_42 = arith.constant 0 : index
    %53 = vector.load %arg26[%c0_41, %c0_42] : memref<12x256xf32, #tpu.memory_space<vmem>>, vector<12x256xf32>
    %54 = vector.extract_strided_slice %53 {offsets = [0, 0], sizes = [8, 256], strides = [1, 1]} : vector<12x256xf32> to vector<8x256xf32>
    %c0_43 = arith.constant 0 : index
    %c0_44 = arith.constant 0 : index
    %c0_45 = arith.constant 0 : index
    %55 = vector.load %arg4[%c0_43, %c0_44, %c0_45] : memref<5x256x512xf32, #tpu.memory_space<vmem>>, vector<1x256x512xf32>
    %56 = vector.shape_cast %55 : vector<1x256x512xf32> to vector<256x512xf32>
    %cst_46 = arith.constant dense<0.000000e+00> : vector<8x512xf32>
    %57 = tpu.matmul %54, %56, %cst_46 {dimension_numbers = #tpu.dot_dimension_numbers<[1], [0], [0], [1], [0, 0, 1, 1], [], []>} : vector<8x256xf32>, vector<256x512xf32>, vector<8x512xf32> -> vector<8x512xf32>
    %58 = vector.extract_strided_slice %53 {offsets = [1, 0], sizes = [8, 256], strides = [1, 1]} : vector<12x256xf32> to vector<8x256xf32>
    %c1_47 = arith.constant 1 : index
    %c0_48 = arith.constant 0 : index
    %c0_49 = arith.constant 0 : index
    %59 = vector.load %arg4[%c1_47, %c0_48, %c0_49] : memref<5x256x512xf32, #tpu.memory_space<vmem>>, vector<1x256x512xf32>
    %60 = vector.shape_cast %59 : vector<1x256x512xf32> to vector<256x512xf32>
    %cst_50 = arith.constant dense<0.000000e+00> : vector<8x512xf32>
    %61 = tpu.matmul %58, %60, %cst_50 {dimension_numbers = #tpu.dot_dimension_numbers<[1], [0], [0], [1], [0, 0, 1, 1], [], []>} : vector<8x256xf32>, vector<256x512xf32>, vector<8x512xf32> -> vector<8x512xf32>
    %62 = arith.addf %57, %61 : vector<8x512xf32>
    %63 = vector.extract_strided_slice %53 {offsets = [2, 0], sizes = [8, 256], strides = [1, 1]} : vector<12x256xf32> to vector<8x256xf32>
    %c2_51 = arith.constant 2 : index
    %c0_52 = arith.constant 0 : index
    %c0_53 = arith.constant 0 : index
    %64 = vector.load %arg4[%c2_51, %c0_52, %c0_53] : memref<5x256x512xf32, #tpu.memory_space<vmem>>, vector<1x256x512xf32>
    %65 = vector.shape_cast %64 : vector<1x256x512xf32> to vector<256x512xf32>
    %cst_54 = arith.constant dense<0.000000e+00> : vector<8x512xf32>
    %66 = tpu.matmul %63, %65, %cst_54 {dimension_numbers = #tpu.dot_dimension_numbers<[1], [0], [0], [1], [0, 0, 1, 1], [], []>} : vector<8x256xf32>, vector<256x512xf32>, vector<8x512xf32> -> vector<8x512xf32>
    %67 = arith.addf %62, %66 : vector<8x512xf32>
    %68 = vector.extract_strided_slice %53 {offsets = [3, 0], sizes = [8, 256], strides = [1, 1]} : vector<12x256xf32> to vector<8x256xf32>
    %c3_55 = arith.constant 3 : index
    %c0_56 = arith.constant 0 : index
    %c0_57 = arith.constant 0 : index
    %69 = vector.load %arg4[%c3_55, %c0_56, %c0_57] : memref<5x256x512xf32, #tpu.memory_space<vmem>>, vector<1x256x512xf32>
    %70 = vector.shape_cast %69 : vector<1x256x512xf32> to vector<256x512xf32>
    %cst_58 = arith.constant dense<0.000000e+00> : vector<8x512xf32>
    %71 = tpu.matmul %68, %70, %cst_58 {dimension_numbers = #tpu.dot_dimension_numbers<[1], [0], [0], [1], [0, 0, 1, 1], [], []>} : vector<8x256xf32>, vector<256x512xf32>, vector<8x512xf32> -> vector<8x512xf32>
    %72 = arith.addf %67, %71 : vector<8x512xf32>
    %73 = vector.extract_strided_slice %53 {offsets = [4, 0], sizes = [8, 256], strides = [1, 1]} : vector<12x256xf32> to vector<8x256xf32>
    %c4_59 = arith.constant 4 : index
    %c0_60 = arith.constant 0 : index
    %c0_61 = arith.constant 0 : index
    %74 = vector.load %arg4[%c4_59, %c0_60, %c0_61] : memref<5x256x512xf32, #tpu.memory_space<vmem>>, vector<1x256x512xf32>
    %75 = vector.shape_cast %74 : vector<1x256x512xf32> to vector<256x512xf32>
    %cst_62 = arith.constant dense<0.000000e+00> : vector<8x512xf32>
    %76 = tpu.matmul %73, %75, %cst_62 {dimension_numbers = #tpu.dot_dimension_numbers<[1], [0], [0], [1], [0, 0, 1, 1], [], []>} : vector<8x256xf32>, vector<256x512xf32>, vector<8x512xf32> -> vector<8x512xf32>
    %77 = arith.addf %72, %76 : vector<8x512xf32>
    %c0_63 = arith.constant 0 : index
    %c0_64 = arith.constant 0 : index
    %78 = vector.load %arg5[%c0_63, %c0_64] : memref<1x512xf32, #tpu.memory_space<vmem>>, vector<1x512xf32>
    %79 = vector.broadcast %78 : vector<1x512xf32> to vector<8x512xf32>
    %80 = arith.addf %77, %79 : vector<8x512xf32>
    %cst_65 = arith.constant 5.000000e-01 : f32
    %81 = vector.broadcast %cst_65 : f32 to vector<8x512xf32>
    %82 = arith.mulf %81, %80 : vector<8x512xf32>
    %cst_66 = arith.constant 0.707106769 : f32
    %83 = vector.broadcast %cst_66 : f32 to vector<8x512xf32>
    %84 = arith.mulf %80, %83 : vector<8x512xf32>
    %85 = math.erf %84 : vector<8x512xf32>
    %cst_67 = arith.constant 1.000000e+00 : f32
    %86 = vector.broadcast %cst_67 : f32 to vector<8x512xf32>
    %87 = arith.addf %86, %85 : vector<8x512xf32>
    %88 = arith.mulf %82, %87 : vector<8x512xf32>
    %89 = vector.extract_strided_slice %88 {offsets = [0, 0], sizes = [8, 256], strides = [1, 1]} : vector<8x512xf32> to vector<8x256xf32>
    %90 = vector.extract_strided_slice %88 {offsets = [0, 256], sizes = [8, 256], strides = [1, 1]} : vector<8x512xf32> to vector<8x256xf32>
    %91 = arith.maximumf %89, %90 : vector<8x256xf32>
    %c2_68 = arith.constant 2 : index
    %c0_69 = arith.constant 0 : index
    %92 = vector.load %arg27[%c2_68, %c0_69] : memref<12x256xf32, #tpu.memory_space<vmem>>, vector<8x256xf32>
    tpu.vector_store %arg27[%c2_68, %c0_69], %91 {strides = array<i32>} : memref<12x256xf32, #tpu.memory_space<vmem>>, vector<8x256xf32>,
    %c0_70 = arith.constant 0 : index
    %c0_71 = arith.constant 0 : index
    %93 = vector.load %arg27[%c0_70, %c0_71] : memref<12x256xf32, #tpu.memory_space<vmem>>, vector<12x256xf32>
    %94 = vector.extract_strided_slice %93 {offsets = [0, 0], sizes = [8, 256], strides = [1, 1]} : vector<12x256xf32> to vector<8x256xf32>
    %c0_72 = arith.constant 0 : index
    %c0_73 = arith.constant 0 : index
    %c0_74 = arith.constant 0 : index
    %95 = vector.load %arg6[%c0_72, %c0_73, %c0_74] : memref<5x256x256xf32, #tpu.memory_space<vmem>>, vector<1x256x256xf32>
    %96 = vector.shape_cast %95 : vector<1x256x256xf32> to vector<256x256xf32>
    %cst_75 = arith.constant dense<0.000000e+00> : vector<8x256xf32>
    %97 = tpu.matmul %94, %96, %cst_75 {dimension_numbers = #tpu.dot_dimension_numbers<[1], [0], [0], [1], [0, 0, 1, 1], [], []>} : vector<8x256xf32>, vector<256x256xf32>, vector<8x256xf32> -> vector<8x256xf32>
    %98 = vector.extract_strided_slice %93 {offsets = [1, 0], sizes = [8, 256], strides = [1, 1]} : vector<12x256xf32> to vector<8x256xf32>
    %c1_76 = arith.constant 1 : index
    %c0_77 = arith.constant 0 : index
    %c0_78 = arith.constant 0 : index
    %99 = vector.load %arg6[%c1_76, %c0_77, %c0_78] : memref<5x256x256xf32, #tpu.memory_space<vmem>>, vector<1x256x256xf32>
    %100 = vector.shape_cast %99 : vector<1x256x256xf32> to vector<256x256xf32>
    %cst_79 = arith.constant dense<0.000000e+00> : vector<8x256xf32>
    %101 = tpu.matmul %98, %100, %cst_79 {dimension_numbers = #tpu.dot_dimension_numbers<[1], [0], [0], [1], [0, 0, 1, 1], [], []>} : vector<8x256xf32>, vector<256x256xf32>, vector<8x256xf32> -> vector<8x256xf32>
    %102 = arith.addf %97, %101 : vector<8x256xf32>
    %103 = vector.extract_strided_slice %93 {offsets = [2, 0], sizes = [8, 256], strides = [1, 1]} : vector<12x256xf32> to vector<8x256xf32>
    %c2_80 = arith.constant 2 : index
    %c0_81 = arith.constant 0 : index
    %c0_82 = arith.constant 0 : index
    %104 = vector.load %arg6[%c2_80, %c0_81, %c0_82] : memref<5x256x256xf32, #tpu.memory_space<vmem>>, vector<1x256x256xf32>
    %105 = vector.shape_cast %104 : vector<1x256x256xf32> to vector<256x256xf32>
    %cst_83 = arith.constant dense<0.000000e+00> : vector<8x256xf32>
    %106 = tpu.matmul %103, %105, %cst_83 {dimension_numbers = #tpu.dot_dimension_numbers<[1], [0], [0], [1], [0, 0, 1, 1], [], []>} : vector<8x256xf32>, vector<256x256xf32>, vector<8x256xf32> -> vector<8x256xf32>
    %107 = arith.addf %102, %106 : vector<8x256xf32>
    %108 = vector.extract_strided_slice %93 {offsets = [3, 0], sizes = [8, 256], strides = [1, 1]} : vector<12x256xf32> to vector<8x256xf32>
    %c3_84 = arith.constant 3 : index
    %c0_85 = arith.constant 0 : index
    %c0_86 = arith.constant 0 : index
    %109 = vector.load %arg6[%c3_84, %c0_85, %c0_86] : memref<5x256x256xf32, #tpu.memory_space<vmem>>, vector<1x256x256xf32>
    %110 = vector.shape_cast %109 : vector<1x256x256xf32> to vector<256x256xf32>
    %cst_87 = arith.constant dense<0.000000e+00> : vector<8x256xf32>
    %111 = tpu.matmul %108, %110, %cst_87 {dimension_numbers = #tpu.dot_dimension_numbers<[1], [0], [0], [1], [0, 0, 1, 1], [], []>} : vector<8x256xf32>, vector<256x256xf32>, vector<8x256xf32> -> vector<8x256xf32>
    %112 = arith.addf %107, %111 : vector<8x256xf32>
    %113 = vector.extract_strided_slice %93 {offsets = [4, 0], sizes = [8, 256], strides = [1, 1]} : vector<12x256xf32> to vector<8x256xf32>
    %c4_88 = arith.constant 4 : index
    %c0_89 = arith.constant 0 : index
    %c0_90 = arith.constant 0 : index
    %114 = vector.load %arg6[%c4_88, %c0_89, %c0_90] : memref<5x256x256xf32, #tpu.memory_space<vmem>>, vector<1x256x256xf32>
    %115 = vector.shape_cast %114 : vector<1x256x256xf32> to vector<256x256xf32>
    %cst_91 = arith.constant dense<0.000000e+00> : vector<8x256xf32>
    %116 = tpu.matmul %113, %115, %cst_91 {dimension_numbers = #tpu.dot_dimension_numbers<[1], [0], [0], [1], [0, 0, 1, 1], [], []>} : vector<8x256xf32>, vector<256x256xf32>, vector<8x256xf32> -> vector<8x256xf32>
    %117 = arith.addf %112, %116 : vector<8x256xf32>
    %c0_92 = arith.constant 0 : index
    %c0_93 = arith.constant 0 : index
    %118 = vector.load %arg7[%c0_92, %c0_93] : memref<1x256xf32, #tpu.memory_space<vmem>>, vector<1x256xf32>
    %119 = vector.broadcast %118 : vector<1x256xf32> to vector<8x256xf32>
    %120 = arith.addf %117, %119 : vector<8x256xf32>
    %cst_94 = arith.constant 5.000000e-01 : f32
    %121 = vector.broadcast %cst_94 : f32 to vector<8x256xf32>
    %122 = arith.mulf %121, %120 : vector<8x256xf32>
    %cst_95 = arith.constant 0.707106769 : f32
    %123 = vector.broadcast %cst_95 : f32 to vector<8x256xf32>
    %124 = arith.mulf %120, %123 : vector<8x256xf32>
    %125 = math.erf %124 : vector<8x256xf32>
    %cst_96 = arith.constant 1.000000e+00 : f32
    %126 = vector.broadcast %cst_96 : f32 to vector<8x256xf32>
    %127 = arith.addf %126, %125 : vector<8x256xf32>
    %128 = arith.mulf %122, %127 : vector<8x256xf32>
    %129 = vector.extract_strided_slice %128 {offsets = [0, 0], sizes = [8, 128], strides = [1, 1]} : vector<8x256xf32> to vector<8x128xf32>
    %130 = vector.extract_strided_slice %128 {offsets = [0, 128], sizes = [8, 128], strides = [1, 1]} : vector<8x256xf32> to vector<8x128xf32>
    %131 = arith.maximumf %129, %130 : vector<8x128xf32>
    %c2_97 = arith.constant 2 : index
    %c0_98 = arith.constant 0 : index
    %132 = vector.load %arg28[%c2_97, %c0_98] : memref<12x128xf32, #tpu.memory_space<vmem>>, vector<8x128xf32>
    tpu.vector_store %arg28[%c2_97, %c0_98], %131 {strides = array<i32>} : memref<12x128xf32, #tpu.memory_space<vmem>>, vector<8x128xf32>,
    %c0_99 = arith.constant 0 : index
    %c0_100 = arith.constant 0 : index
    %133 = vector.load %arg28[%c0_99, %c0_100] : memref<12x128xf32, #tpu.memory_space<vmem>>, vector<12x128xf32>
    %134 = vector.extract_strided_slice %133 {offsets = [0, 0], sizes = [8, 128], strides = [1, 1]} : vector<12x128xf32> to vector<8x128xf32>
    %c0_101 = arith.constant 0 : index
    %c0_102 = arith.constant 0 : index
    %c0_103 = arith.constant 0 : index
    %135 = vector.load %arg8[%c0_101, %c0_102, %c0_103] : memref<5x128x128xf32, #tpu.memory_space<vmem>>, vector<1x128x128xf32>
    %136 = vector.shape_cast %135 : vector<1x128x128xf32> to vector<128x128xf32>
    %cst_104 = arith.constant dense<0.000000e+00> : vector<8x128xf32>
    %137 = tpu.matmul %134, %136, %cst_104 {dimension_numbers = #tpu.dot_dimension_numbers<[1], [0], [0], [1], [0, 0, 1, 1], [], []>} : vector<8x128xf32>, vector<128x128xf32>, vector<8x128xf32> -> vector<8x128xf32>
    %138 = vector.extract_strided_slice %133 {offsets = [1, 0], sizes = [8, 128], strides = [1, 1]} : vector<12x128xf32> to vector<8x128xf32>
    %c1_105 = arith.constant 1 : index
    %c0_106 = arith.constant 0 : index
    %c0_107 = arith.constant 0 : index
    %139 = vector.load %arg8[%c1_105, %c0_106, %c0_107] : memref<5x128x128xf32, #tpu.memory_space<vmem>>, vector<1x128x128xf32>
    %140 = vector.shape_cast %139 : vector<1x128x128xf32> to vector<128x128xf32>
    %cst_108 = arith.constant dense<0.000000e+00> : vector<8x128xf32>
    %141 = tpu.matmul %138, %140, %cst_108 {dimension_numbers = #tpu.dot_dimension_numbers<[1], [0], [0], [1], [0, 0, 1, 1], [], []>} : vector<8x128xf32>, vector<128x128xf32>, vector<8x128xf32> -> vector<8x128xf32>
    %142 = arith.addf %137, %141 : vector<8x128xf32>
    %143 = vector.extract_strided_slice %133 {offsets = [2, 0], sizes = [8, 128], strides = [1, 1]} : vector<12x128xf32> to vector<8x128xf32>
    %c2_109 = arith.constant 2 : index
    %c0_110 = arith.constant 0 : index
    %c0_111 = arith.constant 0 : index
    %144 = vector.load %arg8[%c2_109, %c0_110, %c0_111] : memref<5x128x128xf32, #tpu.memory_space<vmem>>, vector<1x128x128xf32>
    %145 = vector.shape_cast %144 : vector<1x128x128xf32> to vector<128x128xf32>
    %cst_112 = arith.constant dense<0.000000e+00> : vector<8x128xf32>
    %146 = tpu.matmul %143, %145, %cst_112 {dimension_numbers = #tpu.dot_dimension_numbers<[1], [0], [0], [1], [0, 0, 1, 1], [], []>} : vector<8x128xf32>, vector<128x128xf32>, vector<8x128xf32> -> vector<8x128xf32>
    %147 = arith.addf %142, %146 : vector<8x128xf32>
    %148 = vector.extract_strided_slice %133 {offsets = [3, 0], sizes = [8, 128], strides = [1, 1]} : vector<12x128xf32> to vector<8x128xf32>
    %c3_113 = arith.constant 3 : index
    %c0_114 = arith.constant 0 : index
    %c0_115 = arith.constant 0 : index
    %149 = vector.load %arg8[%c3_113, %c0_114, %c0_115] : memref<5x128x128xf32, #tpu.memory_space<vmem>>, vector<1x128x128xf32>
    %150 = vector.shape_cast %149 : vector<1x128x128xf32> to vector<128x128xf32>
    %cst_116 = arith.constant dense<0.000000e+00> : vector<8x128xf32>
    %151 = tpu.matmul %148, %150, %cst_116 {dimension_numbers = #tpu.dot_dimension_numbers<[1], [0], [0], [1], [0, 0, 1, 1], [], []>} : vector<8x128xf32>, vector<128x128xf32>, vector<8x128xf32> -> vector<8x128xf32>
    %152 = arith.addf %147, %151 : vector<8x128xf32>
    %153 = vector.extract_strided_slice %133 {offsets = [4, 0], sizes = [8, 128], strides = [1, 1]} : vector<12x128xf32> to vector<8x128xf32>
    %c4_117 = arith.constant 4 : index
    %c0_118 = arith.constant 0 : index
    %c0_119 = arith.constant 0 : index
    %154 = vector.load %arg8[%c4_117, %c0_118, %c0_119] : memref<5x128x128xf32, #tpu.memory_space<vmem>>, vector<1x128x128xf32>
    %155 = vector.shape_cast %154 : vector<1x128x128xf32> to vector<128x128xf32>
    %cst_120 = arith.constant dense<0.000000e+00> : vector<8x128xf32>
    %156 = tpu.matmul %153, %155, %cst_120 {dimension_numbers = #tpu.dot_dimension_numbers<[1], [0], [0], [1], [0, 0, 1, 1], [], []>} : vector<8x128xf32>, vector<128x128xf32>, vector<8x128xf32> -> vector<8x128xf32>
    %157 = arith.addf %152, %156 : vector<8x128xf32>
    %c0_121 = arith.constant 0 : index
    %c0_122 = arith.constant 0 : index
    %158 = vector.load %arg9[%c0_121, %c0_122] : memref<1x128xf32, #tpu.memory_space<vmem>>, vector<1x128xf32>
    %159 = vector.broadcast %158 : vector<1x128xf32> to vector<8x128xf32>
    %160 = arith.addf %157, %159 : vector<8x128xf32>
    %cst_123 = arith.constant 5.000000e-01 : f32
    %161 = vector.broadcast %cst_123 : f32 to vector<8x128xf32>
    %162 = arith.mulf %161, %160 : vector<8x128xf32>
    %cst_124 = arith.constant 0.707106769 : f32
    %163 = vector.broadcast %cst_124 : f32 to vector<8x128xf32>
    %164 = arith.mulf %160, %163 : vector<8x128xf32>
    %165 = math.erf %164 : vector<8x128xf32>
    %cst_125 = arith.constant 1.000000e+00 : f32
    %166 = vector.broadcast %cst_125 : f32 to vector<8x128xf32>
    %167 = arith.addf %166, %165 : vector<8x128xf32>
    %168 = arith.mulf %162, %167 : vector<8x128xf32>
    %169 = vector.extract_strided_slice %168 {offsets = [0, 0], sizes = [8, 64], strides = [1, 1]} : vector<8x128xf32> to vector<8x64xf32>
    %170 = vector.extract_strided_slice %168 {offsets = [0, 64], sizes = [8, 64], strides = [1, 1]} : vector<8x128xf32> to vector<8x64xf32>
    %171 = arith.maximumf %169, %170 : vector<8x64xf32>
    %c0_126 = arith.constant 0 : index
    %c0_127 = arith.constant 0 : index
    %172 = vector.load %arg10[%c0_126, %c0_127] : memref<64x32xf32, #tpu.memory_space<vmem>>, vector<64x32xf32>
    %cst_128 = arith.constant dense<0.000000e+00> : vector<8x32xf32>
    %173 = tpu.matmul %171, %172, %cst_128 {dimension_numbers = #tpu.dot_dimension_numbers<[1], [0], [0], [1], [0, 0, 1, 1], [], []>} : vector<8x64xf32>, vector<64x32xf32>, vector<8x32xf32> -> vector<8x32xf32>
    %c0_129 = arith.constant 0 : index
    %c0_130 = arith.constant 0 : index
    %174 = vector.load %arg11[%c0_129, %c0_130] : memref<1x32xf32, #tpu.memory_space<vmem>>, vector<1x32xf32>
    %175 = vector.broadcast %174 : vector<1x32xf32> to vector<8x32xf32>
    %176 = arith.addf %173, %175 : vector<8x32xf32>
    %c0_131 = arith.constant 0 : index
    %c0_132 = arith.constant 0 : index
    %177 = vector.load %arg12[%c0_131, %c0_132] : memref<1x32xf32, #tpu.memory_space<vmem>>, vector<1x32xf32>
    %178 = tpu.concatenate %177, %176 in 0 : vector<1x32xf32>, vector<8x32xf32> -> vector<9x32xf32>
    %c0_133 = arith.constant 0 : index
    %c0_134 = arith.constant 0 : index
    %c0_135 = arith.constant 0 : index
    %c0_136 = arith.constant 0 : index
    %179 = vector.load %arg13[%c0_133, %c0_134, %c0_135, %c0_136] : memref<2x4x32x32xf32, #tpu.memory_space<vmem>>, vector<1x1x32x32xf32>
    %180 = vector.shape_cast %179 : vector<1x1x32x32xf32> to vector<32x32xf32>
    %cst_137 = arith.constant dense<0.000000e+00> : vector<9x32xf32>
    %181 = tpu.matmul %178, %180, %cst_137 {dimension_numbers = #tpu.dot_dimension_numbers<[1], [0], [0], [1], [0, 0, 1, 1], [], []>} : vector<9x32xf32>, vector<32x32xf32>, vector<9x32xf32> -> vector<9x32xf32>
    %c0_138 = arith.constant 0 : index
    %c0_139 = arith.constant 0 : index
    %c0_140 = arith.constant 0 : index
    %c0_141 = arith.constant 0 : index
    %182 = vector.load %arg14[%c0_138, %c0_139, %c0_140, %c0_141] : memref<2x4x1x32xf32, #tpu.memory_space<vmem>>, vector<1x1x1x32xf32>
    %183 = vector.shape_cast %182 : vector<1x1x1x32xf32> to vector<1x32xf32>
    %184 = vector.broadcast %183 : vector<1x32xf32> to vector<9x32xf32>
    %185 = arith.addf %181, %184 : vector<9x32xf32>
    %cst_142 = arith.constant dense<0.000000e+00> : vector<9x9xf32>
    %186 = tpu.matmul %185, %178, %cst_142 {dimension_numbers = #tpu.dot_dimension_numbers<[1], [1], [0], [0], [0, 0, 1, 0], [], []>} : vector<9x32xf32>, vector<9x32xf32>, vector<9x9xf32> -> vector<9x9xf32>
    %cst_143 = arith.constant dense<0xFF800000> : vector<9xf32>
    %187 = vector.multi_reduction <maximumf>, %186, %cst_143 [1] : vector<9x9xf32> to vector<9xf32>
    %188 = vector.shape_cast %187 : vector<9xf32> to vector<9x1xf32>
    %189 = vector.broadcast %188 : vector<9x1xf32> to vector<9x9xf32>
    %190 = arith.subf %186, %189 : vector<9x9xf32>
    %191 = math.exp %190 : vector<9x9xf32>
    %cst_144 = arith.constant dense<0.000000e+00> : vector<9xf32>
    %192 = vector.multi_reduction <add>, %191, %cst_144 [1] : vector<9x9xf32> to vector<9xf32>
    %193 = vector.shape_cast %192 : vector<9xf32> to vector<9x1xf32>
    %194 = tpu.reciprocal %193 {approx = true} : vector<9x1xf32> -> vector<9x1xf32>
    %195 = vector.broadcast %194 : vector<9x1xf32> to vector<9x9xf32>
    %196 = arith.mulf %191, %195 : vector<9x9xf32>
    %cst_145 = arith.constant dense<0.000000e+00> : vector<9x32xf32>
    %197 = tpu.matmul %196, %178, %cst_145 {dimension_numbers = #tpu.dot_dimension_numbers<[1], [0], [0], [1], [0, 0, 1, 1], [], []>} : vector<9x9xf32>, vector<9x32xf32>, vector<9x32xf32> -> vector<9x32xf32>
    %c0_146 = arith.constant 0 : index
    %c0_147 = arith.constant 0 : index
    %c0_148 = arith.constant 0 : index
    %c0_149 = arith.constant 0 : index
    %198 = vector.load %arg15[%c0_146, %c0_147, %c0_148, %c0_149] : memref<2x4x32x32xf32, #tpu.memory_space<vmem>>, vector<1x1x32x32xf32>
    %199 = vector.shape_cast %198 : vector<1x1x32x32xf32> to vector<32x32xf32>
    %cst_150 = arith.constant dense<0.000000e+00> : vector<9x32xf32>
    %200 = tpu.matmul %197, %199, %cst_150 {dimension_numbers = #tpu.dot_dimension_numbers<[1], [0], [0], [1], [0, 0, 1, 1], [], []>} : vector<9x32xf32>, vector<32x32xf32>, vector<9x32xf32> -> vector<9x32xf32>
    %c0_151 = arith.constant 0 : index
    %c1_152 = arith.constant 1 : index
    %c0_153 = arith.constant 0 : index
    %c0_154 = arith.constant 0 : index
    %201 = vector.load %arg13[%c0_151, %c1_152, %c0_153, %c0_154] : memref<2x4x32x32xf32, #tpu.memory_space<vmem>>, vector<1x1x32x32xf32>
    %202 = vector.shape_cast %201 : vector<1x1x32x32xf32> to vector<32x32xf32>
    %cst_155 = arith.constant dense<0.000000e+00> : vector<9x32xf32>
    %203 = tpu.matmul %178, %202, %cst_155 {dimension_numbers = #tpu.dot_dimension_numbers<[1], [0], [0], [1], [0, 0, 1, 1], [], []>} : vector<9x32xf32>, vector<32x32xf32>, vector<9x32xf32> -> vector<9x32xf32>
    %c0_156 = arith.constant 0 : index
    %c1_157 = arith.constant 1 : index
    %c0_158 = arith.constant 0 : index
    %c0_159 = arith.constant 0 : index
    %204 = vector.load %arg14[%c0_156, %c1_157, %c0_158, %c0_159] : memref<2x4x1x32xf32, #tpu.memory_space<vmem>>, vector<1x1x1x32xf32>
    %205 = vector.shape_cast %204 : vector<1x1x1x32xf32> to vector<1x32xf32>
    %206 = vector.broadcast %205 : vector<1x32xf32> to vector<9x32xf32>
    %207 = arith.addf %203, %206 : vector<9x32xf32>
    %cst_160 = arith.constant dense<0.000000e+00> : vector<9x9xf32>
    %208 = tpu.matmul %207, %178, %cst_160 {dimension_numbers = #tpu.dot_dimension_numbers<[1], [1], [0], [0], [0, 0, 1, 0], [], []>} : vector<9x32xf32>, vector<9x32xf32>, vector<9x9xf32> -> vector<9x9xf32>
    %cst_161 = arith.constant dense<0xFF800000> : vector<9xf32>
    %209 = vector.multi_reduction <maximumf>, %208, %cst_161 [1] : vector<9x9xf32> to vector<9xf32>
    %210 = vector.shape_cast %209 : vector<9xf32> to vector<9x1xf32>
    %211 = vector.broadcast %210 : vector<9x1xf32> to vector<9x9xf32>
    %212 = arith.subf %208, %211 : vector<9x9xf32>
    %213 = math.exp %212 : vector<9x9xf32>
    %cst_162 = arith.constant dense<0.000000e+00> : vector<9xf32>
    %214 = vector.multi_reduction <add>, %213, %cst_162 [1] : vector<9x9xf32> to vector<9xf32>
    %215 = vector.shape_cast %214 : vector<9xf32> to vector<9x1xf32>
    %216 = tpu.reciprocal %215 {approx = true} : vector<9x1xf32> -> vector<9x1xf32>
    %217 = vector.broadcast %216 : vector<9x1xf32> to vector<9x9xf32>
    %218 = arith.mulf %213, %217 : vector<9x9xf32>
    %cst_163 = arith.constant dense<0.000000e+00> : vector<9x32xf32>
    %219 = tpu.matmul %218, %178, %cst_163 {dimension_numbers = #tpu.dot_dimension_numbers<[1], [0], [0], [1], [0, 0, 1, 1], [], []>} : vector<9x9xf32>, vector<9x32xf32>, vector<9x32xf32> -> vector<9x32xf32>
    %c0_164 = arith.constant 0 : index
    %c1_165 = arith.constant 1 : index
    %c0_166 = arith.constant 0 : index
    %c0_167 = arith.constant 0 : index
    %220 = vector.load %arg15[%c0_164, %c1_165, %c0_166, %c0_167] : memref<2x4x32x32xf32, #tpu.memory_space<vmem>>, vector<1x1x32x32xf32>
    %221 = vector.shape_cast %220 : vector<1x1x32x32xf32> to vector<32x32xf32>
    %cst_168 = arith.constant dense<0.000000e+00> : vector<9x32xf32>
    %222 = tpu.matmul %219, %221, %cst_168 {dimension_numbers = #tpu.dot_dimension_numbers<[1], [0], [0], [1], [0, 0, 1, 1], [], []>} : vector<9x32xf32>, vector<32x32xf32>, vector<9x32xf32> -> vector<9x32xf32>
    %223 = arith.addf %200, %222 : vector<9x32xf32>
    %c0_169 = arith.constant 0 : index
    %c2_170 = arith.constant 2 : index
    %c0_171 = arith.constant 0 : index
    %c0_172 = arith.constant 0 : index
    %224 = vector.load %arg13[%c0_169, %c2_170, %c0_171, %c0_172] : memref<2x4x32x32xf32, #tpu.memory_space<vmem>>, vector<1x1x32x32xf32>
    %225 = vector.shape_cast %224 : vector<1x1x32x32xf32> to vector<32x32xf32>
    %cst_173 = arith.constant dense<0.000000e+00> : vector<9x32xf32>
    %226 = tpu.matmul %178, %225, %cst_173 {dimension_numbers = #tpu.dot_dimension_numbers<[1], [0], [0], [1], [0, 0, 1, 1], [], []>} : vector<9x32xf32>, vector<32x32xf32>, vector<9x32xf32> -> vector<9x32xf32>
    %c0_174 = arith.constant 0 : index
    %c2_175 = arith.constant 2 : index
    %c0_176 = arith.constant 0 : index
    %c0_177 = arith.constant 0 : index
    %227 = vector.load %arg14[%c0_174, %c2_175, %c0_176, %c0_177] : memref<2x4x1x32xf32, #tpu.memory_space<vmem>>, vector<1x1x1x32xf32>
    %228 = vector.shape_cast %227 : vector<1x1x1x32xf32> to vector<1x32xf32>
    %229 = vector.broadcast %228 : vector<1x32xf32> to vector<9x32xf32>
    %230 = arith.addf %226, %229 : vector<9x32xf32>
    %cst_178 = arith.constant dense<0.000000e+00> : vector<9x9xf32>
    %231 = tpu.matmul %230, %178, %cst_178 {dimension_numbers = #tpu.dot_dimension_numbers<[1], [1], [0], [0], [0, 0, 1, 0], [], []>} : vector<9x32xf32>, vector<9x32xf32>, vector<9x9xf32> -> vector<9x9xf32>
    %cst_179 = arith.constant dense<0xFF800000> : vector<9xf32>
    %232 = vector.multi_reduction <maximumf>, %231, %cst_179 [1] : vector<9x9xf32> to vector<9xf32>
    %233 = vector.shape_cast %232 : vector<9xf32> to vector<9x1xf32>
    %234 = vector.broadcast %233 : vector<9x1xf32> to vector<9x9xf32>
    %235 = arith.subf %231, %234 : vector<9x9xf32>
    %236 = math.exp %235 : vector<9x9xf32>
    %cst_180 = arith.constant dense<0.000000e+00> : vector<9xf32>
    %237 = vector.multi_reduction <add>, %236, %cst_180 [1] : vector<9x9xf32> to vector<9xf32>
    %238 = vector.shape_cast %237 : vector<9xf32> to vector<9x1xf32>
    %239 = tpu.reciprocal %238 {approx = true} : vector<9x1xf32> -> vector<9x1xf32>
    %240 = vector.broadcast %239 : vector<9x1xf32> to vector<9x9xf32>
    %241 = arith.mulf %236, %240 : vector<9x9xf32>
    %cst_181 = arith.constant dense<0.000000e+00> : vector<9x32xf32>
    %242 = tpu.matmul %241, %178, %cst_181 {dimension_numbers = #tpu.dot_dimension_numbers<[1], [0], [0], [1], [0, 0, 1, 1], [], []>} : vector<9x9xf32>, vector<9x32xf32>, vector<9x32xf32> -> vector<9x32xf32>
    %c0_182 = arith.constant 0 : index
    %c2_183 = arith.constant 2 : index
    %c0_184 = arith.constant 0 : index
    %c0_185 = arith.constant 0 : index
    %243 = vector.load %arg15[%c0_182, %c2_183, %c0_184, %c0_185] : memref<2x4x32x32xf32, #tpu.memory_space<vmem>>, vector<1x1x32x32xf32>
    %244 = vector.shape_cast %243 : vector<1x1x32x32xf32> to vector<32x32xf32>
    %cst_186 = arith.constant dense<0.000000e+00> : vector<9x32xf32>
    %245 = tpu.matmul %242, %244, %cst_186 {dimension_numbers = #tpu.dot_dimension_numbers<[1], [0], [0], [1], [0, 0, 1, 1], [], []>} : vector<9x32xf32>, vector<32x32xf32>, vector<9x32xf32> -> vector<9x32xf32>
    %246 = arith.addf %223, %245 : vector<9x32xf32>
    %c0_187 = arith.constant 0 : index
    %c3_188 = arith.constant 3 : index
    %c0_189 = arith.constant 0 : index
    %c0_190 = arith.constant 0 : index
    %247 = vector.load %arg13[%c0_187, %c3_188, %c0_189, %c0_190] : memref<2x4x32x32xf32, #tpu.memory_space<vmem>>, vector<1x1x32x32xf32>
    %248 = vector.shape_cast %247 : vector<1x1x32x32xf32> to vector<32x32xf32>
    %cst_191 = arith.constant dense<0.000000e+00> : vector<9x32xf32>
    %249 = tpu.matmul %178, %248, %cst_191 {dimension_numbers = #tpu.dot_dimension_numbers<[1], [0], [0], [1], [0, 0, 1, 1], [], []>} : vector<9x32xf32>, vector<32x32xf32>, vector<9x32xf32> -> vector<9x32xf32>
    %c0_192 = arith.constant 0 : index
    %c3_193 = arith.constant 3 : index
    %c0_194 = arith.constant 0 : index
    %c0_195 = arith.constant 0 : index
    %250 = vector.load %arg14[%c0_192, %c3_193, %c0_194, %c0_195] : memref<2x4x1x32xf32, #tpu.memory_space<vmem>>, vector<1x1x1x32xf32>
    %251 = vector.shape_cast %250 : vector<1x1x1x32xf32> to vector<1x32xf32>
    %252 = vector.broadcast %251 : vector<1x32xf32> to vector<9x32xf32>
    %253 = arith.addf %249, %252 : vector<9x32xf32>
    %cst_196 = arith.constant dense<0.000000e+00> : vector<9x9xf32>
    %254 = tpu.matmul %253, %178, %cst_196 {dimension_numbers = #tpu.dot_dimension_numbers<[1], [1], [0], [0], [0, 0, 1, 0], [], []>} : vector<9x32xf32>, vector<9x32xf32>, vector<9x9xf32> -> vector<9x9xf32>
    %cst_197 = arith.constant dense<0xFF800000> : vector<9xf32>
    %255 = vector.multi_reduction <maximumf>, %254, %cst_197 [1] : vector<9x9xf32> to vector<9xf32>
    %256 = vector.shape_cast %255 : vector<9xf32> to vector<9x1xf32>
    %257 = vector.broadcast %256 : vector<9x1xf32> to vector<9x9xf32>
    %258 = arith.subf %254, %257 : vector<9x9xf32>
    %259 = math.exp %258 : vector<9x9xf32>
    %cst_198 = arith.constant dense<0.000000e+00> : vector<9xf32>
    %260 = vector.multi_reduction <add>, %259, %cst_198 [1] : vector<9x9xf32> to vector<9xf32>
    %261 = vector.shape_cast %260 : vector<9xf32> to vector<9x1xf32>
    %262 = tpu.reciprocal %261 {approx = true} : vector<9x1xf32> -> vector<9x1xf32>
    %263 = vector.broadcast %262 : vector<9x1xf32> to vector<9x9xf32>
    %264 = arith.mulf %259, %263 : vector<9x9xf32>
    %cst_199 = arith.constant dense<0.000000e+00> : vector<9x32xf32>
    %265 = tpu.matmul %264, %178, %cst_199 {dimension_numbers = #tpu.dot_dimension_numbers<[1], [0], [0], [1], [0, 0, 1, 1], [], []>} : vector<9x9xf32>, vector<9x32xf32>, vector<9x32xf32> -> vector<9x32xf32>
    %c0_200 = arith.constant 0 : index
    %c3_201 = arith.constant 3 : index
    %c0_202 = arith.constant 0 : index
    %c0_203 = arith.constant 0 : index
    %266 = vector.load %arg15[%c0_200, %c3_201, %c0_202, %c0_203] : memref<2x4x32x32xf32, #tpu.memory_space<vmem>>, vector<1x1x32x32xf32>
    %267 = vector.shape_cast %266 : vector<1x1x32x32xf32> to vector<32x32xf32>
    %cst_204 = arith.constant dense<0.000000e+00> : vector<9x32xf32>
    %268 = tpu.matmul %265, %267, %cst_204 {dimension_numbers = #tpu.dot_dimension_numbers<[1], [0], [0], [1], [0, 0, 1, 1], [], []>} : vector<9x32xf32>, vector<32x32xf32>, vector<9x32xf32> -> vector<9x32xf32>
    %269 = arith.addf %246, %268 : vector<9x32xf32>
    %270 = arith.addf %178, %269 : vector<9x32xf32>
    %c0_205 = arith.constant 0 : index
    %c0_206 = arith.constant 0 : index
    %c0_207 = arith.constant 0 : index
    %271 = vector.load %arg16[%c0_205, %c0_206, %c0_207] : memref<2x1x32xf32, #tpu.memory_space<vmem>>, vector<1x1x32xf32>
    %272 = vector.shape_cast %271 : vector<1x1x32xf32> to vector<1x32xf32>
    %273 = vector.broadcast %272 : vector<1x32xf32> to vector<9x32xf32>
    %274 = arith.addf %270, %273 : vector<9x32xf32>
    %c0_208 = arith.constant 0 : index
    %c0_209 = arith.constant 0 : index
    %c0_210 = arith.constant 0 : index
    %275 = vector.load %arg17[%c0_208, %c0_209, %c0_210] : memref<2x1x32xf32, #tpu.memory_space<vmem>>, vector<1x1x32xf32>
    %276 = vector.shape_cast %275 : vector<1x1x32xf32> to vector<1x32xf32>
    %c0_211 = arith.constant 0 : index
    %c0_212 = arith.constant 0 : index
    %c0_213 = arith.constant 0 : index
    %277 = vector.load %arg18[%c0_211, %c0_212, %c0_213] : memref<2x1x32xf32, #tpu.memory_space<vmem>>, vector<1x1x32xf32>
    %278 = vector.shape_cast %277 : vector<1x1x32xf32> to vector<1x32xf32>
    %cst_214 = arith.constant dense<0.000000e+00> : vector<9xf32>
    %279 = vector.multi_reduction <add>, %274, %cst_214 [1] : vector<9x32xf32> to vector<9xf32>
    %280 = vector.shape_cast %279 : vector<9xf32> to vector<9x1xf32>
    %cst_215 = arith.constant 3.200000e+01 : f32
    %281 = vector.broadcast %cst_215 : f32 to vector<9x1xf32>
    %282 = arith.divf %280, %281 : vector<9x1xf32>
    %283 = vector.broadcast %282 : vector<9x1xf32> to vector<9x32xf32>
    %284 = arith.subf %274, %283 : vector<9x32xf32>
    %285 = arith.mulf %284, %284 : vector<9x32xf32>
    %cst_216 = arith.constant dense<0.000000e+00> : vector<9xf32>
    %286 = vector.multi_reduction <add>, %285, %cst_216 [1] : vector<9x32xf32> to vector<9xf32>
    %287 = vector.shape_cast %286 : vector<9xf32> to vector<9x1xf32>
    %cst_217 = arith.constant 3.200000e+01 : f32
    %288 = vector.broadcast %cst_217 : f32 to vector<9x1xf32>
    %289 = arith.divf %287, %288 : vector<9x1xf32>
    %cst_218 = arith.constant 9.99999974E-6 : f32
    %290 = vector.broadcast %cst_218 : f32 to vector<9x1xf32>
    %291 = arith.addf %289, %290 : vector<9x1xf32>
    %292 = math.rsqrt %291 : vector<9x1xf32>
    %293 = vector.broadcast %292 : vector<9x1xf32> to vector<9x32xf32>
    %294 = arith.mulf %284, %293 : vector<9x32xf32>
    %295 = vector.broadcast %276 : vector<1x32xf32> to vector<9x32xf32>
    %296 = arith.mulf %294, %295 : vector<9x32xf32>
    %297 = vector.broadcast %278 : vector<1x32xf32> to vector<9x32xf32>
    %298 = arith.addf %296, %297 : vector<9x32xf32>
    %c0_219 = arith.constant 0 : index
    %c0_220 = arith.constant 0 : index
    %c0_221 = arith.constant 0 : index
    %299 = vector.load %arg19[%c0_219, %c0_220, %c0_221] : memref<2x32x128xf32, #tpu.memory_space<vmem>>, vector<1x32x128xf32>
    %300 = vector.shape_cast %299 : vector<1x32x128xf32> to vector<32x128xf32>
    %cst_222 = arith.constant dense<0.000000e+00> : vector<9x128xf32>
    %301 = tpu.matmul %298, %300, %cst_222 {dimension_numbers = #tpu.dot_dimension_numbers<[1], [0], [0], [1], [0, 0, 1, 1], [], []>} : vector<9x32xf32>, vector<32x128xf32>, vector<9x128xf32> -> vector<9x128xf32>
    %c0_223 = arith.constant 0 : index
    %c0_224 = arith.constant 0 : index
    %c0_225 = arith.constant 0 : index
    %302 = vector.load %arg20[%c0_223, %c0_224, %c0_225] : memref<2x1x128xf32, #tpu.memory_space<vmem>>, vector<1x1x128xf32>
    %303 = vector.shape_cast %302 : vector<1x1x128xf32> to vector<1x128xf32>
    %304 = vector.broadcast %303 : vector<1x128xf32> to vector<9x128xf32>
    %305 = arith.addf %301, %304 : vector<9x128xf32>
    %cst_226 = arith.constant 5.000000e-01 : f32
    %306 = vector.broadcast %cst_226 : f32 to vector<9x128xf32>
    %307 = arith.mulf %306, %305 : vector<9x128xf32>
    %cst_227 = arith.constant 0.707106769 : f32
    %308 = vector.broadcast %cst_227 : f32 to vector<9x128xf32>
    %309 = arith.mulf %305, %308 : vector<9x128xf32>
    %310 = math.erf %309 : vector<9x128xf32>
    %cst_228 = arith.constant 1.000000e+00 : f32
    %311 = vector.broadcast %cst_228 : f32 to vector<9x128xf32>
    %312 = arith.addf %311, %310 : vector<9x128xf32>
    %313 = arith.mulf %307, %312 : vector<9x128xf32>
    %c0_229 = arith.constant 0 : index
    %c0_230 = arith.constant 0 : index
    %c0_231 = arith.constant 0 : index
    %314 = vector.load %arg21[%c0_229, %c0_230, %c0_231] : memref<2x128x32xf32, #tpu.memory_space<vmem>>, vector<1x128x32xf32>
    %315 = vector.shape_cast %314 : vector<1x128x32xf32> to vector<128x32xf32>
    %cst_232 = arith.constant dense<0.000000e+00> : vector<9x32xf32>
    %316 = tpu.matmul %313, %315, %cst_232 {dimension_numbers = #tpu.dot_dimension_numbers<[1], [0], [0], [1], [0, 0, 1, 1], [], []>} : vector<9x128xf32>, vector<128x32xf32>, vector<9x32xf32> -> vector<9x32xf32>
    %317 = arith.addf %298, %316 : vector<9x32xf32>
    %c0_233 = arith.constant 0 : index
    %c0_234 = arith.constant 0 : index
    %c0_235 = arith.constant 0 : index
    %318 = vector.load %arg22[%c0_233, %c0_234, %c0_235] : memref<2x1x32xf32, #tpu.memory_space<vmem>>, vector<1x1x32xf32>
    %319 = vector.shape_cast %318 : vector<1x1x32xf32> to vector<1x32xf32>
    %320 = vector.broadcast %319 : vector<1x32xf32> to vector<9x32xf32>
    %321 = arith.addf %317, %320 : vector<9x32xf32>
    %c0_236 = arith.constant 0 : index
    %c0_237 = arith.constant 0 : index
    %c0_238 = arith.constant 0 : index
    %322 = vector.load %arg23[%c0_236, %c0_237, %c0_238] : memref<2x1x32xf32, #tpu.memory_space<vmem>>, vector<1x1x32xf32>
    %323 = vector.shape_cast %322 : vector<1x1x32xf32> to vector<1x32xf32>
    %c0_239 = arith.constant 0 : index
    %c0_240 = arith.constant 0 : index
    %c0_241 = arith.constant 0 : index
    %324 = vector.load %arg24[%c0_239, %c0_240, %c0_241] : memref<2x1x32xf32, #tpu.memory_space<vmem>>, vector<1x1x32xf32>
    %325 = vector.shape_cast %324 : vector<1x1x32xf32> to vector<1x32xf32>
    %cst_242 = arith.constant dense<0.000000e+00> : vector<9xf32>
    %326 = vector.multi_reduction <add>, %321, %cst_242 [1] : vector<9x32xf32> to vector<9xf32>
    %327 = vector.shape_cast %326 : vector<9xf32> to vector<9x1xf32>
    %cst_243 = arith.constant 3.200000e+01 : f32
    %328 = vector.broadcast %cst_243 : f32 to vector<9x1xf32>
    %329 = arith.divf %327, %328 : vector<9x1xf32>
    %330 = vector.broadcast %329 : vector<9x1xf32> to vector<9x32xf32>
    %331 = arith.subf %321, %330 : vector<9x32xf32>
    %332 = arith.mulf %331, %331 : vector<9x32xf32>
    %cst_244 = arith.constant dense<0.000000e+00> : vector<9xf32>
    %333 = vector.multi_reduction <add>, %332, %cst_244 [1] : vector<9x32xf32> to vector<9xf32>
    %334 = vector.shape_cast %333 : vector<9xf32> to vector<9x1xf32>
    %cst_245 = arith.constant 3.200000e+01 : f32
    %335 = vector.broadcast %cst_245 : f32 to vector<9x1xf32>
    %336 = arith.divf %334, %335 : vector<9x1xf32>
    %cst_246 = arith.constant 9.99999974E-6 : f32
    %337 = vector.broadcast %cst_246 : f32 to vector<9x1xf32>
    %338 = arith.addf %336, %337 : vector<9x1xf32>
    %339 = math.rsqrt %338 : vector<9x1xf32>
    %340 = vector.broadcast %339 : vector<9x1xf32> to vector<9x32xf32>
    %341 = arith.mulf %331, %340 : vector<9x32xf32>
    %342 = vector.broadcast %323 : vector<1x32xf32> to vector<9x32xf32>
    %343 = arith.mulf %341, %342 : vector<9x32xf32>
    %344 = vector.broadcast %325 : vector<1x32xf32> to vector<9x32xf32>
    %345 = arith.addf %343, %344 : vector<9x32xf32>
    %346 = vector.extract_strided_slice %345 {offsets = [1, 0], sizes = [8, 32], strides = [1, 1]} : vector<9x32xf32> to vector<8x32xf32>
    %c1_247 = arith.constant 1 : index
    %c0_248 = arith.constant 0 : index
    %c0_249 = arith.constant 0 : index
    %c0_250 = arith.constant 0 : index
    %347 = vector.load %arg13[%c1_247, %c0_248, %c0_249, %c0_250] : memref<2x4x32x32xf32, #tpu.memory_space<vmem>>, vector<1x1x32x32xf32>
    %348 = vector.shape_cast %347 : vector<1x1x32x32xf32> to vector<32x32xf32>
    %cst_251 = arith.constant dense<0.000000e+00> : vector<9x32xf32>
    %349 = tpu.matmul %345, %348, %cst_251 {dimension_numbers = #tpu.dot_dimension_numbers<[1], [0], [0], [1], [0, 0, 1, 1], [], []>} : vector<9x32xf32>, vector<32x32xf32>, vector<9x32xf32> -> vector<9x32xf32>
    %c1_252 = arith.constant 1 : index
    %c0_253 = arith.constant 0 : index
    %c0_254 = arith.constant 0 : index
    %c0_255 = arith.constant 0 : index
    %350 = vector.load %arg14[%c1_252, %c0_253, %c0_254, %c0_255] : memref<2x4x1x32xf32, #tpu.memory_space<vmem>>, vector<1x1x1x32xf32>
    %351 = vector.shape_cast %350 : vector<1x1x1x32xf32> to vector<1x32xf32>
    %352 = vector.broadcast %351 : vector<1x32xf32> to vector<9x32xf32>
    %353 = arith.addf %349, %352 : vector<9x32xf32>
    %cst_256 = arith.constant dense<0.000000e+00> : vector<9x9xf32>
    %354 = tpu.matmul %353, %345, %cst_256 {dimension_numbers = #tpu.dot_dimension_numbers<[1], [1], [0], [0], [0, 0, 1, 0], [], []>} : vector<9x32xf32>, vector<9x32xf32>, vector<9x9xf32> -> vector<9x9xf32>
    %cst_257 = arith.constant dense<0xFF800000> : vector<9xf32>
    %355 = vector.multi_reduction <maximumf>, %354, %cst_257 [1] : vector<9x9xf32> to vector<9xf32>
    %356 = vector.shape_cast %355 : vector<9xf32> to vector<9x1xf32>
    %357 = vector.broadcast %356 : vector<9x1xf32> to vector<9x9xf32>
    %358 = arith.subf %354, %357 : vector<9x9xf32>
    %359 = math.exp %358 : vector<9x9xf32>
    %cst_258 = arith.constant dense<0.000000e+00> : vector<9xf32>
    %360 = vector.multi_reduction <add>, %359, %cst_258 [1] : vector<9x9xf32> to vector<9xf32>
    %361 = vector.shape_cast %360 : vector<9xf32> to vector<9x1xf32>
    %362 = tpu.reciprocal %361 {approx = true} : vector<9x1xf32> -> vector<9x1xf32>
    %363 = vector.broadcast %362 : vector<9x1xf32> to vector<9x9xf32>
    %364 = arith.mulf %359, %363 : vector<9x9xf32>
    %cst_259 = arith.constant dense<0.000000e+00> : vector<9x32xf32>
    %365 = tpu.matmul %364, %345, %cst_259 {dimension_numbers = #tpu.dot_dimension_numbers<[1], [0], [0], [1], [0, 0, 1, 1], [], []>} : vector<9x9xf32>, vector<9x32xf32>, vector<9x32xf32> -> vector<9x32xf32>
    %c1_260 = arith.constant 1 : index
    %c0_261 = arith.constant 0 : index
    %c0_262 = arith.constant 0 : index
    %c0_263 = arith.constant 0 : index
    %366 = vector.load %arg15[%c1_260, %c0_261, %c0_262, %c0_263] : memref<2x4x32x32xf32, #tpu.memory_space<vmem>>, vector<1x1x32x32xf32>
    %367 = vector.shape_cast %366 : vector<1x1x32x32xf32> to vector<32x32xf32>
    %cst_264 = arith.constant dense<0.000000e+00> : vector<9x32xf32>
    %368 = tpu.matmul %365, %367, %cst_264 {dimension_numbers = #tpu.dot_dimension_numbers<[1], [0], [0], [1], [0, 0, 1, 1], [], []>} : vector<9x32xf32>, vector<32x32xf32>, vector<9x32xf32> -> vector<9x32xf32>
    %c1_265 = arith.constant 1 : index
    %c1_266 = arith.constant 1 : index
    %c0_267 = arith.constant 0 : index
    %c0_268 = arith.constant 0 : index
    %369 = vector.load %arg13[%c1_265, %c1_266, %c0_267, %c0_268] : memref<2x4x32x32xf32, #tpu.memory_space<vmem>>, vector<1x1x32x32xf32>
    %370 = vector.shape_cast %369 : vector<1x1x32x32xf32> to vector<32x32xf32>
    %cst_269 = arith.constant dense<0.000000e+00> : vector<9x32xf32>
    %371 = tpu.matmul %345, %370, %cst_269 {dimension_numbers = #tpu.dot_dimension_numbers<[1], [0], [0], [1], [0, 0, 1, 1], [], []>} : vector<9x32xf32>, vector<32x32xf32>, vector<9x32xf32> -> vector<9x32xf32>
    %c1_270 = arith.constant 1 : index
    %c1_271 = arith.constant 1 : index
    %c0_272 = arith.constant 0 : index
    %c0_273 = arith.constant 0 : index
    %372 = vector.load %arg14[%c1_270, %c1_271, %c0_272, %c0_273] : memref<2x4x1x32xf32, #tpu.memory_space<vmem>>, vector<1x1x1x32xf32>
    %373 = vector.shape_cast %372 : vector<1x1x1x32xf32> to vector<1x32xf32>
    %374 = vector.broadcast %373 : vector<1x32xf32> to vector<9x32xf32>
    %375 = arith.addf %371, %374 : vector<9x32xf32>
    %cst_274 = arith.constant dense<0.000000e+00> : vector<9x9xf32>
    %376 = tpu.matmul %375, %345, %cst_274 {dimension_numbers = #tpu.dot_dimension_numbers<[1], [1], [0], [0], [0, 0, 1, 0], [], []>} : vector<9x32xf32>, vector<9x32xf32>, vector<9x9xf32> -> vector<9x9xf32>
    %cst_275 = arith.constant dense<0xFF800000> : vector<9xf32>
    %377 = vector.multi_reduction <maximumf>, %376, %cst_275 [1] : vector<9x9xf32> to vector<9xf32>
    %378 = vector.shape_cast %377 : vector<9xf32> to vector<9x1xf32>
    %379 = vector.broadcast %378 : vector<9x1xf32> to vector<9x9xf32>
    %380 = arith.subf %376, %379 : vector<9x9xf32>
    %381 = math.exp %380 : vector<9x9xf32>
    %cst_276 = arith.constant dense<0.000000e+00> : vector<9xf32>
    %382 = vector.multi_reduction <add>, %381, %cst_276 [1] : vector<9x9xf32> to vector<9xf32>
    %383 = vector.shape_cast %382 : vector<9xf32> to vector<9x1xf32>
    %384 = tpu.reciprocal %383 {approx = true} : vector<9x1xf32> -> vector<9x1xf32>
    %385 = vector.broadcast %384 : vector<9x1xf32> to vector<9x9xf32>
    %386 = arith.mulf %381, %385 : vector<9x9xf32>
    %cst_277 = arith.constant dense<0.000000e+00> : vector<9x32xf32>
    %387 = tpu.matmul %386, %345, %cst_277 {dimension_numbers = #tpu.dot_dimension_numbers<[1], [0], [0], [1], [0, 0, 1, 1], [], []>} : vector<9x9xf32>, vector<9x32xf32>, vector<9x32xf32> -> vector<9x32xf32>
    %c1_278 = arith.constant 1 : index
    %c1_279 = arith.constant 1 : index
    %c0_280 = arith.constant 0 : index
    %c0_281 = arith.constant 0 : index
    %388 = vector.load %arg15[%c1_278, %c1_279, %c0_280, %c0_281] : memref<2x4x32x32xf32, #tpu.memory_space<vmem>>, vector<1x1x32x32xf32>
    %389 = vector.shape_cast %388 : vector<1x1x32x32xf32> to vector<32x32xf32>
    %cst_282 = arith.constant dense<0.000000e+00> : vector<9x32xf32>
    %390 = tpu.matmul %387, %389, %cst_282 {dimension_numbers = #tpu.dot_dimension_numbers<[1], [0], [0], [1], [0, 0, 1, 1], [], []>} : vector<9x32xf32>, vector<32x32xf32>, vector<9x32xf32> -> vector<9x32xf32>
    %391 = arith.addf %368, %390 : vector<9x32xf32>
    %c1_283 = arith.constant 1 : index
    %c2_284 = arith.constant 2 : index
    %c0_285 = arith.constant 0 : index
    %c0_286 = arith.constant 0 : index
    %392 = vector.load %arg13[%c1_283, %c2_284, %c0_285, %c0_286] : memref<2x4x32x32xf32, #tpu.memory_space<vmem>>, vector<1x1x32x32xf32>
    %393 = vector.shape_cast %392 : vector<1x1x32x32xf32> to vector<32x32xf32>
    %cst_287 = arith.constant dense<0.000000e+00> : vector<9x32xf32>
    %394 = tpu.matmul %345, %393, %cst_287 {dimension_numbers = #tpu.dot_dimension_numbers<[1], [0], [0], [1], [0, 0, 1, 1], [], []>} : vector<9x32xf32>, vector<32x32xf32>, vector<9x32xf32> -> vector<9x32xf32>
    %c1_288 = arith.constant 1 : index
    %c2_289 = arith.constant 2 : index
    %c0_290 = arith.constant 0 : index
    %c0_291 = arith.constant 0 : index
    %395 = vector.load %arg14[%c1_288, %c2_289, %c0_290, %c0_291] : memref<2x4x1x32xf32, #tpu.memory_space<vmem>>, vector<1x1x1x32xf32>
    %396 = vector.shape_cast %395 : vector<1x1x1x32xf32> to vector<1x32xf32>
    %397 = vector.broadcast %396 : vector<1x32xf32> to vector<9x32xf32>
    %398 = arith.addf %394, %397 : vector<9x32xf32>
    %cst_292 = arith.constant dense<0.000000e+00> : vector<9x9xf32>
    %399 = tpu.matmul %398, %345, %cst_292 {dimension_numbers = #tpu.dot_dimension_numbers<[1], [1], [0], [0], [0, 0, 1, 0], [], []>} : vector<9x32xf32>, vector<9x32xf32>, vector<9x9xf32> -> vector<9x9xf32>
    %cst_293 = arith.constant dense<0xFF800000> : vector<9xf32>
    %400 = vector.multi_reduction <maximumf>, %399, %cst_293 [1] : vector<9x9xf32> to vector<9xf32>
    %401 = vector.shape_cast %400 : vector<9xf32> to vector<9x1xf32>
    %402 = vector.broadcast %401 : vector<9x1xf32> to vector<9x9xf32>
    %403 = arith.subf %399, %402 : vector<9x9xf32>
    %404 = math.exp %403 : vector<9x9xf32>
    %cst_294 = arith.constant dense<0.000000e+00> : vector<9xf32>
    %405 = vector.multi_reduction <add>, %404, %cst_294 [1] : vector<9x9xf32> to vector<9xf32>
    %406 = vector.shape_cast %405 : vector<9xf32> to vector<9x1xf32>
    %407 = tpu.reciprocal %406 {approx = true} : vector<9x1xf32> -> vector<9x1xf32>
    %408 = vector.broadcast %407 : vector<9x1xf32> to vector<9x9xf32>
    %409 = arith.mulf %404, %408 : vector<9x9xf32>
    %cst_295 = arith.constant dense<0.000000e+00> : vector<9x32xf32>
    %410 = tpu.matmul %409, %345, %cst_295 {dimension_numbers = #tpu.dot_dimension_numbers<[1], [0], [0], [1], [0, 0, 1, 1], [], []>} : vector<9x9xf32>, vector<9x32xf32>, vector<9x32xf32> -> vector<9x32xf32>
    %c1_296 = arith.constant 1 : index
    %c2_297 = arith.constant 2 : index
    %c0_298 = arith.constant 0 : index
    %c0_299 = arith.constant 0 : index
    %411 = vector.load %arg15[%c1_296, %c2_297, %c0_298, %c0_299] : memref<2x4x32x32xf32, #tpu.memory_space<vmem>>, vector<1x1x32x32xf32>
    %412 = vector.shape_cast %411 : vector<1x1x32x32xf32> to vector<32x32xf32>
    %cst_300 = arith.constant dense<0.000000e+00> : vector<9x32xf32>
    %413 = tpu.matmul %410, %412, %cst_300 {dimension_numbers = #tpu.dot_dimension_numbers<[1], [0], [0], [1], [0, 0, 1, 1], [], []>} : vector<9x32xf32>, vector<32x32xf32>, vector<9x32xf32> -> vector<9x32xf32>
    %414 = arith.addf %391, %413 : vector<9x32xf32>
    %c1_301 = arith.constant 1 : index
    %c3_302 = arith.constant 3 : index
    %c0_303 = arith.constant 0 : index
    %c0_304 = arith.constant 0 : index
    %415 = vector.load %arg13[%c1_301, %c3_302, %c0_303, %c0_304] : memref<2x4x32x32xf32, #tpu.memory_space<vmem>>, vector<1x1x32x32xf32>
    %416 = vector.shape_cast %415 : vector<1x1x32x32xf32> to vector<32x32xf32>
    %cst_305 = arith.constant dense<0.000000e+00> : vector<9x32xf32>
    %417 = tpu.matmul %345, %416, %cst_305 {dimension_numbers = #tpu.dot_dimension_numbers<[1], [0], [0], [1], [0, 0, 1, 1], [], []>} : vector<9x32xf32>, vector<32x32xf32>, vector<9x32xf32> -> vector<9x32xf32>
    %c1_306 = arith.constant 1 : index
    %c3_307 = arith.constant 3 : index
    %c0_308 = arith.constant 0 : index
    %c0_309 = arith.constant 0 : index
    %418 = vector.load %arg14[%c1_306, %c3_307, %c0_308, %c0_309] : memref<2x4x1x32xf32, #tpu.memory_space<vmem>>, vector<1x1x1x32xf32>
    %419 = vector.shape_cast %418 : vector<1x1x1x32xf32> to vector<1x32xf32>
    %420 = vector.broadcast %419 : vector<1x32xf32> to vector<9x32xf32>
    %421 = arith.addf %417, %420 : vector<9x32xf32>
    %cst_310 = arith.constant dense<0.000000e+00> : vector<9x9xf32>
    %422 = tpu.matmul %421, %345, %cst_310 {dimension_numbers = #tpu.dot_dimension_numbers<[1], [1], [0], [0], [0, 0, 1, 0], [], []>} : vector<9x32xf32>, vector<9x32xf32>, vector<9x9xf32> -> vector<9x9xf32>
    %cst_311 = arith.constant dense<0xFF800000> : vector<9xf32>
    %423 = vector.multi_reduction <maximumf>, %422, %cst_311 [1] : vector<9x9xf32> to vector<9xf32>
    %424 = vector.shape_cast %423 : vector<9xf32> to vector<9x1xf32>
    %425 = vector.broadcast %424 : vector<9x1xf32> to vector<9x9xf32>
    %426 = arith.subf %422, %425 : vector<9x9xf32>
    %427 = math.exp %426 : vector<9x9xf32>
    %cst_312 = arith.constant dense<0.000000e+00> : vector<9xf32>
    %428 = vector.multi_reduction <add>, %427, %cst_312 [1] : vector<9x9xf32> to vector<9xf32>
    %429 = vector.shape_cast %428 : vector<9xf32> to vector<9x1xf32>
    %430 = tpu.reciprocal %429 {approx = true} : vector<9x1xf32> -> vector<9x1xf32>
    %431 = vector.broadcast %430 : vector<9x1xf32> to vector<9x9xf32>
    %432 = arith.mulf %427, %431 : vector<9x9xf32>
    %cst_313 = arith.constant dense<0.000000e+00> : vector<9x32xf32>
    %433 = tpu.matmul %432, %345, %cst_313 {dimension_numbers = #tpu.dot_dimension_numbers<[1], [0], [0], [1], [0, 0, 1, 1], [], []>} : vector<9x9xf32>, vector<9x32xf32>, vector<9x32xf32> -> vector<9x32xf32>
    %c1_314 = arith.constant 1 : index
    %c3_315 = arith.constant 3 : index
    %c0_316 = arith.constant 0 : index
    %c0_317 = arith.constant 0 : index
    %434 = vector.load %arg15[%c1_314, %c3_315, %c0_316, %c0_317] : memref<2x4x32x32xf32, #tpu.memory_space<vmem>>, vector<1x1x32x32xf32>
    %435 = vector.shape_cast %434 : vector<1x1x32x32xf32> to vector<32x32xf32>
    %cst_318 = arith.constant dense<0.000000e+00> : vector<9x32xf32>
    %436 = tpu.matmul %433, %435, %cst_318 {dimension_numbers = #tpu.dot_dimension_numbers<[1], [0], [0], [1], [0, 0, 1, 1], [], []>} : vector<9x32xf32>, vector<32x32xf32>, vector<9x32xf32> -> vector<9x32xf32>
    %437 = arith.addf %414, %436 : vector<9x32xf32>
    %438 = arith.addf %345, %437 : vector<9x32xf32>
    %c1_319 = arith.constant 1 : index
    %c0_320 = arith.constant 0 : index
    %c0_321 = arith.constant 0 : index
    %439 = vector.load %arg16[%c1_319, %c0_320, %c0_321] : memref<2x1x32xf32, #tpu.memory_space<vmem>>, vector<1x1x32xf32>
    %440 = vector.shape_cast %439 : vector<1x1x32xf32> to vector<1x32xf32>
    %441 = vector.broadcast %440 : vector<1x32xf32> to vector<9x32xf32>
    %442 = arith.addf %438, %441 : vector<9x32xf32>
    %c1_322 = arith.constant 1 : index
    %c0_323 = arith.constant 0 : index
    %c0_324 = arith.constant 0 : index
    %443 = vector.load %arg17[%c1_322, %c0_323, %c0_324] : memref<2x1x32xf32, #tpu.memory_space<vmem>>, vector<1x1x32xf32>
    %444 = vector.shape_cast %443 : vector<1x1x32xf32> to vector<1x32xf32>
    %c1_325 = arith.constant 1 : index
    %c0_326 = arith.constant 0 : index
    %c0_327 = arith.constant 0 : index
    %445 = vector.load %arg18[%c1_325, %c0_326, %c0_327] : memref<2x1x32xf32, #tpu.memory_space<vmem>>, vector<1x1x32xf32>
    %446 = vector.shape_cast %445 : vector<1x1x32xf32> to vector<1x32xf32>
    %cst_328 = arith.constant dense<0.000000e+00> : vector<9xf32>
    %447 = vector.multi_reduction <add>, %442, %cst_328 [1] : vector<9x32xf32> to vector<9xf32>
    %448 = vector.shape_cast %447 : vector<9xf32> to vector<9x1xf32>
    %cst_329 = arith.constant 3.200000e+01 : f32
    %449 = vector.broadcast %cst_329 : f32 to vector<9x1xf32>
    %450 = arith.divf %448, %449 : vector<9x1xf32>
    %451 = vector.broadcast %450 : vector<9x1xf32> to vector<9x32xf32>
    %452 = arith.subf %442, %451 : vector<9x32xf32>
    %453 = arith.mulf %452, %452 : vector<9x32xf32>
    %cst_330 = arith.constant dense<0.000000e+00> : vector<9xf32>
    %454 = vector.multi_reduction <add>, %453, %cst_330 [1] : vector<9x32xf32> to vector<9xf32>
    %455 = vector.shape_cast %454 : vector<9xf32> to vector<9x1xf32>
    %cst_331 = arith.constant 3.200000e+01 : f32
    %456 = vector.broadcast %cst_331 : f32 to vector<9x1xf32>
    %457 = arith.divf %455, %456 : vector<9x1xf32>
    %cst_332 = arith.constant 9.99999974E-6 : f32
    %458 = vector.broadcast %cst_332 : f32 to vector<9x1xf32>
    %459 = arith.addf %457, %458 : vector<9x1xf32>
    %460 = math.rsqrt %459 : vector<9x1xf32>
    %461 = vector.broadcast %460 : vector<9x1xf32> to vector<9x32xf32>
    %462 = arith.mulf %452, %461 : vector<9x32xf32>
    %463 = vector.broadcast %444 : vector<1x32xf32> to vector<9x32xf32>
    %464 = arith.mulf %462, %463 : vector<9x32xf32>
    %465 = vector.broadcast %446 : vector<1x32xf32> to vector<9x32xf32>
    %466 = arith.addf %464, %465 : vector<9x32xf32>
    %c1_333 = arith.constant 1 : index
    %c0_334 = arith.constant 0 : index
    %c0_335 = arith.constant 0 : index
    %467 = vector.load %arg19[%c1_333, %c0_334, %c0_335] : memref<2x32x128xf32, #tpu.memory_space<vmem>>, vector<1x32x128xf32>
    %468 = vector.shape_cast %467 : vector<1x32x128xf32> to vector<32x128xf32>
    %cst_336 = arith.constant dense<0.000000e+00> : vector<9x128xf32>
    %469 = tpu.matmul %466, %468, %cst_336 {dimension_numbers = #tpu.dot_dimension_numbers<[1], [0], [0], [1], [0, 0, 1, 1], [], []>} : vector<9x32xf32>, vector<32x128xf32>, vector<9x128xf32> -> vector<9x128xf32>
    %c1_337 = arith.constant 1 : index
    %c0_338 = arith.constant 0 : index
    %c0_339 = arith.constant 0 : index
    %470 = vector.load %arg20[%c1_337, %c0_338, %c0_339] : memref<2x1x128xf32, #tpu.memory_space<vmem>>, vector<1x1x128xf32>
    %471 = vector.shape_cast %470 : vector<1x1x128xf32> to vector<1x128xf32>
    %472 = vector.broadcast %471 : vector<1x128xf32> to vector<9x128xf32>
    %473 = arith.addf %469, %472 : vector<9x128xf32>
    %cst_340 = arith.constant 5.000000e-01 : f32
    %474 = vector.broadcast %cst_340 : f32 to vector<9x128xf32>
    %475 = arith.mulf %474, %473 : vector<9x128xf32>
    %cst_341 = arith.constant 0.707106769 : f32
    %476 = vector.broadcast %cst_341 : f32 to vector<9x128xf32>
    %477 = arith.mulf %473, %476 : vector<9x128xf32>
    %478 = math.erf %477 : vector<9x128xf32>
    %cst_342 = arith.constant 1.000000e+00 : f32
    %479 = vector.broadcast %cst_342 : f32 to vector<9x128xf32>
    %480 = arith.addf %479, %478 : vector<9x128xf32>
    %481 = arith.mulf %475, %480 : vector<9x128xf32>
    %c1_343 = arith.constant 1 : index
    %c0_344 = arith.constant 0 : index
    %c0_345 = arith.constant 0 : index
    %482 = vector.load %arg21[%c1_343, %c0_344, %c0_345] : memref<2x128x32xf32, #tpu.memory_space<vmem>>, vector<1x128x32xf32>
    %483 = vector.shape_cast %482 : vector<1x128x32xf32> to vector<128x32xf32>
    %cst_346 = arith.constant dense<0.000000e+00> : vector<9x32xf32>
    %484 = tpu.matmul %481, %483, %cst_346 {dimension_numbers = #tpu.dot_dimension_numbers<[1], [0], [0], [1], [0, 0, 1, 1], [], []>} : vector<9x128xf32>, vector<128x32xf32>, vector<9x32xf32> -> vector<9x32xf32>
    %485 = arith.addf %466, %484 : vector<9x32xf32>
    %c1_347 = arith.constant 1 : index
    %c0_348 = arith.constant 0 : index
    %c0_349 = arith.constant 0 : index
    %486 = vector.load %arg22[%c1_347, %c0_348, %c0_349] : memref<2x1x32xf32, #tpu.memory_space<vmem>>, vector<1x1x32xf32>
    %487 = vector.shape_cast %486 : vector<1x1x32xf32> to vector<1x32xf32>
    %488 = vector.broadcast %487 : vector<1x32xf32> to vector<9x32xf32>
    %489 = arith.addf %485, %488 : vector<9x32xf32>
    %c1_350 = arith.constant 1 : index
    %c0_351 = arith.constant 0 : index
    %c0_352 = arith.constant 0 : index
    %490 = vector.load %arg23[%c1_350, %c0_351, %c0_352] : memref<2x1x32xf32, #tpu.memory_space<vmem>>, vector<1x1x32xf32>
    %491 = vector.shape_cast %490 : vector<1x1x32xf32> to vector<1x32xf32>
    %c1_353 = arith.constant 1 : index
    %c0_354 = arith.constant 0 : index
    %c0_355 = arith.constant 0 : index
    %492 = vector.load %arg24[%c1_353, %c0_354, %c0_355] : memref<2x1x32xf32, #tpu.memory_space<vmem>>, vector<1x1x32xf32>
    %493 = vector.shape_cast %492 : vector<1x1x32xf32> to vector<1x32xf32>
    %cst_356 = arith.constant dense<0.000000e+00> : vector<9xf32>
    %494 = vector.multi_reduction <add>, %489, %cst_356 [1] : vector<9x32xf32> to vector<9xf32>
    %495 = vector.shape_cast %494 : vector<9xf32> to vector<9x1xf32>
    %cst_357 = arith.constant 3.200000e+01 : f32
    %496 = vector.broadcast %cst_357 : f32 to vector<9x1xf32>
    %497 = arith.divf %495, %496 : vector<9x1xf32>
    %498 = vector.broadcast %497 : vector<9x1xf32> to vector<9x32xf32>
    %499 = arith.subf %489, %498 : vector<9x32xf32>
    %500 = arith.mulf %499, %499 : vector<9x32xf32>
    %cst_358 = arith.constant dense<0.000000e+00> : vector<9xf32>
    %501 = vector.multi_reduction <add>, %500, %cst_358 [1] : vector<9x32xf32> to vector<9xf32>
    %502 = vector.shape_cast %501 : vector<9xf32> to vector<9x1xf32>
    %cst_359 = arith.constant 3.200000e+01 : f32
    %503 = vector.broadcast %cst_359 : f32 to vector<9x1xf32>
    %504 = arith.divf %502, %503 : vector<9x1xf32>
    %cst_360 = arith.constant 9.99999974E-6 : f32
    %505 = vector.broadcast %cst_360 : f32 to vector<9x1xf32>
    %506 = arith.addf %504, %505 : vector<9x1xf32>
    %507 = math.rsqrt %506 : vector<9x1xf32>
    %508 = vector.broadcast %507 : vector<9x1xf32> to vector<9x32xf32>
    %509 = arith.mulf %499, %508 : vector<9x32xf32>
    %510 = vector.broadcast %491 : vector<1x32xf32> to vector<9x32xf32>
    %511 = arith.mulf %509, %510 : vector<9x32xf32>
    %512 = vector.broadcast %493 : vector<1x32xf32> to vector<9x32xf32>
    %513 = arith.addf %511, %512 : vector<9x32xf32>
    %514 = vector.extract_strided_slice %513 {offsets = [1, 0], sizes = [8, 32], strides = [1, 1]} : vector<9x32xf32> to vector<8x32xf32>
    %515 = tpu.concatenate %346, %514 in 1 : vector<8x32xf32>, vector<8x32xf32> -> vector<8x64xf32>
    %c0_361 = arith.constant 0 : index
    %c0_362 = arith.constant 0 : index
    %c0_363 = arith.constant 0 : index
    %516 = vector.load %arg25[%c0_361, %c0_362, %c0_363] : memref<1x8x64xf32, #tpu.memory_space<vmem>>, vector<1x8x64xf32>
    %517 = vector.shape_cast %516 : vector<1x8x64xf32> to vector<8x64xf32>
    %518 = vector.shape_cast %515 : vector<8x64xf32> to vector<1x8x64xf32>
    tpu.vector_store %arg25[%c0_361, %c0_362, %c0_363], %518 {strides = array<i32>} : memref<1x8x64xf32, #tpu.memory_space<vmem>>, vector<1x8x64xf32>,
    return
  }
  func.func @transform_0(%arg0: i32) -> (i32, i32, i32) {
    %c0_i32 = arith.constant 0 : i32
    %c0_i32_0 = arith.constant 0 : i32
    %c0_i32_1 = arith.constant 0 : i32
    return %arg0, %c0_i32, %c0_i32_0 : i32, i32, i32
  }
  func.func @transform_1(%arg0: i32) -> (i32, i32, i32) {
    %c0_i32 = arith.constant 0 : i32
    %c0_i32_0 = arith.constant 0 : i32
    %c0_i32_1 = arith.constant 0 : i32
    %c0_i32_2 = arith.constant 0 : i32
    return %c0_i32, %c0_i32_0, %c0_i32_1 : i32, i32, i32
  }
  func.func @transform_2(%arg0: i32) -> (i32, i32) {
    %c0_i32 = arith.constant 0 : i32
    %c0_i32_0 = arith.constant 0 : i32
    %c0_i32_1 = arith.constant 0 : i32
    return %c0_i32, %c0_i32_0 : i32, i32
  }
  func.func @transform_3(%arg0: i32) -> (i32, i32, i32) {
    %c0_i32 = arith.constant 0 : i32
    %c0_i32_0 = arith.constant 0 : i32
    %c0_i32_1 = arith.constant 0 : i32
    %c0_i32_2 = arith.constant 0 : i32
    return %c0_i32, %c0_i32_0, %c0_i32_1 : i32, i32, i32
  }
  func.func @transform_4(%arg0: i32) -> (i32, i32) {
    %c0_i32 = arith.constant 0 : i32
    %c0_i32_0 = arith.constant 0 : i32
    %c0_i32_1 = arith.constant 0 : i32
    return %c0_i32, %c0_i32_0 : i32, i32
  }
  func.func @transform_5(%arg0: i32) -> (i32, i32, i32) {
    %c0_i32 = arith.constant 0 : i32
    %c0_i32_0 = arith.constant 0 : i32
    %c0_i32_1 = arith.constant 0 : i32
    %c0_i32_2 = arith.constant 0 : i32
    return %c0_i32, %c0_i32_0, %c0_i32_1 : i32, i32, i32
  }
  func.func @transform_6(%arg0: i32) -> (i32, i32) {
    %c0_i32 = arith.constant 0 : i32
    %c0_i32_0 = arith.constant 0 : i32
    %c0_i32_1 = arith.constant 0 : i32
    return %c0_i32, %c0_i32_0 : i32, i32
  }
  func.func @transform_7(%arg0: i32) -> (i32, i32, i32) {
    %c0_i32 = arith.constant 0 : i32
    %c0_i32_0 = arith.constant 0 : i32
    %c0_i32_1 = arith.constant 0 : i32
    %c0_i32_2 = arith.constant 0 : i32
    return %c0_i32, %c0_i32_0, %c0_i32_1 : i32, i32, i32
  }
  func.func @transform_8(%arg0: i32) -> (i32, i32) {
    %c0_i32 = arith.constant 0 : i32
    %c0_i32_0 = arith.constant 0 : i32
    %c0_i32_1 = arith.constant 0 : i32
    return %c0_i32, %c0_i32_0 : i32, i32
  }
  func.func @transform_9(%arg0: i32) -> (i32, i32) {
    %c0_i32 = arith.constant 0 : i32
    %c0_i32_0 = arith.constant 0 : i32
    %c0_i32_1 = arith.constant 0 : i32
    return %c0_i32, %c0_i32_0 : i32, i32
  }
  func.func @transform_10(%arg0: i32) -> (i32, i32) {
    %c0_i32 = arith.constant 0 : i32
    %c0_i32_0 = arith.constant 0 : i32
    %c0_i32_1 = arith.constant 0 : i32
    return %c0_i32, %c0_i32_0 : i32, i32
  }
  func.func @transform_11(%arg0: i32) -> (i32, i32) {
    %c0_i32 = arith.constant 0 : i32
    %c0_i32_0 = arith.constant 0 : i32
    %c0_i32_1 = arith.constant 0 : i32
    return %c0_i32, %c0_i32_0 : i32, i32
  }
  func.func @transform_12(%arg0: i32) -> (i32, i32, i32, i32) {
    %c0_i32 = arith.constant 0 : i32
    %c0_i32_0 = arith.constant 0 : i32
    %c0_i32_1 = arith.constant 0 : i32
    %c0_i32_2 = arith.constant 0 : i32
    %c0_i32_3 = arith.constant 0 : i32
    return %c0_i32, %c0_i32_0, %c0_i32_1, %c0_i32_2 : i32, i32, i32, i32
  }
  func.func @transform_13(%arg0: i32) -> (i32, i32, i32, i32) {
    %c0_i32 = arith.constant 0 : i32
    %c0_i32_0 = arith.constant 0 : i32
    %c0_i32_1 = arith.constant 0 : i32
    %c0_i32_2 = arith.constant 0 : i32
    %c0_i32_3 = arith.constant 0 : i32
    return %c0_i32, %c0_i32_0, %c0_i32_1, %c0_i32_2 : i32, i32, i32, i32
  }
  func.func @transform_14(%arg0: i32) -> (i32, i32, i32, i32) {
    %c0_i32 = arith.constant 0 : i32
    %c0_i32_0 = arith.constant 0 : i32
    %c0_i32_1 = arith.constant 0 : i32
    %c0_i32_2 = arith.constant 0 : i32
    %c0_i32_3 = arith.constant 0 : i32
    return %c0_i32, %c0_i32_0, %c0_i32_1, %c0_i32_2 : i32, i32, i32, i32
  }
  func.func @transform_15(%arg0: i32) -> (i32, i32, i32) {
    %c0_i32 = arith.constant 0 : i32
    %c0_i32_0 = arith.constant 0 : i32
    %c0_i32_1 = arith.constant 0 : i32
    %c0_i32_2 = arith.constant 0 : i32
    return %c0_i32, %c0_i32_0, %c0_i32_1 : i32, i32, i32
  }
  func.func @transform_16(%arg0: i32) -> (i32, i32, i32) {
    %c0_i32 = arith.constant 0 : i32
    %c0_i32_0 = arith.constant 0 : i32
    %c0_i32_1 = arith.constant 0 : i32
    %c0_i32_2 = arith.constant 0 : i32
    return %c0_i32, %c0_i32_0, %c0_i32_1 : i32, i32, i32
  }
  func.func @transform_17(%arg0: i32) -> (i32, i32, i32) {
    %c0_i32 = arith.constant 0 : i32
    %c0_i32_0 = arith.constant 0 : i32
    %c0_i32_1 = arith.constant 0 : i32
    %c0_i32_2 = arith.constant 0 : i32
    return %c0_i32, %c0_i32_0, %c0_i32_1 : i32, i32, i32
  }
  func.func @transform_18(%arg0: i32) -> (i32, i32, i32) {
    %c0_i32 = arith.constant 0 : i32
    %c0_i32_0 = arith.constant 0 : i32
    %c0_i32_1 = arith.constant 0 : i32
    %c0_i32_2 = arith.constant 0 : i32
    return %c0_i32, %c0_i32_0, %c0_i32_1 : i32, i32, i32
  }
  func.func @transform_19(%arg0: i32) -> (i32, i32, i32) {
    %c0_i32 = arith.constant 0 : i32
    %c0_i32_0 = arith.constant 0 : i32
    %c0_i32_1 = arith.constant 0 : i32
    %c0_i32_2 = arith.constant 0 : i32
    return %c0_i32, %c0_i32_0, %c0_i32_1 : i32, i32, i32
  }
  func.func @transform_20(%arg0: i32) -> (i32, i32, i32) {
    %c0_i32 = arith.constant 0 : i32
    %c0_i32_0 = arith.constant 0 : i32
    %c0_i32_1 = arith.constant 0 : i32
    %c0_i32_2 = arith.constant 0 : i32
    return %c0_i32, %c0_i32_0, %c0_i32_1 : i32, i32, i32
  }
  func.func @transform_21(%arg0: i32) -> (i32, i32, i32) {
    %c0_i32 = arith.constant 0 : i32
    %c0_i32_0 = arith.constant 0 : i32
    %c0_i32_1 = arith.constant 0 : i32
    %c0_i32_2 = arith.constant 0 : i32
    return %c0_i32, %c0_i32_0, %c0_i32_1 : i32, i32, i32
  }
  func.func @transform_22(%arg0: i32) -> (i32, i32, i32) {
    %c0_i32 = arith.constant 0 : i32
    %c0_i32_0 = arith.constant 0 : i32
    %c0_i32_1 = arith.constant 0 : i32
    %c0_i32_2 = arith.constant 0 : i32
    return %c0_i32, %c0_i32_0, %c0_i32_1 : i32, i32, i32
  }
  func.func @transform_23(%arg0: i32) -> (i32, i32, i32) {
    %c0_i32 = arith.constant 0 : i32
    %c0_i32_0 = arith.constant 0 : i32
    %c0_i32_1 = arith.constant 0 : i32
    %c0_i32_2 = arith.constant 0 : i32
    return %c0_i32, %c0_i32_0, %c0_i32_1 : i32, i32, i32
  }
  func.func @transform_24(%arg0: i32) -> (i32, i32, i32) {
    %c0_i32 = arith.constant 0 : i32
    %c0_i32_0 = arith.constant 0 : i32
    %c0_i32_1 = arith.constant 0 : i32
    return %arg0, %c0_i32, %c0_i32_0 : i32, i32, i32
  }
}

</mosaic_0001>

<llo_original>
// kernel: vit_forward.1
$region0: #{vit_forward.1}
  #allocation0 [shape = 'u32[]', space=smem, size = 0x4, offset = 0x4, fixed_abs, tag = 'smem constant byte address 0x4 - core index']
  #allocation1 [shape = 'u32[72,128]{1,0:T(1,128)}', space=vmem, size = 0x9000, scoped, tag = 'internal scratch']
  #allocation2 [shape = 'f32[12,256]{1,0:T(8,128)}', space=vmem, size = 0x4000, scoped, tag = 'scratch operand']
  #allocation3 [shape = 'f32[12,256]{1,0:T(8,128)}', space=vmem, size = 0x4000, scoped, tag = 'scratch operand']
  #allocation4 [shape = 'f32[12,128]{1,0:T(8,128)}', space=vmem, size = 0x2000, scoped, tag = 'scratch operand']
  %s0 = inlined_call_operand.vmem [shape: f32[2,12,16], index: 0, kind: input, shape index: {}]
  %s1 = inlined_call_operand.hbm [shape: f32[5,16,512], index: 1, kind: input, shape index: {}]
  %s2 = inlined_call_operand.hbm [shape: f32[1,512], index: 2, kind: input, shape index: {}]
  %s3 = inlined_call_operand.hbm [shape: f32[5,256,512], index: 3, kind: input, shape index: {}]
  %s4 = inlined_call_operand.hbm [shape: f32[1,512], index: 4, kind: input, shape index: {}]
  %s5 = inlined_call_operand.hbm [shape: f32[5,256,256], index: 5, kind: input, shape index: {}]
  %s6 = inlined_call_operand.hbm [shape: f32[1,256], index: 6, kind: input, shape index: {}]
  %s7 = inlined_call_operand.hbm [shape: f32[5,128,128], index: 7, kind: input, shape index: {}]
  %s8 = inlined_call_operand.hbm [shape: f32[1,128], index: 8, kind: input, shape index: {}]
  %s9 = inlined_call_operand.vmem [shape: f32[64,32], index: 9, kind: input, shape index: {}]
  %s10 = inlined_call_operand.hbm [shape: f32[1,32], index: 10, kind: input, shape index: {}]
  %s11 = inlined_call_operand.hbm [shape: f32[1,32], index: 11, kind: input, shape index: {}]
  %s12 = inlined_call_operand.hbm [shape: f32[2,4,32,32], index: 12, kind: input, shape index: {}]
  %s13 = inlined_call_operand.hbm [shape: f32[2,4,1,32], index: 13, kind: input, shape index: {}]
  %s14 = inlined_call_operand.hbm [shape: f32[2,4,32,32], index: 14, kind: input, shape index: {}]
  %s15 = inlined_call_operand.hbm [shape: f32[2,1,32], index: 15, kind: input, shape index: {}]
  %s16 = inlined_call_operand.hbm [shape: f32[2,1,32], index: 16, kind: input, shape index: {}]
  %s17 = inlined_call_operand.hbm [shape: f32[2,1,32], index: 17, kind: input, shape index: {}]
  %s18 = inlined_call_operand.hbm [shape: f32[2,32,128], index: 18, kind: input, shape index: {}]
  %s19 = inlined_call_operand.hbm [shape: f32[2,1,128], index: 19, kind: input, shape index: {}]
  %s20 = inlined_call_operand.vmem [shape: f32[2,128,32], index: 20, kind: input, shape index: {}]
  %s21 = inlined_call_operand.hbm [shape: f32[2,1,32], index: 21, kind: input, shape index: {}]
  %s22 = inlined_call_operand.hbm [shape: f32[2,1,32], index: 22, kind: input, shape index: {}]
  %s23 = inlined_call_operand.hbm [shape: f32[2,1,32], index: 23, kind: input, shape index: {}]
  %s24 = inlined_call_operand.vmem [shape: f32[2,8,64], index: 24, kind: output, shape index: {}]
  %s25 = sld [smem:[#allocation0]]
  $region213: #{vit_forward.1} parent=0
    _
  %s27 = ssub.s32 1, %s25
  %s28 = scalar_select 0, %s27, %s25
  $region1: #{vit_forward.1} parent=0
    #allocation5 [shape = 'u8[163840]{0}', space=vmem, size = 0x28000, scoped, tag = 'input window, operand 1, single buffered']
    #allocation6 [shape = 's32[2]{0}', space=sflag, size = 0x8, scoped, tag = 'scoped memory for vit_forward.1']
    #allocation7 [shape = 'u8[2048]{0}', space=vmem, size = 0x800, scoped, tag = 'input window, operand 2, single buffered']
    #allocation8 [shape = 's32[1]{0}', space=sflag, size = 0x4, scoped, tag = 'scoped memory for vit_forward.1']
    #allocation9 [shape = 'u8[2621440]{0}', space=vmem, size = 0x280000, scoped, tag = 'input window, operand 3, single buffered']
    #allocation10 [shape = 'u8[2048]{0}', space=vmem, size = 0x800, scoped, tag = 'input window, operand 4, single buffered']
    #allocation11 [shape = 's32[1]{0}', space=sflag, size = 0x4, scoped, tag = 'scoped memory for vit_forward.1']
    #allocation12 [shape = 'u8[1310720]{0}', space=vmem, size = 0x140000, scoped, tag = 'input window, operand 5, single buffered']
    #allocation13 [shape = 'u8[1024]{0}', space=vmem, size = 0x400, scoped, tag = 'input window, operand 6, single buffered']
    #allocation14 [shape = 's32[1]{0}', space=sflag, size = 0x4, scoped, tag = 'scoped memory for vit_forward.1']
    #allocation15 [shape = 'u8[327680]{0}', space=vmem, size = 0x50000, scoped, tag = 'input window, operand 7, single buffered']
    #allocation16 [shape = 'u8[512]{0}', space=vmem, size = 0x400, scoped, tag = 'input window, operand 8, single buffered']
    #allocation17 [shape = 's32[1]{0}', space=sflag, size = 0x4, scoped, tag = 'scoped memory for vit_forward.1']
    #allocation18 [shape = 'u8[512]{0}', space=vmem, size = 0x400, scoped, tag = 'input window, operand 10, single buffered']
    #allocation19 [shape = 'u8[512]{0}', space=vmem, size = 0x400, scoped, tag = 'input window, operand 11, single buffered']
    #allocation20 [shape = 's32[1]{0}', space=sflag, size = 0x4, scoped, tag = 'scoped memory for vit_forward.1']
    #allocation21 [shape = 'u8[131072]{0}', space=vmem, size = 0x20000, scoped, tag = 'input window, operand 12, single buffered']
    #allocation22 [shape = 'u8[4096]{0}', space=vmem, size = 0x1000, scoped, tag = 'input window, operand 13, single buffered']
    #allocation23 [shape = 's32[1]{0}', space=sflag, size = 0x4, scoped, tag = 'scoped memory for vit_forward.1']
    #allocation24 [shape = 'u8[131072]{0}', space=vmem, size = 0x20000, scoped, tag = 'input window, operand 14, single buffered']
    #allocation25 [shape = 'u8[1024]{0}', space=vmem, size = 0x400, scoped, tag = 'input window, operand 15, single buffered']
    #allocation26 [shape = 's32[1]{0}', space=sflag, size = 0x4, scoped, tag = 'scoped memory for vit_forward.1']
    #allocation27 [shape = 'u8[1024]{0}', space=vmem, size = 0x400, scoped, tag = 'input window, operand 16, single buffered']
    #allocation28 [shape = 'u8[1024]{0}', space=vmem, size = 0x400, scoped, tag = 'input window, operand 17, single buffered']
    #allocation29 [shape = 's32[1]{0}', space=sflag, size = 0x4, scoped, tag = 'scoped memory for vit_forward.1']
    #allocation30 [shape = 'u8[32768]{0}', space=vmem, size = 0x8000, scoped, tag = 'input window, operand 18, single buffered']
    #allocation31 [shape = 'u8[1024]{0}', space=vmem, size = 0x400, scoped, tag = 'input window, operand 19, single buffered']
    #allocation32 [shape = 's32[1]{0}', space=sflag, size = 0x4, scoped, tag = 'scoped memory for vit_forward.1']
    #allocation33 [shape = 'u8[1024]{0}', space=vmem, size = 0x400, scoped, tag = 'input window, operand 21, single buffered']
    #allocation34 [shape = 'u8[1024]{0}', space=vmem, size = 0x400, scoped, tag = 'input window, operand 22, single buffered']
    #allocation35 [shape = 's32[1]{0}', space=sflag, size = 0x4, scoped, tag = 'scoped memory for vit_forward.1']
    #allocation36 [shape = 'u8[1024]{0}', space=vmem, size = 0x400, scoped, tag = 'input window, operand 23, single buffered']
    %29 = vsyncpa [#allocation6], 0
    %30 = vsyncpa [#allocation8], 0
    %31 = vsyncpa [#allocation11], 0
    %32 = vsyncpa [#allocation14], 0
    %33 = vsyncpa [#allocation17], 0
    %34 = vsyncpa [#allocation20], 0
    %35 = vsyncpa [#allocation23], 0
    %36 = vsyncpa [#allocation26], 0
    %37 = vsyncpa [#allocation29], 0
    %38 = vsyncpa [#allocation32], 0
    %39 = vsyncpa [#allocation35], 0
    loop: start=0, step=1, limit=4
    $region2: #{vit_forward.1} parent=1 // loop_pre_header
      _
    $region3: #{vit_forward.1} parent=1 // loop_header
      %s41 = sphi 0, %s45
      %p42 = scmp.ge.s32.totalorder %s41, 4
      %s51 = sphi 0, %s53
      %s54 = sphi 0, %s51
      %s55 = sphi 0, %s54
      %s71 = sphi 0, %s55
      %s75 = sphi 0, %s75
      %s77 = sphi 0, %s75
      %s78 = sphi 0, %s77
      %s92 = sphi 0, %s78
      %s96 = sphi 0, %s96
      %s98 = sphi 0, %s96
      %s99 = sphi 0, %s98
      %s113 = sphi 0, %s99
      %s117 = sphi 0, %s117
      %s119 = sphi 0, %s117
      %s120 = sphi 0, %s119
      %s134 = sphi 0, %s120
      %s138 = sphi 0, %s138
      %s140 = sphi 0, %s138
      %s141 = sphi 0, %s140
      %s155 = sphi 0, %s141
      %s159 = sphi 0, %s159
      %s161 = sphi 0, %s159
      %s162 = sphi 0, %s161
      %s176 = sphi 0, %s162
      %s180 = sphi 0, %s180
      %s182 = sphi 0, %s180
      %s183 = sphi 0, %s182
      %s197 = sphi 0, %s183
      %s201 = sphi 0, %s201
      %s203 = sphi 0, %s201
      %s204 = sphi 0, %s203
      %s218 = sphi 0, %s204
      %s222 = sphi 0, %s222
      %s224 = sphi 0, %s222
      %s225 = sphi 0, %s224
      %s239 = sphi 0, %s225
      %s243 = sphi 0, %s243
      %s245 = sphi 0, %s243
      %s246 = sphi 0, %s245
      %s260 = sphi 0, %s246
      %s264 = sphi 0, %s264
      %s266 = sphi 0, %s264
      %s267 = sphi 0, %s266
      %s281 = sphi 0, %s267
      %s285 = sphi 0, %s285
      %s287 = sphi 0, %s285
      %s288 = sphi 0, %s287
      %s302 = sphi 0, %s288
      %s306 = sphi 0, %s306
      %s308 = sphi 0, %s306
      %s309 = sphi 0, %s308
      %s323 = sphi 0, %s309
      %s327 = sphi 0, %s327
      %s329 = sphi 0, %s327
      %s330 = sphi 0, %s329
      %s344 = sphi 0, %s330
      %s348 = sphi 0, %s348
      %s350 = sphi 0, %s348
      %s351 = sphi 0, %s350
      %s365 = sphi 0, %s351
      %s369 = sphi 0, %s369
      %s371 = sphi 0, %s369
      %s372 = sphi 0, %s371
      %s386 = sphi 0, %s372
      %s390 = sphi 0, %s390
      %s392 = sphi 0, %s390
      %s393 = sphi 0, %s392
      %s407 = sphi 0, %s393
      %s411 = sphi 0, %s411
      %s413 = sphi 0, %s411
      %s414 = sphi 0, %s413
      %s428 = sphi 0, %s414
      %s432 = sphi 0, %s432
      %s434 = sphi 0, %s432
      %s435 = sphi 0, %s434
      %s449 = sphi 0, %s435
      %s453 = sphi 0, %s453
      %s455 = sphi 0, %s453
      %s456 = sphi 0, %s455
      %s470 = sphi 0, %s456
      %s474 = sphi 0, %s474
      %s476 = sphi 0, %s474
      %s477 = sphi 0, %s476
      %s491 = sphi 0, %s477
      %s495 = sphi 0, %s495
      %s497 = sphi 0, %s495
      %s498 = sphi 0, %s497
      %s512 = sphi 0, %s498
      %s516 = sphi 0, %s516
      %s518 = sphi 0, %s516
      %s519 = sphi 0, %s518
      %s533 = sphi 0, %s519
      %s537 = sphi 0, %s537
      %s539 = sphi 0, %s537
      %s540 = sphi 0, %s539
      %s554 = sphi 0, %s540
      %s560 = sphi 0, %s562
      %s563 = sphi 0, %s560
      %s564 = sphi 0, %s563
      %s580 = sphi 0, %s564
    $region4: #{vit_forward.1} parent=1 // loop_header_branch
      %44 = sbr.rel (%p42) target = $region8
    $region5: #{vit_forward.1} parent=1 // loop_body
      %s46 = ssub.s32 %s41, 1
      %s47 = ssub.s32 %s41, 2
      %s48 = sadd.s32 %s41, 1
      %s49 = ssub.s32 %s41, %s48
      %p50 = scmp.eq.s32.totalorder %s49, 0
      %s52 = sadd.s32 %s51, 1
      %s53 = scalar_select %p50, %s51, %s52
      %p56 = pneg %p50
      %p57 = scmp.eq.s32.totalorder %s41, 1
      %p58 = por %p56, %p57
      %p59 = scmp.ne.s32.totalorder %s51, %s54
      %p60 = scmp.eq.s32.totalorder %s41, 0
      %p61 = por %p59, %p60
      %p62 = scmp.ne.s32.totalorder %s51, %s54
      %p63 = scmp.eq.s32.totalorder %s46, 1
      %p64 = por %p62, %p63
      %p65 = scmp.ne.s32.totalorder %s54, %s55
      %p66 = scmp.eq.s32.totalorder %s46, 0
      %p67 = por %p65, %p66
      %p68 = scmp.ne.s32.totalorder %s54, %s55
      %p69 = scmp.eq.s32.totalorder %s47, 1
      %p70 = por %p68, %p69
      %p72 = scmp.ne.s32.totalorder %s55, %s71
      %p73 = scmp.eq.s32.totalorder %s47, 0
      %p74 = por %p72, %p73
      %s76 = sadd.s32 %s75, 1
      %p79 = scmp.eq.s32.totalorder %s41, 1
      %p80 = scmp.ne.s32.totalorder %s75, %s77
      %p81 = scmp.eq.s32.totalorder %s41, 0
      %p82 = por %p80, %p81
      %p83 = scmp.ne.s32.totalorder %s75, %s77
      %p84 = scmp.eq.s32.totalorder %s46, 1
      %p85 = por %p83, %p84
      %p86 = scmp.ne.s32.totalorder %s77, %s78
      %p87 = scmp.eq.s32.totalorder %s46, 0
      %p88 = por %p86, %p87
      %p89 = scmp.ne.s32.totalorder %s77, %s78
      %p90 = scmp.eq.s32.totalorder %s47, 1
      %p91 = por %p89, %p90
      %p93 = scmp.ne.s32.totalorder %s78, %s92
      %p94 = scmp.eq.s32.totalorder %s47, 0
      %p95 = por %p93, %p94
      %s97 = sadd.s32 %s96, 1
      %p100 = scmp.eq.s32.totalorder %s41, 1
      %p101 = scmp.ne.s32.totalorder %s96, %s98
      %p102 = scmp.eq.s32.totalorder %s41, 0
      %p103 = por %p101, %p102
      %p104 = scmp.ne.s32.totalorder %s96, %s98
      %p105 = scmp.eq.s32.totalorder %s46, 1
      %p106 = por %p104, %p105
      %p107 = scmp.ne.s32.totalorder %s98, %s99
      %p108 = scmp.eq.s32.totalorder %s46, 0
      %p109 = por %p107, %p108
      %p110 = scmp.ne.s32.totalorder %s98, %s99
      %p111 = scmp.eq.s32.totalorder %s47, 1
      %p112 = por %p110, %p111
      %p114 = scmp.ne.s32.totalorder %s99, %s113
      %p115 = scmp.eq.s32.totalorder %s47, 0
      %p116 = por %p114, %p115
      %s118 = sadd.s32 %s117, 1
      %p121 = scmp.eq.s32.totalorder %s41, 1
      %p122 = scmp.ne.s32.totalorder %s117, %s119
      %p123 = scmp.eq.s32.totalorder %s41, 0
      %p124 = por %p122, %p123
      %p125 = scmp.ne.s32.totalorder %s117, %s119
      %p126 = scmp.eq.s32.totalorder %s46, 1
      %p127 = por %p125, %p126
      %p128 = scmp.ne.s32.totalorder %s119, %s120
      %p129 = scmp.eq.s32.totalorder %s46, 0
      %p130 = por %p128, %p129
      %p131 = scmp.ne.s32.totalorder %s119, %s120
      %p132 = scmp.eq.s32.totalorder %s47, 1
      %p133 = por %p131, %p132
      %p135 = scmp.ne.s32.totalorder %s120, %s134
      %p136 = scmp.eq.s32.totalorder %s47, 0
      %p137 = por %p135, %p136
      %s139 = sadd.s32 %s138, 1
      %p142 = scmp.eq.s32.totalorder %s41, 1
      %p143 = scmp.ne.s32.totalorder %s138, %s140
      %p144 = scmp.eq.s32.totalorder %s41, 0
      %p145 = por %p143, %p144
      %p146 = scmp.ne.s32.totalorder %s138, %s140
      %p147 = scmp.eq.s32.totalorder %s46, 1
      %p148 = por %p146, %p147
      %p149 = scmp.ne.s32.totalorder %s140, %s141
      %p150 = scmp.eq.s32.totalorder %s46, 0
      %p151 = por %p149, %p150
      %p152 = scmp.ne.s32.totalorder %s140, %s141
      %p153 = scmp.eq.s32.totalorder %s47, 1
      %p154 = por %p152, %p153
      %p156 = scmp.ne.s32.totalorder %s141, %s155
      %p157 = scmp.eq.s32.totalorder %s47, 0
      %p158 = por %p156, %p157
      %s160 = sadd.s32 %s159, 1
      %p163 = scmp.eq.s32.totalorder %s41, 1
      %p164 = scmp.ne.s32.totalorder %s159, %s161
      %p165 = scmp.eq.s32.totalorder %s41, 0
      %p166 = por %p164, %p165
      %p167 = scmp.ne.s32.totalorder %s159, %s161
      %p168 = scmp.eq.s32.totalorder %s46, 1
      %p169 = por %p167, %p168
      %p170 = scmp.ne.s32.totalorder %s161, %s162
      %p171 = scmp.eq.s32.totalorder %s46, 0
      %p172 = por %p170, %p171
      %p173 = scmp.ne.s32.totalorder %s161, %s162
      %p174 = scmp.eq.s32.totalorder %s47, 1
      %p175 = por %p173, %p174
      %p177 = scmp.ne.s32.totalorder %s162, %s176
      %p178 = scmp.eq.s32.totalorder %s47, 0
      %p179 = por %p177, %p178
      %s181 = sadd.s32 %s180, 1
      %p184 = scmp.eq.s32.totalorder %s41, 1
      %p185 = scmp.ne.s32.totalorder %s180, %s182
      %p186 = scmp.eq.s32.totalorder %s41, 0
      %p187 = por %p185, %p186
      %p188 = scmp.ne.s32.totalorder %s180, %s182
      %p189 = scmp.eq.s32.totalorder %s46, 1
      %p190 = por %p188, %p189
      %p191 = scmp.ne.s32.totalorder %s182, %s183
      %p192 = scmp.eq.s32.totalorder %s46, 0
      %p193 = por %p191, %p192
      %p194 = scmp.ne.s32.totalorder %s182, %s183
      %p195 = scmp.eq.s32.totalorder %s47, 1
      %p196 = por %p194, %p195
      %p198 = scmp.ne.s32.totalorder %s183, %s197
      %p199 = scmp.eq.s32.totalorder %s47, 0
      %p200 = por %p198, %p199
      %s202 = sadd.s32 %s201, 1
      %p205 = scmp.eq.s32.totalorder %s41, 1
      %p206 = scmp.ne.s32.totalorder %s201, %s203
      %p207 = scmp.eq.s32.totalorder %s41, 0
      %p208 = por %p206, %p207
      %p209 = scmp.ne.s32.totalorder %s201, %s203
      %p210 = scmp.eq.s32.totalorder %s46, 1
      %p211 = por %p209, %p210
      %p212 = scmp.ne.s32.totalorder %s203, %s204
      %p213 = scmp.eq.s32.totalorder %s46, 0
      %p214 = por %p212, %p213
      %p215 = scmp.ne.s32.totalorder %s203, %s204
      %p216 = scmp.eq.s32.totalorder %s47, 1
      %p217 = por %p215, %p216
      %p219 = scmp.ne.s32.totalorder %s204, %s218
      %p220 = scmp.eq.s32.totalorder %s47, 0
      %p221 = por %p219, %p220
      %s223 = sadd.s32 %s222, 1
      %p226 = scmp.eq.s32.totalorder %s41, 1
      %p227 = scmp.ne.s32.totalorder %s222, %s224
      %p228 = scmp.eq.s32.totalorder %s41, 0
      %p229 = por %p227, %p228
      %p230 = scmp.ne.s32.totalorder %s222, %s224
      %p231 = scmp.eq.s32.totalorder %s46, 1
      %p232 = por %p230, %p231
      %p233 = scmp.ne.s32.totalorder %s224, %s225
      %p234 = scmp.eq.s32.totalorder %s46, 0
      %p235 = por %p233, %p234
      %p236 = scmp.ne.s32.totalorder %s224, %s225
      %p237 = scmp.eq.s32.totalorder %s47, 1
      %p238 = por %p236, %p237
      %p240 = scmp.ne.s32.totalorder %s225, %s239
      %p241 = scmp.eq.s32.totalorder %s47, 0
      %p242 = por %p240, %p241
      %s244 = sadd.s32 %s243, 1
      %p247 = scmp.eq.s32.totalorder %s41, 1
      %p248 = scmp.ne.s32.totalorder %s243, %s245
      %p249 = scmp.eq.s32.totalorder %s41, 0
      %p250 = por %p248, %p249
      %p251 = scmp.ne.s32.totalorder %s243, %s245
      %p252 = scmp.eq.s32.totalorder %s46, 1
      %p253 = por %p251, %p252
      %p254 = scmp.ne.s32.totalorder %s245, %s246
      %p255 = scmp.eq.s32.totalorder %s46, 0
      %p256 = por %p254, %p255
      %p257 = scmp.ne.s32.totalorder %s245, %s246
      %p258 = scmp.eq.s32.totalorder %s47, 1
      %p259 = por %p257, %p258
      %p261 = scmp.ne.s32.totalorder %s246, %s260
      %p262 = scmp.eq.s32.totalorder %s47, 0
      %p263 = por %p261, %p262
      %s265 = sadd.s32 %s264, 1
      %p268 = scmp.eq.s32.totalorder %s41, 1
      %p269 = scmp.ne.s32.totalorder %s264, %s266
      %p270 = scmp.eq.s32.totalorder %s41, 0
      %p271 = por %p269, %p270
      %p272 = scmp.ne.s32.totalorder %s264, %s266
      %p273 = scmp.eq.s32.totalorder %s46, 1
      %p274 = por %p272, %p273
      %p275 = scmp.ne.s32.totalorder %s266, %s267
      %p276 = scmp.eq.s32.totalorder %s46, 0
      %p277 = por %p275, %p276
      %p278 = scmp.ne.s32.totalorder %s266, %s267
      %p279 = scmp.eq.s32.totalorder %s47, 1
      %p280 = por %p278, %p279
      %p282 = scmp.ne.s32.totalorder %s267, %s281
      %p283 = scmp.eq.s32.totalorder %s47, 0
      %p284 = por %p282, %p283
      %s286 = sadd.s32 %s285, 1
      %p289 = scmp.eq.s32.totalorder %s41, 1
      %p290 = scmp.ne.s32.totalorder %s285, %s287
      %p291 = scmp.eq.s32.totalorder %s41, 0
      %p292 = por %p290, %p291
      %p293 = scmp.ne.s32.totalorder %s285, %s287
      %p294 = scmp.eq.s32.totalorder %s46, 1
      %p295 = por %p293, %p294
      %p296 = scmp.ne.s32.totalorder %s287, %s288
      %p297 = scmp.eq.s32.totalorder %s46, 0
      %p298 = por %p296, %p297
      %p299 = scmp.ne.s32.totalorder %s287, %s288
      %p300 = scmp.eq.s32.totalorder %s47, 1
      %p301 = por %p299, %p300
      %p303 = scmp.ne.s32.totalorder %s288, %s302
      %p304 = scmp.eq.s32.totalorder %s47, 0
      %p305 = por %p303, %p304
      %s307 = sadd.s32 %s306, 1
      %p310 = scmp.eq.s32.totalorder %s41, 1
      %p311 = scmp.ne.s32.totalorder %s306, %s308
      %p312 = scmp.eq.s32.totalorder %s41, 0
      %p313 = por %p311, %p312
      %p314 = scmp.ne.s32.totalorder %s306, %s308
      %p315 = scmp.eq.s32.totalorder %s46, 1
      %p316 = por %p314, %p315
      %p317 = scmp.ne.s32.totalorder %s308, %s309
      %p318 = scmp.eq.s32.totalorder %s46, 0
      %p319 = por %p317, %p318
      %p320 = scmp.ne.s32.totalorder %s308, %s309
      %p321 = scmp.eq.s32.totalorder %s47, 1
      %p322 = por %p320, %p321
      %p324 = scmp.ne.s32.totalorder %s309, %s323
      %p325 = scmp.eq.s32.totalorder %s47, 0
      %p326 = por %p324, %p325
      %s328 = sadd.s32 %s327, 1
      %p331 = scmp.eq.s32.totalorder %s41, 1
      %p332 = scmp.ne.s32.totalorder %s327, %s329
      %p333 = scmp.eq.s32.totalorder %s41, 0
      %p334 = por %p332, %p333
      %p335 = scmp.ne.s32.totalorder %s327, %s329
      %p336 = scmp.eq.s32.totalorder %s46, 1
      %p337 = por %p335, %p336
      %p338 = scmp.ne.s32.totalorder %s329, %s330
      %p339 = scmp.eq.s32.totalorder %s46, 0
      %p340 = por %p338, %p339
      %p341 = scmp.ne.s32.totalorder %s329, %s330
      %p342 = scmp.eq.s32.totalorder %s47, 1
      %p343 = por %p341, %p342
      %p345 = scmp.ne.s32.totalorder %s330, %s344
      %p346 = scmp.eq.s32.totalorder %s47, 0
      %p347 = por %p345, %p346
      %s349 = sadd.s32 %s348, 1
      %p352 = scmp.eq.s32.totalorder %s41, 1
      %p353 = scmp.ne.s32.totalorder %s348, %s350
      %p354 = scmp.eq.s32.totalorder %s41, 0
      %p355 = por %p353, %p354
      %p356 = scmp.ne.s32.totalorder %s348, %s350
      %p357 = scmp.eq.s32.totalorder %s46, 1
      %p358 = por %p356, %p357
      %p359 = scmp.ne.s32.totalorder %s350, %s351
      %p360 = scmp.eq.s32.totalorder %s46, 0
      %p361 = por %p359, %p360
      %p362 = scmp.ne.s32.totalorder %s350, %s351
      %p363 = scmp.eq.s32.totalorder %s47, 1
      %p364 = por %p362, %p363
      %p366 = scmp.ne.s32.totalorder %s351, %s365
      %p367 = scmp.eq.s32.totalorder %s47, 0
      %p368 = por %p366, %p367
      %s370 = sadd.s32 %s369, 1
      %p373 = scmp.eq.s32.totalorder %s41, 1
      %p374 = scmp.ne.s32.totalorder %s369, %s371
      %p375 = scmp.eq.s32.totalorder %s41, 0
      %p376 = por %p374, %p375
      %p377 = scmp.ne.s32.totalorder %s369, %s371
      %p378 = scmp.eq.s32.totalorder %s46, 1
      %p379 = por %p377, %p378
      %p380 = scmp.ne.s32.totalorder %s371, %s372
      %p381 = scmp.eq.s32.totalorder %s46, 0
      %p382 = por %p380, %p381
      %p383 = scmp.ne.s32.totalorder %s371, %s372
      %p384 = scmp.eq.s32.totalorder %s47, 1
      %p385 = por %p383, %p384
      %p387 = scmp.ne.s32.totalorder %s372, %s386
      %p388 = scmp.eq.s32.totalorder %s47, 0
      %p389 = por %p387, %p388
      %s391 = sadd.s32 %s390, 1
      %p394 = scmp.eq.s32.totalorder %s41, 1
      %p395 = scmp.ne.s32.totalorder %s390, %s392
      %p396 = scmp.eq.s32.totalorder %s41, 0
      %p397 = por %p395, %p396
      %p398 = scmp.ne.s32.totalorder %s390, %s392
      %p399 = scmp.eq.s32.totalorder %s46, 1
      %p400 = por %p398, %p399
      %p401 = scmp.ne.s32.totalorder %s392, %s393
      %p402 = scmp.eq.s32.totalorder %s46, 0
      %p403 = por %p401, %p402
      %p404 = scmp.ne.s32.totalorder %s392, %s393
      %p405 = scmp.eq.s32.totalorder %s47, 1
      %p406 = por %p404, %p405
      %p408 = scmp.ne.s32.totalorder %s393, %s407
      %p409 = scmp.eq.s32.totalorder %s47, 0
      %p410 = por %p408, %p409
      %s412 = sadd.s32 %s411, 1
      %p415 = scmp.eq.s32.totalorder %s41, 1
      %p416 = scmp.ne.s32.totalorder %s411, %s413
      %p417 = scmp.eq.s32.totalorder %s41, 0
      %p418 = por %p416, %p417
      %p419 = scmp.ne.s32.totalorder %s411, %s413
      %p420 = scmp.eq.s32.totalorder %s46, 1
      %p421 = por %p419, %p420
      %p422 = scmp.ne.s32.totalorder %s413, %s414
      %p423 = scmp.eq.s32.totalorder %s46, 0
      %p424 = por %p422, %p423
      %p425 = scmp.ne.s32.totalorder %s413, %s414
      %p426 = scmp.eq.s32.totalorder %s47, 1
      %p427 = por %p425, %p426
      %p429 = scmp.ne.s32.totalorder %s414, %s428
      %p430 = scmp.eq.s32.totalorder %s47, 0
      %p431 = por %p429, %p430
      %s433 = sadd.s32 %s432, 1
      %p436 = scmp.eq.s32.totalorder %s41, 1
      %p437 = scmp.ne.s32.totalorder %s432, %s434
      %p438 = scmp.eq.s32.totalorder %s41, 0
      %p439 = por %p437, %p438
      %p440 = scmp.ne.s32.totalorder %s432, %s434
      %p441 = scmp.eq.s32.totalorder %s46, 1
      %p442 = por %p440, %p441
      %p443 = scmp.ne.s32.totalorder %s434, %s435
      %p444 = scmp.eq.s32.totalorder %s46, 0
      %p445 = por %p443, %p444
      %p446 = scmp.ne.s32.totalorder %s434, %s435
      %p447 = scmp.eq.s32.totalorder %s47, 1
      %p448 = por %p446, %p447
      %p450 = scmp.ne.s32.totalorder %s435, %s449
      %p451 = scmp.eq.s32.totalorder %s47, 0
      %p452 = por %p450, %p451
      %s454 = sadd.s32 %s453, 1
      %p457 = scmp.eq.s32.totalorder %s41, 1
      %p458 = scmp.ne.s32.totalorder %s453, %s455
      %p459 = scmp.eq.s32.totalorder %s41, 0
      %p460 = por %p458, %p459
      %p461 = scmp.ne.s32.totalorder %s453, %s455
      %p462 = scmp.eq.s32.totalorder %s46, 1
      %p463 = por %p461, %p462
      %p464 = scmp.ne.s32.totalorder %s455, %s456
      %p465 = scmp.eq.s32.totalorder %s46, 0
      %p466 = por %p464, %p465
      %p467 = scmp.ne.s32.totalorder %s455, %s456
      %p468 = scmp.eq.s32.totalorder %s47, 1
      %p469 = por %p467, %p468
      %p471 = scmp.ne.s32.totalorder %s456, %s470
      %p472 = scmp.eq.s32.totalorder %s47, 0
      %p473 = por %p471, %p472
      %s475 = sadd.s32 %s474, 1
      %p478 = scmp.eq.s32.totalorder %s41, 1
      %p479 = scmp.ne.s32.totalorder %s474, %s476
      %p480 = scmp.eq.s32.totalorder %s41, 0
      %p481 = por %p479, %p480
      %p482 = scmp.ne.s32.totalorder %s474, %s476
      %p483 = scmp.eq.s32.totalorder %s46, 1
      %p484 = por %p482, %p483
      %p485 = scmp.ne.s32.totalorder %s476, %s477
      %p486 = scmp.eq.s32.totalorder %s46, 0
      %p487 = por %p485, %p486
      %p488 = scmp.ne.s32.totalorder %s476, %s477
      %p489 = scmp.eq.s32.totalorder %s47, 1
      %p490 = por %p488, %p489
      %p492 = scmp.ne.s32.totalorder %s477, %s491
      %p493 = scmp.eq.s32.totalorder %s47, 0
      %p494 = por %p492, %p493
      %s496 = sadd.s32 %s495, 1
      %p499 = scmp.eq.s32.totalorder %s41, 1
      %p500 = scmp.ne.s32.totalorder %s495, %s497
      %p501 = scmp.eq.s32.totalorder %s41, 0
      %p502 = por %p500, %p501
      %p503 = scmp.ne.s32.totalorder %s495, %s497
      %p504 = scmp.eq.s32.totalorder %s46, 1
      %p505 = por %p503, %p504
      %p506 = scmp.ne.s32.totalorder %s497, %s498
      %p507 = scmp.eq.s32.totalorder %s46, 0
      %p508 = por %p506, %p507
      %p509 = scmp.ne.s32.totalorder %s497, %s498
      %p510 = scmp.eq.s32.totalorder %s47, 1
      %p511 = por %p509, %p510
      %p513 = scmp.ne.s32.totalorder %s498, %s512
      %p514 = scmp.eq.s32.totalorder %s47, 0
      %p515 = por %p513, %p514
      %s517 = sadd.s32 %s516, 1
      %p520 = scmp.eq.s32.totalorder %s41, 1
      %p521 = scmp.ne.s32.totalorder %s516, %s518
      %p522 = scmp.eq.s32.totalorder %s41, 0
      %p523 = por %p521, %p522
      %p524 = scmp.ne.s32.totalorder %s516, %s518
      %p525 = scmp.eq.s32.totalorder %s46, 1
      %p526 = por %p524, %p525
      %p527 = scmp.ne.s32.totalorder %s518, %s519
      %p528 = scmp.eq.s32.totalorder %s46, 0
      %p529 = por %p527, %p528
      %p530 = scmp.ne.s32.totalorder %s518, %s519
      %p531 = scmp.eq.s32.totalorder %s47, 1
      %p532 = por %p530, %p531
      %p534 = scmp.ne.s32.totalorder %s519, %s533
      %p535 = scmp.eq.s32.totalorder %s47, 0
      %p536 = por %p534, %p535
      %s538 = sadd.s32 %s537, 1
      %p541 = scmp.eq.s32.totalorder %s41, 1
      %p542 = scmp.ne.s32.totalorder %s537, %s539
      %p543 = scmp.eq.s32.totalorder %s41, 0
      %p544 = por %p542, %p543
      %p545 = scmp.ne.s32.totalorder %s537, %s539
      %p546 = scmp.eq.s32.totalorder %s46, 1
      %p547 = por %p545, %p546
      %p548 = scmp.ne.s32.totalorder %s539, %s540
      %p549 = scmp.eq.s32.totalorder %s46, 0
      %p550 = por %p548, %p549
      %p551 = scmp.ne.s32.totalorder %s539, %s540
      %p552 = scmp.eq.s32.totalorder %s47, 1
      %p553 = por %p551, %p552
      %p555 = scmp.ne.s32.totalorder %s540, %s554
      %p556 = scmp.eq.s32.totalorder %s47, 0
      %p557 = por %p555, %p556
      %s558 = ssub.s32 %s41, %s48
      %p559 = scmp.eq.s32.totalorder %s558, 0
      %s561 = sadd.s32 %s560, 1
      %s562 = scalar_select %p559, %s560, %s561
      %p565 = pneg %p559
      %p566 = scmp.eq.s32.totalorder %s41, 1
      %p567 = por %p565, %p566
      %p568 = scmp.ne.s32.totalorder %s560, %s563
      %p569 = scmp.eq.s32.totalorder %s41, 0
      %p570 = por %p568, %p569
      %p571 = scmp.ne.s32.totalorder %s560, %s563
      %p572 = scmp.eq.s32.totalorder %s46, 1
      %p573 = por %p571, %p572
      %p574 = scmp.ne.s32.totalorder %s563, %s564
      %p575 = scmp.eq.s32.totalorder %s46, 0
      %p576 = por %p574, %p575
      %p577 = scmp.ne.s32.totalorder %s563, %s564
      %p578 = scmp.eq.s32.totalorder %s47, 1
      %p579 = por %p577, %p578
      %p581 = scmp.ne.s32.totalorder %s564, %s580
      %p582 = scmp.eq.s32.totalorder %s47, 0
      %p583 = por %p581, %p582
      %p584 = scmp.le.s32.totalorder 1, %s41
      %p585 = scmp.lt.s32.totalorder %s41, 3
      %p586 = pnand %p584, %p585
      %p587 = pneg %p586
      // Predicated region
      $region9: #{vit_forward.1} parent=5 // pred_check
        _
      $region10: #{vit_forward.1} parent=5 // pred_check_branch
        %589 = sbr.rel (%p586) target = $region12
      $region11: #{vit_forward.1} parent=5 // pred_region
        %s590 = ssub.s32 %s41, 1
        // Predicated region
        $region13: #{vit_forward.1} parent=11 // pred_check
          %p591 = pneg %p88
        $region14: #{vit_forward.1} parent=11 // pred_check_branch
          %593 = sbr.rel (%p591) target = $region16
        $region15: #{vit_forward.1} parent=11 // pred_region
          %595 = vsyncadd [#allocation6], 0
          %s596 = sshll.u32 %s1, 4
          %s597 = int_to_ptr.hbm [resolvable:$true] %s596
          %s598 = sshll.u32 [#allocation5], 4
          %s599 = int_to_ptr.vmem [resolvable:$true] %s598
          %604 = dma.hbm_to_vmem [thread:$0]  %s597, 5120, %s599, [#allocation6], 512, 512, 32
        $region16: #{vit_forward.1} parent=11 // pred_fallthru
          _
        // Predicated region
        $region17: #{vit_forward.1} parent=11 // pred_check
          %p605 = pneg %p109
        $region18: #{vit_forward.1} parent=11 // pred_check_branch
          %607 = sbr.rel (%p605) target = $region20
        $region19: #{vit_forward.1} parent=11 // pred_region
          %609 = vsyncadd [#allocation8], 0
          %s611 = sshll.u32 %s2, 4
          %s612 = int_to_ptr.hbm [resolvable:$true] %s611
          %s613 = sshll.u32 [#allocation7], 4
          %s614 = int_to_ptr.vmem [resolvable:$true] %s613
          %616 = dma.hbm_to_vmem [thread:$0]  %s612, 64, %s614, [#allocation8]
        $region20: #{vit_forward.1} parent=11 // pred_fallthru
          _
        // Predicated region
        $region21: #{vit_forward.1} parent=11 // pred_check
          %p617 = pneg %p130
        $region22: #{vit_forward.1} parent=11 // pred_check_branch
          %619 = sbr.rel (%p617) target = $region24
        $region23: #{vit_forward.1} parent=11 // pred_region
          %621 = vsyncadd [#allocation8], 0
          %s622 = sshll.u32 %s3, 4
          %s623 = int_to_ptr.hbm [resolvable:$true] %s622
          %s624 = sshll.u32 [#allocation9], 4
          %s625 = int_to_ptr.vmem [resolvable:$true] %s624
          %630 = dma.hbm_to_vmem [thread:$0]  %s623, 81920, %s625, [#allocation8], 512, 512, 32
        $region24: #{vit_forward.1} parent=11 // pred_fallthru
          _
        // Predicated region
        $region25: #{vit_forward.1} parent=11 // pred_check
          %p631 = pneg %p151
        $region26: #{vit_forward.1} parent=11 // pred_check_branch
          %633 = sbr.rel (%p631) target = $region28
        $region27: #{vit_forward.1} parent=11 // pred_region
          %635 = vsyncadd [#allocation11], 0
          %s637 = sshll.u32 %s4, 4
          %s638 = int_to_ptr.hbm [resolvable:$true] %s637
          %s639 = sshll.u32 [#allocation10], 4
          %s640 = int_to_ptr.vmem [resolvable:$true] %s639
          %642 = dma.hbm_to_vmem [thread:$0]  %s638, 64, %s640, [#allocation11]
        $region28: #{vit_forward.1} parent=11 // pred_fallthru
          _
        // Predicated region
        $region29: #{vit_forward.1} parent=11 // pred_check
          %p643 = pneg %p172
        $region30: #{vit_forward.1} parent=11 // pred_check_branch
          %645 = sbr.rel (%p643) target = $region32
        $region31: #{vit_forward.1} parent=11 // pred_region
          %647 = vsyncadd [#allocation11], 0
          %s648 = sshll.u32 %s5, 4
          %s649 = int_to_ptr.hbm [resolvable:$true] %s648
          %s650 = sshll.u32 [#allocation12], 4
          %s651 = int_to_ptr.vmem [resolvable:$true] %s650
          %656 = dma.hbm_to_vmem [thread:$0]  %s649, 40960, %s651, [#allocation11], 256, 256, 16
        $region32: #{vit_forward.1} parent=11 // pred_fallthru
          _
        // Predicated region
        $region33: #{vit_forward.1} parent=11 // pred_check
          %p657 = pneg %p193
        $region34: #{vit_forward.1} parent=11 // pred_check_branch
          %659 = sbr.rel (%p657) target = $region36
        $region35: #{vit_forward.1} parent=11 // pred_region
          %661 = vsyncadd [#allocation14], 0
          %s663 = sshll.u32 %s6, 4
          %s664 = int_to_ptr.hbm [resolvable:$true] %s663
          %s665 = sshll.u32 [#allocation13], 4
          %s666 = int_to_ptr.vmem [resolvable:$true] %s665
          %668 = dma.hbm_to_vmem [thread:$0]  %s664, 32, %s666, [#allocation14]
        $region36: #{vit_forward.1} parent=11 // pred_fallthru
          _
        // Predicated region
        $region37: #{vit_forward.1} parent=11 // pred_check
          %p669 = pneg %p214
        $region38: #{vit_forward.1} parent=11 // pred_check_branch
          %671 = sbr.rel (%p669) target = $region40
        $region39: #{vit_forward.1} parent=11 // pred_region
          %673 = vsyncadd [#allocation14], 0
          %s674 = sshll.u32 %s7, 4
          %s675 = int_to_ptr.hbm [resolvable:$true] %s674
          %s676 = sshll.u32 [#allocation15], 4
          %s677 = int_to_ptr.vmem [resolvable:$true] %s676
          %682 = dma.hbm_to_vmem [thread:$0]  %s675, 10240, %s677, [#allocation14], 128, 128, 8
        $region40: #{vit_forward.1} parent=11 // pred_fallthru
          _
        // Predicated region
        $region41: #{vit_forward.1} parent=11 // pred_check
          %p683 = pneg %p235
        $region42: #{vit_forward.1} parent=11 // pred_check_branch
          %685 = sbr.rel (%p683) target = $region44
        $region43: #{vit_forward.1} parent=11 // pred_region
          %687 = vsyncadd [#allocation17], 0
          %s689 = sshll.u32 %s8, 4
          %s690 = int_to_ptr.hbm [resolvable:$true] %s689
          %s691 = sshll.u32 [#allocation16], 4
          %s692 = int_to_ptr.vmem [resolvable:$true] %s691
          %694 = dma.hbm_to_vmem [thread:$0]  %s690, 16, %s692, [#allocation17]
        $region44: #{vit_forward.1} parent=11 // pred_fallthru
          _
        // Predicated region
        $region45: #{vit_forward.1} parent=11 // pred_check
          %p695 = pneg %p256
        $region46: #{vit_forward.1} parent=11 // pred_check_branch
          %697 = sbr.rel (%p695) target = $region48
        $region47: #{vit_forward.1} parent=11 // pred_region
          _
        $region48: #{vit_forward.1} parent=11 // pred_fallthru
          _
        // Predicated region
        $region49: #{vit_forward.1} parent=11 // pred_check
          %p698 = pneg %p277
        $region50: #{vit_forward.1} parent=11 // pred_check_branch
          %700 = sbr.rel (%p698) target = $region52
        $region51: #{vit_forward.1} parent=11 // pred_region
          %702 = vsyncadd [#allocation17], 0
          %s704 = sshll.u32 %s10, 4
          %s705 = int_to_ptr.hbm [resolvable:$true] %s704
          %s706 = sshll.u32 [#allocation18], 4
          %s707 = int_to_ptr.vmem [resolvable:$true] %s706
          %709 = dma.hbm_to_vmem [thread:$0]  %s705, 16, %s707, [#allocation17]
        $region52: #{vit_forward.1} parent=11 // pred_fallthru
          _
        // Predicated region
        $region53: #{vit_forward.1} parent=11 // pred_check
          %p710 = pneg %p298
        $region54: #{vit_forward.1} parent=11 // pred_check_branch
          %712 = sbr.rel (%p710) target = $region56
        $region55: #{vit_forward.1} parent=11 // pred_region
          %714 = vsyncadd [#allocation20], 0
          %s716 = sshll.u32 %s11, 4
          %s717 = int_to_ptr.hbm [resolvable:$true] %s716
          %s718 = sshll.u32 [#allocation19], 4
          %s719 = int_to_ptr.vmem [resolvable:$true] %s718
          %721 = dma.hbm_to_vmem [thread:$0]  %s717, 16, %s719, [#allocation20]
        $region56: #{vit_forward.1} parent=11 // pred_fallthru
          _
        // Predicated region
        $region57: #{vit_forward.1} parent=11 // pred_check
          %p722 = pneg %p319
        $region58: #{vit_forward.1} parent=11 // pred_check_branch
          %724 = sbr.rel (%p722) target = $region60
        $region59: #{vit_forward.1} parent=11 // pred_region
          %726 = vsyncadd [#allocation20], 0
          %s727 = sshll.u32 %s12, 4
          %s728 = int_to_ptr.hbm [resolvable:$true] %s727
          %s729 = sshll.u32 [#allocation21], 4
          %s730 = int_to_ptr.vmem [resolvable:$true] %s729
          %735 = dma.hbm_to_vmem [thread:$0]  %s728, 4096, %s730, [#allocation20], 128, 128, 8
        $region60: #{vit_forward.1} parent=11 // pred_fallthru
          _
        // Predicated region
        $region61: #{vit_forward.1} parent=11 // pred_check
          %p736 = pneg %p340
        $region62: #{vit_forward.1} parent=11 // pred_check_branch
          %738 = sbr.rel (%p736) target = $region64
        $region63: #{vit_forward.1} parent=11 // pred_region
          %740 = vsyncadd [#allocation23], 0
          %s741 = sshll.u32 %s13, 4
          %s742 = int_to_ptr.hbm [resolvable:$true] %s741
          %s743 = sshll.u32 [#allocation22], 4
          %s744 = int_to_ptr.vmem [resolvable:$true] %s743
          %749 = dma.hbm_to_vmem [thread:$0]  %s742, 128, %s744, [#allocation23], 16, 16, 1
        $region64: #{vit_forward.1} parent=11 // pred_fallthru
          _
        // Predicated region
        $region65: #{vit_forward.1} parent=11 // pred_check
          %p750 = pneg %p361
        $region66: #{vit_forward.1} parent=11 // pred_check_branch
          %752 = sbr.rel (%p750) target = $region68
        $region67: #{vit_forward.1} parent=11 // pred_region
          %754 = vsyncadd [#allocation23], 0
          %s755 = sshll.u32 %s14, 4
          %s756 = int_to_ptr.hbm [resolvable:$true] %s755
          %s757 = sshll.u32 [#allocation24], 4
          %s758 = int_to_ptr.vmem [resolvable:$true] %s757
          %763 = dma.hbm_to_vmem [thread:$0]  %s756, 4096, %s758, [#allocation23], 128, 128, 8
        $region68: #{vit_forward.1} parent=11 // pred_fallthru
          _
        // Predicated region
        $region69: #{vit_forward.1} parent=11 // pred_check
          %p764 = pneg %p382
        $region70: #{vit_forward.1} parent=11 // pred_check_branch
          %766 = sbr.rel (%p764) target = $region72
        $region71: #{vit_forward.1} parent=11 // pred_region
          %768 = vsyncadd [#allocation26], 0
          %s769 = sshll.u32 %s15, 4
          %s770 = int_to_ptr.hbm [resolvable:$true] %s769
          %s771 = sshll.u32 [#allocation25], 4
          %s772 = int_to_ptr.vmem [resolvable:$true] %s771
          %777 = dma.hbm_to_vmem [thread:$0]  %s770, 32, %s772, [#allocation26], 16, 16, 1
        $region72: #{vit_forward.1} parent=11 // pred_fallthru
          _
        // Predicated region
        $region73: #{vit_forward.1} parent=11 // pred_check
          %p778 = pneg %p403
        $region74: #{vit_forward.1} parent=11 // pred_check_branch
          %780 = sbr.rel (%p778) target = $region76
        $region75: #{vit_forward.1} parent=11 // pred_region
          %782 = vsyncadd [#allocation26], 0
          %s783 = sshll.u32 %s16, 4
          %s784 = int_to_ptr.hbm [resolvable:$true] %s783
          %s785 = sshll.u32 [#allocation27], 4
          %s786 = int_to_ptr.vmem [resolvable:$true] %s785
          %791 = dma.hbm_to_vmem [thread:$0]  %s784, 32, %s786, [#allocation26], 16, 16, 1
        $region76: #{vit_forward.1} parent=11 // pred_fallthru
          _
        // Predicated region
        $region77: #{vit_forward.1} parent=11 // pred_check
          %p792 = pneg %p424
        $region78: #{vit_forward.1} parent=11 // pred_check_branch
          %794 = sbr.rel (%p792) target = $region80
        $region79: #{vit_forward.1} parent=11 // pred_region
          %796 = vsyncadd [#allocation29], 0
          %s797 = sshll.u32 %s17, 4
          %s798 = int_to_ptr.hbm [resolvable:$true] %s797
          %s799 = sshll.u32 [#allocation28], 4
          %s800 = int_to_ptr.vmem [resolvable:$true] %s799
          %805 = dma.hbm_to_vmem [thread:$0]  %s798, 32, %s800, [#allocation29], 16, 16, 1
        $region80: #{vit_forward.1} parent=11 // pred_fallthru
          _
        // Predicated region
        $region81: #{vit_forward.1} parent=11 // pred_check
          %p806 = pneg %p445
        $region82: #{vit_forward.1} parent=11 // pred_check_branch
          %808 = sbr.rel (%p806) target = $region84
        $region83: #{vit_forward.1} parent=11 // pred_region
          %810 = vsyncadd [#allocation29], 0
          %s811 = sshll.u32 %s18, 4
          %s812 = int_to_ptr.hbm [resolvable:$true] %s811
          %s813 = sshll.u32 [#allocation30], 4
          %s814 = int_to_ptr.vmem [resolvable:$true] %s813
          %819 = dma.hbm_to_vmem [thread:$0]  %s812, 1024, %s814, [#allocation29], 128, 128, 8
        $region84: #{vit_forward.1} parent=11 // pred_fallthru
          _
        // Predicated region
        $region85: #{vit_forward.1} parent=11 // pred_check
          %p820 = pneg %p466
        $region86: #{vit_forward.1} parent=11 // pred_check_branch
          %822 = sbr.rel (%p820) target = $region88
        $region87: #{vit_forward.1} parent=11 // pred_region
          %824 = vsyncadd [#allocation32], 0
          %s825 = sshll.u32 %s19, 4
          %s826 = int_to_ptr.hbm [resolvable:$true] %s825
          %s827 = sshll.u32 [#allocation31], 4
          %s828 = int_to_ptr.vmem [resolvable:$true] %s827
          %833 = dma.hbm_to_vmem [thread:$0]  %s826, 32, %s828, [#allocation32], 16, 16, 1
        $region88: #{vit_forward.1} parent=11 // pred_fallthru
          _
        // Predicated region
        $region89: #{vit_forward.1} parent=11 // pred_check
          %p834 = pneg %p487
        $region90: #{vit_forward.1} parent=11 // pred_check_branch
          %836 = sbr.rel (%p834) target = $region92
        $region91: #{vit_forward.1} parent=11 // pred_region
          _
        $region92: #{vit_forward.1} parent=11 // pred_fallthru
          _
        // Predicated region
        $region93: #{vit_forward.1} parent=11 // pred_check
          %p837 = pneg %p508
        $region94: #{vit_forward.1} parent=11 // pred_check_branch
          %839 = sbr.rel (%p837) target = $region96
        $region95: #{vit_forward.1} parent=11 // pred_region
          %841 = vsyncadd [#allocation32], 0
          %s842 = sshll.u32 %s21, 4
          %s843 = int_to_ptr.hbm [resolvable:$true] %s842
          %s844 = sshll.u32 [#allocation33], 4
          %s845 = int_to_ptr.vmem [resolvable:$true] %s844
          %850 = dma.hbm_to_vmem [thread:$0]  %s843, 32, %s845, [#allocation32], 16, 16, 1
        $region96: #{vit_forward.1} parent=11 // pred_fallthru
          _
        // Predicated region
        $region97: #{vit_forward.1} parent=11 // pred_check
          %p851 = pneg %p529
        $region98: #{vit_forward.1} parent=11 // pred_check_branch
          %853 = sbr.rel (%p851) target = $region100
        $region99: #{vit_forward.1} parent=11 // pred_region
          %855 = vsyncadd [#allocation35], 0
          %s856 = sshll.u32 %s22, 4
          %s857 = int_to_ptr.hbm [resolvable:$true] %s856
          %s858 = sshll.u32 [#allocation34], 4
          %s859 = int_to_ptr.vmem [resolvable:$true] %s858
          %864 = dma.hbm_to_vmem [thread:$0]  %s857, 32, %s859, [#allocation35], 16, 16, 1
        $region100: #{vit_forward.1} parent=11 // pred_fallthru
          _
        // Predicated region
        $region101: #{vit_forward.1} parent=11 // pred_check
          %p865 = pneg %p550
        $region102: #{vit_forward.1} parent=11 // pred_check_branch
          %867 = sbr.rel (%p865) target = $region104
        $region103: #{vit_forward.1} parent=11 // pred_region
          %869 = vsyncadd [#allocation35], 0
          %s870 = sshll.u32 %s23, 4
          %s871 = int_to_ptr.hbm [resolvable:$true] %s870
          %s872 = sshll.u32 [#allocation36], 4
          %s873 = int_to_ptr.vmem [resolvable:$true] %s872
          %878 = dma.hbm_to_vmem [thread:$0]  %s871, 32, %s873, [#allocation35], 16, 16, 1
        $region104: #{vit_forward.1} parent=11 // pred_fallthru
          _
      $region12: #{vit_forward.1} parent=5 // pred_fallthru
        _
      %p879 = scmp.lt.s32.totalorder %s41, 2
      // Predicated region
      $region105: #{vit_forward.1} parent=5 // pred_check
        %p880 = pneg %p879
      $region106: #{vit_forward.1} parent=5 // pred_check_branch
        %882 = sbr.rel (%p880) target = $region108
      $region107: #{vit_forward.1} parent=5 // pred_region
        // Predicated region
        $region109: #{vit_forward.1} parent=107 // pred_check
          %p883 = pneg %p61
        $region110: #{vit_forward.1} parent=107 // pred_check_branch
          %885 = sbr.rel (%p883) target = $region112
        $region111: #{vit_forward.1} parent=107 // pred_region
          %p886 = scmp.lt.s32.totalorder %s41, 1
          %s887 = scalar_select %p886, %s41, 1
          %s888 = smul.addr %s887, 2
          %s889 = smul.addr %s888, 8
          %s890 = scalar_lea.vmem %s0, %s889
        $region112: #{vit_forward.1} parent=107 // pred_fallthru
          _
      $region108: #{vit_forward.1} parent=5 // pred_fallthru
        _
      %p891 = scmp.le.s32.totalorder 1, %s41
      %p892 = scmp.lt.s32.totalorder %s41, 3
      %p893 = pnand %p891, %p892
      %p894 = pneg %p893
      // Predicated region
      $region113: #{vit_forward.1} parent=5 // pred_check
        _
      $region114: #{vit_forward.1} parent=5 // pred_check_branch
        %896 = sbr.rel (%p893) target = $region116
      $region115: #{vit_forward.1} parent=5 // pred_region
        %s897 = ssub.s32 %s41, 1
        // Predicated region
        $region117: #{vit_forward.1} parent=115 // pred_check
          %p898 = pneg %p88
        $region118: #{vit_forward.1} parent=115 // pred_check_branch
          %900 = sbr.rel (%p898) target = $region120
        $region119: #{vit_forward.1} parent=115 // pred_region
          %902 = dma.done [#allocation6], 5120
        $region120: #{vit_forward.1} parent=115 // pred_fallthru
          _
        // Predicated region
        $region121: #{vit_forward.1} parent=115 // pred_check
          %p903 = pneg %p109
        $region122: #{vit_forward.1} parent=115 // pred_check_branch
          %905 = sbr.rel (%p903) target = $region124
        $region123: #{vit_forward.1} parent=115 // pred_region
          %907 = dma.done [#allocation8], 64
        $region124: #{vit_forward.1} parent=115 // pred_fallthru
          _
        // Predicated region
        $region125: #{vit_forward.1} parent=115 // pred_check
          %p908 = pneg %p130
        $region126: #{vit_forward.1} parent=115 // pred_check_branch
          %910 = sbr.rel (%p908) target = $region128
        $region127: #{vit_forward.1} parent=115 // pred_region
          %912 = dma.done [#allocation8], 81920
        $region128: #{vit_forward.1} parent=115 // pred_fallthru
          _
        // Predicated region
        $region129: #{vit_forward.1} parent=115 // pred_check
          %p913 = pneg %p151
        $region130: #{vit_forward.1} parent=115 // pred_check_branch
          %915 = sbr.rel (%p913) target = $region132
        $region131: #{vit_forward.1} parent=115 // pred_region
          %917 = dma.done [#allocation11], 64
        $region132: #{vit_forward.1} parent=115 // pred_fallthru
          _
        // Predicated region
        $region133: #{vit_forward.1} parent=115 // pred_check
          %p918 = pneg %p172
        $region134: #{vit_forward.1} parent=115 // pred_check_branch
          %920 = sbr.rel (%p918) target = $region136
        $region135: #{vit_forward.1} parent=115 // pred_region
          %922 = dma.done [#allocation11], 40960
        $region136: #{vit_forward.1} parent=115 // pred_fallthru
          _
        // Predicated region
        $region137: #{vit_forward.1} parent=115 // pred_check
          %p923 = pneg %p193
        $region138: #{vit_forward.1} parent=115 // pred_check_branch
          %925 = sbr.rel (%p923) target = $region140
        $region139: #{vit_forward.1} parent=115 // pred_region
          %927 = dma.done [#allocation14], 32
        $region140: #{vit_forward.1} parent=115 // pred_fallthru
          _
        // Predicated region
        $region141: #{vit_forward.1} parent=115 // pred_check
          %p928 = pneg %p214
        $region142: #{vit_forward.1} parent=115 // pred_check_branch
          %930 = sbr.rel (%p928) target = $region144
        $region143: #{vit_forward.1} parent=115 // pred_region
          %932 = dma.done [#allocation14], 10240
        $region144: #{vit_forward.1} parent=115 // pred_fallthru
          _
        // Predicated region
        $region145: #{vit_forward.1} parent=115 // pred_check
          %p933 = pneg %p235
        $region146: #{vit_forward.1} parent=115 // pred_check_branch
          %935 = sbr.rel (%p933) target = $region148
        $region147: #{vit_forward.1} parent=115 // pred_region
          %937 = dma.done [#allocation17], 16
        $region148: #{vit_forward.1} parent=115 // pred_fallthru
          _
        // Predicated region
        $region149: #{vit_forward.1} parent=115 // pred_check
          %p938 = pneg %p277
        $region150: #{vit_forward.1} parent=115 // pred_check_branch
          %940 = sbr.rel (%p938) target = $region152
        $region151: #{vit_forward.1} parent=115 // pred_region
          %942 = dma.done [#allocation17], 16
        $region152: #{vit_forward.1} parent=115 // pred_fallthru
          _
        // Predicated region
        $region153: #{vit_forward.1} parent=115 // pred_check
          %p943 = pneg %p298
        $region154: #{vit_forward.1} parent=115 // pred_check_branch
          %945 = sbr.rel (%p943) target = $region156
        $region155: #{vit_forward.1} parent=115 // pred_region
          %947 = dma.done [#allocation20], 16
        $region156: #{vit_forward.1} parent=115 // pred_fallthru
          _
        // Predicated region
        $region157: #{vit_forward.1} parent=115 // pred_check
          %p948 = pneg %p319
        $region158: #{vit_forward.1} parent=115 // pred_check_branch
          %950 = sbr.rel (%p948) target = $region160
        $region159: #{vit_forward.1} parent=115 // pred_region
          %952 = dma.done [#allocation20], 4096
        $region160: #{vit_forward.1} parent=115 // pred_fallthru
          _
        // Predicated region
        $region161: #{vit_forward.1} parent=115 // pred_check
          %p953 = pneg %p340
        $region162: #{vit_forward.1} parent=115 // pred_check_branch
          %955 = sbr.rel (%p953) target = $region164
        $region163: #{vit_forward.1} parent=115 // pred_region
          %957 = dma.done [#allocation23], 128
        $region164: #{vit_forward.1} parent=115 // pred_fallthru
          _
        // Predicated region
        $region165: #{vit_forward.1} parent=115 // pred_check
          %p958 = pneg %p361
        $region166: #{vit_forward.1} parent=115 // pred_check_branch
          %960 = sbr.rel (%p958) target = $region168
        $region167: #{vit_forward.1} parent=115 // pred_region
          %962 = dma.done [#allocation23], 4096
        $region168: #{vit_forward.1} parent=115 // pred_fallthru
          _
        // Predicated region
        $region169: #{vit_forward.1} parent=115 // pred_check
          %p963 = pneg %p382
        $region170: #{vit_forward.1} parent=115 // pred_check_branch
          %965 = sbr.rel (%p963) target = $region172
        $region171: #{vit_forward.1} parent=115 // pred_region
          %967 = dma.done [#allocation26], 32
        $region172: #{vit_forward.1} parent=115 // pred_fallthru
          _
        // Predicated region
        $region173: #{vit_forward.1} parent=115 // pred_check
          %p968 = pneg %p403
        $region174: #{vit_forward.1} parent=115 // pred_check_branch
          %970 = sbr.rel (%p968) target = $region176
        $region175: #{vit_forward.1} parent=115 // pred_region
          %972 = dma.done [#allocation26], 32
        $region176: #{vit_forward.1} parent=115 // pred_fallthru
          _
        // Predicated region
        $region177: #{vit_forward.1} parent=115 // pred_check
          %p973 = pneg %p424
        $region178: #{vit_forward.1} parent=115 // pred_check_branch
          %975 = sbr.rel (%p973) target = $region180
        $region179: #{vit_forward.1} parent=115 // pred_region
          %977 = dma.done [#allocation29], 32
        $region180: #{vit_forward.1} parent=115 // pred_fallthru
          _
        // Predicated region
        $region181: #{vit_forward.1} parent=115 // pred_check
          %p978 = pneg %p445
        $region182: #{vit_forward.1} parent=115 // pred_check_branch
          %980 = sbr.rel (%p978) target = $region184
        $region183: #{vit_forward.1} parent=115 // pred_region
          %982 = dma.done [#allocation29], 1024
        $region184: #{vit_forward.1} parent=115 // pred_fallthru
          _
        // Predicated region
        $region185: #{vit_forward.1} parent=115 // pred_check
          %p983 = pneg %p466
        $region186: #{vit_forward.1} parent=115 // pred_check_branch
          %985 = sbr.rel (%p983) target = $region188
        $region187: #{vit_forward.1} parent=115 // pred_region
          %987 = dma.done [#allocation32], 32
        $region188: #{vit_forward.1} parent=115 // pred_fallthru
          _
        // Predicated region
        $region189: #{vit_forward.1} parent=115 // pred_check
          %p988 = pneg %p508
        $region190: #{vit_forward.1} parent=115 // pred_check_branch
          %990 = sbr.rel (%p988) target = $region192
        $region191: #{vit_forward.1} parent=115 // pred_region
          %992 = dma.done [#allocation32], 32
        $region192: #{vit_forward.1} parent=115 // pred_fallthru
          _
        // Predicated region
        $region193: #{vit_forward.1} parent=115 // pred_check
          %p993 = pneg %p529
        $region194: #{vit_forward.1} parent=115 // pred_check_branch
          %995 = sbr.rel (%p993) target = $region196
        $region195: #{vit_forward.1} parent=115 // pred_region
          %997 = dma.done [#allocation35], 32
        $region196: #{vit_forward.1} parent=115 // pred_fallthru
          _
        // Predicated region
        $region197: #{vit_forward.1} parent=115 // pred_check
          %p998 = pneg %p550
        $region198: #{vit_forward.1} parent=115 // pred_check_branch
          %1000 = sbr.rel (%p998) target = $region200
        $region199: #{vit_forward.1} parent=115 // pred_region
          %1002 = dma.done [#allocation35], 32
        $region200: #{vit_forward.1} parent=115 // pred_fallthru
          _
        %p1003 = scmp.lt.s32.totalorder %s46, 1
        %s1004 = scalar_select %p1003, %s46, 1
        %s1005 = smul.addr %s1004, 2
        %s1006 = smul.addr %s1005, 8
        %s1007 = scalar_lea.vmem %s0, %s1006
        %p1008 = pneg %p67
        %p1009 = pneg %p64
        %p1010 = pneg %p88
        %p1011 = pneg %p85
        %p1012 = pneg %p109
        %p1013 = pneg %p106
        %p1014 = pneg %p130
        %p1015 = pneg %p127
        %p1016 = pneg %p151
        %p1017 = pneg %p148
        %p1018 = pneg %p172
        %p1019 = pneg %p169
        %p1020 = pneg %p193
        %p1021 = pneg %p190
        %p1022 = pneg %p214
        %p1023 = pneg %p211
        %p1024 = pneg %p235
        %p1025 = pneg %p232
        %p1026 = pneg %p256
        %p1027 = pneg %p253
        %p1028 = pneg %p277
        %p1029 = pneg %p274
        %p1030 = pneg %p298
        %p1031 = pneg %p295
        %p1032 = pneg %p319
        %p1033 = pneg %p316
        %p1034 = pneg %p340
        %p1035 = pneg %p337
        %p1036 = pneg %p361
        %p1037 = pneg %p358
        %p1038 = pneg %p382
        %p1039 = pneg %p379
        %p1040 = pneg %p403
        %p1041 = pneg %p400
        %p1042 = pneg %p424
        %p1043 = pneg %p421
        %p1044 = pneg %p445
        %p1045 = pneg %p442
        %p1046 = pneg %p466
        %p1047 = pneg %p463
        %p1048 = pneg %p487
        %p1049 = pneg %p484
        %p1050 = pneg %p508
        %p1051 = pneg %p505
        %p1052 = pneg %p529
        %p1053 = pneg %p526
        %p1054 = pneg %p550
        %p1055 = pneg %p547
        %p1056 = pneg %p576
        %p1057 = pneg %p573
        %p1058 = scmp.lt.s32.totalorder %s46, 1
        %s1059 = scalar_select %p1058, %s46, 1
        %s1060 = smul.addr %s1059, 8
        %s1061 = scalar_lea.vmem %s24, %s1060
        %p1062 = scmp.lt.s32.totalorder %s46, 1
        %s1063 = scalar_select %p1062, %s46, 1
        %s1064 = smul.addr %s1063, 2
        %s1065 = smul.addr %s1064, 8
        %s1066 = scalar_lea.vmem %s0, %s1065
        %p1067 = scmp.lt.s32.totalorder %s46, 1
        %s1068 = scalar_select %p1067, %s46, 1
        %s1069 = smul.addr %s1068, 8
        %s1070 = scalar_lea.vmem %s24, %s1069
        %1071 = vst [vmem:[#allocation2] sm:$0x3] 0.0
        %1072 = vst [vmem:[#allocation2 + $0x8] sm:$0x3] 0.0
        %1073 = vst [vmem:[#allocation2 + $0x10] sm:$0xc] 0.0
        %1074 = vst [vmem:[#allocation2 + $0x18] sm:$0xc] 0.0
        %1075 = vst [vmem:[#allocation3] sm:$0x3] 0.0
        %1076 = vst [vmem:[#allocation3 + $0x8] sm:$0x3] 0.0
        %1077 = vst [vmem:[#allocation3 + $0x10] sm:$0xc] 0.0
        %1078 = vst [vmem:[#allocation3 + $0x18] sm:$0xc] 0.0
        %1079 = vst [vmem:[#allocation4] sm:$0x3] 0.0
        %1080 = vst [vmem:[#allocation4 + $0xa] sm:$0x3] 0.0
        %v1081 = vld [vmem:[%s1066] sm:$0xff]
        %v1082 = vld [vmem:[%s1066 + $0x8] sm:$0xf]
        %v1083 = vld [vmem:[#allocation5] sm:$0xff]
        %v1084 = vld [vmem:[#allocation5 + $0x8] sm:$0xff]
        %v1085 = vld [vmem:[#allocation5 + $0x10] sm:$0xff]
        %v1086 = vld [vmem:[#allocation5 + $0x18] sm:$0xff]
        %v1087 = vld [vmem:[#allocation5 + $0x20] sm:$0xff]
        %v1088 = vld [vmem:[#allocation5 + $0x28] sm:$0xff]
        %v1089 = vld [vmem:[#allocation5 + $0x30] sm:$0xff]
        %v1090 = vld [vmem:[#allocation5 + $0x38] sm:$0xff]
        %s1091 = scalar_lea.vmem [#allocation5], 64
        %v1092 = vld [vmem:[%s1091] sm:$0xff]
        %v1093 = vld [vmem:[%s1091 + $0x8] sm:$0xff]
        %v1094 = vld [vmem:[%s1091 + $0x10] sm:$0xff]
        %v1095 = vld [vmem:[%s1091 + $0x18] sm:$0xff]
        %v1096 = vld [vmem:[%s1091 + $0x20] sm:$0xff]
        %v1097 = vld [vmem:[%s1091 + $0x28] sm:$0xff]
        %v1098 = vld [vmem:[%s1091 + $0x30] sm:$0xff]
        %v1099 = vld [vmem:[%s1091 + $0x38] sm:$0xff]
        %vm1102 = vcmask 1046528
        %v1103 = vrot.slane %v1081, 1
        %v1104 = vrot.slane %v1082, 1
        %v1105 = vsel %vm1102, %v1103, %v1104
        %vm1106 = vcmask 130048
        %v1107 = vsel %vm1106, %v1105, 0
        %1109 = vmatpush.msra.mxu0 0.0
        %1110 = vmatpush.msra.mxu0 0.0
        %1111 = vmatpush.msra.mxu0 0.0
        %1112 = vmatpush.msra.mxu0 0.0
        %1113 = vmatpush.msra.mxu0 0.0
        %1114 = vmatpush.msra.mxu0 0.0
        %1115 = vmatpush.msra.mxu0 0.0
        %1116 = vmatpush.msra.mxu0 0.0
        %1117 = vmatpush.msra.mxu0 0.0
        %1118 = vmatpush.msra.mxu0 0.0
        %1119 = vmatpush.msra.mxu0 0.0
        %1120 = vmatpush.msra.mxu0 0.0
        %1121 = vmatpush.msra.mxu0 0.0
        %1122 = vmatpush.msra.mxu0 0.0
        %1123 = vmatpush.msra.mxu0 %v1096
        %1124 = vmatpush.msra.mxu0 %v1092
        %1125 = vmatmul.f32.gmra.mxu0 %v1107
        %v1126 = vpop.f32.mrf.mxu0
        %v1127 = vadd.f32 0.0, %v1126
        %1128 = vdwg.mxu0
        %1129 = vmatpush.msra.mxu0 0.0
        %1130 = vmatpush.msra.mxu0 0.0
        %1131 = vmatpush.msra.mxu0 0.0
        %1132 = vmatpush.msra.mxu0 0.0
        %1133 = vmatpush.msra.mxu0 0.0
        %1134 = vmatpush.msra.mxu0 0.0
        %1135 = vmatpush.msra.mxu0 0.0
        %1136 = vmatpush.msra.mxu0 0.0
        %1137 = vmatpush.msra.mxu0 0.0
        %1138 = vmatpush.msra.mxu0 0.0
        %1139 = vmatpush.msra.mxu0 0.0
        %1140 = vmatpush.msra.mxu0 0.0
        %1141 = vmatpush.msra.mxu0 0.0
        %1142 = vmatpush.msra.mxu0 0.0
        %1143 = vmatpush.msra.mxu0 %v1097
        %1144 = vmatpush.msra.mxu0 %v1093
        %1145 = vmatmul.f32.gmra.mxu0 %v1107
        %v1146 = vpop.f32.mrf.mxu0
        %v1147 = vadd.f32 0.0, %v1146
        %1148 = vdwg.mxu0
        %1149 = vmatpush.msra.mxu0 0.0
        %1150 = vmatpush.msra.mxu0 0.0
        %1151 = vmatpush.msra.mxu0 0.0
        %1152 = vmatpush.msra.mxu0 0.0
        %1153 = vmatpush.msra.mxu0 0.0
        %1154 = vmatpush.msra.mxu0 0.0
        %1155 = vmatpush.msra.mxu0 0.0
        %1156 = vmatpush.msra.mxu0 0.0
        %1157 = vmatpush.msra.mxu0 0.0
        %1158 = vmatpush.msra.mxu0 0.0
        %1159 = vmatpush.msra.mxu0 0.0
        %1160 = vmatpush.msra.mxu0 0.0
        %1161 = vmatpush.msra.mxu0 0.0
        %1162 = vmatpush.msra.mxu0 0.0
        %1163 = vmatpush.msra.mxu0 %v1098
        %1164 = vmatpush.msra.mxu0 %v1094
        %1165 = vmatmul.f32.gmra.mxu0 %v1107
        %v1166 = vpop.f32.mrf.mxu0
        %v1167 = vadd.f32 0.0, %v1166
        %1168 = vdwg.mxu0
        %1169 = vmatpush.msra.mxu0 0.0
        %1170 = vmatpush.msra.mxu0 0.0
        %1171 = vmatpush.msra.mxu0 0.0
        %1172 = vmatpush.msra.mxu0 0.0
        %1173 = vmatpush.msra.mxu0 0.0
        %1174 = vmatpush.msra.mxu0 0.0
        %1175 = vmatpush.msra.mxu0 0.0
        %1176 = vmatpush.msra.mxu0 0.0
        %1177 = vmatpush.msra.mxu0 0.0
        %1178 = vmatpush.msra.mxu0 0.0
        %1179 = vmatpush.msra.mxu0 0.0
        %1180 = vmatpush.msra.mxu0 0.0
        %1181 = vmatpush.msra.mxu0 0.0
        %1182 = vmatpush.msra.mxu0 0.0
        %1183 = vmatpush.msra.mxu0 %v1099
        %1184 = vmatpush.msra.mxu0 %v1095
        %1185 = vmatmul.f32.gmra.mxu0 %v1107
        %v1186 = vpop.f32.mrf.mxu0
        %v1187 = vadd.f32 0.0, %v1186
        %1188 = vdwg.mxu0
        %v1189 = vsel %vm1106, %v1081, 0
        %1191 = vmatpush.msra.mxu0 0.0
        %1192 = vmatpush.msra.mxu0 0.0
        %1193 = vmatpush.msra.mxu0 0.0
        %1194 = vmatpush.msra.mxu0 0.0
        %1195 = vmatpush.msra.mxu0 0.0
        %1196 = vmatpush.msra.mxu0 0.0
        %1197 = vmatpush.msra.mxu0 0.0
        %1198 = vmatpush.msra.mxu0 0.0
        %1199 = vmatpush.msra.mxu0 0.0
        %1200 = vmatpush.msra.mxu0 0.0
        %1201 = vmatpush.msra.mxu0 0.0
        %1202 = vmatpush.msra.mxu0 0.0
        %1203 = vmatpush.msra.mxu0 0.0
        %1204 = vmatpush.msra.mxu0 0.0
        %1205 = vmatpush.msra.mxu0 %v1087
        %1206 = vmatpush.msra.mxu0 %v1083
        %1207 = vmatmul.f32.gmra.mxu0 %v1189
        %v1208 = vpop.f32.mrf.mxu0
        %v1209 = vadd.f32 %v1127, %v1208
        %1210 = vdwg.mxu0
        %1211 = vmatpush.msra.mxu0 0.0
        %1212 = vmatpush.msra.mxu0 0.0
        %1213 = vmatpush.msra.mxu0 0.0
        %1214 = vmatpush.msra.mxu0 0.0
        %1215 = vmatpush.msra.mxu0 0.0
        %1216 = vmatpush.msra.mxu0 0.0
        %1217 = vmatpush.msra.mxu0 0.0
        %1218 = vmatpush.msra.mxu0 0.0
        %1219 = vmatpush.msra.mxu0 0.0
        %1220 = vmatpush.msra.mxu0 0.0
        %1221 = vmatpush.msra.mxu0 0.0
        %1222 = vmatpush.msra.mxu0 0.0
        %1223 = vmatpush.msra.mxu0 0.0
        %1224 = vmatpush.msra.mxu0 0.0
        %1225 = vmatpush.msra.mxu0 %v1088
        %1226 = vmatpush.msra.mxu0 %v1084
        %1227 = vmatmul.f32.gmra.mxu0 %v1189
        %v1228 = vpop.f32.mrf.mxu0
        %v1229 = vadd.f32 %v1147, %v1228
        %1230 = vdwg.mxu0
        %1231 = vmatpush.msra.mxu0 0.0
        %1232 = vmatpush.msra.mxu0 0.0
        %1233 = vmatpush.msra.mxu0 0.0
        %1234 = vmatpush.msra.mxu0 0.0
        %1235 = vmatpush.msra.mxu0 0.0
        %1236 = vmatpush.msra.mxu0 0.0
        %1237 = vmatpush.msra.mxu0 0.0
        %1238 = vmatpush.msra.mxu0 0.0
        %1239 = vmatpush.msra.mxu0 0.0
        %1240 = vmatpush.msra.mxu0 0.0
        %1241 = vmatpush.msra.mxu0 0.0
        %1242 = vmatpush.msra.mxu0 0.0
        %1243 = vmatpush.msra.mxu0 0.0
        %1244 = vmatpush.msra.mxu0 0.0
        %1245 = vmatpush.msra.mxu0 %v1089
        %1246 = vmatpush.msra.mxu0 %v1085
        %1247 = vmatmul.f32.gmra.mxu0 %v1189
        %v1248 = vpop.f32.mrf.mxu0
        %v1249 = vadd.f32 %v1167, %v1248
        %1250 = vdwg.mxu0
        %1251 = vmatpush.msra.mxu0 0.0
        %1252 = vmatpush.msra.mxu0 0.0
        %1253 = vmatpush.msra.mxu0 0.0
        %1254 = vmatpush.msra.mxu0 0.0
        %1255 = vmatpush.msra.mxu0 0.0
        %1256 = vmatpush.msra.mxu0 0.0
        %1257 = vmatpush.msra.mxu0 0.0
        %1258 = vmatpush.msra.mxu0 0.0
        %1259 = vmatpush.msra.mxu0 0.0
        %1260 = vmatpush.msra.mxu0 0.0
        %1261 = vmatpush.msra.mxu0 0.0
        %1262 = vmatpush.msra.mxu0 0.0
        %1263 = vmatpush.msra.mxu0 0.0
        %1264 = vmatpush.msra.mxu0 0.0
        %1265 = vmatpush.msra.mxu0 %v1090
        %1266 = vmatpush.msra.mxu0 %v1086
        %1267 = vmatmul.f32.gmra.mxu0 %v1189
        %v1268 = vpop.f32.mrf.mxu0
        %v1269 = vadd.f32 %v1187, %v1268
        %1270 = vdwg.mxu0
        %s1271 = scalar_lea.vmem [#allocation5], 128
        %v1272 = vld [vmem:[%s1271] sm:$0xff]
        %v1273 = vld [vmem:[%s1271 + $0x8] sm:$0xff]
        %v1274 = vld [vmem:[%s1271 + $0x10] sm:$0xff]
        %v1275 = vld [vmem:[%s1271 + $0x18] sm:$0xff]
        %v1276 = vld [vmem:[%s1271 + $0x20] sm:$0xff]
        %v1277 = vld [vmem:[%s1271 + $0x28] sm:$0xff]
        %v1278 = vld [vmem:[%s1271 + $0x30] sm:$0xff]
        %v1279 = vld [vmem:[%s1271 + $0x38] sm:$0xff]
        %vm1280 = vcmask 1045504
        %v1281 = vrot.slane %v1081, 2
        %v1282 = vrot.slane %v1082, 2
        %v1283 = vsel %vm1280, %v1281, %v1282
        %v1284 = vsel %vm1106, %v1283, 0
        %1286 = vmatpush.msra.mxu0 0.0
        %1287 = vmatpush.msra.mxu0 0.0
        %1288 = vmatpush.msra.mxu0 0.0
        %1289 = vmatpush.msra.mxu0 0.0
        %1290 = vmatpush.msra.mxu0 0.0
        %1291 = vmatpush.msra.mxu0 0.0
        %1292 = vmatpush.msra.mxu0 0.0
        %1293 = vmatpush.msra.mxu0 0.0
        %1294 = vmatpush.msra.mxu0 0.0
        %1295 = vmatpush.msra.mxu0 0.0
        %1296 = vmatpush.msra.mxu0 0.0
        %1297 = vmatpush.msra.mxu0 0.0
        %1298 = vmatpush.msra.mxu0 0.0
        %1299 = vmatpush.msra.mxu0 0.0
        %1300 = vmatpush.msra.mxu0 %v1276
        %1301 = vmatpush.msra.mxu0 %v1272
        %1302 = vmatmul.f32.gmra.mxu0 %v1284
        %v1303 = vpop.f32.mrf.mxu0
        %v1304 = vadd.f32 0.0, %v1303
        %1305 = vdwg.mxu0
        %1306 = vmatpush.msra.mxu0 0.0
        %1307 = vmatpush.msra.mxu0 0.0
        %1308 = vmatpush.msra.mxu0 0.0
        %1309 = vmatpush.msra.mxu0 0.0
        %1310 = vmatpush.msra.mxu0 0.0
        %1311 = vmatpush.msra.mxu0 0.0
        %1312 = vmatpush.msra.mxu0 0.0
        %1313 = vmatpush.msra.mxu0 0.0
        %1314 = vmatpush.msra.mxu0 0.0
        %1315 = vmatpush.msra.mxu0 0.0
        %1316 = vmatpush.msra.mxu0 0.0
        %1317 = vmatpush.msra.mxu0 0.0
        %1318 = vmatpush.msra.mxu0 0.0
        %1319 = vmatpush.msra.mxu0 0.0
        %1320 = vmatpush.msra.mxu0 %v1277
        %1321 = vmatpush.msra.mxu0 %v1273
        %1322 = vmatmul.f32.gmra.mxu0 %v1284
        %v1323 = vpop.f32.mrf.mxu0
        %v1324 = vadd.f32 0.0, %v1323
        %1325 = vdwg.mxu0
        %1326 = vmatpush.msra.mxu0 0.0
        %1327 = vmatpush.msra.mxu0 0.0
        %1328 = vmatpush.msra.mxu0 0.0
        %1329 = vmatpush.msra.mxu0 0.0
        %1330 = vmatpush.msra.mxu0 0.0
        %1331 = vmatpush.msra.mxu0 0.0
        %1332 = vmatpush.msra.mxu0 0.0
        %1333 = vmatpush.msra.mxu0 0.0
        %1334 = vmatpush.msra.mxu0 0.0
        %1335 = vmatpush.msra.mxu0 0.0
        %1336 = vmatpush.msra.mxu0 0.0
        %1337 = vmatpush.msra.mxu0 0.0
        %1338 = vmatpush.msra.mxu0 0.0
        %1339 = vmatpush.msra.mxu0 0.0
        %1340 = vmatpush.msra.mxu0 %v1278
        %1341 = vmatpush.msra.mxu0 %v1274
        %1342 = vmatmul.f32.gmra.mxu0 %v1284
        %v1343 = vpop.f32.mrf.mxu0
        %v1344 = vadd.f32 0.0, %v1343
        %1345 = vdwg.mxu0
        %1346 = vmatpush.msra.mxu0 0.0
        %1347 = vmatpush.msra.mxu0 0.0
        %1348 = vmatpush.msra.mxu0 0.0
        %1349 = vmatpush.msra.mxu0 0.0
        %1350 = vmatpush.msra.mxu0 0.0
        %1351 = vmatpush.msra.mxu0 0.0
        %1352 = vmatpush.msra.mxu0 0.0
        %1353 = vmatpush.msra.mxu0 0.0
        %1354 = vmatpush.msra.mxu0 0.0
        %1355 = vmatpush.msra.mxu0 0.0
        %1356 = vmatpush.msra.mxu0 0.0
        %1357 = vmatpush.msra.mxu0 0.0
        %1358 = vmatpush.msra.mxu0 0.0
        %1359 = vmatpush.msra.mxu0 0.0
        %1360 = vmatpush.msra.mxu0 %v1279
        %1361 = vmatpush.msra.mxu0 %v1275
        %1362 = vmatmul.f32.gmra.mxu0 %v1284
        %v1363 = vpop.f32.mrf.mxu0
        %v1364 = vadd.f32 0.0, %v1363
        %1365 = vdwg.mxu0
        %v1366 = vadd.f32 %v1209, %v1304
        %v1367 = vadd.f32 %v1229, %v1324
        %v1368 = vadd.f32 %v1249, %v1344
        %v1369 = vadd.f32 %v1269, %v1364
        %s1370 = scalar_lea.vmem [#allocation5], 192
        %v1371 = vld [vmem:[%s1370] sm:$0xff]
        %v1372 = vld [vmem:[%s1370 + $0x8] sm:$0xff]
        %v1373 = vld [vmem:[%s1370 + $0x10] sm:$0xff]
        %v1374 = vld [vmem:[%s1370 + $0x18] sm:$0xff]
        %v1375 = vld [vmem:[%s1370 + $0x20] sm:$0xff]
        %v1376 = vld [vmem:[%s1370 + $0x28] sm:$0xff]
        %v1377 = vld [vmem:[%s1370 + $0x30] sm:$0xff]
        %v1378 = vld [vmem:[%s1370 + $0x38] sm:$0xff]
        %vm1379 = vcmask 1044480
        %v1380 = vrot.slane %v1081, 3
        %v1381 = vrot.slane %v1082, 3
        %v1382 = vsel %vm1379, %v1380, %v1381
        %v1383 = vsel %vm1106, %v1382, 0
        %1385 = vmatpush.msra.mxu0 0.0
        %1386 = vmatpush.msra.mxu0 0.0
        %1387 = vmatpush.msra.mxu0 0.0
        %1388 = vmatpush.msra.mxu0 0.0
        %1389 = vmatpush.msra.mxu0 0.0
        %1390 = vmatpush.msra.mxu0 0.0
        %1391 = vmatpush.msra.mxu0 0.0
        %1392 = vmatpush.msra.mxu0 0.0
        %1393 = vmatpush.msra.mxu0 0.0
        %1394 = vmatpush.msra.mxu0 0.0
        %1395 = vmatpush.msra.mxu0 0.0
        %1396 = vmatpush.msra.mxu0 0.0
        %1397 = vmatpush.msra.mxu0 0.0
        %1398 = vmatpush.msra.mxu0 0.0
        %1399 = vmatpush.msra.mxu0 %v1375
        %1400 = vmatpush.msra.mxu0 %v1371
        %1401 = vmatmul.f32.gmra.mxu0 %v1383
        %v1402 = vpop.f32.mrf.mxu0
        %v1403 = vadd.f32 0.0, %v1402
        %1404 = vdwg.mxu0
        %1405 = vmatpush.msra.mxu0 0.0
        %1406 = vmatpush.msra.mxu0 0.0
        %1407 = vmatpush.msra.mxu0 0.0
        %1408 = vmatpush.msra.mxu0 0.0
        %1409 = vmatpush.msra.mxu0 0.0
        %1410 = vmatpush.msra.mxu0 0.0
        %1411 = vmatpush.msra.mxu0 0.0
        %1412 = vmatpush.msra.mxu0 0.0
        %1413 = vmatpush.msra.mxu0 0.0
        %1414 = vmatpush.msra.mxu0 0.0
        %1415 = vmatpush.msra.mxu0 0.0
        %1416 = vmatpush.msra.mxu0 0.0
        %1417 = vmatpush.msra.mxu0 0.0
        %1418 = vmatpush.msra.mxu0 0.0
        %1419 = vmatpush.msra.mxu0 %v1376
        %1420 = vmatpush.msra.mxu0 %v1372
        %1421 = vmatmul.f32.gmra.mxu0 %v1383
        %v1422 = vpop.f32.mrf.mxu0
        %v1423 = vadd.f32 0.0, %v1422
        %1424 = vdwg.mxu0
        %1425 = vmatpush.msra.mxu0 0.0
        %1426 = vmatpush.msra.mxu0 0.0
        %1427 = vmatpush.msra.mxu0 0.0
        %1428 = vmatpush.msra.mxu0 0.0
        %1429 = vmatpush.msra.mxu0 0.0
        %1430 = vmatpush.msra.mxu0 0.0
        %1431 = vmatpush.msra.mxu0 0.0
        %1432 = vmatpush.msra.mxu0 0.0
        %1433 = vmatpush.msra.mxu0 0.0
        %1434 = vmatpush.msra.mxu0 0.0
        %1435 = vmatpush.msra.mxu0 0.0
        %1436 = vmatpush.msra.mxu0 0.0
        %1437 = vmatpush.msra.mxu0 0.0
        %1438 = vmatpush.msra.mxu0 0.0
        %1439 = vmatpush.msra.mxu0 %v1377
        %1440 = vmatpush.msra.mxu0 %v1373
        %1441 = vmatmul.f32.gmra.mxu0 %v1383
        %v1442 = vpop.f32.mrf.mxu0
        %v1443 = vadd.f32 0.0, %v1442
        %1444 = vdwg.mxu0
        %1445 = vmatpush.msra.mxu0 0.0
        %1446 = vmatpush.msra.mxu0 0.0
        %1447 = vmatpush.msra.mxu0 0.0
        %1448 = vmatpush.msra.mxu0 0.0
        %1449 = vmatpush.msra.mxu0 0.0
        %1450 = vmatpush.msra.mxu0 0.0
        %1451 = vmatpush.msra.mxu0 0.0
        %1452 = vmatpush.msra.mxu0 0.0
        %1453 = vmatpush.msra.mxu0 0.0
        %1454 = vmatpush.msra.mxu0 0.0
        %1455 = vmatpush.msra.mxu0 0.0
        %1456 = vmatpush.msra.mxu0 0.0
        %1457 = vmatpush.msra.mxu0 0.0
        %1458 = vmatpush.msra.mxu0 0.0
        %1459 = vmatpush.msra.mxu0 %v1378
        %1460 = vmatpush.msra.mxu0 %v1374
        %1461 = vmatmul.f32.gmra.mxu0 %v1383
        %v1462 = vpop.f32.mrf.mxu0
        %v1463 = vadd.f32 0.0, %v1462
        %1464 = vdwg.mxu0
        %v1465 = vadd.f32 %v1366, %v1403
        %v1466 = vadd.f32 %v1367, %v1423
        %v1467 = vadd.f32 %v1368, %v1443
        %v1468 = vadd.f32 %v1369, %v1463
        %s1469 = scalar_lea.vmem [#allocation5], 256
        %v1470 = vld [vmem:[%s1469] sm:$0xff]
        %v1471 = vld [vmem:[%s1469 + $0x8] sm:$0xff]
        %v1472 = vld [vmem:[%s1469 + $0x10] sm:$0xff]
        %v1473 = vld [vmem:[%s1469 + $0x18] sm:$0xff]
        %v1474 = vld [vmem:[%s1469 + $0x20] sm:$0xff]
        %v1475 = vld [vmem:[%s1469 + $0x28] sm:$0xff]
        %v1476 = vld [vmem:[%s1469 + $0x30] sm:$0xff]
        %v1477 = vld [vmem:[%s1469 + $0x38] sm:$0xff]
        %vm1478 = vcmask 1043456
        %v1479 = vrot.slane %v1081, 4
        %v1480 = vrot.slane %v1082, 4
        %v1481 = vsel %vm1478, %v1479, %v1480
        %v1482 = vsel %vm1106, %v1481, 0
        %1484 = vmatpush.msra.mxu0 0.0
        %1485 = vmatpush.msra.mxu0 0.0
        %1486 = vmatpush.msra.mxu0 0.0
        %1487 = vmatpush.msra.mxu0 0.0
        %1488 = vmatpush.msra.mxu0 0.0
        %1489 = vmatpush.msra.mxu0 0.0
        %1490 = vmatpush.msra.mxu0 0.0
        %1491 = vmatpush.msra.mxu0 0.0
        %1492 = vmatpush.msra.mxu0 0.0
        %1493 = vmatpush.msra.mxu0 0.0
        %1494 = vmatpush.msra.mxu0 0.0
        %1495 = vmatpush.msra.mxu0 0.0
        %1496 = vmatpush.msra.mxu0 0.0
        %1497 = vmatpush.msra.mxu0 0.0
        %1498 = vmatpush.msra.mxu0 %v1474
        %1499 = vmatpush.msra.mxu0 %v1470
        %1500 = vmatmul.f32.gmra.mxu0 %v1482
        %v1501 = vpop.f32.mrf.mxu0
        %v1502 = vadd.f32 0.0, %v1501
        %1503 = vdwg.mxu0
        %1504 = vmatpush.msra.mxu0 0.0
        %1505 = vmatpush.msra.mxu0 0.0
        %1506 = vmatpush.msra.mxu0 0.0
        %1507 = vmatpush.msra.mxu0 0.0
        %1508 = vmatpush.msra.mxu0 0.0
        %1509 = vmatpush.msra.mxu0 0.0
        %1510 = vmatpush.msra.mxu0 0.0
        %1511 = vmatpush.msra.mxu0 0.0
        %1512 = vmatpush.msra.mxu0 0.0
        %1513 = vmatpush.msra.mxu0 0.0
        %1514 = vmatpush.msra.mxu0 0.0
        %1515 = vmatpush.msra.mxu0 0.0
        %1516 = vmatpush.msra.mxu0 0.0
        %1517 = vmatpush.msra.mxu0 0.0
        %1518 = vmatpush.msra.mxu0 %v1475
        %1519 = vmatpush.msra.mxu0 %v1471
        %1520 = vmatmul.f32.gmra.mxu0 %v1482
        %v1521 = vpop.f32.mrf.mxu0
        %v1522 = vadd.f32 0.0, %v1521
        %1523 = vdwg.mxu0
        %1524 = vmatpush.msra.mxu0 0.0
        %1525 = vmatpush.msra.mxu0 0.0
        %1526 = vmatpush.msra.mxu0 0.0
        %1527 = vmatpush.msra.mxu0 0.0
        %1528 = vmatpush.msra.mxu0 0.0
        %1529 = vmatpush.msra.mxu0 0.0
        %1530 = vmatpush.msra.mxu0 0.0
        %1531 = vmatpush.msra.mxu0 0.0
        %1532 = vmatpush.msra.mxu0 0.0
        %1533 = vmatpush.msra.mxu0 0.0
        %1534 = vmatpush.msra.mxu0 0.0
        %1535 = vmatpush.msra.mxu0 0.0
        %1536 = vmatpush.msra.mxu0 0.0
        %1537 = vmatpush.msra.mxu0 0.0
        %1538 = vmatpush.msra.mxu0 %v1476
        %1539 = vmatpush.msra.mxu0 %v1472
        %1540 = vmatmul.f32.gmra.mxu0 %v1482
        %v1541 = vpop.f32.mrf.mxu0
        %v1542 = vadd.f32 0.0, %v1541
        %1543 = vdwg.mxu0
        %1544 = vmatpush.msra.mxu0 0.0
        %1545 = vmatpush.msra.mxu0 0.0
        %1546 = vmatpush.msra.mxu0 0.0
        %1547 = vmatpush.msra.mxu0 0.0
        %1548 = vmatpush.msra.mxu0 0.0
        %1549 = vmatpush.msra.mxu0 0.0
        %1550 = vmatpush.msra.mxu0 0.0
        %1551 = vmatpush.msra.mxu0 0.0
        %1552 = vmatpush.msra.mxu0 0.0
        %1553 = vmatpush.msra.mxu0 0.0
        %1554 = vmatpush.msra.mxu0 0.0
        %1555 = vmatpush.msra.mxu0 0.0
        %1556 = vmatpush.msra.mxu0 0.0
        %1557 = vmatpush.msra.mxu0 0.0
        %1558 = vmatpush.msra.mxu0 %v1477
        %1559 = vmatpush.msra.mxu0 %v1473
        %1560 = vmatmul.f32.gmra.mxu0 %v1482
        %v1561 = vpop.f32.mrf.mxu0
        %v1562 = vadd.f32 0.0, %v1561
        %1563 = vdwg.mxu0
        %v1564 = vadd.f32 %v1465, %v1502
        %v1565 = vadd.f32 %v1466, %v1522
        %v1566 = vadd.f32 %v1467, %v1542
        %v1567 = vadd.f32 %v1468, %v1562
        %v1568 = vld [vmem:[#allocation7] sm:$0xf]
        %v1570 = vperm.slane %v1568, 0
        %v1571 = vperm.slane %v1568, 1
        %v1572 = vperm.slane %v1568, 2
        %v1573 = vperm.slane %v1568, 3
        %v1578 = vadd.f32 %v1564, %v1570
        %v1579 = vadd.f32 %v1565, %v1571
        %v1580 = vadd.f32 %v1566, %v1572
        %v1581 = vadd.f32 %v1567, %v1573
        %v1582 = vmul.f32 %v1578, 0.5
        %v1583 = vmul.f32 %v1579, 0.5
        %v1584 = vmul.f32 %v1580, 0.5
        %v1585 = vmul.f32 %v1581, 0.5
        %v1586 = vmul.f32 %v1578, 0.70710677
        %v1587 = vmul.f32 %v1579, 0.70710677
        %v1588 = vmul.f32 %v1580, 0.70710677
        %v1589 = vmul.f32 %v1581, 0.70710677
        %v1590 = vmul.f32 %v1586, %v1586
        %v1591 = vmin.f32 16.0, %v1590
        %v1592 = vmul.f32 %v1591, 2.1237322e-06
        %v1593 = vadd.f32 %v1592, 0.00028619796
        %v1594 = vmul.f32 %v1591, %v1593
        %v1595 = vadd.f32 %v1594, 0.0036580483
        %v1596 = vmul.f32 %v1591, %v1595
        %v1597 = vadd.f32 %v1596, 0.05243302
        %v1598 = vmul.f32 %v1591, %v1597
        %v1599 = vadd.f32 %v1598, 0.18741608
        %v1600 = vmul.f32 %v1591, %v1599
        %v1601 = vadd.f32 %v1600, 1.1283791
        %v1602 = vmul.f32 %v1586, %v1601
        %v1603 = vmul.f32 %v1591, 3.8918573e-05
        %v1604 = vadd.f32 %v1603, 0.001143296
        %v1605 = vmul.f32 %v1591, %v1604
        %v1606 = vadd.f32 %v1605, 0.014752088
        %v1607 = vmul.f32 %v1591, %v1606
        %v1608 = vadd.f32 %v1607, 0.112945676
        %v1609 = vmul.f32 %v1591, %v1608
        %v1610 = vadd.f32 %v1609, 0.4994258
        %v1611 = vmul.f32 %v1591, %v1610
        %v1612 = vadd.f32 %v1611, 1.0
        %v1613 = vrcp.pop %v1612
        %v1614 = vmul.f32 %v1612, %v1613
        %v1615 = vsub.f32 1.0, %v1614
        %v1616 = vmul.f32 %v1613, %v1615
        %v1617 = vadd.f32 %v1613, %v1616
        %vm1618 = vweird.f32 %v1612
        %vm1619 = vweird.f32 %v1613
        %vm1620 = vmor %vm1618, %vm1619
        %v1621 = vsel %vm1620, %v1613, %v1617
        %v1622 = vand.u32 2147483647, %v1612
        %vm1623 = vcmp.eq.f32.partialorder %v1622, 8.507059e+37
        %v1624 = vand.u32 %v1612, 2147483648
        %v1625 = vor.u32 1.1754944e-38, %v1624
        %v1626 = vsel %vm1623, %v1625, %v1621
        %v1627 = vmul.f32 %v1602, %v1626
        %v1628 = vmin.f32 %v1627, 1.0
        %v1629 = vmax.f32 %v1628, -1.0
        %v1630 = vmul.f32 %v1587, %v1587
        %v1631 = vmin.f32 16.0, %v1630
        %v1632 = vmul.f32 %v1631, 2.1237322e-06
        %v1633 = vadd.f32 %v1632, 0.00028619796
        %v1634 = vmul.f32 %v1631, %v1633
        %v1635 = vadd.f32 %v1634, 0.0036580483
        %v1636 = vmul.f32 %v1631, %v1635
        %v1637 = vadd.f32 %v1636, 0.05243302
        %v1638 = vmul.f32 %v1631, %v1637
        %v1639 = vadd.f32 %v1638, 0.18741608
        %v1640 = vmul.f32 %v1631, %v1639
        %v1641 = vadd.f32 %v1640, 1.1283791
        %v1642 = vmul.f32 %v1587, %v1641
        %v1643 = vmul.f32 %v1631, 3.8918573e-05
        %v1644 = vadd.f32 %v1643, 0.001143296
        %v1645 = vmul.f32 %v1631, %v1644
        %v1646 = vadd.f32 %v1645, 0.014752088
        %v1647 = vmul.f32 %v1631, %v1646
        %v1648 = vadd.f32 %v1647, 0.112945676
        %v1649 = vmul.f32 %v1631, %v1648
        %v1650 = vadd.f32 %v1649, 0.4994258
        %v1651 = vmul.f32 %v1631, %v1650
        %v1652 = vadd.f32 %v1651, 1.0
        %v1653 = vrcp.pop %v1652
        %v1654 = vmul.f32 %v1652, %v1653
        %v1655 = vsub.f32 1.0, %v1654
        %v1656 = vmul.f32 %v1653, %v1655
        %v1657 = vadd.f32 %v1653, %v1656
        %vm1658 = vweird.f32 %v1652
        %vm1659 = vweird.f32 %v1653
        %vm1660 = vmor %vm1658, %vm1659
        %v1661 = vsel %vm1660, %v1653, %v1657
        %v1662 = vand.u32 2147483647, %v1652
        %vm1663 = vcmp.eq.f32.partialorder %v1662, 8.507059e+37
        %v1664 = vand.u32 %v1652, 2147483648
        %v1665 = vor.u32 1.1754944e-38, %v1664
        %v1666 = vsel %vm1663, %v1665, %v1661
        %v1667 = vmul.f32 %v1642, %v1666
        %v1668 = vmin.f32 %v1667, 1.0
        %v1669 = vmax.f32 %v1668, -1.0
        %v1670 = vmul.f32 %v1588, %v1588
        %v1671 = vmin.f32 16.0, %v1670
        %v1672 = vmul.f32 %v1671, 2.1237322e-06
        %v1673 = vadd.f32 %v1672, 0.00028619796
        %v1674 = vmul.f32 %v1671, %v1673
        %v1675 = vadd.f32 %v1674, 0.0036580483
        %v1676 = vmul.f32 %v1671, %v1675
        %v1677 = vadd.f32 %v1676, 0.05243302
        %v1678 = vmul.f32 %v1671, %v1677
        %v1679 = vadd.f32 %v1678, 0.18741608
        %v1680 = vmul.f32 %v1671, %v1679
        %v1681 = vadd.f32 %v1680, 1.1283791
        %v1682 = vmul.f32 %v1588, %v1681
        %v1683 = vmul.f32 %v1671, 3.8918573e-05
        %v1684 = vadd.f32 %v1683, 0.001143296
        %v1685 = vmul.f32 %v1671, %v1684
        %v1686 = vadd.f32 %v1685, 0.014752088
        %v1687 = vmul.f32 %v1671, %v1686
        %v1688 = vadd.f32 %v1687, 0.112945676
        %v1689 = vmul.f32 %v1671, %v1688
        %v1690 = vadd.f32 %v1689, 0.4994258
        %v1691 = vmul.f32 %v1671, %v1690
        %v1692 = vadd.f32 %v1691, 1.0
        %v1693 = vrcp.pop %v1692
        %v1694 = vmul.f32 %v1692, %v1693
        %v1695 = vsub.f32 1.0, %v1694
        %v1696 = vmul.f32 %v1693, %v1695
        %v1697 = vadd.f32 %v1693, %v1696
        %vm1698 = vweird.f32 %v1692
        %vm1699 = vweird.f32 %v1693
        %vm1700 = vmor %vm1698, %vm1699
        %v1701 = vsel %vm1700, %v1693, %v1697
        %v1702 = vand.u32 2147483647, %v1692
        %vm1703 = vcmp.eq.f32.partialorder %v1702, 8.507059e+37
        %v1704 = vand.u32 %v1692, 2147483648
        %v1705 = vor.u32 1.1754944e-38, %v1704
        %v1706 = vsel %vm1703, %v1705, %v1701
        %v1707 = vmul.f32 %v1682, %v1706
        %v1708 = vmin.f32 %v1707, 1.0
        %v1709 = vmax.f32 %v1708, -1.0
        %v1710 = vmul.f32 %v1589, %v1589
        %v1711 = vmin.f32 16.0, %v1710
        %v1712 = vmul.f32 %v1711, 2.1237322e-06
        %v1713 = vadd.f32 %v1712, 0.00028619796
        %v1714 = vmul.f32 %v1711, %v1713
        %v1715 = vadd.f32 %v1714, 0.0036580483
        %v1716 = vmul.f32 %v1711, %v1715
        %v1717 = vadd.f32 %v1716, 0.05243302
        %v1718 = vmul.f32 %v1711, %v1717
        %v1719 = vadd.f32 %v1718, 0.18741608
        %v1720 = vmul.f32 %v1711, %v1719
        %v1721 = vadd.f32 %v1720, 1.1283791
        %v1722 = vmul.f32 %v1589, %v1721
        %v1723 = vmul.f32 %v1711, 3.8918573e-05
        %v1724 = vadd.f32 %v1723, 0.001143296
        %v1725 = vmul.f32 %v1711, %v1724
        %v1726 = vadd.f32 %v1725, 0.014752088
        %v1727 = vmul.f32 %v1711, %v1726
        %v1728 = vadd.f32 %v1727, 0.112945676
        %v1729 = vmul.f32 %v1711, %v1728
        %v1730 = vadd.f32 %v1729, 0.4994258
        %v1731 = vmul.f32 %v1711, %v1730
        %v1732 = vadd.f32 %v1731, 1.0
        %v1733 = vrcp.pop %v1732
        %v1734 = vmul.f32 %v1732, %v1733
        %v1735 = vsub.f32 1.0, %v1734
        %v1736 = vmul.f32 %v1733, %v1735
        %v1737 = vadd.f32 %v1733, %v1736
        %vm1738 = vweird.f32 %v1732
        %vm1739 = vweird.f32 %v1733
        %vm1740 = vmor %vm1738, %vm1739
        %v1741 = vsel %vm1740, %v1733, %v1737
        %v1742 = vand.u32 2147483647, %v1732
        %vm1743 = vcmp.eq.f32.partialorder %v1742, 8.507059e+37
        %v1744 = vand.u32 %v1732, 2147483648
        %v1745 = vor.u32 1.1754944e-38, %v1744
        %v1746 = vsel %vm1743, %v1745, %v1741
        %v1747 = vmul.f32 %v1722, %v1746
        %v1748 = vmin.f32 %v1747, 1.0
        %v1749 = vmax.f32 %v1748, -1.0
        %v1750 = vadd.f32 %v1629, 1.0
        %v1751 = vadd.f32 %v1669, 1.0
        %v1752 = vadd.f32 %v1709, 1.0
        %v1753 = vadd.f32 %v1749, 1.0
        %v1754 = vmul.f32 %v1582, %v1750
        %v1755 = vmul.f32 %v1583, %v1751
        %v1756 = vmul.f32 %v1584, %v1752
        %v1757 = vmul.f32 %v1585, %v1753
        %v1758 = vmax.f32 %v1754, %v1756
        %v1759 = vmax.f32 %v1755, %v1757
        %v1762 = vrot.slane %v1758, 6
        %v1763 = vrot.slane %v1759, 6
        %1766 = vst [vmem:[#allocation2] sm:$0xfc] %v1762
        %1767 = vst [vmem:[#allocation2 + $0x8] sm:$0xfc] %v1763
        %1768 = vst [vmem:[#allocation2 + $0x10] sm:$0x3] %v1762
        %1769 = vst [vmem:[#allocation2 + $0x18] sm:$0x3] %v1763
        %v1770 = vld [vmem:[#allocation2] sm:$0xff]
        %v1771 = vld [vmem:[#allocation2 + $0x8] sm:$0xff]
        %v1772 = vld [vmem:[#allocation2 + $0x10] sm:$0xf]
        %v1773 = vld [vmem:[#allocation2 + $0x18] sm:$0xf]
        %v1774 = vld [vmem:[#allocation9] sm:$0xff]
        %v1775 = vld [vmem:[#allocation9 + $0x8] sm:$0xff]
        %v1776 = vld [vmem:[#allocation9 + $0x10] sm:$0xff]
        %v1777 = vld [vmem:[#allocation9 + $0x18] sm:$0xff]
        %v1778 = vld [vmem:[#allocation9 + $0x20] sm:$0xff]
        %v1779 = vld [vmem:[#allocation9 + $0x28] sm:$0xff]
        %v1780 = vld [vmem:[#allocation9 + $0x30] sm:$0xff]
        %v1781 = vld [vmem:[#allocation9 + $0x38] sm:$0xff]
        %v1782 = vld [vmem:[#allocation9 + $0x40] sm:$0xff]
        %v1783 = vld [vmem:[#allocation9 + $0x48] sm:$0xff]
        %v1784 = vld [vmem:[#allocation9 + $0x50] sm:$0xff]
        %v1785 = vld [vmem:[#allocation9 + $0x58] sm:$0xff]
        %v1786 = vld [vmem:[#allocation9 + $0x60] sm:$0xff]
        %v1787 = vld [vmem:[#allocation9 + $0x68] sm:$0xff]
        %v1788 = vld [vmem:[#allocation9 + $0x70] sm:$0xff]
        %v1789 = vld [vmem:[#allocation9 + $0x78] sm:$0xff]
        %v1790 = vld [vmem:[#allocation9 + $0x80] sm:$0xff]
        %v1791 = vld [vmem:[#allocation9 + $0x88] sm:$0xff]
        %v1792 = vld [vmem:[#allocation9 + $0x90] sm:$0xff]
        %v1793 = vld [vmem:[#allocation9 + $0x98] sm:$0xff]
        %v1794 = vld [vmem:[#allocation9 + $0xa0] sm:$0xff]
        %v1795 = vld [vmem:[#allocation9 + $0xa8] sm:$0xff]
        %v1796 = vld [vmem:[#allocation9 + $0xb0] sm:$0xff]
        %v1797 = vld [vmem:[#allocation9 + $0xb8] sm:$0xff]
        %v1798 = vld [vmem:[#allocation9 + $0xc0] sm:$0xff]
        %v1799 = vld [vmem:[#allocation9 + $0xc8] sm:$0xff]
        %v1800 = vld [vmem:[#allocation9 + $0xd0] sm:$0xff]
        %v1801 = vld [vmem:[#allocation9 + $0xd8] sm:$0xff]
        %v1802 = vld [vmem:[#allocation9 + $0xe0] sm:$0xff]
        %v1803 = vld [vmem:[#allocation9 + $0xe8] sm:$0xff]
        %v1804 = vld [vmem:[#allocation9 + $0xf0] sm:$0xff]
        %v1805 = vld [vmem:[#allocation9 + $0xf8] sm:$0xff]
        %v1806 = vld [vmem:[#allocation9 + $0x100] sm:$0xff]
        %v1807 = vld [vmem:[#allocation9 + $0x108] sm:$0xff]
        %v1808 = vld [vmem:[#allocation9 + $0x110] sm:$0xff]
        %v1809 = vld [vmem:[#allocation9 + $0x118] sm:$0xff]
        %v1810 = vld [vmem:[#allocation9 + $0x120] sm:$0xff]
        %v1811 = vld [vmem:[#allocation9 + $0x128] sm:$0xff]
        %v1812 = vld [vmem:[#allocation9 + $0x130] sm:$0xff]
        %v1813 = vld [vmem:[#allocation9 + $0x138] sm:$0xff]
        %v1814 = vld [vmem:[#allocation9 + $0x140] sm:$0xff]
        %v1815 = vld [vmem:[#allocation9 + $0x148] sm:$0xff]
        %v1816 = vld [vmem:[#allocation9 + $0x150] sm:$0xff]
        %v1817 = vld [vmem:[#allocation9 + $0x158] sm:$0xff]
        %v1818 = vld [vmem:[#allocation9 + $0x160] sm:$0xff]
        %v1819 = vld [vmem:[#allocation9 + $0x168] sm:$0xff]
        %v1820 = vld [vmem:[#allocation9 + $0x170] sm:$0xff]
        %v1821 = vld [vmem:[#allocation9 + $0x178] sm:$0xff]
        %v1822 = vld [vmem:[#allocation9 + $0x180] sm:$0xff]
        %v1823 = vld [vmem:[#allocation9 + $0x188] sm:$0xff]
        %v1824 = vld [vmem:[#allocation9 + $0x190] sm:$0xff]
        %v1825 = vld [vmem:[#allocation9 + $0x198] sm:$0xff]
        %v1826 = vld [vmem:[#allocation9 + $0x1a0] sm:$0xff]
        %v1827 = vld [vmem:[#allocation9 + $0x1a8] sm:$0xff]
        %v1828 = vld [vmem:[#allocation9 + $0x1b0] sm:$0xff]
        %v1829 = vld [vmem:[#allocation9 + $0x1b8] sm:$0xff]
        %v1830 = vld [vmem:[#allocation9 + $0x1c0] sm:$0xff]
        %v1831 = vld [vmem:[#allocation9 + $0x1c8] sm:$0xff]
        %v1832 = vld [vmem:[#allocation9 + $0x1d0] sm:$0xff]
        %v1833 = vld [vmem:[#allocation9 + $0x1d8] sm:$0xff]
        %v1834 = vld [vmem:[#allocation9 + $0x1e0] sm:$0xff]
        %v1835 = vld [vmem:[#allocation9 + $0x1e8] sm:$0xff]
        %v1836 = vld [vmem:[#allocation9 + $0x1f0] sm:$0xff]
        %v1837 = vld [vmem:[#allocation9 + $0x1f8] sm:$0xff]
        %v1838 = vld [vmem:[#allocation9 + $0x200] sm:$0xff]
        %v1839 = vld [vmem:[#allocation9 + $0x208] sm:$0xff]
        %v1840 = vld [vmem:[#allocation9 + $0x210] sm:$0xff]
        %v1841 = vld [vmem:[#allocation9 + $0x218] sm:$0xff]
        %v1842 = vld [vmem:[#allocation9 + $0x220] sm:$0xff]
        %v1843 = vld [vmem:[#allocation9 + $0x228] sm:$0xff]
        %v1844 = vld [vmem:[#allocation9 + $0x230] sm:$0xff]
        %v1845 = vld [vmem:[#allocation9 + $0x238] sm:$0xff]
        %v1846 = vld [vmem:[#allocation9 + $0x240] sm:$0xff]
        %v1847 = vld [vmem:[#allocation9 + $0x248] sm:$0xff]
        %v1848 = vld [vmem:[#allocation9 + $0x250] sm:$0xff]
        %v1849 = vld [vmem:[#allocation9 + $0x258] sm:$0xff]
        %v1850 = vld [vmem:[#allocation9 + $0x260] sm:$0xff]
        %v1851 = vld [vmem:[#allocation9 + $0x268] sm:$0xff]
        %v1852 = vld [vmem:[#allocation9 + $0x270] sm:$0xff]
        %v1853 = vld [vmem:[#allocation9 + $0x278] sm:$0xff]
        %v1854 = vld [vmem:[#allocation9 + $0x280] sm:$0xff]
        %v1855 = vld [vmem:[#allocation9 + $0x288] sm:$0xff]
        %v1856 = vld [vmem:[#allocation9 + $0x290] sm:$0xff]
        %v1857 = vld [vmem:[#allocation9 + $0x298] sm:$0xff]
        %v1858 = vld [vmem:[#allocation9 + $0x2a0] sm:$0xff]
        %v1859 = vld [vmem:[#allocation9 + $0x2a8] sm:$0xff]
        %v1860 = vld [vmem:[#allocation9 + $0x2b0] sm:$0xff]
        %v1861 = vld [vmem:[#allocation9 + $0x2b8] sm:$0xff]
        %v1862 = vld [vmem:[#allocation9 + $0x2c0] sm:$0xff]
        %v1863 = vld [vmem:[#allocation9 + $0x2c8] sm:$0xff]
        %v1864 = vld [vmem:[#allocation9 + $0x2d0] sm:$0xff]
        %v1865 = vld [vmem:[#allocation9 + $0x2d8] sm:$0xff]
        %v1866 = vld [vmem:[#allocation9 + $0x2e0] sm:$0xff]
        %v1867 = vld [vmem:[#allocation9 + $0x2e8] sm:$0xff]
        %v1868 = vld [vmem:[#allocation9 + $0x2f0] sm:$0xff]
        %v1869 = vld [vmem:[#allocation9 + $0x2f8] sm:$0xff]
        %v1870 = vld [vmem:[#allocation9 + $0x300] sm:$0xff]
        %v1871 = vld [vmem:[#allocation9 + $0x308] sm:$0xff]
        %v1872 = vld [vmem:[#allocation9 + $0x310] sm:$0xff]
        %v1873 = vld [vmem:[#allocation9 + $0x318] sm:$0xff]
        %v1874 = vld [vmem:[#allocation9 + $0x320] sm:$0xff]
        %v1875 = vld [vmem:[#allocation9 + $0x328] sm:$0xff]
        %v1876 = vld [vmem:[#allocation9 + $0x330] sm:$0xff]
        %v1877 = vld [vmem:[#allocation9 + $0x338] sm:$0xff]
        %v1878 = vld [vmem:[#allocation9 + $0x340] sm:$0xff]
        %v1879 = vld [vmem:[#allocation9 + $0x348] sm:$0xff]
        %v1880 = vld [vmem:[#allocation9 + $0x350] sm:$0xff]
        %v1881 = vld [vmem:[#allocation9 + $0x358] sm:$0xff]
        %v1882 = vld [vmem:[#allocation9 + $0x360] sm:$0xff]
        %v1883 = vld [vmem:[#allocation9 + $0x368] sm:$0xff]
        %v1884 = vld [vmem:[#allocation9 + $0x370] sm:$0xff]
        %v1885 = vld [vmem:[#allocation9 + $0x378] sm:$0xff]
        %v1886 = vld [vmem:[#allocation9 + $0x380] sm:$0xff]
        %v1887 = vld [vmem:[#allocation9 + $0x388] sm:$0xff]
        %v1888 = vld [vmem:[#allocation9 + $0x390] sm:$0xff]
        %v1889 = vld [vmem:[#allocation9 + $0x398] sm:$0xff]
        %v1890 = vld [vmem:[#allocation9 + $0x3a0] sm:$0xff]
        %v1891 = vld [vmem:[#allocation9 + $0x3a8] sm:$0xff]
        %v1892 = vld [vmem:[#allocation9 + $0x3b0] sm:$0xff]
        %v1893 = vld [vmem:[#allocation9 + $0x3b8] sm:$0xff]
        %v1894 = vld [vmem:[#allocation9 + $0x3c0] sm:$0xff]
        %v1895 = vld [vmem:[#allocation9 + $0x3c8] sm:$0xff]
        %v1896 = vld [vmem:[#allocation9 + $0x3d0] sm:$0xff]
        %v1897 = vld [vmem:[#allocation9 + $0x3d8] sm:$0xff]
        %v1898 = vld [vmem:[#allocation9 + $0x3e0] sm:$0xff]
        %v1899 = vld [vmem:[#allocation9 + $0x3e8] sm:$0xff]
        %v1900 = vld [vmem:[#allocation9 + $0x3f0] sm:$0xff]
        %v1901 = vld [vmem:[#allocation9 + $0x3f8] sm:$0xff]
        %s1902 = scalar_lea.vmem [#allocation9], 1024
        %v1903 = vld [vmem:[%s1902] sm:$0xff]
        %v1904 = vld [vmem:[%s1902 + $0x8] sm:$0xff]
        %v1905 = vld [vmem:[%s1902 + $0x10] sm:$0xff]
        %v1906 = vld [vmem:[%s1902 + $0x18] sm:$0xff]
        %v1907 = vld [vmem:[%s1902 + $0x20] sm:$0xff]
        %v1908 = vld [vmem:[%s1902 + $0x28] sm:$0xff]
        %v1909 = vld [vmem:[%s1902 + $0x30] sm:$0xff]
        %v1910 = vld [vmem:[%s1902 + $0x38] sm:$0xff]
        %v1911 = vld [vmem:[%s1902 + $0x40] sm:$0xff]
        %v1912 = vld [vmem:[%s1902 + $0x48] sm:$0xff]
        %v1913 = vld [vmem:[%s1902 + $0x50] sm:$0xff]
        %v1914 = vld [vmem:[%s1902 + $0x58] sm:$0xff]
        %v1915 = vld [vmem:[%s1902 + $0x60] sm:$0xff]
        %v1916 = vld [vmem:[%s1902 + $0x68] sm:$0xff]
        %v1917 = vld [vmem:[%s1902 + $0x70] sm:$0xff]
        %v1918 = vld [vmem:[%s1902 + $0x78] sm:$0xff]
        %v1919 = vld [vmem:[%s1902 + $0x80] sm:$0xff]
        %v1920 = vld [vmem:[%s1902 + $0x88] sm:$0xff]
        %v1921 = vld [vmem:[%s1902 + $0x90] sm:$0xff]
        %v1922 = vld [vmem:[%s1902 + $0x98] sm:$0xff]
        %v1923 = vld [vmem:[%s1902 + $0xa0] sm:$0xff]
        %v1924 = vld [vmem:[%s1902 + $0xa8] sm:$0xff]
        %v1925 = vld [vmem:[%s1902 + $0xb0] sm:$0xff]
        %v1926 = vld [vmem:[%s1902 + $0xb8] sm:$0xff]
        %v1927 = vld [vmem:[%s1902 + $0xc0] sm:$0xff]
        %v1928 = vld [vmem:[%s1902 + $0xc8] sm:$0xff]
        %v1929 = vld [vmem:[%s1902 + $0xd0] sm:$0xff]
        %v1930 = vld [vmem:[%s1902 + $0xd8] sm:$0xff]
        %v1931 = vld [vmem:[%s1902 + $0xe0] sm:$0xff]
        %v1932 = vld [vmem:[%s1902 + $0xe8] sm:$0xff]
        %v1933 = vld [vmem:[%s1902 + $0xf0] sm:$0xff]
        %v1934 = vld [vmem:[%s1902 + $0xf8] sm:$0xff]
        %v1935 = vld [vmem:[%s1902 + $0x100] sm:$0xff]
        %v1936 = vld [vmem:[%s1902 + $0x108] sm:$0xff]
        %v1937 = vld [vmem:[%s1902 + $0x110] sm:$0xff]
        %v1938 = vld [vmem:[%s1902 + $0x118] sm:$0xff]
        %v1939 = vld [vmem:[%s1902 + $0x120] sm:$0xff]
        %v1940 = vld [vmem:[%s1902 + $0x128] sm:$0xff]
        %v1941 = vld [vmem:[%s1902 + $0x130] sm:$0xff]
        %v1942 = vld [vmem:[%s1902 + $0x138] sm:$0xff]
        %v1943 = vld [vmem:[%s1902 + $0x140] sm:$0xff]
        %v1944 = vld [vmem:[%s1902 + $0x148] sm:$0xff]
        %v1945 = vld [vmem:[%s1902 + $0x150] sm:$0xff]
        %v1946 = vld [vmem:[%s1902 + $0x158] sm:$0xff]
        %v1947 = vld [vmem:[%s1902 + $0x160] sm:$0xff]
        %v1948 = vld [vmem:[%s1902 + $0x168] sm:$0xff]
        %v1949 = vld [vmem:[%s1902 + $0x170] sm:$0xff]
        %v1950 = vld [vmem:[%s1902 + $0x178] sm:$0xff]
        %v1951 = vld [vmem:[%s1902 + $0x180] sm:$0xff]
        %v1952 = vld [vmem:[%s1902 + $0x188] sm:$0xff]
        %v1953 = vld [vmem:[%s1902 + $0x190] sm:$0xff]
        %v1954 = vld [vmem:[%s1902 + $0x198] sm:$0xff]
        %v1955 = vld [vmem:[%s1902 + $0x1a0] sm:$0xff]
        %v1956 = vld [vmem:[%s1902 + $0x1a8] sm:$0xff]
        %v1957 = vld [vmem:[%s1902 + $0x1b0] sm:$0xff]
        %v1958 = vld [vmem:[%s1902 + $0x1b8] sm:$0xff]
        %v1959 = vld [vmem:[%s1902 + $0x1c0] sm:$0xff]
        %v1960 = vld [vmem:[%s1902 + $0x1c8] sm:$0xff]
        %v1961 = vld [vmem:[%s1902 + $0x1d0] sm:$0xff]
        %v1962 = vld [vmem:[%s1902 + $0x1d8] sm:$0xff]
        %v1963 = vld [vmem:[%s1902 + $0x1e0] sm:$0xff]
        %v1964 = vld [vmem:[%s1902 + $0x1e8] sm:$0xff]
        %v1965 = vld [vmem:[%s1902 + $0x1f0] sm:$0xff]
        %v1966 = vld [vmem:[%s1902 + $0x1f8] sm:$0xff]
        %v1967 = vld [vmem:[%s1902 + $0x200] sm:$0xff]
        %v1968 = vld [vmem:[%s1902 + $0x208] sm:$0xff]
        %v1969 = vld [vmem:[%s1902 + $0x210] sm:$0xff]
        %v1970 = vld [vmem:[%s1902 + $0x218] sm:$0xff]
        %v1971 = vld [vmem:[%s1902 + $0x220] sm:$0xff]
        %v1972 = vld [vmem:[%s1902 + $0x228] sm:$0xff]
        %v1973 = vld [vmem:[%s1902 + $0x230] sm:$0xff]
        %v1974 = vld [vmem:[%s1902 + $0x238] sm:$0xff]
        %v1975 = vld [vmem:[%s1902 + $0x240] sm:$0xff]
        %v1976 = vld [vmem:[%s1902 + $0x248] sm:$0xff]
        %v1977 = vld [vmem:[%s1902 + $0x250] sm:$0xff]
        %v1978 = vld [vmem:[%s1902 + $0x258] sm:$0xff]
        %v1979 = vld [vmem:[%s1902 + $0x260] sm:$0xff]
        %v1980 = vld [vmem:[%s1902 + $0x268] sm:$0xff]
        %v1981 = vld [vmem:[%s1902 + $0x270] sm:$0xff]
        %v1982 = vld [vmem:[%s1902 + $0x278] sm:$0xff]
        %v1983 = vld [vmem:[%s1902 + $0x280] sm:$0xff]
        %v1984 = vld [vmem:[%s1902 + $0x288] sm:$0xff]
        %v1985 = vld [vmem:[%s1902 + $0x290] sm:$0xff]
        %v1986 = vld [vmem:[%s1902 + $0x298] sm:$0xff]
        %v1987 = vld [vmem:[%s1902 + $0x2a0] sm:$0xff]
        %v1988 = vld [vmem:[%s1902 + $0x2a8] sm:$0xff]
        %v1989 = vld [vmem:[%s1902 + $0x2b0] sm:$0xff]
        %v1990 = vld [vmem:[%s1902 + $0x2b8] sm:$0xff]
        %v1991 = vld [vmem:[%s1902 + $0x2c0] sm:$0xff]
        %v1992 = vld [vmem:[%s1902 + $0x2c8] sm:$0xff]
        %v1993 = vld [vmem:[%s1902 + $0x2d0] sm:$0xff]
        %v1994 = vld [vmem:[%s1902 + $0x2d8] sm:$0xff]
        %v1995 = vld [vmem:[%s1902 + $0x2e0] sm:$0xff]
        %v1996 = vld [vmem:[%s1902 + $0x2e8] sm:$0xff]
        %v1997 = vld [vmem:[%s1902 + $0x2f0] sm:$0xff]
        %v1998 = vld [vmem:[%s1902 + $0x2f8] sm:$0xff]
        %v1999 = vld [vmem:[%s1902 + $0x300] sm:$0xff]
        %v2000 = vld [vmem:[%s1902 + $0x308] sm:$0xff]
        %v2001 = vld [vmem:[%s1902 + $0x310] sm:$0xff]
        %v2002 = vld [vmem:[%s1902 + $0x318] sm:$0xff]
        %v2003 = vld [vmem:[%s1902 + $0x320] sm:$0xff]
        %v2004 = vld [vmem:[%s1902 + $0x328] sm:$0xff]
        %v2005 = vld [vmem:[%s1902 + $0x330] sm:$0xff]
        %v2006 = vld [vmem:[%s1902 + $0x338] sm:$0xff]
        %v2007 = vld [vmem:[%s1902 + $0x340] sm:$0xff]
        %v2008 = vld [vmem:[%s1902 + $0x348] sm:$0xff]
        %v2009 = vld [vmem:[%s1902 + $0x350] sm:$0xff]
        %v2010 = vld [vmem:[%s1902 + $0x358] sm:$0xff]
        %v2011 = vld [vmem:[%s1902 + $0x360] sm:$0xff]
        %v2012 = vld [vmem:[%s1902 + $0x368] sm:$0xff]
        %v2013 = vld [vmem:[%s1902 + $0x370] sm:$0xff]
        %v2014 = vld [vmem:[%s1902 + $0x378] sm:$0xff]
        %v2015 = vld [vmem:[%s1902 + $0x380] sm:$0xff]
        %v2016 = vld [vmem:[%s1902 + $0x388] sm:$0xff]
        %v2017 = vld [vmem:[%s1902 + $0x390] sm:$0xff]
        %v2018 = vld [vmem:[%s1902 + $0x398] sm:$0xff]
        %v2019 = vld [vmem:[%s1902 + $0x3a0] sm:$0xff]
        %v2020 = vld [vmem:[%s1902 + $0x3a8] sm:$0xff]
        %v2021 = vld [vmem:[%s1902 + $0x3b0] sm:$0xff]
        %v2022 = vld [vmem:[%s1902 + $0x3b8] sm:$0xff]
        %v2023 = vld [vmem:[%s1902 + $0x3c0] sm:$0xff]
        %v2024 = vld [vmem:[%s1902 + $0x3c8] sm:$0xff]
        %v2025 = vld [vmem:[%s1902 + $0x3d0] sm:$0xff]
        %v2026 = vld [vmem:[%s1902 + $0x3d8] sm:$0xff]
        %v2027 = vld [vmem:[%s1902 + $0x3e0] sm:$0xff]
        %v2028 = vld [vmem:[%s1902 + $0x3e8] sm:$0xff]
        %v2029 = vld [vmem:[%s1902 + $0x3f0] sm:$0xff]
        %v2030 = vld [vmem:[%s1902 + $0x3f8] sm:$0xff]
        %v2035 = vrot.slane %v1770, 1
        %v2036 = vrot.slane %v1772, 1
        %v2037 = vsel %vm1102, %v2035, %v2036
        %v2038 = vrot.slane %v1771, 1
        %v2039 = vrot.slane %v1773, 1
        %v2040 = vsel %vm1102, %v2038, %v2039
        %2043 = vmatpush.msra.mxu0 %v1963
        %2044 = vmatpush.msra.mxu0 %v1959
        %2045 = vmatpush.msra.mxu0 %v1955
        %2046 = vmatpush.msra.mxu0 %v1951
        %2047 = vmatpush.msra.mxu0 %v1947
        %2048 = vmatpush.msra.mxu0 %v1943
        %2049 = vmatpush.msra.mxu0 %v1939
        %2050 = vmatpush.msra.mxu0 %v1935
        %2051 = vmatpush.msra.mxu0 %v1931
        %2052 = vmatpush.msra.mxu0 %v1927
        %2053 = vmatpush.msra.mxu0 %v1923
        %2054 = vmatpush.msra.mxu0 %v1919
        %2055 = vmatpush.msra.mxu0 %v1915
        %2056 = vmatpush.msra.mxu0 %v1911
        %2057 = vmatpush.msra.mxu0 %v1907
        %2058 = vmatpush.msra.mxu0 %v1903
        %2059 = vmatmul.f32.gmra.mxu0 %v2037
        %v2060 = vpop.f32.mrf.mxu0
        %v2061 = vadd.f32 0.0, %v2060
        %2062 = vdwg.mxu0
        %2063 = vmatpush.msra.mxu0 %v2027
        %2064 = vmatpush.msra.mxu0 %v2023
        %2065 = vmatpush.msra.mxu0 %v2019
        %2066 = vmatpush.msra.mxu0 %v2015
        %2067 = vmatpush.msra.mxu0 %v2011
        %2068 = vmatpush.msra.mxu0 %v2007
        %2069 = vmatpush.msra.mxu0 %v2003
        %2070 = vmatpush.msra.mxu0 %v1999
        %2071 = vmatpush.msra.mxu0 %v1995
        %2072 = vmatpush.msra.mxu0 %v1991
        %2073 = vmatpush.msra.mxu0 %v1987
        %2074 = vmatpush.msra.mxu0 %v1983
        %2075 = vmatpush.msra.mxu0 %v1979
        %2076 = vmatpush.msra.mxu0 %v1975
        %2077 = vmatpush.msra.mxu0 %v1971
        %2078 = vmatpush.msra.mxu0 %v1967
        %2079 = vmatmul.f32.gmra.mxu0 %v2040
        %v2080 = vpop.f32.mrf.mxu0
        %v2081 = vadd.f32 %v2061, %v2080
        %2082 = vdwg.mxu0
        %2083 = vmatpush.msra.mxu0 %v1964
        %2084 = vmatpush.msra.mxu0 %v1960
        %2085 = vmatpush.msra.mxu0 %v1956
        %2086 = vmatpush.msra.mxu0 %v1952
        %2087 = vmatpush.msra.mxu0 %v1948
        %2088 = vmatpush.msra.mxu0 %v1944
        %2089 = vmatpush.msra.mxu0 %v1940
        %2090 = vmatpush.msra.mxu0 %v1936
        %2091 = vmatpush.msra.mxu0 %v1932
        %2092 = vmatpush.msra.mxu0 %v1928
        %2093 = vmatpush.msra.mxu0 %v1924
        %2094 = vmatpush.msra.mxu0 %v1920
        %2095 = vmatpush.msra.mxu0 %v1916
        %2096 = vmatpush.msra.mxu0 %v1912
        %2097 = vmatpush.msra.mxu0 %v1908
        %2098 = vmatpush.msra.mxu0 %v1904
        %2099 = vmatmul.f32.gmra.mxu0 %v2037
        %v2100 = vpop.f32.mrf.mxu0
        %v2101 = vadd.f32 0.0, %v2100
        %2102 = vdwg.mxu0
        %2103 = vmatpush.msra.mxu0 %v2028
        %2104 = vmatpush.msra.mxu0 %v2024
        %2105 = vmatpush.msra.mxu0 %v2020
        %2106 = vmatpush.msra.mxu0 %v2016
        %2107 = vmatpush.msra.mxu0 %v2012
        %2108 = vmatpush.msra.mxu0 %v2008
        %2109 = vmatpush.msra.mxu0 %v2004
        %2110 = vmatpush.msra.mxu0 %v2000
        %2111 = vmatpush.msra.mxu0 %v1996
        %2112 = vmatpush.msra.mxu0 %v1992
        %2113 = vmatpush.msra.mxu0 %v1988
        %2114 = vmatpush.msra.mxu0 %v1984
        %2115 = vmatpush.msra.mxu0 %v1980
        %2116 = vmatpush.msra.mxu0 %v1976
        %2117 = vmatpush.msra.mxu0 %v1972
        %2118 = vmatpush.msra.mxu0 %v1968
        %2119 = vmatmul.f32.gmra.mxu0 %v2040
        %v2120 = vpop.f32.mrf.mxu0
        %v2121 = vadd.f32 %v2101, %v2120
        %2122 = vdwg.mxu0
        %2123 = vmatpush.msra.mxu0 %v1965
        %2124 = vmatpush.msra.mxu0 %v1961
        %2125 = vmatpush.msra.mxu0 %v1957
        %2126 = vmatpush.msra.mxu0 %v1953
        %2127 = vmatpush.msra.mxu0 %v1949
        %2128 = vmatpush.msra.mxu0 %v1945
        %2129 = vmatpush.msra.mxu0 %v1941
        %2130 = vmatpush.msra.mxu0 %v1937
        %2131 = vmatpush.msra.mxu0 %v1933
        %2132 = vmatpush.msra.mxu0 %v1929
        %2133 = vmatpush.msra.mxu0 %v1925
        %2134 = vmatpush.msra.mxu0 %v1921
        %2135 = vmatpush.msra.mxu0 %v1917
        %2136 = vmatpush.msra.mxu0 %v1913
        %2137 = vmatpush.msra.mxu0 %v1909
        %2138 = vmatpush.msra.mxu0 %v1905
        %2139 = vmatmul.f32.gmra.mxu0 %v2037
        %v2140 = vpop.f32.mrf.mxu0
        %v2141 = vadd.f32 0.0, %v2140
        %2142 = vdwg.mxu0
        %2143 = vmatpush.msra.mxu0 %v2029
        %2144 = vmatpush.msra.mxu0 %v2025
        %2145 = vmatpush.msra.mxu0 %v2021
        %2146 = vmatpush.msra.mxu0 %v2017
        %2147 = vmatpush.msra.mxu0 %v2013
        %2148 = vmatpush.msra.mxu0 %v2009
        %2149 = vmatpush.msra.mxu0 %v2005
        %2150 = vmatpush.msra.mxu0 %v2001
        %2151 = vmatpush.msra.mxu0 %v1997
        %2152 = vmatpush.msra.mxu0 %v1993
        %2153 = vmatpush.msra.mxu0 %v1989
        %2154 = vmatpush.msra.mxu0 %v1985
        %2155 = vmatpush.msra.mxu0 %v1981
        %2156 = vmatpush.msra.mxu0 %v1977
        %2157 = vmatpush.msra.mxu0 %v1973
        %2158 = vmatpush.msra.mxu0 %v1969
        %2159 = vmatmul.f32.gmra.mxu0 %v2040
        %v2160 = vpop.f32.mrf.mxu0
        %v2161 = vadd.f32 %v2141, %v2160
        %2162 = vdwg.mxu0
        %2163 = vmatpush.msra.mxu0 %v1966
        %2164 = vmatpush.msra.mxu0 %v1962
        %2165 = vmatpush.msra.mxu0 %v1958
        %2166 = vmatpush.msra.mxu0 %v1954
        %2167 = vmatpush.msra.mxu0 %v1950
        %2168 = vmatpush.msra.mxu0 %v1946
        %2169 = vmatpush.msra.mxu0 %v1942
        %2170 = vmatpush.msra.mxu0 %v1938
        %2171 = vmatpush.msra.mxu0 %v1934
        %2172 = vmatpush.msra.mxu0 %v1930
        %2173 = vmatpush.msra.mxu0 %v1926
        %2174 = vmatpush.msra.mxu0 %v1922
        %2175 = vmatpush.msra.mxu0 %v1918
        %2176 = vmatpush.msra.mxu0 %v1914
        %2177 = vmatpush.msra.mxu0 %v1910
        %2178 = vmatpush.msra.mxu0 %v1906
        %2179 = vmatmul.f32.gmra.mxu0 %v2037
        %v2180 = vpop.f32.mrf.mxu0
        %v2181 = vadd.f32 0.0, %v2180
        %2182 = vdwg.mxu0
        %2183 = vmatpush.msra.mxu0 %v2030
        %2184 = vmatpush.msra.mxu0 %v2026
        %2185 = vmatpush.msra.mxu0 %v2022
        %2186 = vmatpush.msra.mxu0 %v2018
        %2187 = vmatpush.msra.mxu0 %v2014
        %2188 = vmatpush.msra.mxu0 %v2010
        %2189 = vmatpush.msra.mxu0 %v2006
        %2190 = vmatpush.msra.mxu0 %v2002
        %2191 = vmatpush.msra.mxu0 %v1998
        %2192 = vmatpush.msra.mxu0 %v1994
        %2193 = vmatpush.msra.mxu0 %v1990
        %2194 = vmatpush.msra.mxu0 %v1986
        %2195 = vmatpush.msra.mxu0 %v1982
        %2196 = vmatpush.msra.mxu0 %v1978
        %2197 = vmatpush.msra.mxu0 %v1974
        %2198 = vmatpush.msra.mxu0 %v1970
        %2199 = vmatmul.f32.gmra.mxu0 %v2040
        %v2200 = vpop.f32.mrf.mxu0
        %v2201 = vadd.f32 %v2181, %v2200
        %2202 = vdwg.mxu0
        %2203 = vmatpush.msra.mxu0 %v1834
        %2204 = vmatpush.msra.mxu0 %v1830
        %2205 = vmatpush.msra.mxu0 %v1826
        %2206 = vmatpush.msra.mxu0 %v1822
        %2207 = vmatpush.msra.mxu0 %v1818
        %2208 = vmatpush.msra.mxu0 %v1814
        %2209 = vmatpush.msra.mxu0 %v1810
        %2210 = vmatpush.msra.mxu0 %v1806
        %2211 = vmatpush.msra.mxu0 %v1802
        %2212 = vmatpush.msra.mxu0 %v1798
        %2213 = vmatpush.msra.mxu0 %v1794
        %2214 = vmatpush.msra.mxu0 %v1790
        %2215 = vmatpush.msra.mxu0 %v1786
        %2216 = vmatpush.msra.mxu0 %v1782
        %2217 = vmatpush.msra.mxu0 %v1778
        %2218 = vmatpush.msra.mxu0 %v1774
        %2219 = vmatmul.f32.gmra.mxu0 %v1770
        %v2220 = vpop.f32.mrf.mxu0
        %v2221 = vadd.f32 %v2081, %v2220
        %2222 = vdwg.mxu0
        %2223 = vmatpush.msra.mxu0 %v1898
        %2224 = vmatpush.msra.mxu0 %v1894
        %2225 = vmatpush.msra.mxu0 %v1890
        %2226 = vmatpush.msra.mxu0 %v1886
        %2227 = vmatpush.msra.mxu0 %v1882
        %2228 = vmatpush.msra.mxu0 %v1878
        %2229 = vmatpush.msra.mxu0 %v1874
        %2230 = vmatpush.msra.mxu0 %v1870
        %2231 = vmatpush.msra.mxu0 %v1866
        %2232 = vmatpush.msra.mxu0 %v1862
        %2233 = vmatpush.msra.mxu0 %v1858
        %2234 = vmatpush.msra.mxu0 %v1854
        %2235 = vmatpush.msra.mxu0 %v1850
        %2236 = vmatpush.msra.mxu0 %v1846
        %2237 = vmatpush.msra.mxu0 %v1842
        %2238 = vmatpush.msra.mxu0 %v1838
        %2239 = vmatmul.f32.gmra.mxu0 %v1771
        %v2240 = vpop.f32.mrf.mxu0
        %v2241 = vadd.f32 %v2221, %v2240
        %2242 = vdwg.mxu0
        %2243 = vmatpush.msra.mxu0 %v1835
        %2244 = vmatpush.msra.mxu0 %v1831
        %2245 = vmatpush.msra.mxu0 %v1827
        %2246 = vmatpush.msra.mxu0 %v1823
        %2247 = vmatpush.msra.mxu0 %v1819
        %2248 = vmatpush.msra.mxu0 %v1815
        %2249 = vmatpush.msra.mxu0 %v1811
        %2250 = vmatpush.msra.mxu0 %v1807
        %2251 = vmatpush.msra.mxu0 %v1803
        %2252 = vmatpush.msra.mxu0 %v1799
        %2253 = vmatpush.msra.mxu0 %v1795
        %2254 = vmatpush.msra.mxu0 %v1791
        %2255 = vmatpush.msra.mxu0 %v1787
        %2256 = vmatpush.msra.mxu0 %v1783
        %2257 = vmatpush.msra.mxu0 %v1779
        %2258 = vmatpush.msra.mxu0 %v1775
        %2259 = vmatmul.f32.gmra.mxu0 %v1770
        %v2260 = vpop.f32.mrf.mxu0
        %v2261 = vadd.f32 %v2121, %v2260
        %2262 = vdwg.mxu0
        %2263 = vmatpush.msra.mxu0 %v1899
        %2264 = vmatpush.msra.mxu0 %v1895
        %2265 = vmatpush.msra.mxu0 %v1891
        %2266 = vmatpush.msra.mxu0 %v1887
        %2267 = vmatpush.msra.mxu0 %v1883
        %2268 = vmatpush.msra.mxu0 %v1879
        %2269 = vmatpush.msra.mxu0 %v1875
        %2270 = vmatpush.msra.mxu0 %v1871
        %2271 = vmatpush.msra.mxu0 %v1867
        %2272 = vmatpush.msra.mxu0 %v1863
        %2273 = vmatpush.msra.mxu0 %v1859
        %2274 = vmatpush.msra.mxu0 %v1855
        %2275 = vmatpush.msra.mxu0 %v1851
        %2276 = vmatpush.msra.mxu0 %v1847
        %2277 = vmatpush.msra.mxu0 %v1843
        %2278 = vmatpush.msra.mxu0 %v1839
        %2279 = vmatmul.f32.gmra.mxu0 %v1771
        %v2280 = vpop.f32.mrf.mxu0
        %v2281 = vadd.f32 %v2261, %v2280
        %2282 = vdwg.mxu0
        %2283 = vmatpush.msra.mxu0 %v1836
        %2284 = vmatpush.msra.mxu0 %v1832
        %2285 = vmatpush.msra.mxu0 %v1828
        %2286 = vmatpush.msra.mxu0 %v1824
        %2287 = vmatpush.msra.mxu0 %v1820
        %2288 = vmatpush.msra.mxu0 %v1816
        %2289 = vmatpush.msra.mxu0 %v1812
        %2290 = vmatpush.msra.mxu0 %v1808
        %2291 = vmatpush.msra.mxu0 %v1804
        %2292 = vmatpush.msra.mxu0 %v1800
        %2293 = vmatpush.msra.mxu0 %v1796
        %2294 = vmatpush.msra.mxu0 %v1792
        %2295 = vmatpush.msra.mxu0 %v1788
        %2296 = vmatpush.msra.mxu0 %v1784
        %2297 = vmatpush.msra.mxu0 %v1780
        %2298 = vmatpush.msra.mxu0 %v1776
        %2299 = vmatmul.f32.gmra.mxu0 %v1770
        %v2300 = vpop.f32.mrf.mxu0
        %v2301 = vadd.f32 %v2161, %v2300
        %2302 = vdwg.mxu0
        %2303 = vmatpush.msra.mxu0 %v1900
        %2304 = vmatpush.msra.mxu0 %v1896
        %2305 = vmatpush.msra.mxu0 %v1892
        %2306 = vmatpush.msra.mxu0 %v1888
        %2307 = vmatpush.msra.mxu0 %v1884
        %2308 = vmatpush.msra.mxu0 %v1880
        %2309 = vmatpush.msra.mxu0 %v1876
        %2310 = vmatpush.msra.mxu0 %v1872
        %2311 = vmatpush.msra.mxu0 %v1868
        %2312 = vmatpush.msra.mxu0 %v1864
        %2313 = vmatpush.msra.mxu0 %v1860
        %2314 = vmatpush.msra.mxu0 %v1856
        %2315 = vmatpush.msra.mxu0 %v1852
        %2316 = vmatpush.msra.mxu0 %v1848
        %2317 = vmatpush.msra.mxu0 %v1844
        %2318 = vmatpush.msra.mxu0 %v1840
        %2319 = vmatmul.f32.gmra.mxu0 %v1771
        %v2320 = vpop.f32.mrf.mxu0
        %v2321 = vadd.f32 %v2301, %v2320
        %2322 = vdwg.mxu0
        %2323 = vmatpush.msra.mxu0 %v1837
        %2324 = vmatpush.msra.mxu0 %v1833
        %2325 = vmatpush.msra.mxu0 %v1829
        %2326 = vmatpush.msra.mxu0 %v1825
        %2327 = vmatpush.msra.mxu0 %v1821
        %2328 = vmatpush.msra.mxu0 %v1817
        %2329 = vmatpush.msra.mxu0 %v1813
        %2330 = vmatpush.msra.mxu0 %v1809
        %2331 = vmatpush.msra.mxu0 %v1805
        %2332 = vmatpush.msra.mxu0 %v1801
        %2333 = vmatpush.msra.mxu0 %v1797
        %2334 = vmatpush.msra.mxu0 %v1793
        %2335 = vmatpush.msra.mxu0 %v1789
        %2336 = vmatpush.msra.mxu0 %v1785
        %2337 = vmatpush.msra.mxu0 %v1781
        %2338 = vmatpush.msra.mxu0 %v1777
        %2339 = vmatmul.f32.gmra.mxu0 %v1770
        %v2340 = vpop.f32.mrf.mxu0
        %v2341 = vadd.f32 %v2201, %v2340
        %2342 = vdwg.mxu0
        %2343 = vmatpush.msra.mxu0 %v1901
        %2344 = vmatpush.msra.mxu0 %v1897
        %2345 = vmatpush.msra.mxu0 %v1893
        %2346 = vmatpush.msra.mxu0 %v1889
        %2347 = vmatpush.msra.mxu0 %v1885
        %2348 = vmatpush.msra.mxu0 %v1881
        %2349 = vmatpush.msra.mxu0 %v1877
        %2350 = vmatpush.msra.mxu0 %v1873
        %2351 = vmatpush.msra.mxu0 %v1869
        %2352 = vmatpush.msra.mxu0 %v1865
        %2353 = vmatpush.msra.mxu0 %v1861
        %2354 = vmatpush.msra.mxu0 %v1857
        %2355 = vmatpush.msra.mxu0 %v1853
        %2356 = vmatpush.msra.mxu0 %v1849
        %2357 = vmatpush.msra.mxu0 %v1845
        %2358 = vmatpush.msra.mxu0 %v1841
        %2359 = vmatmul.f32.gmra.mxu0 %v1771
        %v2360 = vpop.f32.mrf.mxu0
        %v2361 = vadd.f32 %v2341, %v2360
        %2362 = vdwg.mxu0
        %s2363 = scalar_lea.vmem [#allocation9], 2048
        %v2364 = vld [vmem:[%s2363] sm:$0xff]
        %v2365 = vld [vmem:[%s2363 + $0x8] sm:$0xff]
        %v2366 = vld [vmem:[%s2363 + $0x10] sm:$0xff]
        %v2367 = vld [vmem:[%s2363 + $0x18] sm:$0xff]
        %v2368 = vld [vmem:[%s2363 + $0x20] sm:$0xff]
        %v2369 = vld [vmem:[%s2363 + $0x28] sm:$0xff]
        %v2370 = vld [vmem:[%s2363 + $0x30] sm:$0xff]
        %v2371 = vld [vmem:[%s2363 + $0x38] sm:$0xff]
        %v2372 = vld [vmem:[%s2363 + $0x40] sm:$0xff]
        %v2373 = vld [vmem:[%s2363 + $0x48] sm:$0xff]
        %v2374 = vld [vmem:[%s2363 + $0x50] sm:$0xff]
        %v2375 = vld [vmem:[%s2363 + $0x58] sm:$0xff]
        %v2376 = vld [vmem:[%s2363 + $0x60] sm:$0xff]
        %v2377 = vld [vmem:[%s2363 + $0x68] sm:$0xff]
        %v2378 = vld [vmem:[%s2363 + $0x70] sm:$0xff]
        %v2379 = vld [vmem:[%s2363 + $0x78] sm:$0xff]
        %v2380 = vld [vmem:[%s2363 + $0x80] sm:$0xff]
        %v2381 = vld [vmem:[%s2363 + $0x88] sm:$0xff]
        %v2382 = vld [vmem:[%s2363 + $0x90] sm:$0xff]
        %v2383 = vld [vmem:[%s2363 + $0x98] sm:$0xff]
        %v2384 = vld [vmem:[%s2363 + $0xa0] sm:$0xff]
        %v2385 = vld [vmem:[%s2363 + $0xa8] sm:$0xff]
        %v2386 = vld [vmem:[%s2363 + $0xb0] sm:$0xff]
        %v2387 = vld [vmem:[%s2363 + $0xb8] sm:$0xff]
        %v2388 = vld [vmem:[%s2363 + $0xc0] sm:$0xff]
        %v2389 = vld [vmem:[%s2363 + $0xc8] sm:$0xff]
        %v2390 = vld [vmem:[%s2363 + $0xd0] sm:$0xff]
        %v2391 = vld [vmem:[%s2363 + $0xd8] sm:$0xff]
        %v2392 = vld [vmem:[%s2363 + $0xe0] sm:$0xff]
        %v2393 = vld [vmem:[%s2363 + $0xe8] sm:$0xff]
        %v2394 = vld [vmem:[%s2363 + $0xf0] sm:$0xff]
        %v2395 = vld [vmem:[%s2363 + $0xf8] sm:$0xff]
        %v2396 = vld [vmem:[%s2363 + $0x100] sm:$0xff]
        %v2397 = vld [vmem:[%s2363 + $0x108] sm:$0xff]
        %v2398 = vld [vmem:[%s2363 + $0x110] sm:$0xff]
        %v2399 = vld [vmem:[%s2363 + $0x118] sm:$0xff]
        %v2400 = vld [vmem:[%s2363 + $0x120] sm:$0xff]
        %v2401 = vld [vmem:[%s2363 + $0x128] sm:$0xff]
        %v2402 = vld [vmem:[%s2363 + $0x130] sm:$0xff]
        %v2403 = vld [vmem:[%s2363 + $0x138] sm:$0xff]
        %v2404 = vld [vmem:[%s2363 + $0x140] sm:$0xff]
        %v2405 = vld [vmem:[%s2363 + $0x148] sm:$0xff]
        %v2406 = vld [vmem:[%s2363 + $0x150] sm:$0xff]
        %v2407 = vld [vmem:[%s2363 + $0x158] sm:$0xff]
        %v2408 = vld [vmem:[%s2363 + $0x160] sm:$0xff]
        %v2409 = vld [vmem:[%s2363 + $0x168] sm:$0xff]
        %v2410 = vld [vmem:[%s2363 + $0x170] sm:$0xff]
        %v2411 = vld [vmem:[%s2363 + $0x178] sm:$0xff]
        %v2412 = vld [vmem:[%s2363 + $0x180] sm:$0xff]
        %v2413 = vld [vmem:[%s2363 + $0x188] sm:$0xff]
        %v2414 = vld [vmem:[%s2363 + $0x190] sm:$0xff]
        %v2415 = vld [vmem:[%s2363 + $0x198] sm:$0xff]
        %v2416 = vld [vmem:[%s2363 + $0x1a0] sm:$0xff]
        %v2417 = vld [vmem:[%s2363 + $0x1a8] sm:$0xff]
        %v2418 = vld [vmem:[%s2363 + $0x1b0] sm:$0xff]
        %v2419 = vld [vmem:[%s2363 + $0x1b8] sm:$0xff]
        %v2420 = vld [vmem:[%s2363 + $0x1c0] sm:$0xff]
        %v2421 = vld [vmem:[%s2363 + $0x1c8] sm:$0xff]
        %v2422 = vld [vmem:[%s2363 + $0x1d0] sm:$0xff]
        %v2423 = vld [vmem:[%s2363 + $0x1d8] sm:$0xff]
        %v2424 = vld [vmem:[%s2363 + $0x1e0] sm:$0xff]
        %v2425 = vld [vmem:[%s2363 + $0x1e8] sm:$0xff]
        %v2426 = vld [vmem:[%s2363 + $0x1f0] sm:$0xff]
        %v2427 = vld [vmem:[%s2363 + $0x1f8] sm:$0xff]
        %v2428 = vld [vmem:[%s2363 + $0x200] sm:$0xff]
        %v2429 = vld [vmem:[%s2363 + $0x208] sm:$0xff]
        %v2430 = vld [vmem:[%s2363 + $0x210] sm:$0xff]
        %v2431 = vld [vmem:[%s2363 + $0x218] sm:$0xff]
        %v2432 = vld [vmem:[%s2363 + $0x220] sm:$0xff]
        %v2433 = vld [vmem:[%s2363 + $0x228] sm:$0xff]
        %v2434 = vld [vmem:[%s2363 + $0x230] sm:$0xff]
        %v2435 = vld [vmem:[%s2363 + $0x238] sm:$0xff]
        %v2436 = vld [vmem:[%s2363 + $0x240] sm:$0xff]
        %v2437 = vld [vmem:[%s2363 + $0x248] sm:$0xff]
        %v2438 = vld [vmem:[%s2363 + $0x250] sm:$0xff]
        %v2439 = vld [vmem:[%s2363 + $0x258] sm:$0xff]
        %v2440 = vld [vmem:[%s2363 + $0x260] sm:$0xff]
        %v2441 = vld [vmem:[%s2363 + $0x268] sm:$0xff]
        %v2442 = vld [vmem:[%s2363 + $0x270] sm:$0xff]
        %v2443 = vld [vmem:[%s2363 + $0x278] sm:$0xff]
        %v2444 = vld [vmem:[%s2363 + $0x280] sm:$0xff]
        %v2445 = vld [vmem:[%s2363 + $0x288] sm:$0xff]
        %v2446 = vld [vmem:[%s2363 + $0x290] sm:$0xff]
        %v2447 = vld [vmem:[%s2363 + $0x298] sm:$0xff]
        %v2448 = vld [vmem:[%s2363 + $0x2a0] sm:$0xff]
        %v2449 = vld [vmem:[%s2363 + $0x2a8] sm:$0xff]
        %v2450 = vld [vmem:[%s2363 + $0x2b0] sm:$0xff]
        %v2451 = vld [vmem:[%s2363 + $0x2b8] sm:$0xff]
        %v2452 = vld [vmem:[%s2363 + $0x2c0] sm:$0xff]
        %v2453 = vld [vmem:[%s2363 + $0x2c8] sm:$0xff]
        %v2454 = vld [vmem:[%s2363 + $0x2d0] sm:$0xff]
        %v2455 = vld [vmem:[%s2363 + $0x2d8] sm:$0xff]
        %v2456 = vld [vmem:[%s2363 + $0x2e0] sm:$0xff]
        %v2457 = vld [vmem:[%s2363 + $0x2e8] sm:$0xff]
        %v2458 = vld [vmem:[%s2363 + $0x2f0] sm:$0xff]
        %v2459 = vld [vmem:[%s2363 + $0x2f8] sm:$0xff]
        %v2460 = vld [vmem:[%s2363 + $0x300] sm:$0xff]
        %v2461 = vld [vmem:[%s2363 + $0x308] sm:$0xff]
        %v2462 = vld [vmem:[%s2363 + $0x310] sm:$0xff]
        %v2463 = vld [vmem:[%s2363 + $0x318] sm:$0xff]
        %v2464 = vld [vmem:[%s2363 + $0x320] sm:$0xff]
        %v2465 = vld [vmem:[%s2363 + $0x328] sm:$0xff]
        %v2466 = vld [vmem:[%s2363 + $0x330] sm:$0xff]
        %v2467 = vld [vmem:[%s2363 + $0x338] sm:$0xff]
        %v2468 = vld [vmem:[%s2363 + $0x340] sm:$0xff]
        %v2469 = vld [vmem:[%s2363 + $0x348] sm:$0xff]
        %v2470 = vld [vmem:[%s2363 + $0x350] sm:$0xff]
        %v2471 = vld [vmem:[%s2363 + $0x358] sm:$0xff]
        %v2472 = vld [vmem:[%s2363 + $0x360] sm:$0xff]
        %v2473 = vld [vmem:[%s2363 + $0x368] sm:$0xff]
        %v2474 = vld [vmem:[%s2363 + $0x370] sm:$0xff]
        %v2475 = vld [vmem:[%s2363 + $0x378] sm:$0xff]
        %v2476 = vld [vmem:[%s2363 + $0x380] sm:$0xff]
        %v2477 = vld [vmem:[%s2363 + $0x388] sm:$0xff]
        %v2478 = vld [vmem:[%s2363 + $0x390] sm:$0xff]
        %v2479 = vld [vmem:[%s2363 + $0x398] sm:$0xff]
        %v2480 = vld [vmem:[%s2363 + $0x3a0] sm:$0xff]
        %v2481 = vld [vmem:[%s2363 + $0x3a8] sm:$0xff]
        %v2482 = vld [vmem:[%s2363 + $0x3b0] sm:$0xff]
        %v2483 = vld [vmem:[%s2363 + $0x3b8] sm:$0xff]
        %v2484 = vld [vmem:[%s2363 + $0x3c0] sm:$0xff]
        %v2485 = vld [vmem:[%s2363 + $0x3c8] sm:$0xff]
        %v2486 = vld [vmem:[%s2363 + $0x3d0] sm:$0xff]
        %v2487 = vld [vmem:[%s2363 + $0x3d8] sm:$0xff]
        %v2488 = vld [vmem:[%s2363 + $0x3e0] sm:$0xff]
        %v2489 = vld [vmem:[%s2363 + $0x3e8] sm:$0xff]
        %v2490 = vld [vmem:[%s2363 + $0x3f0] sm:$0xff]
        %v2491 = vld [vmem:[%s2363 + $0x3f8] sm:$0xff]
        %v2492 = vrot.slane %v1770, 2
        %v2493 = vrot.slane %v1772, 2
        %v2494 = vsel %vm1280, %v2492, %v2493
        %v2495 = vrot.slane %v1771, 2
        %v2496 = vrot.slane %v1773, 2
        %v2497 = vsel %vm1280, %v2495, %v2496
        %2500 = vmatpush.msra.mxu0 %v2424
        %2501 = vmatpush.msra.mxu0 %v2420
        %2502 = vmatpush.msra.mxu0 %v2416
        %2503 = vmatpush.msra.mxu0 %v2412
        %2504 = vmatpush.msra.mxu0 %v2408
        %2505 = vmatpush.msra.mxu0 %v2404
        %2506 = vmatpush.msra.mxu0 %v2400
        %2507 = vmatpush.msra.mxu0 %v2396
        %2508 = vmatpush.msra.mxu0 %v2392
        %2509 = vmatpush.msra.mxu0 %v2388
        %2510 = vmatpush.msra.mxu0 %v2384
        %2511 = vmatpush.msra.mxu0 %v2380
        %2512 = vmatpush.msra.mxu0 %v2376
        %2513 = vmatpush.msra.mxu0 %v2372
        %2514 = vmatpush.msra.mxu0 %v2368
        %2515 = vmatpush.msra.mxu0 %v2364
        %2516 = vmatmul.f32.gmra.mxu0 %v2494
        %v2517 = vpop.f32.mrf.mxu0
        %v2518 = vadd.f32 0.0, %v2517
        %2519 = vdwg.mxu0
        %2520 = vmatpush.msra.mxu0 %v2488
        %2521 = vmatpush.msra.mxu0 %v2484
        %2522 = vmatpush.msra.mxu0 %v2480
        %2523 = vmatpush.msra.mxu0 %v2476
        %2524 = vmatpush.msra.mxu0 %v2472
        %2525 = vmatpush.msra.mxu0 %v2468
        %2526 = vmatpush.msra.mxu0 %v2464
        %2527 = vmatpush.msra.mxu0 %v2460
        %2528 = vmatpush.msra.mxu0 %v2456
        %2529 = vmatpush.msra.mxu0 %v2452
        %2530 = vmatpush.msra.mxu0 %v2448
        %2531 = vmatpush.msra.mxu0 %v2444
        %2532 = vmatpush.msra.mxu0 %v2440
        %2533 = vmatpush.msra.mxu0 %v2436
        %2534 = vmatpush.msra.mxu0 %v2432
        %2535 = vmatpush.msra.mxu0 %v2428
        %2536 = vmatmul.f32.gmra.mxu0 %v2497
        %v2537 = vpop.f32.mrf.mxu0
        %v2538 = vadd.f32 %v2518, %v2537
        %2539 = vdwg.mxu0
        %2540 = vmatpush.msra.mxu0 %v2425
        %2541 = vmatpush.msra.mxu0 %v2421
        %2542 = vmatpush.msra.mxu0 %v2417
        %2543 = vmatpush.msra.mxu0 %v2413
        %2544 = vmatpush.msra.mxu0 %v2409
        %2545 = vmatpush.msra.mxu0 %v2405
        %2546 = vmatpush.msra.mxu0 %v2401
        %2547 = vmatpush.msra.mxu0 %v2397
        %2548 = vmatpush.msra.mxu0 %v2393
        %2549 = vmatpush.msra.mxu0 %v2389
        %2550 = vmatpush.msra.mxu0 %v2385
        %2551 = vmatpush.msra.mxu0 %v2381
        %2552 = vmatpush.msra.mxu0 %v2377
        %2553 = vmatpush.msra.mxu0 %v2373
        %2554 = vmatpush.msra.mxu0 %v2369
        %2555 = vmatpush.msra.mxu0 %v2365
        %2556 = vmatmul.f32.gmra.mxu0 %v2494
        %v2557 = vpop.f32.mrf.mxu0
        %v2558 = vadd.f32 0.0, %v2557
        %2559 = vdwg.mxu0
        %2560 = vmatpush.msra.mxu0 %v2489
        %2561 = vmatpush.msra.mxu0 %v2485
        %2562 = vmatpush.msra.mxu0 %v2481
        %2563 = vmatpush.msra.mxu0 %v2477
        %2564 = vmatpush.msra.mxu0 %v2473
        %2565 = vmatpush.msra.mxu0 %v2469
        %2566 = vmatpush.msra.mxu0 %v2465
        %2567 = vmatpush.msra.mxu0 %v2461
        %2568 = vmatpush.msra.mxu0 %v2457
        %2569 = vmatpush.msra.mxu0 %v2453
        %2570 = vmatpush.msra.mxu0 %v2449
        %2571 = vmatpush.msra.mxu0 %v2445
        %2572 = vmatpush.msra.mxu0 %v2441
        %2573 = vmatpush.msra.mxu0 %v2437
        %2574 = vmatpush.msra.mxu0 %v2433
        %2575 = vmatpush.msra.mxu0 %v2429
        %2576 = vmatmul.f32.gmra.mxu0 %v2497
        %v2577 = vpop.f32.mrf.mxu0
        %v2578 = vadd.f32 %v2558, %v2577
        %2579 = vdwg.mxu0
        %2580 = vmatpush.msra.mxu0 %v2426
        %2581 = vmatpush.msra.mxu0 %v2422
        %2582 = vmatpush.msra.mxu0 %v2418
        %2583 = vmatpush.msra.mxu0 %v2414
        %2584 = vmatpush.msra.mxu0 %v2410
        %2585 = vmatpush.msra.mxu0 %v2406
        %2586 = vmatpush.msra.mxu0 %v2402
        %2587 = vmatpush.msra.mxu0 %v2398
        %2588 = vmatpush.msra.mxu0 %v2394
        %2589 = vmatpush.msra.mxu0 %v2390
        %2590 = vmatpush.msra.mxu0 %v2386
        %2591 = vmatpush.msra.mxu0 %v2382
        %2592 = vmatpush.msra.mxu0 %v2378
        %2593 = vmatpush.msra.mxu0 %v2374
        %2594 = vmatpush.msra.mxu0 %v2370
        %2595 = vmatpush.msra.mxu0 %v2366
        %2596 = vmatmul.f32.gmra.mxu0 %v2494
        %v2597 = vpop.f32.mrf.mxu0
        %v2598 = vadd.f32 0.0, %v2597
        %2599 = vdwg.mxu0
        %2600 = vmatpush.msra.mxu0 %v2490
        %2601 = vmatpush.msra.mxu0 %v2486
        %2602 = vmatpush.msra.mxu0 %v2482
        %2603 = vmatpush.msra.mxu0 %v2478
        %2604 = vmatpush.msra.mxu0 %v2474
        %2605 = vmatpush.msra.mxu0 %v2470
        %2606 = vmatpush.msra.mxu0 %v2466
        %2607 = vmatpush.msra.mxu0 %v2462
        %2608 = vmatpush.msra.mxu0 %v2458
        %2609 = vmatpush.msra.mxu0 %v2454
        %2610 = vmatpush.msra.mxu0 %v2450
        %2611 = vmatpush.msra.mxu0 %v2446
        %2612 = vmatpush.msra.mxu0 %v2442
        %2613 = vmatpush.msra.mxu0 %v2438
        %2614 = vmatpush.msra.mxu0 %v2434
        %2615 = vmatpush.msra.mxu0 %v2430
        %2616 = vmatmul.f32.gmra.mxu0 %v2497
        %v2617 = vpop.f32.mrf.mxu0
        %v2618 = vadd.f32 %v2598, %v2617
        %2619 = vdwg.mxu0
        %2620 = vmatpush.msra.mxu0 %v2427
        %2621 = vmatpush.msra.mxu0 %v2423
        %2622 = vmatpush.msra.mxu0 %v2419
        %2623 = vmatpush.msra.mxu0 %v2415
        %2624 = vmatpush.msra.mxu0 %v2411
        %2625 = vmatpush.msra.mxu0 %v2407
        %2626 = vmatpush.msra.mxu0 %v2403
        %2627 = vmatpush.msra.mxu0 %v2399
        %2628 = vmatpush.msra.mxu0 %v2395
        %2629 = vmatpush.msra.mxu0 %v2391
        %2630 = vmatpush.msra.mxu0 %v2387
        %2631 = vmatpush.msra.mxu0 %v2383
        %2632 = vmatpush.msra.mxu0 %v2379
        %2633 = vmatpush.msra.mxu0 %v2375
        %2634 = vmatpush.msra.mxu0 %v2371
        %2635 = vmatpush.msra.mxu0 %v2367
        %2636 = vmatmul.f32.gmra.mxu0 %v2494
        %v2637 = vpop.f32.mrf.mxu0
        %v2638 = vadd.f32 0.0, %v2637
        %2639 = vdwg.mxu0
        %2640 = vmatpush.msra.mxu0 %v2491
        %2641 = vmatpush.msra.mxu0 %v2487
        %2642 = vmatpush.msra.mxu0 %v2483
        %2643 = vmatpush.msra.mxu0 %v2479
        %2644 = vmatpush.msra.mxu0 %v2475
        %2645 = vmatpush.msra.mxu0 %v2471
        %2646 = vmatpush.msra.mxu0 %v2467
        %2647 = vmatpush.msra.mxu0 %v2463
        %2648 = vmatpush.msra.mxu0 %v2459
        %2649 = vmatpush.msra.mxu0 %v2455
        %2650 = vmatpush.msra.mxu0 %v2451
        %2651 = vmatpush.msra.mxu0 %v2447
        %2652 = vmatpush.msra.mxu0 %v2443
        %2653 = vmatpush.msra.mxu0 %v2439
        %2654 = vmatpush.msra.mxu0 %v2435
        %2655 = vmatpush.msra.mxu0 %v2431
        %2656 = vmatmul.f32.gmra.mxu0 %v2497
        %v2657 = vpop.f32.mrf.mxu0
        %v2658 = vadd.f32 %v2638, %v2657
        %2659 = vdwg.mxu0
        %v2660 = vadd.f32 %v2241, %v2538
        %v2661 = vadd.f32 %v2281, %v2578
        %v2662 = vadd.f32 %v2321, %v2618
        %v2663 = vadd.f32 %v2361, %v2658
        %s2664 = scalar_lea.vmem [#allocation9], 3072
        %v2665 = vld [vmem:[%s2664] sm:$0xff]
        %v2666 = vld [vmem:[%s2664 + $0x8] sm:$0xff]
        %v2667 = vld [vmem:[%s2664 + $0x10] sm:$0xff]
        %v2668 = vld [vmem:[%s2664 + $0x18] sm:$0xff]
        %v2669 = vld [vmem:[%s2664 + $0x20] sm:$0xff]
        %v2670 = vld [vmem:[%s2664 + $0x28] sm:$0xff]
        %v2671 = vld [vmem:[%s2664 + $0x30] sm:$0xff]
        %v2672 = vld [vmem:[%s2664 + $0x38] sm:$0xff]
        %v2673 = vld [vmem:[%s2664 + $0x40] sm:$0xff]
        %v2674 = vld [vmem:[%s2664 + $0x48] sm:$0xff]
        %v2675 = vld [vmem:[%s2664 + $0x50] sm:$0xff]
        %v2676 = vld [vmem:[%s2664 + $0x58] sm:$0xff]
        %v2677 = vld [vmem:[%s2664 + $0x60] sm:$0xff]
        %v2678 = vld [vmem:[%s2664 + $0x68] sm:$0xff]
        %v2679 = vld [vmem:[%s2664 + $0x70] sm:$0xff]
        %v2680 = vld [vmem:[%s2664 + $0x78] sm:$0xff]
        %v2681 = vld [vmem:[%s2664 + $0x80] sm:$0xff]
        %v2682 = vld [vmem:[%s2664 + $0x88] sm:$0xff]
        %v2683 = vld [vmem:[%s2664 + $0x90] sm:$0xff]
        %v2684 = vld [vmem:[%s2664 + $0x98] sm:$0xff]
        %v2685 = vld [vmem:[%s2664 + $0xa0] sm:$0xff]
        %v2686 = vld [vmem:[%s2664 + $0xa8] sm:$0xff]
        %v2687 = vld [vmem:[%s2664 + $0xb0] sm:$0xff]
        %v2688 = vld [vmem:[%s2664 + $0xb8] sm:$0xff]
        %v2689 = vld [vmem:[%s2664 + $0xc0] sm:$0xff]
        %v2690 = vld [vmem:[%s2664 + $0xc8] sm:$0xff]
        %v2691 = vld [vmem:[%s2664 + $0xd0] sm:$0xff]
        %v2692 = vld [vmem:[%s2664 + $0xd8] sm:$0xff]
        %v2693 = vld [vmem:[%s2664 + $0xe0] sm:$0xff]
        %v2694 = vld [vmem:[%s2664 + $0xe8] sm:$0xff]
        %v2695 = vld [vmem:[%s2664 + $0xf0] sm:$0xff]
        %v2696 = vld [vmem:[%s2664 + $0xf8] sm:$0xff]
        %v2697 = vld [vmem:[%s2664 + $0x100] sm:$0xff]
        %v2698 = vld [vmem:[%s2664 + $0x108] sm:$0xff]
        %v2699 = vld [vmem:[%s2664 + $0x110] sm:$0xff]
        %v2700 = vld [vmem:[%s2664 + $0x118] sm:$0xff]
        %v2701 = vld [vmem:[%s2664 + $0x120] sm:$0xff]
        %v2702 = vld [vmem:[%s2664 + $0x128] sm:$0xff]
        %v2703 = vld [vmem:[%s2664 + $0x130] sm:$0xff]
        %v2704 = vld [vmem:[%s2664 + $0x138] sm:$0xff]
        %v2705 = vld [vmem:[%s2664 + $0x140] sm:$0xff]
        %v2706 = vld [vmem:[%s2664 + $0x148] sm:$0xff]
        %v2707 = vld [vmem:[%s2664 + $0x150] sm:$0xff]
        %v2708 = vld [vmem:[%s2664 + $0x158] sm:$0xff]
        %v2709 = vld [vmem:[%s2664 + $0x160] sm:$0xff]
        %v2710 = vld [vmem:[%s2664 + $0x168] sm:$0xff]
        %v2711 = vld [vmem:[%s2664 + $0x170] sm:$0xff]
        %v2712 = vld [vmem:[%s2664 + $0x178] sm:$0xff]
        %v2713 = vld [vmem:[%s2664 + $0x180] sm:$0xff]
        %v2714 = vld [vmem:[%s2664 + $0x188] sm:$0xff]
        %v2715 = vld [vmem:[%s2664 + $0x190] sm:$0xff]
        %v2716 = vld [vmem:[%s2664 + $0x198] sm:$0xff]
        %v2717 = vld [vmem:[%s2664 + $0x1a0] sm:$0xff]
        %v2718 = vld [vmem:[%s2664 + $0x1a8] sm:$0xff]
        %v2719 = vld [vmem:[%s2664 + $0x1b0] sm:$0xff]
        %v2720 = vld [vmem:[%s2664 + $0x1b8] sm:$0xff]
        %v2721 = vld [vmem:[%s2664 + $0x1c0] sm:$0xff]
        %v2722 = vld [vmem:[%s2664 + $0x1c8] sm:$0xff]
        %v2723 = vld [vmem:[%s2664 + $0x1d0] sm:$0xff]
        %v2724 = vld [vmem:[%s2664 + $0x1d8] sm:$0xff]
        %v2725 = vld [vmem:[%s2664 + $0x1e0] sm:$0xff]
        %v2726 = vld [vmem:[%s2664 + $0x1e8] sm:$0xff]
        %v2727 = vld [vmem:[%s2664 + $0x1f0] sm:$0xff]
        %v2728 = vld [vmem:[%s2664 + $0x1f8] sm:$0xff]
        %v2729 = vld [vmem:[%s2664 + $0x200] sm:$0xff]
        %v2730 = vld [vmem:[%s2664 + $0x208] sm:$0xff]
        %v2731 = vld [vmem:[%s2664 + $0x210] sm:$0xff]
        %v2732 = vld [vmem:[%s2664 + $0x218] sm:$0xff]
        %v2733 = vld [vmem:[%s2664 + $0x220] sm:$0xff]
        %v2734 = vld [vmem:[%s2664 + $0x228] sm:$0xff]
        %v2735 = vld [vmem:[%s2664 + $0x230] sm:$0xff]
        %v2736 = vld [vmem:[%s2664 + $0x238] sm:$0xff]
        %v2737 = vld [vmem:[%s2664 + $0x240] sm:$0xff]
        %v2738 = vld [vmem:[%s2664 + $0x248] sm:$0xff]
        %v2739 = vld [vmem:[%s2664 + $0x250] sm:$0xff]
        %v2740 = vld [vmem:[%s2664 + $0x258] sm:$0xff]
        %v2741 = vld [vmem:[%s2664 + $0x260] sm:$0xff]
        %v2742 = vld [vmem:[%s2664 + $0x268] sm:$0xff]
        %v2743 = vld [vmem:[%s2664 + $0x270] sm:$0xff]
        %v2744 = vld [vmem:[%s2664 + $0x278] sm:$0xff]
        %v2745 = vld [vmem:[%s2664 + $0x280] sm:$0xff]
        %v2746 = vld [vmem:[%s2664 + $0x288] sm:$0xff]
        %v2747 = vld [vmem:[%s2664 + $0x290] sm:$0xff]
        %v2748 = vld [vmem:[%s2664 + $0x298] sm:$0xff]
        %v2749 = vld [vmem:[%s2664 + $0x2a0] sm:$0xff]
        %v2750 = vld [vmem:[%s2664 + $0x2a8] sm:$0xff]
        %v2751 = vld [vmem:[%s2664 + $0x2b0] sm:$0xff]
        %v2752 = vld [vmem:[%s2664 + $0x2b8] sm:$0xff]
        %v2753 = vld [vmem:[%s2664 + $0x2c0] sm:$0xff]
        %v2754 = vld [vmem:[%s2664 + $0x2c8] sm:$0xff]
        %v2755 = vld [vmem:[%s2664 + $0x2d0] sm:$0xff]
        %v2756 = vld [vmem:[%s2664 + $0x2d8] sm:$0xff]
        %v2757 = vld [vmem:[%s2664 + $0x2e0] sm:$0xff]
        %v2758 = vld [vmem:[%s2664 + $0x2e8] sm:$0xff]
        %v2759 = vld [vmem:[%s2664 + $0x2f0] sm:$0xff]
        %v2760 = vld [vmem:[%s2664 + $0x2f8] sm:$0xff]
        %v2761 = vld [vmem:[%s2664 + $0x300] sm:$0xff]
        %v2762 = vld [vmem:[%s2664 + $0x308] sm:$0xff]
        %v2763 = vld [vmem:[%s2664 + $0x310] sm:$0xff]
        %v2764 = vld [vmem:[%s2664 + $0x318] sm:$0xff]
        %v2765 = vld [vmem:[%s2664 + $0x320] sm:$0xff]
        %v2766 = vld [vmem:[%s2664 + $0x328] sm:$0xff]
        %v2767 = vld [vmem:[%s2664 + $0x330] sm:$0xff]
        %v2768 = vld [vmem:[%s2664 + $0x338] sm:$0xff]
        %v2769 = vld [vmem:[%s2664 + $0x340] sm:$0xff]
        %v2770 = vld [vmem:[%s2664 + $0x348] sm:$0xff]
        %v2771 = vld [vmem:[%s2664 + $0x350] sm:$0xff]
        %v2772 = vld [vmem:[%s2664 + $0x358] sm:$0xff]
        %v2773 = vld [vmem:[%s2664 + $0x360] sm:$0xff]
        %v2774 = vld [vmem:[%s2664 + $0x368] sm:$0xff]
        %v2775 = vld [vmem:[%s2664 + $0x370] sm:$0xff]
        %v2776 = vld [vmem:[%s2664 + $0x378] sm:$0xff]
        %v2777 = vld [vmem:[%s2664 + $0x380] sm:$0xff]
        %v2778 = vld [vmem:[%s2664 + $0x388] sm:$0xff]
        %v2779 = vld [vmem:[%s2664 + $0x390] sm:$0xff]
        %v2780 = vld [vmem:[%s2664 + $0x398] sm:$0xff]
        %v2781 = vld [vmem:[%s2664 + $0x3a0] sm:$0xff]
        %v2782 = vld [vmem:[%s2664 + $0x3a8] sm:$0xff]
        %v2783 = vld [vmem:[%s2664 + $0x3b0] sm:$0xff]
        %v2784 = vld [vmem:[%s2664 + $0x3b8] sm:$0xff]
        %v2785 = vld [vmem:[%s2664 + $0x3c0] sm:$0xff]
        %v2786 = vld [vmem:[%s2664 + $0x3c8] sm:$0xff]
        %v2787 = vld [vmem:[%s2664 + $0x3d0] sm:$0xff]
        %v2788 = vld [vmem:[%s2664 + $0x3d8] sm:$0xff]
        %v2789 = vld [vmem:[%s2664 + $0x3e0] sm:$0xff]
        %v2790 = vld [vmem:[%s2664 + $0x3e8] sm:$0xff]
        %v2791 = vld [vmem:[%s2664 + $0x3f0] sm:$0xff]
        %v2792 = vld [vmem:[%s2664 + $0x3f8] sm:$0xff]
        %v2793 = vrot.slane %v1770, 3
        %v2794 = vrot.slane %v1772, 3
        %v2795 = vsel %vm1379, %v2793, %v2794
        %v2796 = vrot.slane %v1771, 3
        %v2797 = vrot.slane %v1773, 3
        %v2798 = vsel %vm1379, %v2796, %v2797
        %2801 = vmatpush.msra.mxu0 %v2725
        %2802 = vmatpush.msra.mxu0 %v2721
        %2803 = vmatpush.msra.mxu0 %v2717
        %2804 = vmatpush.msra.mxu0 %v2713
        %2805 = vmatpush.msra.mxu0 %v2709
        %2806 = vmatpush.msra.mxu0 %v2705
        %2807 = vmatpush.msra.mxu0 %v2701
        %2808 = vmatpush.msra.mxu0 %v2697
        %2809 = vmatpush.msra.mxu0 %v2693
        %2810 = vmatpush.msra.mxu0 %v2689
        %2811 = vmatpush.msra.mxu0 %v2685
        %2812 = vmatpush.msra.mxu0 %v2681
        %2813 = vmatpush.msra.mxu0 %v2677
        %2814 = vmatpush.msra.mxu0 %v2673
        %2815 = vmatpush.msra.mxu0 %v2669
        %2816 = vmatpush.msra.mxu0 %v2665
        %2817 = vmatmul.f32.gmra.mxu0 %v2795
        %v2818 = vpop.f32.mrf.mxu0
        %v2819 = vadd.f32 0.0, %v2818
        %2820 = vdwg.mxu0
        %2821 = vmatpush.msra.mxu0 %v2789
        %2822 = vmatpush.msra.mxu0 %v2785
        %2823 = vmatpush.msra.mxu0 %v2781
        %2824 = vmatpush.msra.mxu0 %v2777
        %2825 = vmatpush.msra.mxu0 %v2773
        %2826 = vmatpush.msra.mxu0 %v2769
        %2827 = vmatpush.msra.mxu0 %v2765
        %2828 = vmatpush.msra.mxu0 %v2761
        %2829 = vmatpush.msra.mxu0 %v2757
        %2830 = vmatpush.msra.mxu0 %v2753
        %2831 = vmatpush.msra.mxu0 %v2749
        %2832 = vmatpush.msra.mxu0 %v2745
        %2833 = vmatpush.msra.mxu0 %v2741
        %2834 = vmatpush.msra.mxu0 %v2737
        %2835 = vmatpush.msra.mxu0 %v2733
        %2836 = vmatpush.msra.mxu0 %v2729
        %2837 = vmatmul.f32.gmra.mxu0 %v2798
        %v2838 = vpop.f32.mrf.mxu0
        %v2839 = vadd.f32 %v2819, %v2838
        %2840 = vdwg.mxu0
        %2841 = vmatpush.msra.mxu0 %v2726
        %2842 = vmatpush.msra.mxu0 %v2722
        %2843 = vmatpush.msra.mxu0 %v2718
        %2844 = vmatpush.msra.mxu0 %v2714
        %2845 = vmatpush.msra.mxu0 %v2710
        %2846 = vmatpush.msra.mxu0 %v2706
        %2847 = vmatpush.msra.mxu0 %v2702
        %2848 = vmatpush.msra.mxu0 %v2698
        %2849 = vmatpush.msra.mxu0 %v2694
        %2850 = vmatpush.msra.mxu0 %v2690
        %2851 = vmatpush.msra.mxu0 %v2686
        %2852 = vmatpush.msra.mxu0 %v2682
        %2853 = vmatpush.msra.mxu0 %v2678
        %2854 = vmatpush.msra.mxu0 %v2674
        %2855 = vmatpush.msra.mxu0 %v2670
        %2856 = vmatpush.msra.mxu0 %v2666
        %2857 = vmatmul.f32.gmra.mxu0 %v2795
        %v2858 = vpop.f32.mrf.mxu0
        %v2859 = vadd.f32 0.0, %v2858
        %2860 = vdwg.mxu0
        %2861 = vmatpush.msra.mxu0 %v2790
        %2862 = vmatpush.msra.mxu0 %v2786
        %2863 = vmatpush.msra.mxu0 %v2782
        %2864 = vmatpush.msra.mxu0 %v2778
        %2865 = vmatpush.msra.mxu0 %v2774
        %2866 = vmatpush.msra.mxu0 %v2770
        %2867 = vmatpush.msra.mxu0 %v2766
        %2868 = vmatpush.msra.mxu0 %v2762
        %2869 = vmatpush.msra.mxu0 %v2758
        %2870 = vmatpush.msra.mxu0 %v2754
        %2871 = vmatpush.msra.mxu0 %v2750
        %2872 = vmatpush.msra.mxu0 %v2746
        %2873 = vmatpush.msra.mxu0 %v2742
        %2874 = vmatpush.msra.mxu0 %v2738
        %2875 = vmatpush.msra.mxu0 %v2734
        %2876 = vmatpush.msra.mxu0 %v2730
        %2877 = vmatmul.f32.gmra.mxu0 %v2798
        %v2878 = vpop.f32.mrf.mxu0
        %v2879 = vadd.f32 %v2859, %v2878
        %2880 = vdwg.mxu0
        %2881 = vmatpush.msra.mxu0 %v2727
        %2882 = vmatpush.msra.mxu0 %v2723
        %2883 = vmatpush.msra.mxu0 %v2719
        %2884 = vmatpush.msra.mxu0 %v2715
        %2885 = vmatpush.msra.mxu0 %v2711
        %2886 = vmatpush.msra.mxu0 %v2707
        %2887 = vmatpush.msra.mxu0 %v2703
        %2888 = vmatpush.msra.mxu0 %v2699
        %2889 = vmatpush.msra.mxu0 %v2695
        %2890 = vmatpush.msra.mxu0 %v2691
        %2891 = vmatpush.msra.mxu0 %v2687
        %2892 = vmatpush.msra.mxu0 %v2683
        %2893 = vmatpush.msra.mxu0 %v2679
        %2894 = vmatpush.msra.mxu0 %v2675
        %2895 = vmatpush.msra.mxu0 %v2671
        %2896 = vmatpush.msra.mxu0 %v2667
        %2897 = vmatmul.f32.gmra.mxu0 %v2795
        %v2898 = vpop.f32.mrf.mxu0
        %v2899 = vadd.f32 0.0, %v2898
        %2900 = vdwg.mxu0
        %2901 = vmatpush.msra.mxu0 %v2791
        %2902 = vmatpush.msra.mxu0 %v2787
        %2903 = vmatpush.msra.mxu0 %v2783
        %2904 = vmatpush.msra.mxu0 %v2779
        %2905 = vmatpush.msra.mxu0 %v2775
        %2906 = vmatpush.msra.mxu0 %v2771
        %2907 = vmatpush.msra.mxu0 %v2767
        %2908 = vmatpush.msra.mxu0 %v2763
        %2909 = vmatpush.msra.mxu0 %v2759
        %2910 = vmatpush.msra.mxu0 %v2755
        %2911 = vmatpush.msra.mxu0 %v2751
        %2912 = vmatpush.msra.mxu0 %v2747
        %2913 = vmatpush.msra.mxu0 %v2743
        %2914 = vmatpush.msra.mxu0 %v2739
        %2915 = vmatpush.msra.mxu0 %v2735
        %2916 = vmatpush.msra.mxu0 %v2731
        %2917 = vmatmul.f32.gmra.mxu0 %v2798
        %v2918 = vpop.f32.mrf.mxu0
        %v2919 = vadd.f32 %v2899, %v2918
        %2920 = vdwg.mxu0
        %2921 = vmatpush.msra.mxu0 %v2728
        %2922 = vmatpush.msra.mxu0 %v2724
        %2923 = vmatpush.msra.mxu0 %v2720
        %2924 = vmatpush.msra.mxu0 %v2716
        %2925 = vmatpush.msra.mxu0 %v2712
        %2926 = vmatpush.msra.mxu0 %v2708
        %2927 = vmatpush.msra.mxu0 %v2704
        %2928 = vmatpush.msra.mxu0 %v2700
        %2929 = vmatpush.msra.mxu0 %v2696
        %2930 = vmatpush.msra.mxu0 %v2692
        %2931 = vmatpush.msra.mxu0 %v2688
        %2932 = vmatpush.msra.mxu0 %v2684
        %2933 = vmatpush.msra.mxu0 %v2680
        %2934 = vmatpush.msra.mxu0 %v2676
        %2935 = vmatpush.msra.mxu0 %v2672
        %2936 = vmatpush.msra.mxu0 %v2668
        %2937 = vmatmul.f32.gmra.mxu0 %v2795
        %v2938 = vpop.f32.mrf.mxu0
        %v2939 = vadd.f32 0.0, %v2938
        %2940 = vdwg.mxu0
        %2941 = vmatpush.msra.mxu0 %v2792
        %2942 = vmatpush.msra.mxu0 %v2788
        %2943 = vmatpush.msra.mxu0 %v2784
        %2944 = vmatpush.msra.mxu0 %v2780
        %2945 = vmatpush.msra.mxu0 %v2776
        %2946 = vmatpush.msra.mxu0 %v2772
        %2947 = vmatpush.msra.mxu0 %v2768
        %2948 = vmatpush.msra.mxu0 %v2764
        %2949 = vmatpush.msra.mxu0 %v2760
        %2950 = vmatpush.msra.mxu0 %v2756
        %2951 = vmatpush.msra.mxu0 %v2752
        %2952 = vmatpush.msra.mxu0 %v2748
        %2953 = vmatpush.msra.mxu0 %v2744
        %2954 = vmatpush.msra.mxu0 %v2740
        %2955 = vmatpush.msra.mxu0 %v2736
        %2956 = vmatpush.msra.mxu0 %v2732
        %2957 = vmatmul.f32.gmra.mxu0 %v2798
        %v2958 = vpop.f32.mrf.mxu0
        %v2959 = vadd.f32 %v2939, %v2958
        %2960 = vdwg.mxu0
        %v2961 = vadd.f32 %v2660, %v2839
        %v2962 = vadd.f32 %v2661, %v2879
        %v2963 = vadd.f32 %v2662, %v2919
        %v2964 = vadd.f32 %v2663, %v2959
        %s2965 = scalar_lea.vmem [#allocation9], 4096
        %v2966 = vld [vmem:[%s2965] sm:$0xff]
        %v2967 = vld [vmem:[%s2965 + $0x8] sm:$0xff]
        %v2968 = vld [vmem:[%s2965 + $0x10] sm:$0xff]
        %v2969 = vld [vmem:[%s2965 + $0x18] sm:$0xff]
        %v2970 = vld [vmem:[%s2965 + $0x20] sm:$0xff]
        %v2971 = vld [vmem:[%s2965 + $0x28] sm:$0xff]
        %v2972 = vld [vmem:[%s2965 + $0x30] sm:$0xff]
        %v2973 = vld [vmem:[%s2965 + $0x38] sm:$0xff]
        %v2974 = vld [vmem:[%s2965 + $0x40] sm:$0xff]
        %v2975 = vld [vmem:[%s2965 + $0x48] sm:$0xff]
        %v2976 = vld [vmem:[%s2965 + $0x50] sm:$0xff]
        %v2977 = vld [vmem:[%s2965 + $0x58] sm:$0xff]
        %v2978 = vld [vmem:[%s2965 + $0x60] sm:$0xff]
        %v2979 = vld [vmem:[%s2965 + $0x68] sm:$0xff]
        %v2980 = vld [vmem:[%s2965 + $0x70] sm:$0xff]
        %v2981 = vld [vmem:[%s2965 + $0x78] sm:$0xff]
        %v2982 = vld [vmem:[%s2965 + $0x80] sm:$0xff]
        %v2983 = vld [vmem:[%s2965 + $0x88] sm:$0xff]
        %v2984 = vld [vmem:[%s2965 + $0x90] sm:$0xff]
        %v2985 = vld [vmem:[%s2965 + $0x98] sm:$0xff]
        %v2986 = vld [vmem:[%s2965 + $0xa0] sm:$0xff]
        %v2987 = vld [vmem:[%s2965 + $0xa8] sm:$0xff]
        %v2988 = vld [vmem:[%s2965 + $0xb0] sm:$0xff]
        %v2989 = vld [vmem:[%s2965 + $0xb8] sm:$0xff]
        %v2990 = vld [vmem:[%s2965 + $0xc0] sm:$0xff]
        %v2991 = vld [vmem:[%s2965 + $0xc8] sm:$0xff]
        %v2992 = vld [vmem:[%s2965 + $0xd0] sm:$0xff]
        %v2993 = vld [vmem:[%s2965 + $0xd8] sm:$0xff]
        %v2994 = vld [vmem:[%s2965 + $0xe0] sm:$0xff]
        %v2995 = vld [vmem:[%s2965 + $0xe8] sm:$0xff]
        %v2996 = vld [vmem:[%s2965 + $0xf0] sm:$0xff]
        %v2997 = vld [vmem:[%s2965 + $0xf8] sm:$0xff]
        %v2998 = vld [vmem:[%s2965 + $0x100] sm:$0xff]
        %v2999 = vld [vmem:[%s2965 + $0x108] sm:$0xff]
        %v3000 = vld [vmem:[%s2965 + $0x110] sm:$0xff]
        %v3001 = vld [vmem:[%s2965 + $0x118] sm:$0xff]
        %v3002 = vld [vmem:[%s2965 + $0x120] sm:$0xff]
        %v3003 = vld [vmem:[%s2965 + $0x128] sm:$0xff]
        %v3004 = vld [vmem:[%s2965 + $0x130] sm:$0xff]
        %v3005 = vld [vmem:[%s2965 + $0x138] sm:$0xff]
        %v3006 = vld [vmem:[%s2965 + $0x140] sm:$0xff]
        %v3007 = vld [vmem:[%s2965 + $0x148] sm:$0xff]
        %v3008 = vld [vmem:[%s2965 + $0x150] sm:$0xff]
        %v3009 = vld [vmem:[%s2965 + $0x158] sm:$0xff]
        %v3010 = vld [vmem:[%s2965 + $0x160] sm:$0xff]
        %v3011 = vld [vmem:[%s2965 + $0x168] sm:$0xff]
        %v3012 = vld [vmem:[%s2965 + $0x170] sm:$0xff]
        %v3013 = vld [vmem:[%s2965 + $0x178] sm:$0xff]
        %v3014 = vld [vmem:[%s2965 + $0x180] sm:$0xff]
        %v3015 = vld [vmem:[%s2965 + $0x188] sm:$0xff]
        %v3016 = vld [vmem:[%s2965 + $0x190] sm:$0xff]
        %v3017 = vld [vmem:[%s2965 + $0x198] sm:$0xff]
        %v3018 = vld [vmem:[%s2965 + $0x1a0] sm:$0xff]
        %v3019 = vld [vmem:[%s2965 + $0x1a8] sm:$0xff]
        %v3020 = vld [vmem:[%s2965 + $0x1b0] sm:$0xff]
        %v3021 = vld [vmem:[%s2965 + $0x1b8] sm:$0xff]
        %v3022 = vld [vmem:[%s2965 + $0x1c0] sm:$0xff]
        %v3023 = vld [vmem:[%s2965 + $0x1c8] sm:$0xff]
        %v3024 = vld [vmem:[%s2965 + $0x1d0] sm:$0xff]
        %v3025 = vld [vmem:[%s2965 + $0x1d8] sm:$0xff]
        %v3026 = vld [vmem:[%s2965 + $0x1e0] sm:$0xff]
        %v3027 = vld [vmem:[%s2965 + $0x1e8] sm:$0xff]
        %v3028 = vld [vmem:[%s2965 + $0x1f0] sm:$0xff]
        %v3029 = vld [vmem:[%s2965 + $0x1f8] sm:$0xff]
        %v3030 = vld [vmem:[%s2965 + $0x200] sm:$0xff]
        %v3031 = vld [vmem:[%s2965 + $0x208] sm:$0xff]
        %v3032 = vld [vmem:[%s2965 + $0x210] sm:$0xff]
        %v3033 = vld [vmem:[%s2965 + $0x218] sm:$0xff]
        %v3034 = vld [vmem:[%s2965 + $0x220] sm:$0xff]
        %v3035 = vld [vmem:[%s2965 + $0x228] sm:$0xff]
        %v3036 = vld [vmem:[%s2965 + $0x230] sm:$0xff]
        %v3037 = vld [vmem:[%s2965 + $0x238] sm:$0xff]
        %v3038 = vld [vmem:[%s2965 + $0x240] sm:$0xff]
        %v3039 = vld [vmem:[%s2965 + $0x248] sm:$0xff]
        %v3040 = vld [vmem:[%s2965 + $0x250] sm:$0xff]
        %v3041 = vld [vmem:[%s2965 + $0x258] sm:$0xff]
        %v3042 = vld [vmem:[%s2965 + $0x260] sm:$0xff]
        %v3043 = vld [vmem:[%s2965 + $0x268] sm:$0xff]
        %v3044 = vld [vmem:[%s2965 + $0x270] sm:$0xff]
        %v3045 = vld [vmem:[%s2965 + $0x278] sm:$0xff]
        %v3046 = vld [vmem:[%s2965 + $0x280] sm:$0xff]
        %v3047 = vld [vmem:[%s2965 + $0x288] sm:$0xff]
        %v3048 = vld [vmem:[%s2965 + $0x290] sm:$0xff]
        %v3049 = vld [vmem:[%s2965 + $0x298] sm:$0xff]
        %v3050 = vld [vmem:[%s2965 + $0x2a0] sm:$0xff]
        %v3051 = vld [vmem:[%s2965 + $0x2a8] sm:$0xff]
        %v3052 = vld [vmem:[%s2965 + $0x2b0] sm:$0xff]
        %v3053 = vld [vmem:[%s2965 + $0x2b8] sm:$0xff]
        %v3054 = vld [vmem:[%s2965 + $0x2c0] sm:$0xff]
        %v3055 = vld [vmem:[%s2965 + $0x2c8] sm:$0xff]
        %v3056 = vld [vmem:[%s2965 + $0x2d0] sm:$0xff]
        %v3057 = vld [vmem:[%s2965 + $0x2d8] sm:$0xff]
        %v3058 = vld [vmem:[%s2965 + $0x2e0] sm:$0xff]
        %v3059 = vld [vmem:[%s2965 + $0x2e8] sm:$0xff]
        %v3060 = vld [vmem:[%s2965 + $0x2f0] sm:$0xff]
        %v3061 = vld [vmem:[%s2965 + $0x2f8] sm:$0xff]
        %v3062 = vld [vmem:[%s2965 + $0x300] sm:$0xff]
        %v3063 = vld [vmem:[%s2965 + $0x308] sm:$0xff]
        %v3064 = vld [vmem:[%s2965 + $0x310] sm:$0xff]
        %v3065 = vld [vmem:[%s2965 + $0x318] sm:$0xff]
        %v3066 = vld [vmem:[%s2965 + $0x320] sm:$0xff]
        %v3067 = vld [vmem:[%s2965 + $0x328] sm:$0xff]
        %v3068 = vld [vmem:[%s2965 + $0x330] sm:$0xff]
        %v3069 = vld [vmem:[%s2965 + $0x338] sm:$0xff]
        %v3070 = vld [vmem:[%s2965 + $0x340] sm:$0xff]
        %v3071 = vld [vmem:[%s2965 + $0x348] sm:$0xff]
        %v3072 = vld [vmem:[%s2965 + $0x350] sm:$0xff]
        %v3073 = vld [vmem:[%s2965 + $0x358] sm:$0xff]
        %v3074 = vld [vmem:[%s2965 + $0x360] sm:$0xff]
        %v3075 = vld [vmem:[%s2965 + $0x368] sm:$0xff]
        %v3076 = vld [vmem:[%s2965 + $0x370] sm:$0xff]
        %v3077 = vld [vmem:[%s2965 + $0x378] sm:$0xff]
        %v3078 = vld [vmem:[%s2965 + $0x380] sm:$0xff]
        %v3079 = vld [vmem:[%s2965 + $0x388] sm:$0xff]
        %v3080 = vld [vmem:[%s2965 + $0x390] sm:$0xff]
        %v3081 = vld [vmem:[%s2965 + $0x398] sm:$0xff]
        %v3082 = vld [vmem:[%s2965 + $0x3a0] sm:$0xff]
        %v3083 = vld [vmem:[%s2965 + $0x3a8] sm:$0xff]
        %v3084 = vld [vmem:[%s2965 + $0x3b0] sm:$0xff]
        %v3085 = vld [vmem:[%s2965 + $0x3b8] sm:$0xff]
        %v3086 = vld [vmem:[%s2965 + $0x3c0] sm:$0xff]
        %v3087 = vld [vmem:[%s2965 + $0x3c8] sm:$0xff]
        %v3088 = vld [vmem:[%s2965 + $0x3d0] sm:$0xff]
        %v3089 = vld [vmem:[%s2965 + $0x3d8] sm:$0xff]
        %v3090 = vld [vmem:[%s2965 + $0x3e0] sm:$0xff]
        %v3091 = vld [vmem:[%s2965 + $0x3e8] sm:$0xff]
        %v3092 = vld [vmem:[%s2965 + $0x3f0] sm:$0xff]
        %v3093 = vld [vmem:[%s2965 + $0x3f8] sm:$0xff]
        %v3094 = vrot.slane %v1770, 4
        %v3095 = vrot.slane %v1772, 4
        %v3096 = vsel %vm1478, %v3094, %v3095
        %v3097 = vrot.slane %v1771, 4
        %v3098 = vrot.slane %v1773, 4
        %v3099 = vsel %vm1478, %v3097, %v3098
        %3102 = vmatpush.msra.mxu0 %v3026
        %3103 = vmatpush.msra.mxu0 %v3022
        %3104 = vmatpush.msra.mxu0 %v3018
        %3105 = vmatpush.msra.mxu0 %v3014
        %3106 = vmatpush.msra.mxu0 %v3010
        %3107 = vmatpush.msra.mxu0 %v3006
        %3108 = vmatpush.msra.mxu0 %v3002
        %3109 = vmatpush.msra.mxu0 %v2998
        %3110 = vmatpush.msra.mxu0 %v2994
        %3111 = vmatpush.msra.mxu0 %v2990
        %3112 = vmatpush.msra.mxu0 %v2986
        %3113 = vmatpush.msra.mxu0 %v2982
        %3114 = vmatpush.msra.mxu0 %v2978
        %3115 = vmatpush.msra.mxu0 %v2974
        %3116 = vmatpush.msra.mxu0 %v2970
        %3117 = vmatpush.msra.mxu0 %v2966
        %3118 = vmatmul.f32.gmra.mxu0 %v3096
        %v3119 = vpop.f32.mrf.mxu0
        %v3120 = vadd.f32 0.0, %v3119
        %3121 = vdwg.mxu0
        %3122 = vmatpush.msra.mxu0 %v3090
        %3123 = vmatpush.msra.mxu0 %v3086
        %3124 = vmatpush.msra.mxu0 %v3082
        %3125 = vmatpush.msra.mxu0 %v3078
        %3126 = vmatpush.msra.mxu0 %v3074
        %3127 = vmatpush.msra.mxu0 %v3070
        %3128 = vmatpush.msra.mxu0 %v3066
        %3129 = vmatpush.msra.mxu0 %v3062
        %3130 = vmatpush.msra.mxu0 %v3058
        %3131 = vmatpush.msra.mxu0 %v3054
        %3132 = vmatpush.msra.mxu0 %v3050
        %3133 = vmatpush.msra.mxu0 %v3046
        %3134 = vmatpush.msra.mxu0 %v3042
        %3135 = vmatpush.msra.mxu0 %v3038
        %3136 = vmatpush.msra.mxu0 %v3034
        %3137 = vmatpush.msra.mxu0 %v3030
        %3138 = vmatmul.f32.gmra.mxu0 %v3099
        %v3139 = vpop.f32.mrf.mxu0
        %v3140 = vadd.f32 %v3120, %v3139
        %3141 = vdwg.mxu0
        %3142 = vmatpush.msra.mxu0 %v3027
        %3143 = vmatpush.msra.mxu0 %v3023
        %3144 = vmatpush.msra.mxu0 %v3019
        %3145 = vmatpush.msra.mxu0 %v3015
        %3146 = vmatpush.msra.mxu0 %v3011
        %3147 = vmatpush.msra.mxu0 %v3007
        %3148 = vmatpush.msra.mxu0 %v3003
        %3149 = vmatpush.msra.mxu0 %v2999
        %3150 = vmatpush.msra.mxu0 %v2995
        %3151 = vmatpush.msra.mxu0 %v2991
        %3152 = vmatpush.msra.mxu0 %v2987
        %3153 = vmatpush.msra.mxu0 %v2983
        %3154 = vmatpush.msra.mxu0 %v2979
        %3155 = vmatpush.msra.mxu0 %v2975
        %3156 = vmatpush.msra.mxu0 %v2971
        %3157 = vmatpush.msra.mxu0 %v2967
        %3158 = vmatmul.f32.gmra.mxu0 %v3096
        %v3159 = vpop.f32.mrf.mxu0
        %v3160 = vadd.f32 0.0, %v3159
        %3161 = vdwg.mxu0
        %3162 = vmatpush.msra.mxu0 %v3091
        %3163 = vmatpush.msra.mxu0 %v3087
        %3164 = vmatpush.msra.mxu0 %v3083
        %3165 = vmatpush.msra.mxu0 %v3079
        %3166 = vmatpush.msra.mxu0 %v3075
        %3167 = vmatpush.msra.mxu0 %v3071
        %3168 = vmatpush.msra.mxu0 %v3067
        %3169 = vmatpush.msra.mxu0 %v3063
        %3170 = vmatpush.msra.mxu0 %v3059
        %3171 = vmatpush.msra.mxu0 %v3055
        %3172 = vmatpush.msra.mxu0 %v3051
        %3173 = vmatpush.msra.mxu0 %v3047
        %3174 = vmatpush.msra.mxu0 %v3043
        %3175 = vmatpush.msra.mxu0 %v3039
        %3176 = vmatpush.msra.mxu0 %v3035
        %3177 = vmatpush.msra.mxu0 %v3031
        %3178 = vmatmul.f32.gmra.mxu0 %v3099
        %v3179 = vpop.f32.mrf.mxu0
        %v3180 = vadd.f32 %v3160, %v3179
        %3181 = vdwg.mxu0
        %3182 = vmatpush.msra.mxu0 %v3028
        %3183 = vmatpush.msra.mxu0 %v3024
        %3184 = vmatpush.msra.mxu0 %v3020
        %3185 = vmatpush.msra.mxu0 %v3016
        %3186 = vmatpush.msra.mxu0 %v3012
        %3187 = vmatpush.msra.mxu0 %v3008
        %3188 = vmatpush.msra.mxu0 %v3004
        %3189 = vmatpush.msra.mxu0 %v3000
        %3190 = vmatpush.msra.mxu0 %v2996
        %3191 = vmatpush.msra.mxu0 %v2992
        %3192 = vmatpush.msra.mxu0 %v2988
        %3193 = vmatpush.msra.mxu0 %v2984
        %3194 = vmatpush.msra.mxu0 %v2980
        %3195 = vmatpush.msra.mxu0 %v2976
        %3196 = vmatpush.msra.mxu0 %v2972
        %3197 = vmatpush.msra.mxu0 %v2968
        %3198 = vmatmul.f32.gmra.mxu0 %v3096
        %v3199 = vpop.f32.mrf.mxu0
        %v3200 = vadd.f32 0.0, %v3199
        %3201 = vdwg.mxu0
        %3202 = vmatpush.msra.mxu0 %v3092
        %3203 = vmatpush.msra.mxu0 %v3088
        %3204 = vmatpush.msra.mxu0 %v3084
        %3205 = vmatpush.msra.mxu0 %v3080
        %3206 = vmatpush.msra.mxu0 %v3076
        %3207 = vmatpush.msra.mxu0 %v3072
        %3208 = vmatpush.msra.mxu0 %v3068
        %3209 = vmatpush.msra.mxu0 %v3064
        %3210 = vmatpush.msra.mxu0 %v3060
        %3211 = vmatpush.msra.mxu0 %v3056
        %3212 = vmatpush.msra.mxu0 %v3052
        %3213 = vmatpush.msra.mxu0 %v3048
        %3214 = vmatpush.msra.mxu0 %v3044
        %3215 = vmatpush.msra.mxu0 %v3040
        %3216 = vmatpush.msra.mxu0 %v3036
        %3217 = vmatpush.msra.mxu0 %v3032
        %3218 = vmatmul.f32.gmra.mxu0 %v3099
        %v3219 = vpop.f32.mrf.mxu0
        %v3220 = vadd.f32 %v3200, %v3219
        %3221 = vdwg.mxu0
        %3222 = vmatpush.msra.mxu0 %v3029
        %3223 = vmatpush.msra.mxu0 %v3025
        %3224 = vmatpush.msra.mxu0 %v3021
        %3225 = vmatpush.msra.mxu0 %v3017
        %3226 = vmatpush.msra.mxu0 %v3013
        %3227 = vmatpush.msra.mxu0 %v3009
        %3228 = vmatpush.msra.mxu0 %v3005
        %3229 = vmatpush.msra.mxu0 %v3001
        %3230 = vmatpush.msra.mxu0 %v2997
        %3231 = vmatpush.msra.mxu0 %v2993
        %3232 = vmatpush.msra.mxu0 %v2989
        %3233 = vmatpush.msra.mxu0 %v2985
        %3234 = vmatpush.msra.mxu0 %v2981
        %3235 = vmatpush.msra.mxu0 %v2977
        %3236 = vmatpush.msra.mxu0 %v2973
        %3237 = vmatpush.msra.mxu0 %v2969
        %3238 = vmatmul.f32.gmra.mxu0 %v3096
        %v3239 = vpop.f32.mrf.mxu0
        %v3240 = vadd.f32 0.0, %v3239
        %3241 = vdwg.mxu0
        %3242 = vmatpush.msra.mxu0 %v3093
        %3243 = vmatpush.msra.mxu0 %v3089
        %3244 = vmatpush.msra.mxu0 %v3085
        %3245 = vmatpush.msra.mxu0 %v3081
        %3246 = vmatpush.msra.mxu0 %v3077
        %3247 = vmatpush.msra.mxu0 %v3073
        %3248 = vmatpush.msra.mxu0 %v3069
        %3249 = vmatpush.msra.mxu0 %v3065
        %3250 = vmatpush.msra.mxu0 %v3061
        %3251 = vmatpush.msra.mxu0 %v3057
        %3252 = vmatpush.msra.mxu0 %v3053
        %3253 = vmatpush.msra.mxu0 %v3049
        %3254 = vmatpush.msra.mxu0 %v3045
        %3255 = vmatpush.msra.mxu0 %v3041
        %3256 = vmatpush.msra.mxu0 %v3037
        %3257 = vmatpush.msra.mxu0 %v3033
        %3258 = vmatmul.f32.gmra.mxu0 %v3099
        %v3259 = vpop.f32.mrf.mxu0
        %v3260 = vadd.f32 %v3240, %v3259
        %3261 = vdwg.mxu0
        %v3262 = vadd.f32 %v2961, %v3140
        %v3263 = vadd.f32 %v2962, %v3180
        %v3264 = vadd.f32 %v2963, %v3220
        %v3265 = vadd.f32 %v2964, %v3260
        %v3266 = vld [vmem:[#allocation10] sm:$0xf]
        %v3268 = vperm.slane %v3266, 0
        %v3269 = vperm.slane %v3266, 1
        %v3270 = vperm.slane %v3266, 2
        %v3271 = vperm.slane %v3266, 3
        %v3276 = vadd.f32 %v3262, %v3268
        %v3277 = vadd.f32 %v3263, %v3269
        %v3278 = vadd.f32 %v3264, %v3270
        %v3279 = vadd.f32 %v3265, %v3271
        %v3280 = vmul.f32 %v3276, 0.5
        %v3281 = vmul.f32 %v3277, 0.5
        %v3282 = vmul.f32 %v3278, 0.5
        %v3283 = vmul.f32 %v3279, 0.5
        %v3284 = vmul.f32 %v3276, 0.70710677
        %v3285 = vmul.f32 %v3277, 0.70710677
        %v3286 = vmul.f32 %v3278, 0.70710677
        %v3287 = vmul.f32 %v3279, 0.70710677
        %v3288 = vmul.f32 %v3284, %v3284
        %v3289 = vmin.f32 16.0, %v3288
        %v3290 = vmul.f32 %v3289, 2.1237322e-06
        %v3291 = vadd.f32 %v3290, 0.00028619796
        %v3292 = vmul.f32 %v3289, %v3291
        %v3293 = vadd.f32 %v3292, 0.0036580483
        %v3294 = vmul.f32 %v3289, %v3293
        %v3295 = vadd.f32 %v3294, 0.05243302
        %v3296 = vmul.f32 %v3289, %v3295
        %v3297 = vadd.f32 %v3296, 0.18741608
        %v3298 = vmul.f32 %v3289, %v3297
        %v3299 = vadd.f32 %v3298, 1.1283791
        %v3300 = vmul.f32 %v3284, %v3299
        %v3301 = vmul.f32 %v3289, 3.8918573e-05
        %v3302 = vadd.f32 %v3301, 0.001143296
        %v3303 = vmul.f32 %v3289, %v3302
        %v3304 = vadd.f32 %v3303, 0.014752088
        %v3305 = vmul.f32 %v3289, %v3304
        %v3306 = vadd.f32 %v3305, 0.112945676
        %v3307 = vmul.f32 %v3289, %v3306
        %v3308 = vadd.f32 %v3307, 0.4994258
        %v3309 = vmul.f32 %v3289, %v3308
        %v3310 = vadd.f32 %v3309, 1.0
        %v3311 = vrcp.pop %v3310
        %v3312 = vmul.f32 %v3310, %v3311
        %v3313 = vsub.f32 1.0, %v3312
        %v3314 = vmul.f32 %v3311, %v3313
        %v3315 = vadd.f32 %v3311, %v3314
        %vm3316 = vweird.f32 %v3310
        %vm3317 = vweird.f32 %v3311
        %vm3318 = vmor %vm3316, %vm3317
        %v3319 = vsel %vm3318, %v3311, %v3315
        %v3320 = vand.u32 2147483647, %v3310
        %vm3321 = vcmp.eq.f32.partialorder %v3320, 8.507059e+37
        %v3322 = vand.u32 %v3310, 2147483648
        %v3323 = vor.u32 1.1754944e-38, %v3322
        %v3324 = vsel %vm3321, %v3323, %v3319
        %v3325 = vmul.f32 %v3300, %v3324
        %v3326 = vmin.f32 %v3325, 1.0
        %v3327 = vmax.f32 %v3326, -1.0
        %v3328 = vmul.f32 %v3285, %v3285
        %v3329 = vmin.f32 16.0, %v3328
        %v3330 = vmul.f32 %v3329, 2.1237322e-06
        %v3331 = vadd.f32 %v3330, 0.00028619796
        %v3332 = vmul.f32 %v3329, %v3331
        %v3333 = vadd.f32 %v3332, 0.0036580483
        %v3334 = vmul.f32 %v3329, %v3333
        %v3335 = vadd.f32 %v3334, 0.05243302
        %v3336 = vmul.f32 %v3329, %v3335
        %v3337 = vadd.f32 %v3336, 0.18741608
        %v3338 = vmul.f32 %v3329, %v3337
        %v3339 = vadd.f32 %v3338, 1.1283791
        %v3340 = vmul.f32 %v3285, %v3339
        %v3341 = vmul.f32 %v3329, 3.8918573e-05
        %v3342 = vadd.f32 %v3341, 0.001143296
        %v3343 = vmul.f32 %v3329, %v3342
        %v3344 = vadd.f32 %v3343, 0.014752088
        %v3345 = vmul.f32 %v3329, %v3344
        %v3346 = vadd.f32 %v3345, 0.112945676
        %v3347 = vmul.f32 %v3329, %v3346
        %v3348 = vadd.f32 %v3347, 0.4994258
        %v3349 = vmul.f32 %v3329, %v3348
        %v3350 = vadd.f32 %v3349, 1.0
        %v3351 = vrcp.pop %v3350
        %v3352 = vmul.f32 %v3350, %v3351
        %v3353 = vsub.f32 1.0, %v3352
        %v3354 = vmul.f32 %v3351, %v3353
        %v3355 = vadd.f32 %v3351, %v3354
        %vm3356 = vweird.f32 %v3350
        %vm3357 = vweird.f32 %v3351
        %vm3358 = vmor %vm3356, %vm3357
        %v3359 = vsel %vm3358, %v3351, %v3355
        %v3360 = vand.u32 2147483647, %v3350
        %vm3361 = vcmp.eq.f32.partialorder %v3360, 8.507059e+37
        %v3362 = vand.u32 %v3350, 2147483648
        %v3363 = vor.u32 1.1754944e-38, %v3362
        %v3364 = vsel %vm3361, %v3363, %v3359
        %v3365 = vmul.f32 %v3340, %v3364
        %v3366 = vmin.f32 %v3365, 1.0
        %v3367 = vmax.f32 %v3366, -1.0
        %v3368 = vmul.f32 %v3286, %v3286
        %v3369 = vmin.f32 16.0, %v3368
        %v3370 = vmul.f32 %v3369, 2.1237322e-06
        %v3371 = vadd.f32 %v3370, 0.00028619796
        %v3372 = vmul.f32 %v3369, %v3371
        %v3373 = vadd.f32 %v3372, 0.0036580483
        %v3374 = vmul.f32 %v3369, %v3373
        %v3375 = vadd.f32 %v3374, 0.05243302
        %v3376 = vmul.f32 %v3369, %v3375
        %v3377 = vadd.f32 %v3376, 0.18741608
        %v3378 = vmul.f32 %v3369, %v3377
        %v3379 = vadd.f32 %v3378, 1.1283791
        %v3380 = vmul.f32 %v3286, %v3379
        %v3381 = vmul.f32 %v3369, 3.8918573e-05
        %v3382 = vadd.f32 %v3381, 0.001143296
        %v3383 = vmul.f32 %v3369, %v3382
        %v3384 = vadd.f32 %v3383, 0.014752088
        %v3385 = vmul.f32 %v3369, %v3384
        %v3386 = vadd.f32 %v3385, 0.112945676
        %v3387 = vmul.f32 %v3369, %v3386
        %v3388 = vadd.f32 %v3387, 0.4994258
        %v3389 = vmul.f32 %v3369, %v3388
        %v3390 = vadd.f32 %v3389, 1.0
        %v3391 = vrcp.pop %v3390
        %v3392 = vmul.f32 %v3390, %v3391
        %v3393 = vsub.f32 1.0, %v3392
        %v3394 = vmul.f32 %v3391, %v3393
        %v3395 = vadd.f32 %v3391, %v3394
        %vm3396 = vweird.f32 %v3390
        %vm3397 = vweird.f32 %v3391
        %vm3398 = vmor %vm3396, %vm3397
        %v3399 = vsel %vm3398, %v3391, %v3395
        %v3400 = vand.u32 2147483647, %v3390
        %vm3401 = vcmp.eq.f32.partialorder %v3400, 8.507059e+37
        %v3402 = vand.u32 %v3390, 2147483648
        %v3403 = vor.u32 1.1754944e-38, %v3402
        %v3404 = vsel %vm3401, %v3403, %v3399
        %v3405 = vmul.f32 %v3380, %v3404
        %v3406 = vmin.f32 %v3405, 1.0
        %v3407 = vmax.f32 %v3406, -1.0
        %v3408 = vmul.f32 %v3287, %v3287
        %v3409 = vmin.f32 16.0, %v3408
        %v3410 = vmul.f32 %v3409, 2.1237322e-06
        %v3411 = vadd.f32 %v3410, 0.00028619796
        %v3412 = vmul.f32 %v3409, %v3411
        %v3413 = vadd.f32 %v3412, 0.0036580483
        %v3414 = vmul.f32 %v3409, %v3413
        %v3415 = vadd.f32 %v3414, 0.05243302
        %v3416 = vmul.f32 %v3409, %v3415
        %v3417 = vadd.f32 %v3416, 0.18741608
        %v3418 = vmul.f32 %v3409, %v3417
        %v3419 = vadd.f32 %v3418, 1.1283791
        %v3420 = vmul.f32 %v3287, %v3419
        %v3421 = vmul.f32 %v3409, 3.8918573e-05
        %v3422 = vadd.f32 %v3421, 0.001143296
        %v3423 = vmul.f32 %v3409, %v3422
        %v3424 = vadd.f32 %v3423, 0.014752088
        %v3425 = vmul.f32 %v3409, %v3424
        %v3426 = vadd.f32 %v3425, 0.112945676
        %v3427 = vmul.f32 %v3409, %v3426
        %v3428 = vadd.f32 %v3427, 0.4994258
        %v3429 = vmul.f32 %v3409, %v3428
        %v3430 = vadd.f32 %v3429, 1.0
        %v3431 = vrcp.pop %v3430
        %v3432 = vmul.f32 %v3430, %v3431
        %v3433 = vsub.f32 1.0, %v3432
        %v3434 = vmul.f32 %v3431, %v3433
        %v3435 = vadd.f32 %v3431, %v3434
        %vm3436 = vweird.f32 %v3430
        %vm3437 = vweird.f32 %v3431
        %vm3438 = vmor %vm3436, %vm3437
        %v3439 = vsel %vm3438, %v3431, %v3435
        %v3440 = vand.u32 2147483647, %v3430
        %vm3441 = vcmp.eq.f32.partialorder %v3440, 8.507059e+37
        %v3442 = vand.u32 %v3430, 2147483648
        %v3443 = vor.u32 1.1754944e-38, %v3442
        %v3444 = vsel %vm3441, %v3443, %v3439
        %v3445 = vmul.f32 %v3420, %v3444
        %v3446 = vmin.f32 %v3445, 1.0
        %v3447 = vmax.f32 %v3446, -1.0
        %v3448 = vadd.f32 %v3327, 1.0
        %v3449 = vadd.f32 %v3367, 1.0
        %v3450 = vadd.f32 %v3407, 1.0
        %v3451 = vadd.f32 %v3447, 1.0
        %v3452 = vmul.f32 %v3280, %v3448
        %v3453 = vmul.f32 %v3281, %v3449
        %v3454 = vmul.f32 %v3282, %v3450
        %v3455 = vmul.f32 %v3283, %v3451
        %v3456 = vmax.f32 %v3452, %v3454
        %v3457 = vmax.f32 %v3453, %v3455
        %v3460 = vrot.slane %v3456, 6
        %v3461 = vrot.slane %v3457, 6
        %3464 = vst [vmem:[#allocation3] sm:$0xfc] %v3460
        %3465 = vst [vmem:[#allocation3 + $0x8] sm:$0xfc] %v3461
        %3466 = vst [vmem:[#allocation3 + $0x10] sm:$0x3] %v3460
        %3467 = vst [vmem:[#allocation3 + $0x18] sm:$0x3] %v3461
        %v3468 = vld [vmem:[#allocation3] sm:$0xff]
        %v3469 = vld [vmem:[#allocation3 + $0x8] sm:$0xff]
        %v3470 = vld [vmem:[#allocation3 + $0x10] sm:$0xf]
        %v3471 = vld [vmem:[#allocation3 + $0x18] sm:$0xf]
        %v3472 = vld [vmem:[#allocation12] sm:$0xff]
        %v3473 = vld [vmem:[#allocation12 + $0x8] sm:$0xff]
        %v3474 = vld [vmem:[#allocation12 + $0x10] sm:$0xff]
        %v3475 = vld [vmem:[#allocation12 + $0x18] sm:$0xff]
        %v3476 = vld [vmem:[#allocation12 + $0x20] sm:$0xff]
        %v3477 = vld [vmem:[#allocation12 + $0x28] sm:$0xff]
        %v3478 = vld [vmem:[#allocation12 + $0x30] sm:$0xff]
        %v3479 = vld [vmem:[#allocation12 + $0x38] sm:$0xff]
        %v3480 = vld [vmem:[#allocation12 + $0x40] sm:$0xff]
        %v3481 = vld [vmem:[#allocation12 + $0x48] sm:$0xff]
        %v3482 = vld [vmem:[#allocation12 + $0x50] sm:$0xff]
        %v3483 = vld [vmem:[#allocation12 + $0x58] sm:$0xff]
        %v3484 = vld [vmem:[#allocation12 + $0x60] sm:$0xff]
        %v3485 = vld [vmem:[#allocation12 + $0x68] sm:$0xff]
        %v3486 = vld [vmem:[#allocation12 + $0x70] sm:$0xff]
        %v3487 = vld [vmem:[#allocation12 + $0x78] sm:$0xff]
        %v3488 = vld [vmem:[#allocation12 + $0x80] sm:$0xff]
        %v3489 = vld [vmem:[#allocation12 + $0x88] sm:$0xff]
        %v3490 = vld [vmem:[#allocation12 + $0x90] sm:$0xff]
        %v3491 = vld [vmem:[#allocation12 + $0x98] sm:$0xff]
        %v3492 = vld [vmem:[#allocation12 + $0xa0] sm:$0xff]
        %v3493 = vld [vmem:[#allocation12 + $0xa8] sm:$0xff]
        %v3494 = vld [vmem:[#allocation12 + $0xb0] sm:$0xff]
        %v3495 = vld [vmem:[#allocation12 + $0xb8] sm:$0xff]
        %v3496 = vld [vmem:[#allocation12 + $0xc0] sm:$0xff]
        %v3497 = vld [vmem:[#allocation12 + $0xc8] sm:$0xff]
        %v3498 = vld [vmem:[#allocation12 + $0xd0] sm:$0xff]
        %v3499 = vld [vmem:[#allocation12 + $0xd8] sm:$0xff]
        %v3500 = vld [vmem:[#allocation12 + $0xe0] sm:$0xff]
        %v3501 = vld [vmem:[#allocation12 + $0xe8] sm:$0xff]
        %v3502 = vld [vmem:[#allocation12 + $0xf0] sm:$0xff]
        %v3503 = vld [vmem:[#allocation12 + $0xf8] sm:$0xff]
        %v3504 = vld [vmem:[#allocation12 + $0x100] sm:$0xff]
        %v3505 = vld [vmem:[#allocation12 + $0x108] sm:$0xff]
        %v3506 = vld [vmem:[#allocation12 + $0x110] sm:$0xff]
        %v3507 = vld [vmem:[#allocation12 + $0x118] sm:$0xff]
        %v3508 = vld [vmem:[#allocation12 + $0x120] sm:$0xff]
        %v3509 = vld [vmem:[#allocation12 + $0x128] sm:$0xff]
        %v3510 = vld [vmem:[#allocation12 + $0x130] sm:$0xff]
        %v3511 = vld [vmem:[#allocation12 + $0x138] sm:$0xff]
        %v3512 = vld [vmem:[#allocation12 + $0x140] sm:$0xff]
        %v3513 = vld [vmem:[#allocation12 + $0x148] sm:$0xff]
        %v3514 = vld [vmem:[#allocation12 + $0x150] sm:$0xff]
        %v3515 = vld [vmem:[#allocation12 + $0x158] sm:$0xff]
        %v3516 = vld [vmem:[#allocation12 + $0x160] sm:$0xff]
        %v3517 = vld [vmem:[#allocation12 + $0x168] sm:$0xff]
        %v3518 = vld [vmem:[#allocation12 + $0x170] sm:$0xff]
        %v3519 = vld [vmem:[#allocation12 + $0x178] sm:$0xff]
        %v3520 = vld [vmem:[#allocation12 + $0x180] sm:$0xff]
        %v3521 = vld [vmem:[#allocation12 + $0x188] sm:$0xff]
        %v3522 = vld [vmem:[#allocation12 + $0x190] sm:$0xff]
        %v3523 = vld [vmem:[#allocation12 + $0x198] sm:$0xff]
        %v3524 = vld [vmem:[#allocation12 + $0x1a0] sm:$0xff]
        %v3525 = vld [vmem:[#allocation12 + $0x1a8] sm:$0xff]
        %v3526 = vld [vmem:[#allocation12 + $0x1b0] sm:$0xff]
        %v3527 = vld [vmem:[#allocation12 + $0x1b8] sm:$0xff]
        %v3528 = vld [vmem:[#allocation12 + $0x1c0] sm:$0xff]
        %v3529 = vld [vmem:[#allocation12 + $0x1c8] sm:$0xff]
        %v3530 = vld [vmem:[#allocation12 + $0x1d0] sm:$0xff]
        %v3531 = vld [vmem:[#allocation12 + $0x1d8] sm:$0xff]
        %v3532 = vld [vmem:[#allocation12 + $0x1e0] sm:$0xff]
        %v3533 = vld [vmem:[#allocation12 + $0x1e8] sm:$0xff]
        %v3534 = vld [vmem:[#allocation12 + $0x1f0] sm:$0xff]
        %v3535 = vld [vmem:[#allocation12 + $0x1f8] sm:$0xff]
        %s3536 = scalar_lea.vmem [#allocation12], 512
        %v3537 = vld [vmem:[%s3536] sm:$0xff]
        %v3538 = vld [vmem:[%s3536 + $0x8] sm:$0xff]
        %v3539 = vld [vmem:[%s3536 + $0x10] sm:$0xff]
        %v3540 = vld [vmem:[%s3536 + $0x18] sm:$0xff]
        %v3541 = vld [vmem:[%s3536 + $0x20] sm:$0xff]
        %v3542 = vld [vmem:[%s3536 + $0x28] sm:$0xff]
        %v3543 = vld [vmem:[%s3536 + $0x30] sm:$0xff]
        %v3544 = vld [vmem:[%s3536 + $0x38] sm:$0xff]
        %v3545 = vld [vmem:[%s3536 + $0x40] sm:$0xff]
        %v3546 = vld [vmem:[%s3536 + $0x48] sm:$0xff]
        %v3547 = vld [vmem:[%s3536 + $0x50] sm:$0xff]
        %v3548 = vld [vmem:[%s3536 + $0x58] sm:$0xff]
        %v3549 = vld [vmem:[%s3536 + $0x60] sm:$0xff]
        %v3550 = vld [vmem:[%s3536 + $0x68] sm:$0xff]
        %v3551 = vld [vmem:[%s3536 + $0x70] sm:$0xff]
        %v3552 = vld [vmem:[%s3536 + $0x78] sm:$0xff]
        %v3553 = vld [vmem:[%s3536 + $0x80] sm:$0xff]
        %v3554 = vld [vmem:[%s3536 + $0x88] sm:$0xff]
        %v3555 = vld [vmem:[%s3536 + $0x90] sm:$0xff]
        %v3556 = vld [vmem:[%s3536 + $0x98] sm:$0xff]
        %v3557 = vld [vmem:[%s3536 + $0xa0] sm:$0xff]
        %v3558 = vld [vmem:[%s3536 + $0xa8] sm:$0xff]
        %v3559 = vld [vmem:[%s3536 + $0xb0] sm:$0xff]
        %v3560 = vld [vmem:[%s3536 + $0xb8] sm:$0xff]
        %v3561 = vld [vmem:[%s3536 + $0xc0] sm:$0xff]
        %v3562 = vld [vmem:[%s3536 + $0xc8] sm:$0xff]
        %v3563 = vld [vmem:[%s3536 + $0xd0] sm:$0xff]
        %v3564 = vld [vmem:[%s3536 + $0xd8] sm:$0xff]
        %v3565 = vld [vmem:[%s3536 + $0xe0] sm:$0xff]
        %v3566 = vld [vmem:[%s3536 + $0xe8] sm:$0xff]
        %v3567 = vld [vmem:[%s3536 + $0xf0] sm:$0xff]
        %v3568 = vld [vmem:[%s3536 + $0xf8] sm:$0xff]
        %v3569 = vld [vmem:[%s3536 + $0x100] sm:$0xff]
        %v3570 = vld [vmem:[%s3536 + $0x108] sm:$0xff]
        %v3571 = vld [vmem:[%s3536 + $0x110] sm:$0xff]
        %v3572 = vld [vmem:[%s3536 + $0x118] sm:$0xff]
        %v3573 = vld [vmem:[%s3536 + $0x120] sm:$0xff]
        %v3574 = vld [vmem:[%s3536 + $0x128] sm:$0xff]
        %v3575 = vld [vmem:[%s3536 + $0x130] sm:$0xff]
        %v3576 = vld [vmem:[%s3536 + $0x138] sm:$0xff]
        %v3577 = vld [vmem:[%s3536 + $0x140] sm:$0xff]
        %v3578 = vld [vmem:[%s3536 + $0x148] sm:$0xff]
        %v3579 = vld [vmem:[%s3536 + $0x150] sm:$0xff]
        %v3580 = vld [vmem:[%s3536 + $0x158] sm:$0xff]
        %v3581 = vld [vmem:[%s3536 + $0x160] sm:$0xff]
        %v3582 = vld [vmem:[%s3536 + $0x168] sm:$0xff]
        %v3583 = vld [vmem:[%s3536 + $0x170] sm:$0xff]
        %v3584 = vld [vmem:[%s3536 + $0x178] sm:$0xff]
        %v3585 = vld [vmem:[%s3536 + $0x180] sm:$0xff]
        %v3586 = vld [vmem:[%s3536 + $0x188] sm:$0xff]
        %v3587 = vld [vmem:[%s3536 + $0x190] sm:$0xff]
        %v3588 = vld [vmem:[%s3536 + $0x198] sm:$0xff]
        %v3589 = vld [vmem:[%s3536 + $0x1a0] sm:$0xff]
        %v3590 = vld [vmem:[%s3536 + $0x1a8] sm:$0xff]
        %v3591 = vld [vmem:[%s3536 + $0x1b0] sm:$0xff]
        %v3592 = vld [vmem:[%s3536 + $0x1b8] sm:$0xff]
        %v3593 = vld [vmem:[%s3536 + $0x1c0] sm:$0xff]
        %v3594 = vld [vmem:[%s3536 + $0x1c8] sm:$0xff]
        %v3595 = vld [vmem:[%s3536 + $0x1d0] sm:$0xff]
        %v3596 = vld [vmem:[%s3536 + $0x1d8] sm:$0xff]
        %v3597 = vld [vmem:[%s3536 + $0x1e0] sm:$0xff]
        %v3598 = vld [vmem:[%s3536 + $0x1e8] sm:$0xff]
        %v3599 = vld [vmem:[%s3536 + $0x1f0] sm:$0xff]
        %v3600 = vld [vmem:[%s3536 + $0x1f8] sm:$0xff]
        %v3605 = vrot.slane %v3468, 1
        %v3606 = vrot.slane %v3470, 1
        %v3607 = vsel %vm1102, %v3605, %v3606
        %v3608 = vrot.slane %v3469, 1
        %v3609 = vrot.slane %v3471, 1
        %v3610 = vsel %vm1102, %v3608, %v3609
        %3613 = vmatpush.msra.mxu0 %v3567
        %3614 = vmatpush.msra.mxu0 %v3565
        %3615 = vmatpush.msra.mxu0 %v3563
        %3616 = vmatpush.msra.mxu0 %v3561
        %3617 = vmatpush.msra.mxu0 %v3559
        %3618 = vmatpush.msra.mxu0 %v3557
        %3619 = vmatpush.msra.mxu0 %v3555
        %3620 = vmatpush.msra.mxu0 %v3553
        %3621 = vmatpush.msra.mxu0 %v3551
        %3622 = vmatpush.msra.mxu0 %v3549
        %3623 = vmatpush.msra.mxu0 %v3547
        %3624 = vmatpush.msra.mxu0 %v3545
        %3625 = vmatpush.msra.mxu0 %v3543
        %3626 = vmatpush.msra.mxu0 %v3541
        %3627 = vmatpush.msra.mxu0 %v3539
        %3628 = vmatpush.msra.mxu0 %v3537
        %3629 = vmatmul.f32.gmra.mxu0 %v3607
        %v3630 = vpop.f32.mrf.mxu0
        %v3631 = vadd.f32 0.0, %v3630
        %3632 = vdwg.mxu0
        %3633 = vmatpush.msra.mxu0 %v3599
        %3634 = vmatpush.msra.mxu0 %v3597
        %3635 = vmatpush.msra.mxu0 %v3595
        %3636 = vmatpush.msra.mxu0 %v3593
        %3637 = vmatpush.msra.mxu0 %v3591
        %3638 = vmatpush.msra.mxu0 %v3589
        %3639 = vmatpush.msra.mxu0 %v3587
        %3640 = vmatpush.msra.mxu0 %v3585
        %3641 = vmatpush.msra.mxu0 %v3583
        %3642 = vmatpush.msra.mxu0 %v3581
        %3643 = vmatpush.msra.mxu0 %v3579
        %3644 = vmatpush.msra.mxu0 %v3577
        %3645 = vmatpush.msra.mxu0 %v3575
        %3646 = vmatpush.msra.mxu0 %v3573
        %3647 = vmatpush.msra.mxu0 %v3571
        %3648 = vmatpush.msra.mxu0 %v3569
        %3649 = vmatmul.f32.gmra.mxu0 %v3610
        %v3650 = vpop.f32.mrf.mxu0
        %v3651 = vadd.f32 %v3631, %v3650
        %3652 = vdwg.mxu0
        %3653 = vmatpush.msra.mxu0 %v3568
        %3654 = vmatpush.msra.mxu0 %v3566
        %3655 = vmatpush.msra.mxu0 %v3564
        %3656 = vmatpush.msra.mxu0 %v3562
        %3657 = vmatpush.msra.mxu0 %v3560
        %3658 = vmatpush.msra.mxu0 %v3558
        %3659 = vmatpush.msra.mxu0 %v3556
        %3660 = vmatpush.msra.mxu0 %v3554
        %3661 = vmatpush.msra.mxu0 %v3552
        %3662 = vmatpush.msra.mxu0 %v3550
        %3663 = vmatpush.msra.mxu0 %v3548
        %3664 = vmatpush.msra.mxu0 %v3546
        %3665 = vmatpush.msra.mxu0 %v3544
        %3666 = vmatpush.msra.mxu0 %v3542
        %3667 = vmatpush.msra.mxu0 %v3540
        %3668 = vmatpush.msra.mxu0 %v3538
        %3669 = vmatmul.f32.gmra.mxu0 %v3607
        %v3670 = vpop.f32.mrf.mxu0
        %v3671 = vadd.f32 0.0, %v3670
        %3672 = vdwg.mxu0
        %3673 = vmatpush.msra.mxu0 %v3600
        %3674 = vmatpush.msra.mxu0 %v3598
        %3675 = vmatpush.msra.mxu0 %v3596
        %3676 = vmatpush.msra.mxu0 %v3594
        %3677 = vmatpush.msra.mxu0 %v3592
        %3678 = vmatpush.msra.mxu0 %v3590
        %3679 = vmatpush.msra.mxu0 %v3588
        %3680 = vmatpush.msra.mxu0 %v3586
        %3681 = vmatpush.msra.mxu0 %v3584
        %3682 = vmatpush.msra.mxu0 %v3582
        %3683 = vmatpush.msra.mxu0 %v3580
        %3684 = vmatpush.msra.mxu0 %v3578
        %3685 = vmatpush.msra.mxu0 %v3576
        %3686 = vmatpush.msra.mxu0 %v3574
        %3687 = vmatpush.msra.mxu0 %v3572
        %3688 = vmatpush.msra.mxu0 %v3570
        %3689 = vmatmul.f32.gmra.mxu0 %v3610
        %v3690 = vpop.f32.mrf.mxu0
        %v3691 = vadd.f32 %v3671, %v3690
        %3692 = vdwg.mxu0
        %3693 = vmatpush.msra.mxu0 %v3502
        %3694 = vmatpush.msra.mxu0 %v3500
        %3695 = vmatpush.msra.mxu0 %v3498
        %3696 = vmatpush.msra.mxu0 %v3496
        %3697 = vmatpush.msra.mxu0 %v3494
        %3698 = vmatpush.msra.mxu0 %v3492
        %3699 = vmatpush.msra.mxu0 %v3490
        %3700 = vmatpush.msra.mxu0 %v3488
        %3701 = vmatpush.msra.mxu0 %v3486
        %3702 = vmatpush.msra.mxu0 %v3484
        %3703 = vmatpush.msra.mxu0 %v3482
        %3704 = vmatpush.msra.mxu0 %v3480
        %3705 = vmatpush.msra.mxu0 %v3478
        %3706 = vmatpush.msra.mxu0 %v3476
        %3707 = vmatpush.msra.mxu0 %v3474
        %3708 = vmatpush.msra.mxu0 %v3472
        %3709 = vmatmul.f32.gmra.mxu0 %v3468
        %v3710 = vpop.f32.mrf.mxu0
        %v3711 = vadd.f32 %v3651, %v3710
        %3712 = vdwg.mxu0
        %3713 = vmatpush.msra.mxu0 %v3534
        %3714 = vmatpush.msra.mxu0 %v3532
        %3715 = vmatpush.msra.mxu0 %v3530
        %3716 = vmatpush.msra.mxu0 %v3528
        %3717 = vmatpush.msra.mxu0 %v3526
        %3718 = vmatpush.msra.mxu0 %v3524
        %3719 = vmatpush.msra.mxu0 %v3522
        %3720 = vmatpush.msra.mxu0 %v3520
        %3721 = vmatpush.msra.mxu0 %v3518
        %3722 = vmatpush.msra.mxu0 %v3516
        %3723 = vmatpush.msra.mxu0 %v3514
        %3724 = vmatpush.msra.mxu0 %v3512
        %3725 = vmatpush.msra.mxu0 %v3510
        %3726 = vmatpush.msra.mxu0 %v3508
        %3727 = vmatpush.msra.mxu0 %v3506
        %3728 = vmatpush.msra.mxu0 %v3504
        %3729 = vmatmul.f32.gmra.mxu0 %v3469
        %v3730 = vpop.f32.mrf.mxu0
        %v3731 = vadd.f32 %v3711, %v3730
        %3732 = vdwg.mxu0
        %3733 = vmatpush.msra.mxu0 %v3503
        %3734 = vmatpush.msra.mxu0 %v3501
        %3735 = vmatpush.msra.mxu0 %v3499
        %3736 = vmatpush.msra.mxu0 %v3497
        %3737 = vmatpush.msra.mxu0 %v3495
        %3738 = vmatpush.msra.mxu0 %v3493
        %3739 = vmatpush.msra.mxu0 %v3491
        %3740 = vmatpush.msra.mxu0 %v3489
        %3741 = vmatpush.msra.mxu0 %v3487
        %3742 = vmatpush.msra.mxu0 %v3485
        %3743 = vmatpush.msra.mxu0 %v3483
        %3744 = vmatpush.msra.mxu0 %v3481
        %3745 = vmatpush.msra.mxu0 %v3479
        %3746 = vmatpush.msra.mxu0 %v3477
        %3747 = vmatpush.msra.mxu0 %v3475
        %3748 = vmatpush.msra.mxu0 %v3473
        %3749 = vmatmul.f32.gmra.mxu0 %v3468
        %v3750 = vpop.f32.mrf.mxu0
        %v3751 = vadd.f32 %v3691, %v3750
        %3752 = vdwg.mxu0
        %3753 = vmatpush.msra.mxu0 %v3535
        %3754 = vmatpush.msra.mxu0 %v3533
        %3755 = vmatpush.msra.mxu0 %v3531
        %3756 = vmatpush.msra.mxu0 %v3529
        %3757 = vmatpush.msra.mxu0 %v3527
        %3758 = vmatpush.msra.mxu0 %v3525
        %3759 = vmatpush.msra.mxu0 %v3523
        %3760 = vmatpush.msra.mxu0 %v3521
        %3761 = vmatpush.msra.mxu0 %v3519
        %3762 = vmatpush.msra.mxu0 %v3517
        %3763 = vmatpush.msra.mxu0 %v3515
        %3764 = vmatpush.msra.mxu0 %v3513
        %3765 = vmatpush.msra.mxu0 %v3511
        %3766 = vmatpush.msra.mxu0 %v3509
        %3767 = vmatpush.msra.mxu0 %v3507
        %3768 = vmatpush.msra.mxu0 %v3505
        %3769 = vmatmul.f32.gmra.mxu0 %v3469
        %v3770 = vpop.f32.mrf.mxu0
        %v3771 = vadd.f32 %v3751, %v3770
        %3772 = vdwg.mxu0
        %s3773 = scalar_lea.vmem [#allocation12], 1024
        %v3774 = vld [vmem:[%s3773] sm:$0xff]
        %v3775 = vld [vmem:[%s3773 + $0x8] sm:$0xff]
        %v3776 = vld [vmem:[%s3773 + $0x10] sm:$0xff]
        %v3777 = vld [vmem:[%s3773 + $0x18] sm:$0xff]
        %v3778 = vld [vmem:[%s3773 + $0x20] sm:$0xff]
        %v3779 = vld [vmem:[%s3773 + $0x28] sm:$0xff]
        %v3780 = vld [vmem:[%s3773 + $0x30] sm:$0xff]
        %v3781 = vld [vmem:[%s3773 + $0x38] sm:$0xff]
        %v3782 = vld [vmem:[%s3773 + $0x40] sm:$0xff]
        %v3783 = vld [vmem:[%s3773 + $0x48] sm:$0xff]
        %v3784 = vld [vmem:[%s3773 + $0x50] sm:$0xff]
        %v3785 = vld [vmem:[%s3773 + $0x58] sm:$0xff]
        %v3786 = vld [vmem:[%s3773 + $0x60] sm:$0xff]
        %v3787 = vld [vmem:[%s3773 + $0x68] sm:$0xff]
        %v3788 = vld [vmem:[%s3773 + $0x70] sm:$0xff]
        %v3789 = vld [vmem:[%s3773 + $0x78] sm:$0xff]
        %v3790 = vld [vmem:[%s3773 + $0x80] sm:$0xff]
        %v3791 = vld [vmem:[%s3773 + $0x88] sm:$0xff]
        %v3792 = vld [vmem:[%s3773 + $0x90] sm:$0xff]
        %v3793 = vld [vmem:[%s3773 + $0x98] sm:$0xff]
        %v3794 = vld [vmem:[%s3773 + $0xa0] sm:$0xff]
        %v3795 = vld [vmem:[%s3773 + $0xa8] sm:$0xff]
        %v3796 = vld [vmem:[%s3773 + $0xb0] sm:$0xff]
        %v3797 = vld [vmem:[%s3773 + $0xb8] sm:$0xff]
        %v3798 = vld [vmem:[%s3773 + $0xc0] sm:$0xff]
        %v3799 = vld [vmem:[%s3773 + $0xc8] sm:$0xff]
        %v3800 = vld [vmem:[%s3773 + $0xd0] sm:$0xff]
        %v3801 = vld [vmem:[%s3773 + $0xd8] sm:$0xff]
        %v3802 = vld [vmem:[%s3773 + $0xe0] sm:$0xff]
        %v3803 = vld [vmem:[%s3773 + $0xe8] sm:$0xff]
        %v3804 = vld [vmem:[%s3773 + $0xf0] sm:$0xff]
        %v3805 = vld [vmem:[%s3773 + $0xf8] sm:$0xff]
        %v3806 = vld [vmem:[%s3773 + $0x100] sm:$0xff]
        %v3807 = vld [vmem:[%s3773 + $0x108] sm:$0xff]
        %v3808 = vld [vmem:[%s3773 + $0x110] sm:$0xff]
        %v3809 = vld [vmem:[%s3773 + $0x118] sm:$0xff]
        %v3810 = vld [vmem:[%s3773 + $0x120] sm:$0xff]
        %v3811 = vld [vmem:[%s3773 + $0x128] sm:$0xff]
        %v3812 = vld [vmem:[%s3773 + $0x130] sm:$0xff]
        %v3813 = vld [vmem:[%s3773 + $0x138] sm:$0xff]
        %v3814 = vld [vmem:[%s3773 + $0x140] sm:$0xff]
        %v3815 = vld [vmem:[%s3773 + $0x148] sm:$0xff]
        %v3816 = vld [vmem:[%s3773 + $0x150] sm:$0xff]
        %v3817 = vld [vmem:[%s3773 + $0x158] sm:$0xff]
        %v3818 = vld [vmem:[%s3773 + $0x160] sm:$0xff]
        %v3819 = vld [vmem:[%s3773 + $0x168] sm:$0xff]
        %v3820 = vld [vmem:[%s3773 + $0x170] sm:$0xff]
        %v3821 = vld [vmem:[%s3773 + $0x178] sm:$0xff]
        %v3822 = vld [vmem:[%s3773 + $0x180] sm:$0xff]
        %v3823 = vld [vmem:[%s3773 + $0x188] sm:$0xff]
        %v3824 = vld [vmem:[%s3773 + $0x190] sm:$0xff]
        %v3825 = vld [vmem:[%s3773 + $0x198] sm:$0xff]
        %v3826 = vld [vmem:[%s3773 + $0x1a0] sm:$0xff]
        %v3827 = vld [vmem:[%s3773 + $0x1a8] sm:$0xff]
        %v3828 = vld [vmem:[%s3773 + $0x1b0] sm:$0xff]
        %v3829 = vld [vmem:[%s3773 + $0x1b8] sm:$0xff]
        %v3830 = vld [vmem:[%s3773 + $0x1c0] sm:$0xff]
        %v3831 = vld [vmem:[%s3773 + $0x1c8] sm:$0xff]
        %v3832 = vld [vmem:[%s3773 + $0x1d0] sm:$0xff]
        %v3833 = vld [vmem:[%s3773 + $0x1d8] sm:$0xff]
        %v3834 = vld [vmem:[%s3773 + $0x1e0] sm:$0xff]
        %v3835 = vld [vmem:[%s3773 + $0x1e8] sm:$0xff]
        %v3836 = vld [vmem:[%s3773 + $0x1f0] sm:$0xff]
        %v3837 = vld [vmem:[%s3773 + $0x1f8] sm:$0xff]
        %v3838 = vrot.slane %v3468, 2
        %v3839 = vrot.slane %v3470, 2
        %v3840 = vsel %vm1280, %v3838, %v3839
        %v3841 = vrot.slane %v3469, 2
        %v3842 = vrot.slane %v3471, 2
        %v3843 = vsel %vm1280, %v3841, %v3842
        %3846 = vmatpush.msra.mxu0 %v3804
        %3847 = vmatpush.msra.mxu0 %v3802
        %3848 = vmatpush.msra.mxu0 %v3800
        %3849 = vmatpush.msra.mxu0 %v3798
        %3850 = vmatpush.msra.mxu0 %v3796
        %3851 = vmatpush.msra.mxu0 %v3794
        %3852 = vmatpush.msra.mxu0 %v3792
        %3853 = vmatpush.msra.mxu0 %v3790
        %3854 = vmatpush.msra.mxu0 %v3788
        %3855 = vmatpush.msra.mxu0 %v3786
        %3856 = vmatpush.msra.mxu0 %v3784
        %3857 = vmatpush.msra.mxu0 %v3782
        %3858 = vmatpush.msra.mxu0 %v3780
        %3859 = vmatpush.msra.mxu0 %v3778
        %3860 = vmatpush.msra.mxu0 %v3776
        %3861 = vmatpush.msra.mxu0 %v3774
        %3862 = vmatmul.f32.gmra.mxu0 %v3840
        %v3863 = vpop.f32.mrf.mxu0
        %v3864 = vadd.f32 0.0, %v3863
        %3865 = vdwg.mxu0
        %3866 = vmatpush.msra.mxu0 %v3836
        %3867 = vmatpush.msra.mxu0 %v3834
        %3868 = vmatpush.msra.mxu0 %v3832
        %3869 = vmatpush.msra.mxu0 %v3830
        %3870 = vmatpush.msra.mxu0 %v3828
        %3871 = vmatpush.msra.mxu0 %v3826
        %3872 = vmatpush.msra.mxu0 %v3824
        %3873 = vmatpush.msra.mxu0 %v3822
        %3874 = vmatpush.msra.mxu0 %v3820
        %3875 = vmatpush.msra.mxu0 %v3818
        %3876 = vmatpush.msra.mxu0 %v3816
        %3877 = vmatpush.msra.mxu0 %v3814
        %3878 = vmatpush.msra.mxu0 %v3812
        %3879 = vmatpush.msra.mxu0 %v3810
        %3880 = vmatpush.msra.mxu0 %v3808
        %3881 = vmatpush.msra.mxu0 %v3806
        %3882 = vmatmul.f32.gmra.mxu0 %v3843
        %v3883 = vpop.f32.mrf.mxu0
        %v3884 = vadd.f32 %v3864, %v3883
        %3885 = vdwg.mxu0
        %3886 = vmatpush.msra.mxu0 %v3805
        %3887 = vmatpush.msra.mxu0 %v3803
        %3888 = vmatpush.msra.mxu0 %v3801
        %3889 = vmatpush.msra.mxu0 %v3799
        %3890 = vmatpush.msra.mxu0 %v3797
        %3891 = vmatpush.msra.mxu0 %v3795
        %3892 = vmatpush.msra.mxu0 %v3793
        %3893 = vmatpush.msra.mxu0 %v3791
        %3894 = vmatpush.msra.mxu0 %v3789
        %3895 = vmatpush.msra.mxu0 %v3787
        %3896 = vmatpush.msra.mxu0 %v3785
        %3897 = vmatpush.msra.mxu0 %v3783
        %3898 = vmatpush.msra.mxu0 %v3781
        %3899 = vmatpush.msra.mxu0 %v3779
        %3900 = vmatpush.msra.mxu0 %v3777
        %3901 = vmatpush.msra.mxu0 %v3775
        %3902 = vmatmul.f32.gmra.mxu0 %v3840
        %v3903 = vpop.f32.mrf.mxu0
        %v3904 = vadd.f32 0.0, %v3903
        %3905 = vdwg.mxu0
        %3906 = vmatpush.msra.mxu0 %v3837
        %3907 = vmatpush.msra.mxu0 %v3835
        %3908 = vmatpush.msra.mxu0 %v3833
        %3909 = vmatpush.msra.mxu0 %v3831
        %3910 = vmatpush.msra.mxu0 %v3829
        %3911 = vmatpush.msra.mxu0 %v3827
        %3912 = vmatpush.msra.mxu0 %v3825
        %3913 = vmatpush.msra.mxu0 %v3823
        %3914 = vmatpush.msra.mxu0 %v3821
        %3915 = vmatpush.msra.mxu0 %v3819
        %3916 = vmatpush.msra.mxu0 %v3817
        %3917 = vmatpush.msra.mxu0 %v3815
        %3918 = vmatpush.msra.mxu0 %v3813
        %3919 = vmatpush.msra.mxu0 %v3811
        %3920 = vmatpush.msra.mxu0 %v3809
        %3921 = vmatpush.msra.mxu0 %v3807
        %3922 = vmatmul.f32.gmra.mxu0 %v3843
        %v3923 = vpop.f32.mrf.mxu0
        %v3924 = vadd.f32 %v3904, %v3923
        %3925 = vdwg.mxu0
        %v3926 = vadd.f32 %v3731, %v3884
        %v3927 = vadd.f32 %v3771, %v3924
        %s3928 = scalar_lea.vmem [#allocation12], 1536
        %v3929 = vld [vmem:[%s3928] sm:$0xff]
        %v3930 = vld [vmem:[%s3928 + $0x8] sm:$0xff]
        %v3931 = vld [vmem:[%s3928 + $0x10] sm:$0xff]
        %v3932 = vld [vmem:[%s3928 + $0x18] sm:$0xff]
        %v3933 = vld [vmem:[%s3928 + $0x20] sm:$0xff]
        %v3934 = vld [vmem:[%s3928 + $0x28] sm:$0xff]
        %v3935 = vld [vmem:[%s3928 + $0x30] sm:$0xff]
        %v3936 = vld [vmem:[%s3928 + $0x38] sm:$0xff]
        %v3937 = vld [vmem:[%s3928 + $0x40] sm:$0xff]
        %v3938 = vld [vmem:[%s3928 + $0x48] sm:$0xff]
        %v3939 = vld [vmem:[%s3928 + $0x50] sm:$0xff]
        %v3940 = vld [vmem:[%s3928 + $0x58] sm:$0xff]
        %v3941 = vld [vmem:[%s3928 + $0x60] sm:$0xff]
        %v3942 = vld [vmem:[%s3928 + $0x68] sm:$0xff]
        %v3943 = vld [vmem:[%s3928 + $0x70] sm:$0xff]
        %v3944 = vld [vmem:[%s3928 + $0x78] sm:$0xff]
        %v3945 = vld [vmem:[%s3928 + $0x80] sm:$0xff]
        %v3946 = vld [vmem:[%s3928 + $0x88] sm:$0xff]
        %v3947 = vld [vmem:[%s3928 + $0x90] sm:$0xff]
        %v3948 = vld [vmem:[%s3928 + $0x98] sm:$0xff]
        %v3949 = vld [vmem:[%s3928 + $0xa0] sm:$0xff]
        %v3950 = vld [vmem:[%s3928 + $0xa8] sm:$0xff]
        %v3951 = vld [vmem:[%s3928 + $0xb0] sm:$0xff]
        %v3952 = vld [vmem:[%s3928 + $0xb8] sm:$0xff]
        %v3953 = vld [vmem:[%s3928 + $0xc0] sm:$0xff]
        %v3954 = vld [vmem:[%s3928 + $0xc8] sm:$0xff]
        %v3955 = vld [vmem:[%s3928 + $0xd0] sm:$0xff]
        %v3956 = vld [vmem:[%s3928 + $0xd8] sm:$0xff]
        %v3957 = vld [vmem:[%s3928 + $0xe0] sm:$0xff]
        %v3958 = vld [vmem:[%s3928 + $0xe8] sm:$0xff]
        %v3959 = vld [vmem:[%s3928 + $0xf0] sm:$0xff]
        %v3960 = vld [vmem:[%s3928 + $0xf8] sm:$0xff]
        %v3961 = vld [vmem:[%s3928 + $0x100] sm:$0xff]
        %v3962 = vld [vmem:[%s3928 + $0x108] sm:$0xff]
        %v3963 = vld [vmem:[%s3928 + $0x110] sm:$0xff]
        %v3964 = vld [vmem:[%s3928 + $0x118] sm:$0xff]
        %v3965 = vld [vmem:[%s3928 + $0x120] sm:$0xff]
        %v3966 = vld [vmem:[%s3928 + $0x128] sm:$0xff]
        %v3967 = vld [vmem:[%s3928 + $0x130] sm:$0xff]
        %v3968 = vld [vmem:[%s3928 + $0x138] sm:$0xff]
        %v3969 = vld [vmem:[%s3928 + $0x140] sm:$0xff]
        %v3970 = vld [vmem:[%s3928 + $0x148] sm:$0xff]
        %v3971 = vld [vmem:[%s3928 + $0x150] sm:$0xff]
        %v3972 = vld [vmem:[%s3928 + $0x158] sm:$0xff]
        %v3973 = vld [vmem:[%s3928 + $0x160] sm:$0xff]
        %v3974 = vld [vmem:[%s3928 + $0x168] sm:$0xff]
        %v3975 = vld [vmem:[%s3928 + $0x170] sm:$0xff]
        %v3976 = vld [vmem:[%s3928 + $0x178] sm:$0xff]
        %v3977 = vld [vmem:[%s3928 + $0x180] sm:$0xff]
        %v3978 = vld [vmem:[%s3928 + $0x188] sm:$0xff]
        %v3979 = vld [vmem:[%s3928 + $0x190] sm:$0xff]
        %v3980 = vld [vmem:[%s3928 + $0x198] sm:$0xff]
        %v3981 = vld [vmem:[%s3928 + $0x1a0] sm:$0xff]
        %v3982 = vld [vmem:[%s3928 + $0x1a8] sm:$0xff]
        %v3983 = vld [vmem:[%s3928 + $0x1b0] sm:$0xff]
        %v3984 = vld [vmem:[%s3928 + $0x1b8] sm:$0xff]
        %v3985 = vld [vmem:[%s3928 + $0x1c0] sm:$0xff]
        %v3986 = vld [vmem:[%s3928 + $0x1c8] sm:$0xff]
        %v3987 = vld [vmem:[%s3928 + $0x1d0] sm:$0xff]
        %v3988 = vld [vmem:[%s3928 + $0x1d8] sm:$0xff]
        %v3989 = vld [vmem:[%s3928 + $0x1e0] sm:$0xff]
        %v3990 = vld [vmem:[%s3928 + $0x1e8] sm:$0xff]
        %v3991 = vld [vmem:[%s3928 + $0x1f0] sm:$0xff]
        %v3992 = vld [vmem:[%s3928 + $0x1f8] sm:$0xff]
        %v3993 = vrot.slane %v3468, 3
        %v3994 = vrot.slane %v3470, 3
        %v3995 = vsel %vm1379, %v3993, %v3994
        %v3996 = vrot.slane %v3469, 3
        %v3997 = vrot.slane %v3471, 3
        %v3998 = vsel %vm1379, %v3996, %v3997
        %4001 = vmatpush.msra.mxu0 %v3959
        %4002 = vmatpush.msra.mxu0 %v3957
        %4003 = vmatpush.msra.mxu0 %v3955
        %4004 = vmatpush.msra.mxu0 %v3953
        %4005 = vmatpush.msra.mxu0 %v3951
        %4006 = vmatpush.msra.mxu0 %v3949
        %4007 = vmatpush.msra.mxu0 %v3947
        %4008 = vmatpush.msra.mxu0 %v3945
        %4009 = vmatpush.msra.mxu0 %v3943
        %4010 = vmatpush.msra.mxu0 %v3941
        %4011 = vmatpush.msra.mxu0 %v3939
        %4012 = vmatpush.msra.mxu0 %v3937
        %4013 = vmatpush.msra.mxu0 %v3935
        %4014 = vmatpush.msra.mxu0 %v3933
        %4015 = vmatpush.msra.mxu0 %v3931
        %4016 = vmatpush.msra.mxu0 %v3929
        %4017 = vmatmul.f32.gmra.mxu0 %v3995
        %v4018 = vpop.f32.mrf.mxu0
        %v4019 = vadd.f32 0.0, %v4018
        %4020 = vdwg.mxu0
        %4021 = vmatpush.msra.mxu0 %v3991
        %4022 = vmatpush.msra.mxu0 %v3989
        %4023 = vmatpush.msra.mxu0 %v3987
        %4024 = vmatpush.msra.mxu0 %v3985
        %4025 = vmatpush.msra.mxu0 %v3983
        %4026 = vmatpush.msra.mxu0 %v3981
        %4027 = vmatpush.msra.mxu0 %v3979
        %4028 = vmatpush.msra.mxu0 %v3977
        %4029 = vmatpush.msra.mxu0 %v3975
        %4030 = vmatpush.msra.mxu0 %v3973
        %4031 = vmatpush.msra.mxu0 %v3971
        %4032 = vmatpush.msra.mxu0 %v3969
        %4033 = vmatpush.msra.mxu0 %v3967
        %4034 = vmatpush.msra.mxu0 %v3965
        %4035 = vmatpush.msra.mxu0 %v3963
        %4036 = vmatpush.msra.mxu0 %v3961
        %4037 = vmatmul.f32.gmra.mxu0 %v3998
        %v4038 = vpop.f32.mrf.mxu0
        %v4039 = vadd.f32 %v4019, %v4038
        %4040 = vdwg.mxu0
        %4041 = vmatpush.msra.mxu0 %v3960
        %4042 = vmatpush.msra.mxu0 %v3958
        %4043 = vmatpush.msra.mxu0 %v3956
        %4044 = vmatpush.msra.mxu0 %v3954
        %4045 = vmatpush.msra.mxu0 %v3952
        %4046 = vmatpush.msra.mxu0 %v3950
        %4047 = vmatpush.msra.mxu0 %v3948
        %4048 = vmatpush.msra.mxu0 %v3946
        %4049 = vmatpush.msra.mxu0 %v3944
        %4050 = vmatpush.msra.mxu0 %v3942
        %4051 = vmatpush.msra.mxu0 %v3940
        %4052 = vmatpush.msra.mxu0 %v3938
        %4053 = vmatpush.msra.mxu0 %v3936
        %4054 = vmatpush.msra.mxu0 %v3934
        %4055 = vmatpush.msra.mxu0 %v3932
        %4056 = vmatpush.msra.mxu0 %v3930
        %4057 = vmatmul.f32.gmra.mxu0 %v3995
        %v4058 = vpop.f32.mrf.mxu0
        %v4059 = vadd.f32 0.0, %v4058
        %4060 = vdwg.mxu0
        %4061 = vmatpush.msra.mxu0 %v3992
        %4062 = vmatpush.msra.mxu0 %v3990
        %4063 = vmatpush.msra.mxu0 %v3988
        %4064 = vmatpush.msra.mxu0 %v3986
        %4065 = vmatpush.msra.mxu0 %v3984
        %4066 = vmatpush.msra.mxu0 %v3982
        %4067 = vmatpush.msra.mxu0 %v3980
        %4068 = vmatpush.msra.mxu0 %v3978
        %4069 = vmatpush.msra.mxu0 %v3976
        %4070 = vmatpush.msra.mxu0 %v3974
        %4071 = vmatpush.msra.mxu0 %v3972
        %4072 = vmatpush.msra.mxu0 %v3970
        %4073 = vmatpush.msra.mxu0 %v3968
        %4074 = vmatpush.msra.mxu0 %v3966
        %4075 = vmatpush.msra.mxu0 %v3964
        %4076 = vmatpush.msra.mxu0 %v3962
        %4077 = vmatmul.f32.gmra.mxu0 %v3998
        %v4078 = vpop.f32.mrf.mxu0
        %v4079 = vadd.f32 %v4059, %v4078
        %4080 = vdwg.mxu0
        %v4081 = vadd.f32 %v3926, %v4039
        %v4082 = vadd.f32 %v3927, %v4079
        %s4083 = scalar_lea.vmem [#allocation12], 2048
        %v4084 = vld [vmem:[%s4083] sm:$0xff]
        %v4085 = vld [vmem:[%s4083 + $0x8] sm:$0xff]
        %v4086 = vld [vmem:[%s4083 + $0x10] sm:$0xff]
        %v4087 = vld [vmem:[%s4083 + $0x18] sm:$0xff]
        %v4088 = vld [vmem:[%s4083 + $0x20] sm:$0xff]
        %v4089 = vld [vmem:[%s4083 + $0x28] sm:$0xff]
        %v4090 = vld [vmem:[%s4083 + $0x30] sm:$0xff]
        %v4091 = vld [vmem:[%s4083 + $0x38] sm:$0xff]
        %v4092 = vld [vmem:[%s4083 + $0x40] sm:$0xff]
        %v4093 = vld [vmem:[%s4083 + $0x48] sm:$0xff]
        %v4094 = vld [vmem:[%s4083 + $0x50] sm:$0xff]
        %v4095 = vld [vmem:[%s4083 + $0x58] sm:$0xff]
        %v4096 = vld [vmem:[%s4083 + $0x60] sm:$0xff]
        %v4097 = vld [vmem:[%s4083 + $0x68] sm:$0xff]
        %v4098 = vld [vmem:[%s4083 + $0x70] sm:$0xff]
        %v4099 = vld [vmem:[%s4083 + $0x78] sm:$0xff]
        %v4100 = vld [vmem:[%s4083 + $0x80] sm:$0xff]
        %v4101 = vld [vmem:[%s4083 + $0x88] sm:$0xff]
        %v4102 = vld [vmem:[%s4083 + $0x90] sm:$0xff]
        %v4103 = vld [vmem:[%s4083 + $0x98] sm:$0xff]
        %v4104 = vld [vmem:[%s4083 + $0xa0] sm:$0xff]
        %v4105 = vld [vmem:[%s4083 + $0xa8] sm:$0xff]
        %v4106 = vld [vmem:[%s4083 + $0xb0] sm:$0xff]
        %v4107 = vld [vmem:[%s4083 + $0xb8] sm:$0xff]
        %v4108 = vld [vmem:[%s4083 + $0xc0] sm:$0xff]
        %v4109 = vld [vmem:[%s4083 + $0xc8] sm:$0xff]
        %v4110 = vld [vmem:[%s4083 + $0xd0] sm:$0xff]
        %v4111 = vld [vmem:[%s4083 + $0xd8] sm:$0xff]
        %v4112 = vld [vmem:[%s4083 + $0xe0] sm:$0xff]
        %v4113 = vld [vmem:[%s4083 + $0xe8] sm:$0xff]
        %v4114 = vld [vmem:[%s4083 + $0xf0] sm:$0xff]
        %v4115 = vld [vmem:[%s4083 + $0xf8] sm:$0xff]
        %v4116 = vld [vmem:[%s4083 + $0x100] sm:$0xff]
        %v4117 = vld [vmem:[%s4083 + $0x108] sm:$0xff]
        %v4118 = vld [vmem:[%s4083 + $0x110] sm:$0xff]
        %v4119 = vld [vmem:[%s4083 + $0x118] sm:$0xff]
        %v4120 = vld [vmem:[%s4083 + $0x120] sm:$0xff]
        %v4121 = vld [vmem:[%s4083 + $0x128] sm:$0xff]
        %v4122 = vld [vmem:[%s4083 + $0x130] sm:$0xff]
        %v4123 = vld [vmem:[%s4083 + $0x138] sm:$0xff]
        %v4124 = vld [vmem:[%s4083 + $0x140] sm:$0xff]
        %v4125 = vld [vmem:[%s4083 + $0x148] sm:$0xff]
        %v4126 = vld [vmem:[%s4083 + $0x150] sm:$0xff]
        %v4127 = vld [vmem:[%s4083 + $0x158] sm:$0xff]
        %v4128 = vld [vmem:[%s4083 + $0x160] sm:$0xff]
        %v4129 = vld [vmem:[%s4083 + $0x168] sm:$0xff]
        %v4130 = vld [vmem:[%s4083 + $0x170] sm:$0xff]
        %v4131 = vld [vmem:[%s4083 + $0x178] sm:$0xff]
        %v4132 = vld [vmem:[%s4083 + $0x180] sm:$0xff]
        %v4133 = vld [vmem:[%s4083 + $0x188] sm:$0xff]
        %v4134 = vld [vmem:[%s4083 + $0x190] sm:$0xff]
        %v4135 = vld [vmem:[%s4083 + $0x198] sm:$0xff]
        %v4136 = vld [vmem:[%s4083 + $0x1a0] sm:$0xff]
        %v4137 = vld [vmem:[%s4083 + $0x1a8] sm:$0xff]
        %v4138 = vld [vmem:[%s4083 + $0x1b0] sm:$0xff]
        %v4139 = vld [vmem:[%s4083 + $0x1b8] sm:$0xff]
        %v4140 = vld [vmem:[%s4083 + $0x1c0] sm:$0xff]
        %v4141 = vld [vmem:[%s4083 + $0x1c8] sm:$0xff]
        %v4142 = vld [vmem:[%s4083 + $0x1d0] sm:$0xff]
        %v4143 = vld [vmem:[%s4083 + $0x1d8] sm:$0xff]
        %v4144 = vld [vmem:[%s4083 + $0x1e0] sm:$0xff]
        %v4145 = vld [vmem:[%s4083 + $0x1e8] sm:$0xff]
        %v4146 = vld [vmem:[%s4083 + $0x1f0] sm:$0xff]
        %v4147 = vld [vmem:[%s4083 + $0x1f8] sm:$0xff]
        %v4148 = vrot.slane %v3468, 4
        %v4149 = vrot.slane %v3470, 4
        %v4150 = vsel %vm1478, %v4148, %v4149
        %v4151 = vrot.slane %v3469, 4
        %v4152 = vrot.slane %v3471, 4
        %v4153 = vsel %vm1478, %v4151, %v4152
        %4156 = vmatpush.msra.mxu0 %v4114
        %4157 = vmatpush.msra.mxu0 %v4112
        %4158 = vmatpush.msra.mxu0 %v4110
        %4159 = vmatpush.msra.mxu0 %v4108
        %4160 = vmatpush.msra.mxu0 %v4106
        %4161 = vmatpush.msra.mxu0 %v4104
        %4162 = vmatpush.msra.mxu0 %v4102
        %4163 = vmatpush.msra.mxu0 %v4100
        %4164 = vmatpush.msra.mxu0 %v4098
        %4165 = vmatpush.msra.mxu0 %v4096
        %4166 = vmatpush.msra.mxu0 %v4094
        %4167 = vmatpush.msra.mxu0 %v4092
        %4168 = vmatpush.msra.mxu0 %v4090
        %4169 = vmatpush.msra.mxu0 %v4088
        %4170 = vmatpush.msra.mxu0 %v4086
        %4171 = vmatpush.msra.mxu0 %v4084
        %4172 = vmatmul.f32.gmra.mxu0 %v4150
        %v4173 = vpop.f32.mrf.mxu0
        %v4174 = vadd.f32 0.0, %v4173
        %4175 = vdwg.mxu0
        %4176 = vmatpush.msra.mxu0 %v4146
        %4177 = vmatpush.msra.mxu0 %v4144
        %4178 = vmatpush.msra.mxu0 %v4142
        %4179 = vmatpush.msra.mxu0 %v4140
        %4180 = vmatpush.msra.mxu0 %v4138
        %4181 = vmatpush.msra.mxu0 %v4136
        %4182 = vmatpush.msra.mxu0 %v4134
        %4183 = vmatpush.msra.mxu0 %v4132
        %4184 = vmatpush.msra.mxu0 %v4130
        %4185 = vmatpush.msra.mxu0 %v4128
        %4186 = vmatpush.msra.mxu0 %v4126
        %4187 = vmatpush.msra.mxu0 %v4124
        %4188 = vmatpush.msra.mxu0 %v4122
        %4189 = vmatpush.msra.mxu0 %v4120
        %4190 = vmatpush.msra.mxu0 %v4118
        %4191 = vmatpush.msra.mxu0 %v4116
        %4192 = vmatmul.f32.gmra.mxu0 %v4153
        %v4193 = vpop.f32.mrf.mxu0
        %v4194 = vadd.f32 %v4174, %v4193
        %4195 = vdwg.mxu0
        %4196 = vmatpush.msra.mxu0 %v4115
        %4197 = vmatpush.msra.mxu0 %v4113
        %4198 = vmatpush.msra.mxu0 %v4111
        %4199 = vmatpush.msra.mxu0 %v4109
        %4200 = vmatpush.msra.mxu0 %v4107
        %4201 = vmatpush.msra.mxu0 %v4105
        %4202 = vmatpush.msra.mxu0 %v4103
        %4203 = vmatpush.msra.mxu0 %v4101
        %4204 = vmatpush.msra.mxu0 %v4099
        %4205 = vmatpush.msra.mxu0 %v4097
        %4206 = vmatpush.msra.mxu0 %v4095
        %4207 = vmatpush.msra.mxu0 %v4093
        %4208 = vmatpush.msra.mxu0 %v4091
        %4209 = vmatpush.msra.mxu0 %v4089
        %4210 = vmatpush.msra.mxu0 %v4087
        %4211 = vmatpush.msra.mxu0 %v4085
        %4212 = vmatmul.f32.gmra.mxu0 %v4150
        %v4213 = vpop.f32.mrf.mxu0
        %v4214 = vadd.f32 0.0, %v4213
        %4215 = vdwg.mxu0
        %4216 = vmatpush.msra.mxu0 %v4147
        %4217 = vmatpush.msra.mxu0 %v4145
        %4218 = vmatpush.msra.mxu0 %v4143
        %4219 = vmatpush.msra.mxu0 %v4141
        %4220 = vmatpush.msra.mxu0 %v4139
        %4221 = vmatpush.msra.mxu0 %v4137
        %4222 = vmatpush.msra.mxu0 %v4135
        %4223 = vmatpush.msra.mxu0 %v4133
        %4224 = vmatpush.msra.mxu0 %v4131
        %4225 = vmatpush.msra.mxu0 %v4129
        %4226 = vmatpush.msra.mxu0 %v4127
        %4227 = vmatpush.msra.mxu0 %v4125
        %4228 = vmatpush.msra.mxu0 %v4123
        %4229 = vmatpush.msra.mxu0 %v4121
        %4230 = vmatpush.msra.mxu0 %v4119
        %4231 = vmatpush.msra.mxu0 %v4117
        %4232 = vmatmul.f32.gmra.mxu0 %v4153
        %v4233 = vpop.f32.mrf.mxu0
        %v4234 = vadd.f32 %v4214, %v4233
        %4235 = vdwg.mxu0
        %v4236 = vadd.f32 %v4081, %v4194
        %v4237 = vadd.f32 %v4082, %v4234
        %v4238 = vld [vmem:[#allocation13] sm:$0x3]
        %v4240 = vperm.slane %v4238, 0
        %v4241 = vperm.slane %v4238, 1
        %v4244 = vadd.f32 %v4236, %v4240
        %v4245 = vadd.f32 %v4237, %v4241
        %v4246 = vmul.f32 %v4244, 0.5
        %v4247 = vmul.f32 %v4245, 0.5
        %v4248 = vmul.f32 %v4244, 0.70710677
        %v4249 = vmul.f32 %v4245, 0.70710677
        %v4250 = vmul.f32 %v4248, %v4248
        %v4251 = vmin.f32 16.0, %v4250
        %v4252 = vmul.f32 %v4251, 2.1237322e-06
        %v4253 = vadd.f32 %v4252, 0.00028619796
        %v4254 = vmul.f32 %v4251, %v4253
        %v4255 = vadd.f32 %v4254, 0.0036580483
        %v4256 = vmul.f32 %v4251, %v4255
        %v4257 = vadd.f32 %v4256, 0.05243302
        %v4258 = vmul.f32 %v4251, %v4257
        %v4259 = vadd.f32 %v4258, 0.18741608
        %v4260 = vmul.f32 %v4251, %v4259
        %v4261 = vadd.f32 %v4260, 1.1283791
        %v4262 = vmul.f32 %v4248, %v4261
        %v4263 = vmul.f32 %v4251, 3.8918573e-05
        %v4264 = vadd.f32 %v4263, 0.001143296
        %v4265 = vmul.f32 %v4251, %v4264
        %v4266 = vadd.f32 %v4265, 0.014752088
        %v4267 = vmul.f32 %v4251, %v4266
        %v4268 = vadd.f32 %v4267, 0.112945676
        %v4269 = vmul.f32 %v4251, %v4268
        %v4270 = vadd.f32 %v4269, 0.4994258
        %v4271 = vmul.f32 %v4251, %v4270
        %v4272 = vadd.f32 %v4271, 1.0
        %v4273 = vrcp.pop %v4272
        %v4274 = vmul.f32 %v4272, %v4273
        %v4275 = vsub.f32 1.0, %v4274
        %v4276 = vmul.f32 %v4273, %v4275
        %v4277 = vadd.f32 %v4273, %v4276
        %vm4278 = vweird.f32 %v4272
        %vm4279 = vweird.f32 %v4273
        %vm4280 = vmor %vm4278, %vm4279
        %v4281 = vsel %vm4280, %v4273, %v4277
        %v4282 = vand.u32 2147483647, %v4272
        %vm4283 = vcmp.eq.f32.partialorder %v4282, 8.507059e+37
        %v4284 = vand.u32 %v4272, 2147483648
        %v4285 = vor.u32 1.1754944e-38, %v4284
        %v4286 = vsel %vm4283, %v4285, %v4281
        %v4287 = vmul.f32 %v4262, %v4286
        %v4288 = vmin.f32 %v4287, 1.0
        %v4289 = vmax.f32 %v4288, -1.0
        %v4290 = vmul.f32 %v4249, %v4249
        %v4291 = vmin.f32 16.0, %v4290
        %v4292 = vmul.f32 %v4291, 2.1237322e-06
        %v4293 = vadd.f32 %v4292, 0.00028619796
        %v4294 = vmul.f32 %v4291, %v4293
        %v4295 = vadd.f32 %v4294, 0.0036580483
        %v4296 = vmul.f32 %v4291, %v4295
        %v4297 = vadd.f32 %v4296, 0.05243302
        %v4298 = vmul.f32 %v4291, %v4297
        %v4299 = vadd.f32 %v4298, 0.18741608
        %v4300 = vmul.f32 %v4291, %v4299
        %v4301 = vadd.f32 %v4300, 1.1283791
        %v4302 = vmul.f32 %v4249, %v4301
        %v4303 = vmul.f32 %v4291, 3.8918573e-05
        %v4304 = vadd.f32 %v4303, 0.001143296
        %v4305 = vmul.f32 %v4291, %v4304
        %v4306 = vadd.f32 %v4305, 0.014752088
        %v4307 = vmul.f32 %v4291, %v4306
        %v4308 = vadd.f32 %v4307, 0.112945676
        %v4309 = vmul.f32 %v4291, %v4308
        %v4310 = vadd.f32 %v4309, 0.4994258
        %v4311 = vmul.f32 %v4291, %v4310
        %v4312 = vadd.f32 %v4311, 1.0
        %v4313 = vrcp.pop %v4312
        %v4314 = vmul.f32 %v4312, %v4313
        %v4315 = vsub.f32 1.0, %v4314
        %v4316 = vmul.f32 %v4313, %v4315
        %v4317 = vadd.f32 %v4313, %v4316
        %vm4318 = vweird.f32 %v4312
        %vm4319 = vweird.f32 %v4313
        %vm4320 = vmor %vm4318, %vm4319
        %v4321 = vsel %vm4320, %v4313, %v4317
        %v4322 = vand.u32 2147483647, %v4312
        %vm4323 = vcmp.eq.f32.partialorder %v4322, 8.507059e+37
        %v4324 = vand.u32 %v4312, 2147483648
        %v4325 = vor.u32 1.1754944e-38, %v4324
        %v4326 = vsel %vm4323, %v4325, %v4321
        %v4327 = vmul.f32 %v4302, %v4326
        %v4328 = vmin.f32 %v4327, 1.0
        %v4329 = vmax.f32 %v4328, -1.0
        %v4330 = vadd.f32 %v4289, 1.0
        %v4331 = vadd.f32 %v4329, 1.0
        %v4332 = vmul.f32 %v4246, %v4330
        %v4333 = vmul.f32 %v4247, %v4331
        %v4334 = vmax.f32 %v4332, %v4333
        %4335 = vst [vmem:[#allocation4 + $0x2] sm:$0xff] %v4334
        %v4336 = vld [vmem:[#allocation4] sm:$0xff]
        %v4337 = vld [vmem:[#allocation4 + $0x8] sm:$0xf]
        %v4338 = vld [vmem:[#allocation15] sm:$0xff]
        %v4339 = vld [vmem:[#allocation15 + $0x8] sm:$0xff]
        %v4340 = vld [vmem:[#allocation15 + $0x10] sm:$0xff]
        %v4341 = vld [vmem:[#allocation15 + $0x18] sm:$0xff]
        %v4342 = vld [vmem:[#allocation15 + $0x20] sm:$0xff]
        %v4343 = vld [vmem:[#allocation15 + $0x28] sm:$0xff]
        %v4344 = vld [vmem:[#allocation15 + $0x30] sm:$0xff]
        %v4345 = vld [vmem:[#allocation15 + $0x38] sm:$0xff]
        %v4346 = vld [vmem:[#allocation15 + $0x40] sm:$0xff]
        %v4347 = vld [vmem:[#allocation15 + $0x48] sm:$0xff]
        %v4348 = vld [vmem:[#allocation15 + $0x50] sm:$0xff]
        %v4349 = vld [vmem:[#allocation15 + $0x58] sm:$0xff]
        %v4350 = vld [vmem:[#allocation15 + $0x60] sm:$0xff]
        %v4351 = vld [vmem:[#allocation15 + $0x68] sm:$0xff]
        %v4352 = vld [vmem:[#allocation15 + $0x70] sm:$0xff]
        %v4353 = vld [vmem:[#allocation15 + $0x78] sm:$0xff]
        %s4354 = scalar_lea.vmem [#allocation15], 128
        %v4355 = vld [vmem:[%s4354] sm:$0xff]
        %v4356 = vld [vmem:[%s4354 + $0x8] sm:$0xff]
        %v4357 = vld [vmem:[%s4354 + $0x10] sm:$0xff]
        %v4358 = vld [vmem:[%s4354 + $0x18] sm:$0xff]
        %v4359 = vld [vmem:[%s4354 + $0x20] sm:$0xff]
        %v4360 = vld [vmem:[%s4354 + $0x28] sm:$0xff]
        %v4361 = vld [vmem:[%s4354 + $0x30] sm:$0xff]
        %v4362 = vld [vmem:[%s4354 + $0x38] sm:$0xff]
        %v4363 = vld [vmem:[%s4354 + $0x40] sm:$0xff]
        %v4364 = vld [vmem:[%s4354 + $0x48] sm:$0xff]
        %v4365 = vld [vmem:[%s4354 + $0x50] sm:$0xff]
        %v4366 = vld [vmem:[%s4354 + $0x58] sm:$0xff]
        %v4367 = vld [vmem:[%s4354 + $0x60] sm:$0xff]
        %v4368 = vld [vmem:[%s4354 + $0x68] sm:$0xff]
        %v4369 = vld [vmem:[%s4354 + $0x70] sm:$0xff]
        %v4370 = vld [vmem:[%s4354 + $0x78] sm:$0xff]
        %v4373 = vrot.slane %v4336, 1
        %v4374 = vrot.slane %v4337, 1
        %v4375 = vsel %vm1102, %v4373, %v4374
        %4377 = vmatpush.msra.mxu0 %v4370
        %4378 = vmatpush.msra.mxu0 %v4369
        %4379 = vmatpush.msra.mxu0 %v4368
        %4380 = vmatpush.msra.mxu0 %v4367
        %4381 = vmatpush.msra.mxu0 %v4366
        %4382 = vmatpush.msra.mxu0 %v4365
        %4383 = vmatpush.msra.mxu0 %v4364
        %4384 = vmatpush.msra.mxu0 %v4363
        %4385 = vmatpush.msra.mxu0 %v4362
        %4386 = vmatpush.msra.mxu0 %v4361
        %4387 = vmatpush.msra.mxu0 %v4360
        %4388 = vmatpush.msra.mxu0 %v4359
        %4389 = vmatpush.msra.mxu0 %v4358
        %4390 = vmatpush.msra.mxu0 %v4357
        %4391 = vmatpush.msra.mxu0 %v4356
        %4392 = vmatpush.msra.mxu0 %v4355
        %4393 = vmatmul.f32.gmra.mxu0 %v4375
        %v4394 = vpop.f32.mrf.mxu0
        %v4395 = vadd.f32 0.0, %v4394
        %4396 = vdwg.mxu0
        %4397 = vmatpush.msra.mxu0 %v4353
        %4398 = vmatpush.msra.mxu0 %v4352
        %4399 = vmatpush.msra.mxu0 %v4351
        %4400 = vmatpush.msra.mxu0 %v4350
        %4401 = vmatpush.msra.mxu0 %v4349
        %4402 = vmatpush.msra.mxu0 %v4348
        %4403 = vmatpush.msra.mxu0 %v4347
        %4404 = vmatpush.msra.mxu0 %v4346
        %4405 = vmatpush.msra.mxu0 %v4345
        %4406 = vmatpush.msra.mxu0 %v4344
        %4407 = vmatpush.msra.mxu0 %v4343
        %4408 = vmatpush.msra.mxu0 %v4342
        %4409 = vmatpush.msra.mxu0 %v4341
        %4410 = vmatpush.msra.mxu0 %v4340
        %4411 = vmatpush.msra.mxu0 %v4339
        %4412 = vmatpush.msra.mxu0 %v4338
        %4413 = vmatmul.f32.gmra.mxu0 %v4336
        %v4414 = vpop.f32.mrf.mxu0
        %v4415 = vadd.f32 %v4395, %v4414
        %4416 = vdwg.mxu0
        %s4417 = scalar_lea.vmem [#allocation15], 256
        %v4418 = vld [vmem:[%s4417] sm:$0xff]
        %v4419 = vld [vmem:[%s4417 + $0x8] sm:$0xff]
        %v4420 = vld [vmem:[%s4417 + $0x10] sm:$0xff]
        %v4421 = vld [vmem:[%s4417 + $0x18] sm:$0xff]
        %v4422 = vld [vmem:[%s4417 + $0x20] sm:$0xff]
        %v4423 = vld [vmem:[%s4417 + $0x28] sm:$0xff]
        %v4424 = vld [vmem:[%s4417 + $0x30] sm:$0xff]
        %v4425 = vld [vmem:[%s4417 + $0x38] sm:$0xff]
        %v4426 = vld [vmem:[%s4417 + $0x40] sm:$0xff]
        %v4427 = vld [vmem:[%s4417 + $0x48] sm:$0xff]
        %v4428 = vld [vmem:[%s4417 + $0x50] sm:$0xff]
        %v4429 = vld [vmem:[%s4417 + $0x58] sm:$0xff]
        %v4430 = vld [vmem:[%s4417 + $0x60] sm:$0xff]
        %v4431 = vld [vmem:[%s4417 + $0x68] sm:$0xff]
        %v4432 = vld [vmem:[%s4417 + $0x70] sm:$0xff]
        %v4433 = vld [vmem:[%s4417 + $0x78] sm:$0xff]
        %v4434 = vrot.slane %v4336, 2
        %v4435 = vrot.slane %v4337, 2
        %v4436 = vsel %vm1280, %v4434, %v4435
        %4438 = vmatpush.msra.mxu0 %v4433
        %4439 = vmatpush.msra.mxu0 %v4432
        %4440 = vmatpush.msra.mxu0 %v4431
        %4441 = vmatpush.msra.mxu0 %v4430
        %4442 = vmatpush.msra.mxu0 %v4429
        %4443 = vmatpush.msra.mxu0 %v4428
        %4444 = vmatpush.msra.mxu0 %v4427
        %4445 = vmatpush.msra.mxu0 %v4426
        %4446 = vmatpush.msra.mxu0 %v4425
        %4447 = vmatpush.msra.mxu0 %v4424
        %4448 = vmatpush.msra.mxu0 %v4423
        %4449 = vmatpush.msra.mxu0 %v4422
        %4450 = vmatpush.msra.mxu0 %v4421
        %4451 = vmatpush.msra.mxu0 %v4420
        %4452 = vmatpush.msra.mxu0 %v4419
        %4453 = vmatpush.msra.mxu0 %v4418
        %4454 = vmatmul.f32.gmra.mxu0 %v4436
        %v4455 = vpop.f32.mrf.mxu0
        %v4456 = vadd.f32 0.0, %v4455
        %4457 = vdwg.mxu0
        %v4458 = vadd.f32 %v4415, %v4456
        %s4459 = scalar_lea.vmem [#allocation15], 384
        %v4460 = vld [vmem:[%s4459] sm:$0xff]
        %v4461 = vld [vmem:[%s4459 + $0x8] sm:$0xff]
        %v4462 = vld [vmem:[%s4459 + $0x10] sm:$0xff]
        %v4463 = vld [vmem:[%s4459 + $0x18] sm:$0xff]
        %v4464 = vld [vmem:[%s4459 + $0x20] sm:$0xff]
        %v4465 = vld [vmem:[%s4459 + $0x28] sm:$0xff]
        %v4466 = vld [vmem:[%s4459 + $0x30] sm:$0xff]
        %v4467 = vld [vmem:[%s4459 + $0x38] sm:$0xff]
        %v4468 = vld [vmem:[%s4459 + $0x40] sm:$0xff]
        %v4469 = vld [vmem:[%s4459 + $0x48] sm:$0xff]
        %v4470 = vld [vmem:[%s4459 + $0x50] sm:$0xff]
        %v4471 = vld [vmem:[%s4459 + $0x58] sm:$0xff]
        %v4472 = vld [vmem:[%s4459 + $0x60] sm:$0xff]
        %v4473 = vld [vmem:[%s4459 + $0x68] sm:$0xff]
        %v4474 = vld [vmem:[%s4459 + $0x70] sm:$0xff]
        %v4475 = vld [vmem:[%s4459 + $0x78] sm:$0xff]
        %v4476 = vrot.slane %v4336, 3
        %v4477 = vrot.slane %v4337, 3
        %v4478 = vsel %vm1379, %v4476, %v4477
        %4480 = vmatpush.msra.mxu0 %v4475
        %4481 = vmatpush.msra.mxu0 %v4474
        %4482 = vmatpush.msra.mxu0 %v4473
        %4483 = vmatpush.msra.mxu0 %v4472
        %4484 = vmatpush.msra.mxu0 %v4471
        %4485 = vmatpush.msra.mxu0 %v4470
        %4486 = vmatpush.msra.mxu0 %v4469
        %4487 = vmatpush.msra.mxu0 %v4468
        %4488 = vmatpush.msra.mxu0 %v4467
        %4489 = vmatpush.msra.mxu0 %v4466
        %4490 = vmatpush.msra.mxu0 %v4465
        %4491 = vmatpush.msra.mxu0 %v4464
        %4492 = vmatpush.msra.mxu0 %v4463
        %4493 = vmatpush.msra.mxu0 %v4462
        %4494 = vmatpush.msra.mxu0 %v4461
        %4495 = vmatpush.msra.mxu0 %v4460
        %4496 = vmatmul.f32.gmra.mxu0 %v4478
        %v4497 = vpop.f32.mrf.mxu0
        %v4498 = vadd.f32 0.0, %v4497
        %4499 = vdwg.mxu0
        %v4500 = vadd.f32 %v4458, %v4498
        %s4501 = scalar_lea.vmem [#allocation15], 512
        %v4502 = vld [vmem:[%s4501] sm:$0xff]
        %v4503 = vld [vmem:[%s4501 + $0x8] sm:$0xff]
        %v4504 = vld [vmem:[%s4501 + $0x10] sm:$0xff]
        %v4505 = vld [vmem:[%s4501 + $0x18] sm:$0xff]
        %v4506 = vld [vmem:[%s4501 + $0x20] sm:$0xff]
        %v4507 = vld [vmem:[%s4501 + $0x28] sm:$0xff]
        %v4508 = vld [vmem:[%s4501 + $0x30] sm:$0xff]
        %v4509 = vld [vmem:[%s4501 + $0x38] sm:$0xff]
        %v4510 = vld [vmem:[%s4501 + $0x40] sm:$0xff]
        %v4511 = vld [vmem:[%s4501 + $0x48] sm:$0xff]
        %v4512 = vld [vmem:[%s4501 + $0x50] sm:$0xff]
        %v4513 = vld [vmem:[%s4501 + $0x58] sm:$0xff]
        %v4514 = vld [vmem:[%s4501 + $0x60] sm:$0xff]
        %v4515 = vld [vmem:[%s4501 + $0x68] sm:$0xff]
        %v4516 = vld [vmem:[%s4501 + $0x70] sm:$0xff]
        %v4517 = vld [vmem:[%s4501 + $0x78] sm:$0xff]
        %v4518 = vrot.slane %v4336, 4
        %v4519 = vrot.slane %v4337, 4
        %v4520 = vsel %vm1478, %v4518, %v4519
        %4522 = vmatpush.msra.mxu0 %v4517
        %4523 = vmatpush.msra.mxu0 %v4516
        %4524 = vmatpush.msra.mxu0 %v4515
        %4525 = vmatpush.msra.mxu0 %v4514
        %4526 = vmatpush.msra.mxu0 %v4513
        %4527 = vmatpush.msra.mxu0 %v4512
        %4528 = vmatpush.msra.mxu0 %v4511
        %4529 = vmatpush.msra.mxu0 %v4510
        %4530 = vmatpush.msra.mxu0 %v4509
        %4531 = vmatpush.msra.mxu0 %v4508
        %4532 = vmatpush.msra.mxu0 %v4507
        %4533 = vmatpush.msra.mxu0 %v4506
        %4534 = vmatpush.msra.mxu0 %v4505
        %4535 = vmatpush.msra.mxu0 %v4504
        %4536 = vmatpush.msra.mxu0 %v4503
        %4537 = vmatpush.msra.mxu0 %v4502
        %4538 = vmatmul.f32.gmra.mxu0 %v4520
        %v4539 = vpop.f32.mrf.mxu0
        %v4540 = vadd.f32 0.0, %v4539
        %4541 = vdwg.mxu0
        %v4542 = vadd.f32 %v4500, %v4540
        %v4543 = vld [vmem:[#allocation16] sm:$0x1]
        %v4545 = vperm.slane %v4543, 0
        %v4547 = vadd.f32 %v4542, %v4545
        %v4548 = vmul.f32 %v4547, 0.5
        %v4549 = vmul.f32 %v4547, 0.70710677
        %v4550 = vmul.f32 %v4549, %v4549
        %v4551 = vmin.f32 16.0, %v4550
        %v4552 = vmul.f32 %v4551, 2.1237322e-06
        %v4553 = vadd.f32 %v4552, 0.00028619796
        %v4554 = vmul.f32 %v4551, %v4553
        %v4555 = vadd.f32 %v4554, 0.0036580483
        %v4556 = vmul.f32 %v4551, %v4555
        %v4557 = vadd.f32 %v4556, 0.05243302
        %v4558 = vmul.f32 %v4551, %v4557
        %v4559 = vadd.f32 %v4558, 0.18741608
        %v4560 = vmul.f32 %v4551, %v4559
        %v4561 = vadd.f32 %v4560, 1.1283791
        %v4562 = vmul.f32 %v4549, %v4561
        %v4563 = vmul.f32 %v4551, 3.8918573e-05
        %v4564 = vadd.f32 %v4563, 0.001143296
        %v4565 = vmul.f32 %v4551, %v4564
        %v4566 = vadd.f32 %v4565, 0.014752088
        %v4567 = vmul.f32 %v4551, %v4566
        %v4568 = vadd.f32 %v4567, 0.112945676
        %v4569 = vmul.f32 %v4551, %v4568
        %v4570 = vadd.f32 %v4569, 0.4994258
        %v4571 = vmul.f32 %v4551, %v4570
        %v4572 = vadd.f32 %v4571, 1.0
        %v4573 = vrcp.pop %v4572
        %v4574 = vmul.f32 %v4572, %v4573
        %v4575 = vsub.f32 1.0, %v4574
        %v4576 = vmul.f32 %v4573, %v4575
        %v4577 = vadd.f32 %v4573, %v4576
        %vm4578 = vweird.f32 %v4572
        %vm4579 = vweird.f32 %v4573
        %vm4580 = vmor %vm4578, %vm4579
        %v4581 = vsel %vm4580, %v4573, %v4577
        %v4582 = vand.u32 2147483647, %v4572
        %vm4583 = vcmp.eq.f32.partialorder %v4582, 8.507059e+37
        %v4584 = vand.u32 %v4572, 2147483648
        %v4585 = vor.u32 1.1754944e-38, %v4584
        %v4586 = vsel %vm4583, %v4585, %v4581
        %v4587 = vmul.f32 %v4562, %v4586
        %v4588 = vmin.f32 %v4587, 1.0
        %v4589 = vmax.f32 %v4588, -1.0
        %v4590 = vadd.f32 %v4589, 1.0
        %v4591 = vmul.f32 %v4548, %v4590
        %4593 = vrot.lane.b32.xlu0 %v4591, 64
        %v4594 = vpop.permute.xlu0 %4593
        %v4596 = vmax.f32 %v4591, %v4594
        %v4597 = vld [vmem:[%s9] sm:$0xff]
        %v4598 = vld [vmem:[%s9 + $0x8] sm:$0xff]
        %v4599 = vld [vmem:[%s9 + $0x10] sm:$0xff]
        %v4600 = vld [vmem:[%s9 + $0x18] sm:$0xff]
        %v4601 = vld [vmem:[%s9 + $0x20] sm:$0xff]
        %v4602 = vld [vmem:[%s9 + $0x28] sm:$0xff]
        %v4603 = vld [vmem:[%s9 + $0x30] sm:$0xff]
        %v4604 = vld [vmem:[%s9 + $0x38] sm:$0xff]
        %v4605 = vld [vmem:[#allocation18] sm:$0x1]
        %v4607 = vperm.slane %v4605, 0
        %vm4609 = vcmask 523264
        %v4611 = vsel %vm4609, %v4596, 0
        %4613 = vmatpush.msra.mxu0 0.0
        %4614 = vmatpush.msra.mxu0 0.0
        %4615 = vmatpush.msra.mxu0 0.0
        %4616 = vmatpush.msra.mxu0 0.0
        %4617 = vmatpush.msra.mxu0 0.0
        %4618 = vmatpush.msra.mxu0 0.0
        %4619 = vmatpush.msra.mxu0 0.0
        %4620 = vmatpush.msra.mxu0 0.0
        %4621 = vmatpush.msra.mxu0 %v4604
        %4622 = vmatpush.msra.mxu0 %v4603
        %4623 = vmatpush.msra.mxu0 %v4602
        %4624 = vmatpush.msra.mxu0 %v4601
        %4625 = vmatpush.msra.mxu0 %v4600
        %4626 = vmatpush.msra.mxu0 %v4599
        %4627 = vmatpush.msra.mxu0 %v4598
        %4628 = vmatpush.msra.mxu0 %v4597
        %4629 = vmatmul.f32.gmra.mxu0 %v4611
        %v4630 = vpop.f32.mrf.mxu0
        %v4631 = vadd.f32 %v4607, %v4630
        %4632 = vdwg.mxu0
        %v4633 = vld [vmem:[#allocation19] sm:$0x1]
        %v4635 = vrot.slane %v4631, 7
        %vm4637 = vcmask 1040384
        %v4638 = vsel %vm4637, %v4633, %v4635
        %v4639 = vld [vmem:[#allocation21] sm:$0xff]
        %v4640 = vld [vmem:[#allocation21 + $0x8] sm:$0xff]
        %v4641 = vld [vmem:[#allocation21 + $0x10] sm:$0xff]
        %v4642 = vld [vmem:[#allocation21 + $0x18] sm:$0xff]
        %v4643 = vld [vmem:[#allocation22] sm:$0x1]
        %v4645 = vperm.slane %v4643, 0
        %vm4647 = vcmask 261120
        %v4649 = vsel %vm4647, %v4638, 0
        %v4651 = vsel %vm4647, %v4635, 0
        %4653 = vmatpush.msra.mxu0 0.0
        %4654 = vmatpush.msra.mxu0 0.0
        %4655 = vmatpush.msra.mxu0 0.0
        %4656 = vmatpush.msra.mxu0 0.0
        %4657 = vmatpush.msra.mxu0 0.0
        %4658 = vmatpush.msra.mxu0 0.0
        %4659 = vmatpush.msra.mxu0 0.0
        %4660 = vmatpush.msra.mxu0 0.0
        %4661 = vmatpush.msra.mxu0 0.0
        %4662 = vmatpush.msra.mxu0 0.0
        %4663 = vmatpush.msra.mxu0 0.0
        %4664 = vmatpush.msra.mxu0 0.0
        %4665 = vmatpush.msra.mxu0 %v4642
        %4666 = vmatpush.msra.mxu0 %v4641
        %4667 = vmatpush.msra.mxu0 %v4640
        %4668 = vmatpush.msra.mxu0 %v4639
        %4669 = vmatmul.f32.gmra.mxu0 %v4649
        %v4670 = vpop.f32.mrf.mxu0
        %v4671 = vadd.f32 %v4645, %v4670
        %4672 = vmatmul.f32.gmra.mxu0 %v4651
        %v4673 = vpop.f32.mrf.mxu0
        %v4674 = vadd.f32 %v4645, %v4673
        %4675 = vdwg.mxu0
        %v4677 = vsel %vm4647, %v4671, 0
        %v4680 = vsel %vm4647, %v4674, 0
        %4682 = vmatpush.xpose.msra.mxu0 0.0
        %4683 = vmatpush.xpose.msra.mxu0 0.0
        %4684 = vmatpush.xpose.msra.mxu0 0.0
        %4685 = vmatpush.xpose.msra.mxu0 0.0
        %4686 = vmatpush.xpose.msra.mxu0 0.0
        %4687 = vmatpush.xpose.msra.mxu0 0.0
        %4688 = vmatpush.xpose.msra.mxu0 0.0
        %4689 = vmatpush.xpose.msra.mxu0 0.0
        %4690 = vmatpush.xpose.msra.mxu0 0.0
        %4691 = vmatpush.xpose.msra.mxu0 0.0
        %4692 = vmatpush.xpose.msra.mxu0 0.0
        %4693 = vmatpush.xpose.msra.mxu0 0.0
        %4694 = vmatpush.xpose.msra.mxu0 0.0
        %4695 = vmatpush.xpose.msra.mxu0 0.0
        %4696 = vmatpush.xpose.msra.mxu0 %v4651
        %4697 = vmatpush.xpose.msra.mxu0 %v4649
        %4698 = vmatmul.f32.gmra.mxu0 %v4677
        %v4699 = vpop.f32.mrf.mxu0
        %v4700 = vadd.f32 0.0, %v4699
        %4701 = vmatmul.f32.gmra.mxu0 %v4680
        %v4702 = vpop.f32.mrf.mxu0
        %v4703 = vadd.f32 0.0, %v4702
        %4704 = vdwg.mxu0
        %vm4705 = vcmask 72704
        %v4706 = vsel %vm4705, %v4700, -inf
        %4707 = vmax.xlane.f32.xlu0 %v4706
        %v4708 = vpop.xlane.xlu0 %4707
        %vm4709 = vcmask 65536
        %v4710 = vsel %vm4709, %v4703, -inf
        %4711 = vmax.xlane.f32.xlu0 %v4710
        %v4712 = vpop.xlane.xlu0 %4711
        %v4713 = vsub.f32 %v4700, %v4708
        %v4714 = vsub.f32 %v4703, %v4712
        %v4715 = vmul.f32 %v4713, 1.442695
        %v4716 = vpow.pop %v4715
        %v4717 = vmul.f32 %v4714, 1.442695
        %v4718 = vpow.pop %v4717
        %v4719 = vsel %vm4705, %v4716, 0.0
        %4720 = vadd.xlane.f32.xlu0 %v4719
        %v4721 = vpop.xlane.xlu0 %4720
        %v4722 = vsel %vm4709, %v4718, 0.0
        %4723 = vadd.xlane.f32.xlu0 %v4722
        %v4724 = vpop.xlane.xlu0 %4723
        %v4725 = vrcp.pop %v4721
        %v4726 = vrcp.pop %v4724
        %v4727 = vmul.f32 %v4716, %v4725
        %v4728 = vmul.f32 %v4718, %v4726
        %v4730 = vsel %vm4705, %v4727, 0
        %v4733 = vsel %vm4705, %v4728, 0
        %v4735 = vsel %vm4637, %v4635, 0
        %4737 = vmatpush.msra.mxu0 0.0
        %4738 = vmatpush.msra.mxu0 0.0
        %4739 = vmatpush.msra.mxu0 0.0
        %4740 = vmatpush.msra.mxu0 0.0
        %4741 = vmatpush.msra.mxu0 0.0
        %4742 = vmatpush.msra.mxu0 0.0
        %4743 = vmatpush.msra.mxu0 0.0
        %4744 = vmatpush.msra.mxu0 0.0
        %4745 = vmatpush.msra.mxu0 0.0
        %4746 = vmatpush.msra.mxu0 0.0
        %4747 = vmatpush.msra.mxu0 0.0
        %4748 = vmatpush.msra.mxu0 0.0
        %4749 = vmatpush.msra.mxu0 0.0
        %4750 = vmatpush.msra.mxu0 0.0
        %4751 = vmatpush.msra.mxu0 %v4735
        %4752 = vmatpush.msra.mxu0 %v4638
        %4753 = vmatmul.f32.gmra.mxu0 %v4730
        %v4754 = vpop.f32.mrf.mxu0
        %v4755 = vadd.f32 0.0, %v4754
        %4756 = vmatmul.f32.gmra.mxu0 %v4733
        %v4757 = vpop.f32.mrf.mxu0
        %v4758 = vadd.f32 0.0, %v4757
        %4759 = vdwg.mxu0
        %v4760 = vld [vmem:[#allocation24] sm:$0xff]
        %v4761 = vld [vmem:[#allocation24 + $0x8] sm:$0xff]
        %v4762 = vld [vmem:[#allocation24 + $0x10] sm:$0xff]
        %v4763 = vld [vmem:[#allocation24 + $0x18] sm:$0xff]
        %s4764 = scalar_lea.vmem [#allocation21], 32
        %v4765 = vld [vmem:[%s4764] sm:$0xff]
        %v4766 = vld [vmem:[%s4764 + $0x8] sm:$0xff]
        %v4767 = vld [vmem:[%s4764 + $0x10] sm:$0xff]
        %v4768 = vld [vmem:[%s4764 + $0x18] sm:$0xff]
        %s4769 = scalar_lea.vmem [#allocation22], 1
        %v4770 = vld [vmem:[%s4769] sm:$0x1]
        %v4772 = vperm.slane %v4770, 0
        %4774 = vmatpush.msra.mxu0 0.0
        %4775 = vmatpush.msra.mxu0 0.0
        %4776 = vmatpush.msra.mxu0 0.0
        %4777 = vmatpush.msra.mxu0 0.0
        %4778 = vmatpush.msra.mxu0 0.0
        %4779 = vmatpush.msra.mxu0 0.0
        %4780 = vmatpush.msra.mxu0 0.0
        %4781 = vmatpush.msra.mxu0 0.0
        %4782 = vmatpush.msra.mxu0 0.0
        %4783 = vmatpush.msra.mxu0 0.0
        %4784 = vmatpush.msra.mxu0 0.0
        %4785 = vmatpush.msra.mxu0 0.0
        %4786 = vmatpush.msra.mxu0 %v4768
        %4787 = vmatpush.msra.mxu0 %v4767
        %4788 = vmatpush.msra.mxu0 %v4766
        %4789 = vmatpush.msra.mxu0 %v4765
        %4790 = vmatmul.f32.gmra.mxu0 %v4649
        %v4791 = vpop.f32.mrf.mxu0
        %v4792 = vadd.f32 %v4772, %v4791
        %4793 = vmatmul.f32.gmra.mxu0 %v4651
        %v4794 = vpop.f32.mrf.mxu0
        %v4795 = vadd.f32 %v4772, %v4794
        %4796 = vdwg.mxu0
        %v4798 = vsel %vm4647, %v4792, 0
        %v4801 = vsel %vm4647, %v4795, 0
        %4803 = vmatpush.xpose.msra.mxu0 0.0
        %4804 = vmatpush.xpose.msra.mxu0 0.0
        %4805 = vmatpush.xpose.msra.mxu0 0.0
        %4806 = vmatpush.xpose.msra.mxu0 0.0
        %4807 = vmatpush.xpose.msra.mxu0 0.0
        %4808 = vmatpush.xpose.msra.mxu0 0.0
        %4809 = vmatpush.xpose.msra.mxu0 0.0
        %4810 = vmatpush.xpose.msra.mxu0 0.0
        %4811 = vmatpush.xpose.msra.mxu0 0.0
        %4812 = vmatpush.xpose.msra.mxu0 0.0
        %4813 = vmatpush.xpose.msra.mxu0 0.0
        %4814 = vmatpush.xpose.msra.mxu0 0.0
        %4815 = vmatpush.xpose.msra.mxu0 0.0
        %4816 = vmatpush.xpose.msra.mxu0 0.0
        %4817 = vmatpush.xpose.msra.mxu0 %v4651
        %4818 = vmatpush.xpose.msra.mxu0 %v4649
        %4819 = vmatmul.f32.gmra.mxu0 %v4798
        %v4820 = vpop.f32.mrf.mxu0
        %v4821 = vadd.f32 0.0, %v4820
        %4822 = vmatmul.f32.gmra.mxu0 %v4801
        %v4823 = vpop.f32.mrf.mxu0
        %v4824 = vadd.f32 0.0, %v4823
        %4825 = vdwg.mxu0
        %v4826 = vsel %vm4705, %v4821, -inf
        %4827 = vmax.xlane.f32.xlu0 %v4826
        %v4828 = vpop.xlane.xlu0 %4827
        %v4829 = vsel %vm4709, %v4824, -inf
        %4830 = vmax.xlane.f32.xlu0 %v4829
        %v4831 = vpop.xlane.xlu0 %4830
        %v4832 = vsub.f32 %v4821, %v4828
        %v4833 = vsub.f32 %v4824, %v4831
        %v4834 = vmul.f32 %v4832, 1.442695
        %v4835 = vpow.pop %v4834
        %v4836 = vmul.f32 %v4833, 1.442695
        %v4837 = vpow.pop %v4836
        %v4838 = vsel %vm4705, %v4835, 0.0
        %4839 = vadd.xlane.f32.xlu0 %v4838
        %v4840 = vpop.xlane.xlu0 %4839
        %v4841 = vsel %vm4709, %v4837, 0.0
        %4842 = vadd.xlane.f32.xlu0 %v4841
        %v4843 = vpop.xlane.xlu0 %4842
        %v4844 = vrcp.pop %v4840
        %v4845 = vrcp.pop %v4843
        %v4846 = vmul.f32 %v4835, %v4844
        %v4847 = vmul.f32 %v4837, %v4845
        %v4849 = vsel %vm4705, %v4846, 0
        %v4852 = vsel %vm4705, %v4847, 0
        %4854 = vmatpush.msra.mxu0 0.0
        %4855 = vmatpush.msra.mxu0 0.0
        %4856 = vmatpush.msra.mxu0 0.0
        %4857 = vmatpush.msra.mxu0 0.0
        %4858 = vmatpush.msra.mxu0 0.0
        %4859 = vmatpush.msra.mxu0 0.0
        %4860 = vmatpush.msra.mxu0 0.0
        %4861 = vmatpush.msra.mxu0 0.0
        %4862 = vmatpush.msra.mxu0 0.0
        %4863 = vmatpush.msra.mxu0 0.0
        %4864 = vmatpush.msra.mxu0 0.0
        %4865 = vmatpush.msra.mxu0 0.0
        %4866 = vmatpush.msra.mxu0 0.0
        %4867 = vmatpush.msra.mxu0 0.0
        %4868 = vmatpush.msra.mxu0 %v4735
        %4869 = vmatpush.msra.mxu0 %v4638
        %4870 = vmatmul.f32.gmra.mxu0 %v4849
        %v4871 = vpop.f32.mrf.mxu0
        %v4872 = vadd.f32 0.0, %v4871
        %4873 = vmatmul.f32.gmra.mxu0 %v4852
        %v4874 = vpop.f32.mrf.mxu0
        %v4875 = vadd.f32 0.0, %v4874
        %4876 = vdwg.mxu0
        %s4877 = scalar_lea.vmem [#allocation24], 32
        %v4878 = vld [vmem:[%s4877] sm:$0xff]
        %v4879 = vld [vmem:[%s4877 + $0x8] sm:$0xff]
        %v4880 = vld [vmem:[%s4877 + $0x10] sm:$0xff]
        %v4881 = vld [vmem:[%s4877 + $0x18] sm:$0xff]
        %v4883 = vsel %vm4647, %v4872, 0
        %v4886 = vsel %vm4647, %v4875, 0
        %4888 = vmatpush.msra.mxu0 0.0
        %4889 = vmatpush.msra.mxu0 0.0
        %4890 = vmatpush.msra.mxu0 0.0
        %4891 = vmatpush.msra.mxu0 0.0
        %4892 = vmatpush.msra.mxu0 0.0
        %4893 = vmatpush.msra.mxu0 0.0
        %4894 = vmatpush.msra.mxu0 0.0
        %4895 = vmatpush.msra.mxu0 0.0
        %4896 = vmatpush.msra.mxu0 0.0
        %4897 = vmatpush.msra.mxu0 0.0
        %4898 = vmatpush.msra.mxu0 0.0
        %4899 = vmatpush.msra.mxu0 0.0
        %4900 = vmatpush.msra.mxu0 %v4881
        %4901 = vmatpush.msra.mxu0 %v4880
        %4902 = vmatpush.msra.mxu0 %v4879
        %4903 = vmatpush.msra.mxu0 %v4878
        %4904 = vmatmul.f32.gmra.mxu0 %v4883
        %v4905 = vpop.f32.mrf.mxu0
        %v4906 = vadd.f32 0.0, %v4905
        %4907 = vmatmul.f32.gmra.mxu0 %v4886
        %v4908 = vpop.f32.mrf.mxu0
        %v4909 = vadd.f32 0.0, %v4908
        %4910 = vdwg.mxu0
        %v4912 = vsel %vm4647, %v4755, 0
        %v4915 = vsel %vm4647, %v4758, 0
        %4917 = vmatpush.msra.mxu0 0.0
        %4918 = vmatpush.msra.mxu0 0.0
        %4919 = vmatpush.msra.mxu0 0.0
        %4920 = vmatpush.msra.mxu0 0.0
        %4921 = vmatpush.msra.mxu0 0.0
        %4922 = vmatpush.msra.mxu0 0.0
        %4923 = vmatpush.msra.mxu0 0.0
        %4924 = vmatpush.msra.mxu0 0.0
        %4925 = vmatpush.msra.mxu0 0.0
        %4926 = vmatpush.msra.mxu0 0.0
        %4927 = vmatpush.msra.mxu0 0.0
        %4928 = vmatpush.msra.mxu0 0.0
        %4929 = vmatpush.msra.mxu0 %v4763
        %4930 = vmatpush.msra.mxu0 %v4762
        %4931 = vmatpush.msra.mxu0 %v4761
        %4932 = vmatpush.msra.mxu0 %v4760
        %4933 = vmatmul.f32.gmra.mxu0 %v4912
        %v4934 = vpop.f32.mrf.mxu0
        %v4935 = vadd.f32 %v4906, %v4934
        %4936 = vmatmul.f32.gmra.mxu0 %v4915
        %v4937 = vpop.f32.mrf.mxu0
        %v4938 = vadd.f32 %v4909, %v4937
        %4939 = vdwg.mxu0
        %s4940 = scalar_lea.vmem [#allocation21], 64
        %v4941 = vld [vmem:[%s4940] sm:$0xff]
        %v4942 = vld [vmem:[%s4940 + $0x8] sm:$0xff]
        %v4943 = vld [vmem:[%s4940 + $0x10] sm:$0xff]
        %v4944 = vld [vmem:[%s4940 + $0x18] sm:$0xff]
        %s4945 = scalar_lea.vmem [#allocation22], 2
        %v4946 = vld [vmem:[%s4945] sm:$0x1]
        %v4948 = vperm.slane %v4946, 0
        %4950 = vmatpush.msra.mxu0 0.0
        %4951 = vmatpush.msra.mxu0 0.0
        %4952 = vmatpush.msra.mxu0 0.0
        %4953 = vmatpush.msra.mxu0 0.0
        %4954 = vmatpush.msra.mxu0 0.0
        %4955 = vmatpush.msra.mxu0 0.0
        %4956 = vmatpush.msra.mxu0 0.0
        %4957 = vmatpush.msra.mxu0 0.0
        %4958 = vmatpush.msra.mxu0 0.0
        %4959 = vmatpush.msra.mxu0 0.0
        %4960 = vmatpush.msra.mxu0 0.0
        %4961 = vmatpush.msra.mxu0 0.0
        %4962 = vmatpush.msra.mxu0 %v4944
        %4963 = vmatpush.msra.mxu0 %v4943
        %4964 = vmatpush.msra.mxu0 %v4942
        %4965 = vmatpush.msra.mxu0 %v4941
        %4966 = vmatmul.f32.gmra.mxu0 %v4649
        %v4967 = vpop.f32.mrf.mxu0
        %v4968 = vadd.f32 %v4948, %v4967
        %4969 = vmatmul.f32.gmra.mxu0 %v4651
        %v4970 = vpop.f32.mrf.mxu0
        %v4971 = vadd.f32 %v4948, %v4970
        %4972 = vdwg.mxu0
        %v4974 = vsel %vm4647, %v4968, 0
        %v4977 = vsel %vm4647, %v4971, 0
        %4979 = vmatpush.xpose.msra.mxu0 0.0
        %4980 = vmatpush.xpose.msra.mxu0 0.0
        %4981 = vmatpush.xpose.msra.mxu0 0.0
        %4982 = vmatpush.xpose.msra.mxu0 0.0
        %4983 = vmatpush.xpose.msra.mxu0 0.0
        %4984 = vmatpush.xpose.msra.mxu0 0.0
        %4985 = vmatpush.xpose.msra.mxu0 0.0
        %4986 = vmatpush.xpose.msra.mxu0 0.0
        %4987 = vmatpush.xpose.msra.mxu0 0.0
        %4988 = vmatpush.xpose.msra.mxu0 0.0
        %4989 = vmatpush.xpose.msra.mxu0 0.0
        %4990 = vmatpush.xpose.msra.mxu0 0.0
        %4991 = vmatpush.xpose.msra.mxu0 0.0
        %4992 = vmatpush.xpose.msra.mxu0 0.0
        %4993 = vmatpush.xpose.msra.mxu0 %v4651
        %4994 = vmatpush.xpose.msra.mxu0 %v4649
        %4995 = vmatmul.f32.gmra.mxu0 %v4974
        %v4996 = vpop.f32.mrf.mxu0
        %v4997 = vadd.f32 0.0, %v4996
        %4998 = vmatmul.f32.gmra.mxu0 %v4977
        %v4999 = vpop.f32.mrf.mxu0
        %v5000 = vadd.f32 0.0, %v4999
        %5001 = vdwg.mxu0
        %v5002 = vsel %vm4705, %v4997, -inf
        %5003 = vmax.xlane.f32.xlu0 %v5002
        %v5004 = vpop.xlane.xlu0 %5003
        %v5005 = vsel %vm4709, %v5000, -inf
        %5006 = vmax.xlane.f32.xlu0 %v5005
        %v5007 = vpop.xlane.xlu0 %5006
        %v5008 = vsub.f32 %v4997, %v5004
        %v5009 = vsub.f32 %v5000, %v5007
        %v5010 = vmul.f32 %v5008, 1.442695
        %v5011 = vpow.pop %v5010
        %v5012 = vmul.f32 %v5009, 1.442695
        %v5013 = vpow.pop %v5012
        %v5014 = vsel %vm4705, %v5011, 0.0
        %5015 = vadd.xlane.f32.xlu0 %v5014
        %v5016 = vpop.xlane.xlu0 %5015
        %v5017 = vsel %vm4709, %v5013, 0.0
        %5018 = vadd.xlane.f32.xlu0 %v5017
        %v5019 = vpop.xlane.xlu0 %5018
        %v5020 = vrcp.pop %v5016
        %v5021 = vrcp.pop %v5019
        %v5022 = vmul.f32 %v5011, %v5020
        %v5023 = vmul.f32 %v5013, %v5021
        %v5025 = vsel %vm4705, %v5022, 0
        %v5028 = vsel %vm4705, %v5023, 0
        %5030 = vmatpush.msra.mxu0 0.0
        %5031 = vmatpush.msra.mxu0 0.0
        %5032 = vmatpush.msra.mxu0 0.0
        %5033 = vmatpush.msra.mxu0 0.0
        %5034 = vmatpush.msra.mxu0 0.0
        %5035 = vmatpush.msra.mxu0 0.0
        %5036 = vmatpush.msra.mxu0 0.0
        %5037 = vmatpush.msra.mxu0 0.0
        %5038 = vmatpush.msra.mxu0 0.0
        %5039 = vmatpush.msra.mxu0 0.0
        %5040 = vmatpush.msra.mxu0 0.0
        %5041 = vmatpush.msra.mxu0 0.0
        %5042 = vmatpush.msra.mxu0 0.0
        %5043 = vmatpush.msra.mxu0 0.0
        %5044 = vmatpush.msra.mxu0 %v4735
        %5045 = vmatpush.msra.mxu0 %v4638
        %5046 = vmatmul.f32.gmra.mxu0 %v5025
        %v5047 = vpop.f32.mrf.mxu0
        %v5048 = vadd.f32 0.0, %v5047
        %5049 = vmatmul.f32.gmra.mxu0 %v5028
        %v5050 = vpop.f32.mrf.mxu0
        %v5051 = vadd.f32 0.0, %v5050
        %5052 = vdwg.mxu0
        %s5053 = scalar_lea.vmem [#allocation24], 64
        %v5054 = vld [vmem:[%s5053] sm:$0xff]
        %v5055 = vld [vmem:[%s5053 + $0x8] sm:$0xff]
        %v5056 = vld [vmem:[%s5053 + $0x10] sm:$0xff]
        %v5057 = vld [vmem:[%s5053 + $0x18] sm:$0xff]
        %v5059 = vsel %vm4647, %v5048, 0
        %v5062 = vsel %vm4647, %v5051, 0
        %5064 = vmatpush.msra.mxu0 0.0
        %5065 = vmatpush.msra.mxu0 0.0
        %5066 = vmatpush.msra.mxu0 0.0
        %5067 = vmatpush.msra.mxu0 0.0
        %5068 = vmatpush.msra.mxu0 0.0
        %5069 = vmatpush.msra.mxu0 0.0
        %5070 = vmatpush.msra.mxu0 0.0
        %5071 = vmatpush.msra.mxu0 0.0
        %5072 = vmatpush.msra.mxu0 0.0
        %5073 = vmatpush.msra.mxu0 0.0
        %5074 = vmatpush.msra.mxu0 0.0
        %5075 = vmatpush.msra.mxu0 0.0
        %5076 = vmatpush.msra.mxu0 %v5057
        %5077 = vmatpush.msra.mxu0 %v5056
        %5078 = vmatpush.msra.mxu0 %v5055
        %5079 = vmatpush.msra.mxu0 %v5054
        %5080 = vmatmul.f32.gmra.mxu0 %v5059
        %v5081 = vpop.f32.mrf.mxu0
        %v5082 = vadd.f32 0.0, %v5081
        %5083 = vmatmul.f32.gmra.mxu0 %v5062
        %v5084 = vpop.f32.mrf.mxu0
        %v5085 = vadd.f32 0.0, %v5084
        %5086 = vdwg.mxu0
        %v5087 = vadd.f32 %v4935, %v5082
        %v5088 = vadd.f32 %v4938, %v5085
        %s5089 = scalar_lea.vmem [#allocation21], 96
        %v5090 = vld [vmem:[%s5089] sm:$0xff]
        %v5091 = vld [vmem:[%s5089 + $0x8] sm:$0xff]
        %v5092 = vld [vmem:[%s5089 + $0x10] sm:$0xff]
        %v5093 = vld [vmem:[%s5089 + $0x18] sm:$0xff]
        %s5094 = scalar_lea.vmem [#allocation22], 3
        %v5095 = vld [vmem:[%s5094] sm:$0x1]
        %v5097 = vperm.slane %v5095, 0
        %5099 = vmatpush.msra.mxu0 0.0
        %5100 = vmatpush.msra.mxu0 0.0
        %5101 = vmatpush.msra.mxu0 0.0
        %5102 = vmatpush.msra.mxu0 0.0
        %5103 = vmatpush.msra.mxu0 0.0
        %5104 = vmatpush.msra.mxu0 0.0
        %5105 = vmatpush.msra.mxu0 0.0
        %5106 = vmatpush.msra.mxu0 0.0
        %5107 = vmatpush.msra.mxu0 0.0
        %5108 = vmatpush.msra.mxu0 0.0
        %5109 = vmatpush.msra.mxu0 0.0
        %5110 = vmatpush.msra.mxu0 0.0
        %5111 = vmatpush.msra.mxu0 %v5093
        %5112 = vmatpush.msra.mxu0 %v5092
        %5113 = vmatpush.msra.mxu0 %v5091
        %5114 = vmatpush.msra.mxu0 %v5090
        %5115 = vmatmul.f32.gmra.mxu0 %v4649
        %v5116 = vpop.f32.mrf.mxu0
        %v5117 = vadd.f32 %v5097, %v5116
        %5118 = vmatmul.f32.gmra.mxu0 %v4651
        %v5119 = vpop.f32.mrf.mxu0
        %v5120 = vadd.f32 %v5097, %v5119
        %5121 = vdwg.mxu0
        %v5123 = vsel %vm4647, %v5117, 0
        %v5126 = vsel %vm4647, %v5120, 0
        %5128 = vmatpush.xpose.msra.mxu0 0.0
        %5129 = vmatpush.xpose.msra.mxu0 0.0
        %5130 = vmatpush.xpose.msra.mxu0 0.0
        %5131 = vmatpush.xpose.msra.mxu0 0.0
        %5132 = vmatpush.xpose.msra.mxu0 0.0
        %5133 = vmatpush.xpose.msra.mxu0 0.0
        %5134 = vmatpush.xpose.msra.mxu0 0.0
        %5135 = vmatpush.xpose.msra.mxu0 0.0
        %5136 = vmatpush.xpose.msra.mxu0 0.0
        %5137 = vmatpush.xpose.msra.mxu0 0.0
        %5138 = vmatpush.xpose.msra.mxu0 0.0
        %5139 = vmatpush.xpose.msra.mxu0 0.0
        %5140 = vmatpush.xpose.msra.mxu0 0.0
        %5141 = vmatpush.xpose.msra.mxu0 0.0
        %5142 = vmatpush.xpose.msra.mxu0 %v4651
        %5143 = vmatpush.xpose.msra.mxu0 %v4649
        %5144 = vmatmul.f32.gmra.mxu0 %v5123
        %v5145 = vpop.f32.mrf.mxu0
        %v5146 = vadd.f32 0.0, %v5145
        %5147 = vmatmul.f32.gmra.mxu0 %v5126
        %v5148 = vpop.f32.mrf.mxu0
        %v5149 = vadd.f32 0.0, %v5148
        %5150 = vdwg.mxu0
        %v5151 = vsel %vm4705, %v5146, -inf
        %5152 = vmax.xlane.f32.xlu0 %v5151
        %v5153 = vpop.xlane.xlu0 %5152
        %v5154 = vsel %vm4709, %v5149, -inf
        %5155 = vmax.xlane.f32.xlu0 %v5154
        %v5156 = vpop.xlane.xlu0 %5155
        %v5157 = vsub.f32 %v5146, %v5153
        %v5158 = vsub.f32 %v5149, %v5156
        %v5159 = vmul.f32 %v5157, 1.442695
        %v5160 = vpow.pop %v5159
        %v5161 = vmul.f32 %v5158, 1.442695
        %v5162 = vpow.pop %v5161
        %v5163 = vsel %vm4705, %v5160, 0.0
        %5164 = vadd.xlane.f32.xlu0 %v5163
        %v5165 = vpop.xlane.xlu0 %5164
        %v5166 = vsel %vm4709, %v5162, 0.0
        %5167 = vadd.xlane.f32.xlu0 %v5166
        %v5168 = vpop.xlane.xlu0 %5167
        %v5169 = vrcp.pop %v5165
        %v5170 = vrcp.pop %v5168
        %v5171 = vmul.f32 %v5160, %v5169
        %v5172 = vmul.f32 %v5162, %v5170
        %v5174 = vsel %vm4705, %v5171, 0
        %v5177 = vsel %vm4705, %v5172, 0
        %5179 = vmatpush.msra.mxu0 0.0
        %5180 = vmatpush.msra.mxu0 0.0
        %5181 = vmatpush.msra.mxu0 0.0
        %5182 = vmatpush.msra.mxu0 0.0
        %5183 = vmatpush.msra.mxu0 0.0
        %5184 = vmatpush.msra.mxu0 0.0
        %5185 = vmatpush.msra.mxu0 0.0
        %5186 = vmatpush.msra.mxu0 0.0
        %5187 = vmatpush.msra.mxu0 0.0
        %5188 = vmatpush.msra.mxu0 0.0
        %5189 = vmatpush.msra.mxu0 0.0
        %5190 = vmatpush.msra.mxu0 0.0
        %5191 = vmatpush.msra.mxu0 0.0
        %5192 = vmatpush.msra.mxu0 0.0
        %5193 = vmatpush.msra.mxu0 %v4735
        %5194 = vmatpush.msra.mxu0 %v4638
        %5195 = vmatmul.f32.gmra.mxu0 %v5174
        %v5196 = vpop.f32.mrf.mxu0
        %v5197 = vadd.f32 0.0, %v5196
        %5198 = vmatmul.f32.gmra.mxu0 %v5177
        %v5199 = vpop.f32.mrf.mxu0
        %v5200 = vadd.f32 0.0, %v5199
        %5201 = vdwg.mxu0
        %s5202 = scalar_lea.vmem [#allocation24], 96
        %v5203 = vld [vmem:[%s5202] sm:$0xff]
        %v5204 = vld [vmem:[%s5202 + $0x8] sm:$0xff]
        %v5205 = vld [vmem:[%s5202 + $0x10] sm:$0xff]
        %v5206 = vld [vmem:[%s5202 + $0x18] sm:$0xff]
        %v5208 = vsel %vm4647, %v5197, 0
        %v5211 = vsel %vm4647, %v5200, 0
        %5213 = vmatpush.msra.mxu0 0.0
        %5214 = vmatpush.msra.mxu0 0.0
        %5215 = vmatpush.msra.mxu0 0.0
        %5216 = vmatpush.msra.mxu0 0.0
        %5217 = vmatpush.msra.mxu0 0.0
        %5218 = vmatpush.msra.mxu0 0.0
        %5219 = vmatpush.msra.mxu0 0.0
        %5220 = vmatpush.msra.mxu0 0.0
        %5221 = vmatpush.msra.mxu0 0.0
        %5222 = vmatpush.msra.mxu0 0.0
        %5223 = vmatpush.msra.mxu0 0.0
        %5224 = vmatpush.msra.mxu0 0.0
        %5225 = vmatpush.msra.mxu0 %v5206
        %5226 = vmatpush.msra.mxu0 %v5205
        %5227 = vmatpush.msra.mxu0 %v5204
        %5228 = vmatpush.msra.mxu0 %v5203
        %5229 = vmatmul.f32.gmra.mxu0 %v5208
        %v5230 = vpop.f32.mrf.mxu0
        %v5231 = vadd.f32 0.0, %v5230
        %5232 = vmatmul.f32.gmra.mxu0 %v5211
        %v5233 = vpop.f32.mrf.mxu0
        %v5234 = vadd.f32 0.0, %v5233
        %5235 = vdwg.mxu0
        %v5236 = vadd.f32 %v5087, %v5231
        %v5237 = vadd.f32 %v5088, %v5234
        %v5238 = vadd.f32 %v4638, %v5236
        %v5239 = vadd.f32 %v4635, %v5237
        %v5240 = vld [vmem:[#allocation25] sm:$0x1]
        %v5242 = vperm.slane %v5240, 0
        %v5244 = vadd.f32 %v5238, %v5242
        %v5245 = vadd.f32 %v5239, %v5242
        %v5246 = vld [vmem:[#allocation27] sm:$0x1]
        %v5247 = vld [vmem:[#allocation28] sm:$0x1]
        %v5248 = vsel %vm4647, %v5244, 0.0
        %5249 = vadd.xlane.f32.xlu0 %v5248
        %v5250 = vpop.xlane.xlu0 %5249
        %vm5251 = vcmask 253952
        %v5252 = vsel %vm5251, %v5245, 0.0
        %5253 = vadd.xlane.f32.xlu0 %v5252
        %v5254 = vpop.xlane.xlu0 %5253
        %v5255 = vrcp.pop 32.0
        %v5256 = vmul.f32 32.0, %v5255
        %v5257 = vsub.f32 1.0, %v5256
        %v5258 = vmul.f32 %v5255, %v5257
        %v5259 = vadd.f32 %v5255, %v5258
        %vm5260 = vweird.f32 %v5255
        %v5261 = vsel %vm5260, %v5255, %v5259
        %v5262 = vmul.f32 %v5250, %v5261
        %v5263 = vmul.f32 %v5254, %v5261
        %v5264 = vsub.f32 %v5244, %v5262
        %v5265 = vsub.f32 %v5245, %v5263
        %v5266 = vmul.f32 %v5264, %v5264
        %v5267 = vmul.f32 %v5265, %v5265
        %v5268 = vsel %vm4647, %v5266, 0.0
        %5269 = vadd.xlane.f32.xlu0 %v5268
        %v5270 = vpop.xlane.xlu0 %5269
        %v5271 = vsel %vm5251, %v5267, 0.0
        %5272 = vadd.xlane.f32.xlu0 %v5271
        %v5273 = vpop.xlane.xlu0 %5272
        %v5274 = vmul.f32 %v5270, %v5261
        %v5275 = vmul.f32 %v5273, %v5261
        %v5276 = vadd.f32 %v5274, 1e-05
        %v5277 = vadd.f32 %v5275, 1e-05
        %v5278 = vrsqrt.pop %v5276
        %v5279 = vmul.f32 %v5278, %v5276
        %v5280 = vmul.f32 %v5279, %v5278
        %v5281 = vmul.f32 0.5, %v5280
        %v5282 = vsub.f32 1.5, %v5281
        %v5283 = vmul.f32 %v5278, %v5282
        %vm5284 = vweird.f32 %v5276
        %vm5285 = vweird.f32 %v5278
        %vm5286 = vmor %vm5284, %vm5285
        %v5287 = vsel %vm5286, %v5278, %v5283
        %v5288 = vrsqrt.pop %v5277
        %v5289 = vmul.f32 %v5288, %v5277
        %v5290 = vmul.f32 %v5289, %v5288
        %v5291 = vmul.f32 0.5, %v5290
        %v5292 = vsub.f32 1.5, %v5291
        %v5293 = vmul.f32 %v5288, %v5292
        %vm5294 = vweird.f32 %v5277
        %vm5295 = vweird.f32 %v5288
        %vm5296 = vmor %vm5294, %vm5295
        %v5297 = vsel %vm5296, %v5288, %v5293
        %v5298 = vmul.f32 %v5264, %v5287
        %v5299 = vmul.f32 %v5265, %v5297
        %v5301 = vperm.slane %v5246, 0
        %v5303 = vmul.f32 %v5298, %v5301
        %v5304 = vmul.f32 %v5299, %v5301
        %v5306 = vperm.slane %v5247, 0
        %v5308 = vadd.f32 %v5303, %v5306
        %v5309 = vadd.f32 %v5304, %v5306
        %v5310 = vld [vmem:[#allocation30] sm:$0xff]
        %v5311 = vld [vmem:[#allocation30 + $0x8] sm:$0xff]
        %v5312 = vld [vmem:[#allocation30 + $0x10] sm:$0xff]
        %v5313 = vld [vmem:[#allocation30 + $0x18] sm:$0xff]
        %v5314 = vld [vmem:[#allocation31] sm:$0x1]
        %v5316 = vperm.slane %v5314, 0
        %v5319 = vsel %vm4647, %v5308, 0
        %v5322 = vsel %vm4647, %v5309, 0
        %5324 = vmatpush.msra.mxu0 0.0
        %5325 = vmatpush.msra.mxu0 0.0
        %5326 = vmatpush.msra.mxu0 0.0
        %5327 = vmatpush.msra.mxu0 0.0
        %5328 = vmatpush.msra.mxu0 0.0
        %5329 = vmatpush.msra.mxu0 0.0
        %5330 = vmatpush.msra.mxu0 0.0
        %5331 = vmatpush.msra.mxu0 0.0
        %5332 = vmatpush.msra.mxu0 0.0
        %5333 = vmatpush.msra.mxu0 0.0
        %5334 = vmatpush.msra.mxu0 0.0
        %5335 = vmatpush.msra.mxu0 0.0
        %5336 = vmatpush.msra.mxu0 %v5313
        %5337 = vmatpush.msra.mxu0 %v5312
        %5338 = vmatpush.msra.mxu0 %v5311
        %5339 = vmatpush.msra.mxu0 %v5310
        %5340 = vmatmul.f32.gmra.mxu0 %v5319
        %v5341 = vpop.f32.mrf.mxu0
        %v5342 = vadd.f32 %v5316, %v5341
        %5343 = vmatmul.f32.gmra.mxu0 %v5322
        %v5344 = vpop.f32.mrf.mxu0
        %v5345 = vadd.f32 %v5316, %v5344
        %5346 = vdwg.mxu0
        %v5347 = vmul.f32 %v5342, 0.5
        %v5348 = vmul.f32 %v5345, 0.5
        %v5349 = vmul.f32 %v5342, 0.70710677
        %v5350 = vmul.f32 %v5345, 0.70710677
        %v5351 = vmul.f32 %v5349, %v5349
        %v5352 = vmin.f32 16.0, %v5351
        %v5353 = vmul.f32 %v5352, 2.1237322e-06
        %v5354 = vadd.f32 %v5353, 0.00028619796
        %v5355 = vmul.f32 %v5352, %v5354
        %v5356 = vadd.f32 %v5355, 0.0036580483
        %v5357 = vmul.f32 %v5352, %v5356
        %v5358 = vadd.f32 %v5357, 0.05243302
        %v5359 = vmul.f32 %v5352, %v5358
        %v5360 = vadd.f32 %v5359, 0.18741608
        %v5361 = vmul.f32 %v5352, %v5360
        %v5362 = vadd.f32 %v5361, 1.1283791
        %v5363 = vmul.f32 %v5349, %v5362
        %v5364 = vmul.f32 %v5352, 3.8918573e-05
        %v5365 = vadd.f32 %v5364, 0.001143296
        %v5366 = vmul.f32 %v5352, %v5365
        %v5367 = vadd.f32 %v5366, 0.014752088
        %v5368 = vmul.f32 %v5352, %v5367
        %v5369 = vadd.f32 %v5368, 0.112945676
        %v5370 = vmul.f32 %v5352, %v5369
        %v5371 = vadd.f32 %v5370, 0.4994258
        %v5372 = vmul.f32 %v5352, %v5371
        %v5373 = vadd.f32 %v5372, 1.0
        %v5374 = vrcp.pop %v5373
        %v5375 = vmul.f32 %v5373, %v5374
        %v5376 = vsub.f32 1.0, %v5375
        %v5377 = vmul.f32 %v5374, %v5376
        %v5378 = vadd.f32 %v5374, %v5377
        %vm5379 = vweird.f32 %v5373
        %vm5380 = vweird.f32 %v5374
        %vm5381 = vmor %vm5379, %vm5380
        %v5382 = vsel %vm5381, %v5374, %v5378
        %v5383 = vand.u32 2147483647, %v5373
        %vm5384 = vcmp.eq.f32.partialorder %v5383, 8.507059e+37
        %v5385 = vand.u32 %v5373, 2147483648
        %v5386 = vor.u32 1.1754944e-38, %v5385
        %v5387 = vsel %vm5384, %v5386, %v5382
        %v5388 = vmul.f32 %v5363, %v5387
        %v5389 = vmin.f32 %v5388, 1.0
        %v5390 = vmax.f32 %v5389, -1.0
        %v5391 = vmul.f32 %v5350, %v5350
        %v5392 = vmin.f32 16.0, %v5391
        %v5393 = vmul.f32 %v5392, 2.1237322e-06
        %v5394 = vadd.f32 %v5393, 0.00028619796
        %v5395 = vmul.f32 %v5392, %v5394
        %v5396 = vadd.f32 %v5395, 0.0036580483
        %v5397 = vmul.f32 %v5392, %v5396
        %v5398 = vadd.f32 %v5397, 0.05243302
        %v5399 = vmul.f32 %v5392, %v5398
        %v5400 = vadd.f32 %v5399, 0.18741608
        %v5401 = vmul.f32 %v5392, %v5400
        %v5402 = vadd.f32 %v5401, 1.1283791
        %v5403 = vmul.f32 %v5350, %v5402
        %v5404 = vmul.f32 %v5392, 3.8918573e-05
        %v5405 = vadd.f32 %v5404, 0.001143296
        %v5406 = vmul.f32 %v5392, %v5405
        %v5407 = vadd.f32 %v5406, 0.014752088
        %v5408 = vmul.f32 %v5392, %v5407
        %v5409 = vadd.f32 %v5408, 0.112945676
        %v5410 = vmul.f32 %v5392, %v5409
        %v5411 = vadd.f32 %v5410, 0.4994258
        %v5412 = vmul.f32 %v5392, %v5411
        %v5413 = vadd.f32 %v5412, 1.0
        %v5414 = vrcp.pop %v5413
        %v5415 = vmul.f32 %v5413, %v5414
        %v5416 = vsub.f32 1.0, %v5415
        %v5417 = vmul.f32 %v5414, %v5416
        %v5418 = vadd.f32 %v5414, %v5417
        %vm5419 = vweird.f32 %v5413
        %vm5420 = vweird.f32 %v5414
        %vm5421 = vmor %vm5419, %vm5420
        %v5422 = vsel %vm5421, %v5414, %v5418
        %v5423 = vand.u32 2147483647, %v5413
        %vm5424 = vcmp.eq.f32.partialorder %v5423, 8.507059e+37
        %v5425 = vand.u32 %v5413, 2147483648
        %v5426 = vor.u32 1.1754944e-38, %v5425
        %v5427 = vsel %vm5424, %v5426, %v5422
        %v5428 = vmul.f32 %v5403, %v5427
        %v5429 = vmin.f32 %v5428, 1.0
        %v5430 = vmax.f32 %v5429, -1.0
        %v5431 = vadd.f32 %v5390, 1.0
        %v5432 = vadd.f32 %v5430, 1.0
        %v5433 = vmul.f32 %v5347, %v5431
        %v5434 = vmul.f32 %v5348, %v5432
        %v5435 = vld [vmem:[%s20] sm:$0xff]
        %v5436 = vld [vmem:[%s20 + $0x8] sm:$0xff]
        %v5437 = vld [vmem:[%s20 + $0x10] sm:$0xff]
        %v5438 = vld [vmem:[%s20 + $0x18] sm:$0xff]
        %v5439 = vld [vmem:[%s20 + $0x20] sm:$0xff]
        %v5440 = vld [vmem:[%s20 + $0x28] sm:$0xff]
        %v5441 = vld [vmem:[%s20 + $0x30] sm:$0xff]
        %v5442 = vld [vmem:[%s20 + $0x38] sm:$0xff]
        %v5443 = vld [vmem:[%s20 + $0x40] sm:$0xff]
        %v5444 = vld [vmem:[%s20 + $0x48] sm:$0xff]
        %v5445 = vld [vmem:[%s20 + $0x50] sm:$0xff]
        %v5446 = vld [vmem:[%s20 + $0x58] sm:$0xff]
        %v5447 = vld [vmem:[%s20 + $0x60] sm:$0xff]
        %v5448 = vld [vmem:[%s20 + $0x68] sm:$0xff]
        %v5449 = vld [vmem:[%s20 + $0x70] sm:$0xff]
        %v5450 = vld [vmem:[%s20 + $0x78] sm:$0xff]
        %5451 = vmatpush.msra.mxu0 %v5450
        %5452 = vmatpush.msra.mxu0 %v5449
        %5453 = vmatpush.msra.mxu0 %v5448
        %5454 = vmatpush.msra.mxu0 %v5447
        %5455 = vmatpush.msra.mxu0 %v5446
        %5456 = vmatpush.msra.mxu0 %v5445
        %5457 = vmatpush.msra.mxu0 %v5444
        %5458 = vmatpush.msra.mxu0 %v5443
        %5459 = vmatpush.msra.mxu0 %v5442
        %5460 = vmatpush.msra.mxu0 %v5441
        %5461 = vmatpush.msra.mxu0 %v5440
        %5462 = vmatpush.msra.mxu0 %v5439
        %5463 = vmatpush.msra.mxu0 %v5438
        %5464 = vmatpush.msra.mxu0 %v5437
        %5465 = vmatpush.msra.mxu0 %v5436
        %5466 = vmatpush.msra.mxu0 %v5435
        %5467 = vmatmul.f32.gmra.mxu0 %v5433
        %v5468 = vpop.f32.mrf.mxu0
        %v5469 = vadd.f32 0.0, %v5468
        %5470 = vmatmul.f32.gmra.mxu0 %v5434
        %v5471 = vpop.f32.mrf.mxu0
        %v5472 = vadd.f32 0.0, %v5471
        %5473 = vdwg.mxu0
        %v5474 = vadd.f32 %v5308, %v5469
        %v5475 = vadd.f32 %v5309, %v5472
        %v5476 = vld [vmem:[#allocation33] sm:$0x1]
        %v5478 = vperm.slane %v5476, 0
        %v5480 = vadd.f32 %v5474, %v5478
        %v5481 = vadd.f32 %v5475, %v5478
        %v5482 = vld [vmem:[#allocation34] sm:$0x1]
        %v5483 = vld [vmem:[#allocation36] sm:$0x1]
        %v5484 = vsel %vm4647, %v5480, 0.0
        %5485 = vadd.xlane.f32.xlu0 %v5484
        %v5486 = vpop.xlane.xlu0 %5485
        %v5487 = vsel %vm5251, %v5481, 0.0
        %5488 = vadd.xlane.f32.xlu0 %v5487
        %v5489 = vpop.xlane.xlu0 %5488
        %v5490 = vmul.f32 %v5486, %v5261
        %v5491 = vmul.f32 %v5489, %v5261
        %v5492 = vsub.f32 %v5480, %v5490
        %v5493 = vsub.f32 %v5481, %v5491
        %v5494 = vmul.f32 %v5492, %v5492
        %v5495 = vmul.f32 %v5493, %v5493
        %v5496 = vsel %vm4647, %v5494, 0.0
        %5497 = vadd.xlane.f32.xlu0 %v5496
        %v5498 = vpop.xlane.xlu0 %5497
        %v5499 = vsel %vm5251, %v5495, 0.0
        %5500 = vadd.xlane.f32.xlu0 %v5499
        %v5501 = vpop.xlane.xlu0 %5500
        %v5502 = vmul.f32 %v5498, %v5261
        %v5503 = vmul.f32 %v5501, %v5261
        %v5504 = vadd.f32 %v5502, 1e-05
        %v5505 = vadd.f32 %v5503, 1e-05
        %v5506 = vrsqrt.pop %v5504
        %v5507 = vmul.f32 %v5506, %v5504
        %v5508 = vmul.f32 %v5507, %v5506
        %v5509 = vmul.f32 0.5, %v5508
        %v5510 = vsub.f32 1.5, %v5509
        %v5511 = vmul.f32 %v5506, %v5510
        %vm5512 = vweird.f32 %v5504
        %vm5513 = vweird.f32 %v5506
        %vm5514 = vmor %vm5512, %vm5513
        %v5515 = vsel %vm5514, %v5506, %v5511
        %v5516 = vrsqrt.pop %v5505
        %v5517 = vmul.f32 %v5516, %v5505
        %v5518 = vmul.f32 %v5517, %v5516
        %v5519 = vmul.f32 0.5, %v5518
        %v5520 = vsub.f32 1.5, %v5519
        %v5521 = vmul.f32 %v5516, %v5520
        %vm5522 = vweird.f32 %v5505
        %vm5523 = vweird.f32 %v5516
        %vm5524 = vmor %vm5522, %vm5523
        %v5525 = vsel %vm5524, %v5516, %v5521
        %v5526 = vmul.f32 %v5492, %v5515
        %v5527 = vmul.f32 %v5493, %v5525
        %v5529 = vperm.slane %v5482, 0
        %v5531 = vmul.f32 %v5526, %v5529
        %v5532 = vmul.f32 %v5527, %v5529
        %v5534 = vperm.slane %v5483, 0
        %v5536 = vadd.f32 %v5531, %v5534
        %v5537 = vadd.f32 %v5532, %v5534
        %s5538 = scalar_lea.vmem [#allocation21], 128
        %v5539 = vld [vmem:[%s5538] sm:$0xff]
        %v5540 = vld [vmem:[%s5538 + $0x8] sm:$0xff]
        %v5541 = vld [vmem:[%s5538 + $0x10] sm:$0xff]
        %v5542 = vld [vmem:[%s5538 + $0x18] sm:$0xff]
        %s5543 = scalar_lea.vmem [#allocation22], 4
        %v5544 = vld [vmem:[%s5543] sm:$0x1]
        %v5546 = vperm.slane %v5544, 0
        %v5549 = vsel %vm4647, %v5536, 0
        %v5552 = vsel %vm4647, %v5537, 0
        %5554 = vmatpush.msra.mxu0 0.0
        %5555 = vmatpush.msra.mxu0 0.0
        %5556 = vmatpush.msra.mxu0 0.0
        %5557 = vmatpush.msra.mxu0 0.0
        %5558 = vmatpush.msra.mxu0 0.0
        %5559 = vmatpush.msra.mxu0 0.0
        %5560 = vmatpush.msra.mxu0 0.0
        %5561 = vmatpush.msra.mxu0 0.0
        %5562 = vmatpush.msra.mxu0 0.0
        %5563 = vmatpush.msra.mxu0 0.0
        %5564 = vmatpush.msra.mxu0 0.0
        %5565 = vmatpush.msra.mxu0 0.0
        %5566 = vmatpush.msra.mxu0 %v5542
        %5567 = vmatpush.msra.mxu0 %v5541
        %5568 = vmatpush.msra.mxu0 %v5540
        %5569 = vmatpush.msra.mxu0 %v5539
        %5570 = vmatmul.f32.gmra.mxu0 %v5549
        %v5571 = vpop.f32.mrf.mxu0
        %v5572 = vadd.f32 %v5546, %v5571
        %5573 = vmatmul.f32.gmra.mxu0 %v5552
        %v5574 = vpop.f32.mrf.mxu0
        %v5575 = vadd.f32 %v5546, %v5574
        %5576 = vdwg.mxu0
        %v5578 = vsel %vm4647, %v5572, 0
        %v5581 = vsel %vm4647, %v5575, 0
        %5583 = vmatpush.xpose.msra.mxu0 0.0
        %5584 = vmatpush.xpose.msra.mxu0 0.0
        %5585 = vmatpush.xpose.msra.mxu0 0.0
        %5586 = vmatpush.xpose.msra.mxu0 0.0
        %5587 = vmatpush.xpose.msra.mxu0 0.0
        %5588 = vmatpush.xpose.msra.mxu0 0.0
        %5589 = vmatpush.xpose.msra.mxu0 0.0
        %5590 = vmatpush.xpose.msra.mxu0 0.0
        %5591 = vmatpush.xpose.msra.mxu0 0.0
        %5592 = vmatpush.xpose.msra.mxu0 0.0
        %5593 = vmatpush.xpose.msra.mxu0 0.0
        %5594 = vmatpush.xpose.msra.mxu0 0.0
        %5595 = vmatpush.xpose.msra.mxu0 0.0
        %5596 = vmatpush.xpose.msra.mxu0 0.0
        %5597 = vmatpush.xpose.msra.mxu0 %v5552
        %5598 = vmatpush.xpose.msra.mxu0 %v5549
        %5599 = vmatmul.f32.gmra.mxu0 %v5578
        %v5600 = vpop.f32.mrf.mxu0
        %v5601 = vadd.f32 0.0, %v5600
        %5602 = vmatmul.f32.gmra.mxu0 %v5581
        %v5603 = vpop.f32.mrf.mxu0
        %v5604 = vadd.f32 0.0, %v5603
        %5605 = vdwg.mxu0
        %v5606 = vsel %vm4705, %v5601, -inf
        %5607 = vmax.xlane.f32.xlu0 %v5606
        %v5608 = vpop.xlane.xlu0 %5607
        %v5609 = vsel %vm4709, %v5604, -inf
        %5610 = vmax.xlane.f32.xlu0 %v5609
        %v5611 = vpop.xlane.xlu0 %5610
        %v5612 = vsub.f32 %v5601, %v5608
        %v5613 = vsub.f32 %v5604, %v5611
        %v5614 = vmul.f32 %v5612, 1.442695
        %v5615 = vpow.pop %v5614
        %v5616 = vmul.f32 %v5613, 1.442695
        %v5617 = vpow.pop %v5616
        %v5618 = vsel %vm4705, %v5615, 0.0
        %5619 = vadd.xlane.f32.xlu0 %v5618
        %v5620 = vpop.xlane.xlu0 %5619
        %v5621 = vsel %vm4709, %v5617, 0.0
        %5622 = vadd.xlane.f32.xlu0 %v5621
        %v5623 = vpop.xlane.xlu0 %5622
        %v5624 = vrcp.pop %v5620
        %v5625 = vrcp.pop %v5623
        %v5626 = vmul.f32 %v5615, %v5624
        %v5627 = vmul.f32 %v5617, %v5625
        %v5629 = vsel %vm4705, %v5626, 0
        %v5632 = vsel %vm4705, %v5627, 0
        %v5634 = vsel %vm4637, %v5537, 0
        %5636 = vmatpush.msra.mxu0 0.0
        %5637 = vmatpush.msra.mxu0 0.0
        %5638 = vmatpush.msra.mxu0 0.0
        %5639 = vmatpush.msra.mxu0 0.0
        %5640 = vmatpush.msra.mxu0 0.0
        %5641 = vmatpush.msra.mxu0 0.0
        %5642 = vmatpush.msra.mxu0 0.0
        %5643 = vmatpush.msra.mxu0 0.0
        %5644 = vmatpush.msra.mxu0 0.0
        %5645 = vmatpush.msra.mxu0 0.0
        %5646 = vmatpush.msra.mxu0 0.0
        %5647 = vmatpush.msra.mxu0 0.0
        %5648 = vmatpush.msra.mxu0 0.0
        %5649 = vmatpush.msra.mxu0 0.0
        %5650 = vmatpush.msra.mxu0 %v5634
        %5651 = vmatpush.msra.mxu0 %v5536
        %5652 = vmatmul.f32.gmra.mxu0 %v5629
        %v5653 = vpop.f32.mrf.mxu0
        %v5654 = vadd.f32 0.0, %v5653
        %5655 = vmatmul.f32.gmra.mxu0 %v5632
        %v5656 = vpop.f32.mrf.mxu0
        %v5657 = vadd.f32 0.0, %v5656
        %5658 = vdwg.mxu0
        %s5659 = scalar_lea.vmem [#allocation24], 128
        %v5660 = vld [vmem:[%s5659] sm:$0xff]
        %v5661 = vld [vmem:[%s5659 + $0x8] sm:$0xff]
        %v5662 = vld [vmem:[%s5659 + $0x10] sm:$0xff]
        %v5663 = vld [vmem:[%s5659 + $0x18] sm:$0xff]
        %s5664 = scalar_lea.vmem [#allocation21], 160
        %v5665 = vld [vmem:[%s5664] sm:$0xff]
        %v5666 = vld [vmem:[%s5664 + $0x8] sm:$0xff]
        %v5667 = vld [vmem:[%s5664 + $0x10] sm:$0xff]
        %v5668 = vld [vmem:[%s5664 + $0x18] sm:$0xff]
        %s5669 = scalar_lea.vmem [#allocation22], 5
        %v5670 = vld [vmem:[%s5669] sm:$0x1]
        %v5672 = vperm.slane %v5670, 0
        %5674 = vmatpush.msra.mxu0 0.0
        %5675 = vmatpush.msra.mxu0 0.0
        %5676 = vmatpush.msra.mxu0 0.0
        %5677 = vmatpush.msra.mxu0 0.0
        %5678 = vmatpush.msra.mxu0 0.0
        %5679 = vmatpush.msra.mxu0 0.0
        %5680 = vmatpush.msra.mxu0 0.0
        %5681 = vmatpush.msra.mxu0 0.0
        %5682 = vmatpush.msra.mxu0 0.0
        %5683 = vmatpush.msra.mxu0 0.0
        %5684 = vmatpush.msra.mxu0 0.0
        %5685 = vmatpush.msra.mxu0 0.0
        %5686 = vmatpush.msra.mxu0 %v5668
        %5687 = vmatpush.msra.mxu0 %v5667
        %5688 = vmatpush.msra.mxu0 %v5666
        %5689 = vmatpush.msra.mxu0 %v5665
        %5690 = vmatmul.f32.gmra.mxu0 %v5549
        %v5691 = vpop.f32.mrf.mxu0
        %v5692 = vadd.f32 %v5672, %v5691
        %5693 = vmatmul.f32.gmra.mxu0 %v5552
        %v5694 = vpop.f32.mrf.mxu0
        %v5695 = vadd.f32 %v5672, %v5694
        %5696 = vdwg.mxu0
        %v5698 = vsel %vm4647, %v5692, 0
        %v5701 = vsel %vm4647, %v5695, 0
        %5703 = vmatpush.xpose.msra.mxu0 0.0
        %5704 = vmatpush.xpose.msra.mxu0 0.0
        %5705 = vmatpush.xpose.msra.mxu0 0.0
        %5706 = vmatpush.xpose.msra.mxu0 0.0
        %5707 = vmatpush.xpose.msra.mxu0 0.0
        %5708 = vmatpush.xpose.msra.mxu0 0.0
        %5709 = vmatpush.xpose.msra.mxu0 0.0
        %5710 = vmatpush.xpose.msra.mxu0 0.0
        %5711 = vmatpush.xpose.msra.mxu0 0.0
        %5712 = vmatpush.xpose.msra.mxu0 0.0
        %5713 = vmatpush.xpose.msra.mxu0 0.0
        %5714 = vmatpush.xpose.msra.mxu0 0.0
        %5715 = vmatpush.xpose.msra.mxu0 0.0
        %5716 = vmatpush.xpose.msra.mxu0 0.0
        %5717 = vmatpush.xpose.msra.mxu0 %v5552
        %5718 = vmatpush.xpose.msra.mxu0 %v5549
        %5719 = vmatmul.f32.gmra.mxu0 %v5698
        %v5720 = vpop.f32.mrf.mxu0
        %v5721 = vadd.f32 0.0, %v5720
        %5722 = vmatmul.f32.gmra.mxu0 %v5701
        %v5723 = vpop.f32.mrf.mxu0
        %v5724 = vadd.f32 0.0, %v5723
        %5725 = vdwg.mxu0
        %v5726 = vsel %vm4705, %v5721, -inf
        %5727 = vmax.xlane.f32.xlu0 %v5726
        %v5728 = vpop.xlane.xlu0 %5727
        %v5729 = vsel %vm4709, %v5724, -inf
        %5730 = vmax.xlane.f32.xlu0 %v5729
        %v5731 = vpop.xlane.xlu0 %5730
        %v5732 = vsub.f32 %v5721, %v5728
        %v5733 = vsub.f32 %v5724, %v5731
        %v5734 = vmul.f32 %v5732, 1.442695
        %v5735 = vpow.pop %v5734
        %v5736 = vmul.f32 %v5733, 1.442695
        %v5737 = vpow.pop %v5736
        %v5738 = vsel %vm4705, %v5735, 0.0
        %5739 = vadd.xlane.f32.xlu0 %v5738
        %v5740 = vpop.xlane.xlu0 %5739
        %v5741 = vsel %vm4709, %v5737, 0.0
        %5742 = vadd.xlane.f32.xlu0 %v5741
        %v5743 = vpop.xlane.xlu0 %5742
        %v5744 = vrcp.pop %v5740
        %v5745 = vrcp.pop %v5743
        %v5746 = vmul.f32 %v5735, %v5744
        %v5747 = vmul.f32 %v5737, %v5745
        %v5749 = vsel %vm4705, %v5746, 0
        %v5752 = vsel %vm4705, %v5747, 0
        %5754 = vmatpush.msra.mxu0 0.0
        %5755 = vmatpush.msra.mxu0 0.0
        %5756 = vmatpush.msra.mxu0 0.0
        %5757 = vmatpush.msra.mxu0 0.0
        %5758 = vmatpush.msra.mxu0 0.0
        %5759 = vmatpush.msra.mxu0 0.0
        %5760 = vmatpush.msra.mxu0 0.0
        %5761 = vmatpush.msra.mxu0 0.0
        %5762 = vmatpush.msra.mxu0 0.0
        %5763 = vmatpush.msra.mxu0 0.0
        %5764 = vmatpush.msra.mxu0 0.0
        %5765 = vmatpush.msra.mxu0 0.0
        %5766 = vmatpush.msra.mxu0 0.0
        %5767 = vmatpush.msra.mxu0 0.0
        %5768 = vmatpush.msra.mxu0 %v5634
        %5769 = vmatpush.msra.mxu0 %v5536
        %5770 = vmatmul.f32.gmra.mxu0 %v5749
        %v5771 = vpop.f32.mrf.mxu0
        %v5772 = vadd.f32 0.0, %v5771
        %5773 = vmatmul.f32.gmra.mxu0 %v5752
        %v5774 = vpop.f32.mrf.mxu0
        %v5775 = vadd.f32 0.0, %v5774
        %5776 = vdwg.mxu0
        %s5777 = scalar_lea.vmem [#allocation24], 160
        %v5778 = vld [vmem:[%s5777] sm:$0xff]
        %v5779 = vld [vmem:[%s5777 + $0x8] sm:$0xff]
        %v5780 = vld [vmem:[%s5777 + $0x10] sm:$0xff]
        %v5781 = vld [vmem:[%s5777 + $0x18] sm:$0xff]
        %v5783 = vsel %vm4647, %v5772, 0
        %v5786 = vsel %vm4647, %v5775, 0
        %5788 = vmatpush.msra.mxu0 0.0
        %5789 = vmatpush.msra.mxu0 0.0
        %5790 = vmatpush.msra.mxu0 0.0
        %5791 = vmatpush.msra.mxu0 0.0
        %5792 = vmatpush.msra.mxu0 0.0
        %5793 = vmatpush.msra.mxu0 0.0
        %5794 = vmatpush.msra.mxu0 0.0
        %5795 = vmatpush.msra.mxu0 0.0
        %5796 = vmatpush.msra.mxu0 0.0
        %5797 = vmatpush.msra.mxu0 0.0
        %5798 = vmatpush.msra.mxu0 0.0
        %5799 = vmatpush.msra.mxu0 0.0
        %5800 = vmatpush.msra.mxu0 %v5781
        %5801 = vmatpush.msra.mxu0 %v5780
        %5802 = vmatpush.msra.mxu0 %v5779
        %5803 = vmatpush.msra.mxu0 %v5778
        %5804 = vmatmul.f32.gmra.mxu0 %v5783
        %v5805 = vpop.f32.mrf.mxu0
        %v5806 = vadd.f32 0.0, %v5805
        %5807 = vmatmul.f32.gmra.mxu0 %v5786
        %v5808 = vpop.f32.mrf.mxu0
        %v5809 = vadd.f32 0.0, %v5808
        %5810 = vdwg.mxu0
        %v5812 = vsel %vm4647, %v5654, 0
        %v5815 = vsel %vm4647, %v5657, 0
        %5817 = vmatpush.msra.mxu0 0.0
        %5818 = vmatpush.msra.mxu0 0.0
        %5819 = vmatpush.msra.mxu0 0.0
        %5820 = vmatpush.msra.mxu0 0.0
        %5821 = vmatpush.msra.mxu0 0.0
        %5822 = vmatpush.msra.mxu0 0.0
        %5823 = vmatpush.msra.mxu0 0.0
        %5824 = vmatpush.msra.mxu0 0.0
        %5825 = vmatpush.msra.mxu0 0.0
        %5826 = vmatpush.msra.mxu0 0.0
        %5827 = vmatpush.msra.mxu0 0.0
        %5828 = vmatpush.msra.mxu0 0.0
        %5829 = vmatpush.msra.mxu0 %v5663
        %5830 = vmatpush.msra.mxu0 %v5662
        %5831 = vmatpush.msra.mxu0 %v5661
        %5832 = vmatpush.msra.mxu0 %v5660
        %5833 = vmatmul.f32.gmra.mxu0 %v5812
        %v5834 = vpop.f32.mrf.mxu0
        %v5835 = vadd.f32 %v5806, %v5834
        %5836 = vmatmul.f32.gmra.mxu0 %v5815
        %v5837 = vpop.f32.mrf.mxu0
        %v5838 = vadd.f32 %v5809, %v5837
        %5839 = vdwg.mxu0
        %s5840 = scalar_lea.vmem [#allocation21], 192
        %v5841 = vld [vmem:[%s5840] sm:$0xff]
        %v5842 = vld [vmem:[%s5840 + $0x8] sm:$0xff]
        %v5843 = vld [vmem:[%s5840 + $0x10] sm:$0xff]
        %v5844 = vld [vmem:[%s5840 + $0x18] sm:$0xff]
        %s5845 = scalar_lea.vmem [#allocation22], 6
        %v5846 = vld [vmem:[%s5845] sm:$0x1]
        %v5848 = vperm.slane %v5846, 0
        %5850 = vmatpush.msra.mxu0 0.0
        %5851 = vmatpush.msra.mxu0 0.0
        %5852 = vmatpush.msra.mxu0 0.0
        %5853 = vmatpush.msra.mxu0 0.0
        %5854 = vmatpush.msra.mxu0 0.0
        %5855 = vmatpush.msra.mxu0 0.0
        %5856 = vmatpush.msra.mxu0 0.0
        %5857 = vmatpush.msra.mxu0 0.0
        %5858 = vmatpush.msra.mxu0 0.0
        %5859 = vmatpush.msra.mxu0 0.0
        %5860 = vmatpush.msra.mxu0 0.0
        %5861 = vmatpush.msra.mxu0 0.0
        %5862 = vmatpush.msra.mxu0 %v5844
        %5863 = vmatpush.msra.mxu0 %v5843
        %5864 = vmatpush.msra.mxu0 %v5842
        %5865 = vmatpush.msra.mxu0 %v5841
        %5866 = vmatmul.f32.gmra.mxu0 %v5549
        %v5867 = vpop.f32.mrf.mxu0
        %v5868 = vadd.f32 %v5848, %v5867
        %5869 = vmatmul.f32.gmra.mxu0 %v5552
        %v5870 = vpop.f32.mrf.mxu0
        %v5871 = vadd.f32 %v5848, %v5870
        %5872 = vdwg.mxu0
        %v5874 = vsel %vm4647, %v5868, 0
        %v5877 = vsel %vm4647, %v5871, 0
        %5879 = vmatpush.xpose.msra.mxu0 0.0
        %5880 = vmatpush.xpose.msra.mxu0 0.0
        %5881 = vmatpush.xpose.msra.mxu0 0.0
        %5882 = vmatpush.xpose.msra.mxu0 0.0
        %5883 = vmatpush.xpose.msra.mxu0 0.0
        %5884 = vmatpush.xpose.msra.mxu0 0.0
        %5885 = vmatpush.xpose.msra.mxu0 0.0
        %5886 = vmatpush.xpose.msra.mxu0 0.0
        %5887 = vmatpush.xpose.msra.mxu0 0.0
        %5888 = vmatpush.xpose.msra.mxu0 0.0
        %5889 = vmatpush.xpose.msra.mxu0 0.0
        %5890 = vmatpush.xpose.msra.mxu0 0.0
        %5891 = vmatpush.xpose.msra.mxu0 0.0
        %5892 = vmatpush.xpose.msra.mxu0 0.0
        %5893 = vmatpush.xpose.msra.mxu0 %v5552
        %5894 = vmatpush.xpose.msra.mxu0 %v5549
        %5895 = vmatmul.f32.gmra.mxu0 %v5874
        %v5896 = vpop.f32.mrf.mxu0
        %v5897 = vadd.f32 0.0, %v5896
        %5898 = vmatmul.f32.gmra.mxu0 %v5877
        %v5899 = vpop.f32.mrf.mxu0
        %v5900 = vadd.f32 0.0, %v5899
        %5901 = vdwg.mxu0
        %v5902 = vsel %vm4705, %v5897, -inf
        %5903 = vmax.xlane.f32.xlu0 %v5902
        %v5904 = vpop.xlane.xlu0 %5903
        %v5905 = vsel %vm4709, %v5900, -inf
        %5906 = vmax.xlane.f32.xlu0 %v5905
        %v5907 = vpop.xlane.xlu0 %5906
        %v5908 = vsub.f32 %v5897, %v5904
        %v5909 = vsub.f32 %v5900, %v5907
        %v5910 = vmul.f32 %v5908, 1.442695
        %v5911 = vpow.pop %v5910
        %v5912 = vmul.f32 %v5909, 1.442695
        %v5913 = vpow.pop %v5912
        %v5914 = vsel %vm4705, %v5911, 0.0
        %5915 = vadd.xlane.f32.xlu0 %v5914
        %v5916 = vpop.xlane.xlu0 %5915
        %v5917 = vsel %vm4709, %v5913, 0.0
        %5918 = vadd.xlane.f32.xlu0 %v5917
        %v5919 = vpop.xlane.xlu0 %5918
        %v5920 = vrcp.pop %v5916
        %v5921 = vrcp.pop %v5919
        %v5922 = vmul.f32 %v5911, %v5920
        %v5923 = vmul.f32 %v5913, %v5921
        %v5925 = vsel %vm4705, %v5922, 0
        %v5928 = vsel %vm4705, %v5923, 0
        %5930 = vmatpush.msra.mxu0 0.0
        %5931 = vmatpush.msra.mxu0 0.0
        %5932 = vmatpush.msra.mxu0 0.0
        %5933 = vmatpush.msra.mxu0 0.0
        %5934 = vmatpush.msra.mxu0 0.0
        %5935 = vmatpush.msra.mxu0 0.0
        %5936 = vmatpush.msra.mxu0 0.0
        %5937 = vmatpush.msra.mxu0 0.0
        %5938 = vmatpush.msra.mxu0 0.0
        %5939 = vmatpush.msra.mxu0 0.0
        %5940 = vmatpush.msra.mxu0 0.0
        %5941 = vmatpush.msra.mxu0 0.0
        %5942 = vmatpush.msra.mxu0 0.0
        %5943 = vmatpush.msra.mxu0 0.0
        %5944 = vmatpush.msra.mxu0 %v5634
        %5945 = vmatpush.msra.mxu0 %v5536
        %5946 = vmatmul.f32.gmra.mxu0 %v5925
        %v5947 = vpop.f32.mrf.mxu0
        %v5948 = vadd.f32 0.0, %v5947
        %5949 = vmatmul.f32.gmra.mxu0 %v5928
        %v5950 = vpop.f32.mrf.mxu0
        %v5951 = vadd.f32 0.0, %v5950
        %5952 = vdwg.mxu0
        %s5953 = scalar_lea.vmem [#allocation24], 192
        %v5954 = vld [vmem:[%s5953] sm:$0xff]
        %v5955 = vld [vmem:[%s5953 + $0x8] sm:$0xff]
        %v5956 = vld [vmem:[%s5953 + $0x10] sm:$0xff]
        %v5957 = vld [vmem:[%s5953 + $0x18] sm:$0xff]
        %v5959 = vsel %vm4647, %v5948, 0
        %v5962 = vsel %vm4647, %v5951, 0
        %5964 = vmatpush.msra.mxu0 0.0
        %5965 = vmatpush.msra.mxu0 0.0
        %5966 = vmatpush.msra.mxu0 0.0
        %5967 = vmatpush.msra.mxu0 0.0
        %5968 = vmatpush.msra.mxu0 0.0
        %5969 = vmatpush.msra.mxu0 0.0
        %5970 = vmatpush.msra.mxu0 0.0
        %5971 = vmatpush.msra.mxu0 0.0
        %5972 = vmatpush.msra.mxu0 0.0
        %5973 = vmatpush.msra.mxu0 0.0
        %5974 = vmatpush.msra.mxu0 0.0
        %5975 = vmatpush.msra.mxu0 0.0
        %5976 = vmatpush.msra.mxu0 %v5957
        %5977 = vmatpush.msra.mxu0 %v5956
        %5978 = vmatpush.msra.mxu0 %v5955
        %5979 = vmatpush.msra.mxu0 %v5954
        %5980 = vmatmul.f32.gmra.mxu0 %v5959
        %v5981 = vpop.f32.mrf.mxu0
        %v5982 = vadd.f32 0.0, %v5981
        %5983 = vmatmul.f32.gmra.mxu0 %v5962
        %v5984 = vpop.f32.mrf.mxu0
        %v5985 = vadd.f32 0.0, %v5984
        %5986 = vdwg.mxu0
        %v5987 = vadd.f32 %v5835, %v5982
        %v5988 = vadd.f32 %v5838, %v5985
        %s5989 = scalar_lea.vmem [#allocation21], 224
        %v5990 = vld [vmem:[%s5989] sm:$0xff]
        %v5991 = vld [vmem:[%s5989 + $0x8] sm:$0xff]
        %v5992 = vld [vmem:[%s5989 + $0x10] sm:$0xff]
        %v5993 = vld [vmem:[%s5989 + $0x18] sm:$0xff]
        %s5994 = scalar_lea.vmem [#allocation22], 7
        %v5995 = vld [vmem:[%s5994] sm:$0x1]
        %v5997 = vperm.slane %v5995, 0
        %5999 = vmatpush.msra.mxu0 0.0
        %6000 = vmatpush.msra.mxu0 0.0
        %6001 = vmatpush.msra.mxu0 0.0
        %6002 = vmatpush.msra.mxu0 0.0
        %6003 = vmatpush.msra.mxu0 0.0
        %6004 = vmatpush.msra.mxu0 0.0
        %6005 = vmatpush.msra.mxu0 0.0
        %6006 = vmatpush.msra.mxu0 0.0
        %6007 = vmatpush.msra.mxu0 0.0
        %6008 = vmatpush.msra.mxu0 0.0
        %6009 = vmatpush.msra.mxu0 0.0
        %6010 = vmatpush.msra.mxu0 0.0
        %6011 = vmatpush.msra.mxu0 %v5993
        %6012 = vmatpush.msra.mxu0 %v5992
        %6013 = vmatpush.msra.mxu0 %v5991
        %6014 = vmatpush.msra.mxu0 %v5990
        %6015 = vmatmul.f32.gmra.mxu0 %v5549
        %v6016 = vpop.f32.mrf.mxu0
        %v6017 = vadd.f32 %v5997, %v6016
        %6018 = vmatmul.f32.gmra.mxu0 %v5552
        %v6019 = vpop.f32.mrf.mxu0
        %v6020 = vadd.f32 %v5997, %v6019
        %6021 = vdwg.mxu0
        %v6023 = vsel %vm4647, %v6017, 0
        %v6026 = vsel %vm4647, %v6020, 0
        %6028 = vmatpush.xpose.msra.mxu0 0.0
        %6029 = vmatpush.xpose.msra.mxu0 0.0
        %6030 = vmatpush.xpose.msra.mxu0 0.0
        %6031 = vmatpush.xpose.msra.mxu0 0.0
        %6032 = vmatpush.xpose.msra.mxu0 0.0
        %6033 = vmatpush.xpose.msra.mxu0 0.0
        %6034 = vmatpush.xpose.msra.mxu0 0.0
        %6035 = vmatpush.xpose.msra.mxu0 0.0
        %6036 = vmatpush.xpose.msra.mxu0 0.0
        %6037 = vmatpush.xpose.msra.mxu0 0.0
        %6038 = vmatpush.xpose.msra.mxu0 0.0
        %6039 = vmatpush.xpose.msra.mxu0 0.0
        %6040 = vmatpush.xpose.msra.mxu0 0.0
        %6041 = vmatpush.xpose.msra.mxu0 0.0
        %6042 = vmatpush.xpose.msra.mxu0 %v5552
        %6043 = vmatpush.xpose.msra.mxu0 %v5549
        %6044 = vmatmul.f32.gmra.mxu0 %v6023
        %v6045 = vpop.f32.mrf.mxu0
        %v6046 = vadd.f32 0.0, %v6045
        %6047 = vmatmul.f32.gmra.mxu0 %v6026
        %v6048 = vpop.f32.mrf.mxu0
        %v6049 = vadd.f32 0.0, %v6048
        %6050 = vdwg.mxu0
        %v6051 = vsel %vm4705, %v6046, -inf
        %6052 = vmax.xlane.f32.xlu0 %v6051
        %v6053 = vpop.xlane.xlu0 %6052
        %v6054 = vsel %vm4709, %v6049, -inf
        %6055 = vmax.xlane.f32.xlu0 %v6054
        %v6056 = vpop.xlane.xlu0 %6055
        %v6057 = vsub.f32 %v6046, %v6053
        %v6058 = vsub.f32 %v6049, %v6056
        %v6059 = vmul.f32 %v6057, 1.442695
        %v6060 = vpow.pop %v6059
        %v6061 = vmul.f32 %v6058, 1.442695
        %v6062 = vpow.pop %v6061
        %v6063 = vsel %vm4705, %v6060, 0.0
        %6064 = vadd.xlane.f32.xlu0 %v6063
        %v6065 = vpop.xlane.xlu0 %6064
        %v6066 = vsel %vm4709, %v6062, 0.0
        %6067 = vadd.xlane.f32.xlu0 %v6066
        %v6068 = vpop.xlane.xlu0 %6067
        %v6069 = vrcp.pop %v6065
        %v6070 = vrcp.pop %v6068
        %v6071 = vmul.f32 %v6060, %v6069
        %v6072 = vmul.f32 %v6062, %v6070
        %v6074 = vsel %vm4705, %v6071, 0
        %v6077 = vsel %vm4705, %v6072, 0
        %6079 = vmatpush.msra.mxu0 0.0
        %6080 = vmatpush.msra.mxu0 0.0
        %6081 = vmatpush.msra.mxu0 0.0
        %6082 = vmatpush.msra.mxu0 0.0
        %6083 = vmatpush.msra.mxu0 0.0
        %6084 = vmatpush.msra.mxu0 0.0
        %6085 = vmatpush.msra.mxu0 0.0
        %6086 = vmatpush.msra.mxu0 0.0
        %6087 = vmatpush.msra.mxu0 0.0
        %6088 = vmatpush.msra.mxu0 0.0
        %6089 = vmatpush.msra.mxu0 0.0
        %6090 = vmatpush.msra.mxu0 0.0
        %6091 = vmatpush.msra.mxu0 0.0
        %6092 = vmatpush.msra.mxu0 0.0
        %6093 = vmatpush.msra.mxu0 %v5634
        %6094 = vmatpush.msra.mxu0 %v5536
        %6095 = vmatmul.f32.gmra.mxu0 %v6074
        %v6096 = vpop.f32.mrf.mxu0
        %v6097 = vadd.f32 0.0, %v6096
        %6098 = vmatmul.f32.gmra.mxu0 %v6077
        %v6099 = vpop.f32.mrf.mxu0
        %v6100 = vadd.f32 0.0, %v6099
        %6101 = vdwg.mxu0
        %s6102 = scalar_lea.vmem [#allocation24], 224
        %v6103 = vld [vmem:[%s6102] sm:$0xff]
        %v6104 = vld [vmem:[%s6102 + $0x8] sm:$0xff]
        %v6105 = vld [vmem:[%s6102 + $0x10] sm:$0xff]
        %v6106 = vld [vmem:[%s6102 + $0x18] sm:$0xff]
        %v6108 = vsel %vm4647, %v6097, 0
        %v6111 = vsel %vm4647, %v6100, 0
        %6113 = vmatpush.msra.mxu0 0.0
        %6114 = vmatpush.msra.mxu0 0.0
        %6115 = vmatpush.msra.mxu0 0.0
        %6116 = vmatpush.msra.mxu0 0.0
        %6117 = vmatpush.msra.mxu0 0.0
        %6118 = vmatpush.msra.mxu0 0.0
        %6119 = vmatpush.msra.mxu0 0.0
        %6120 = vmatpush.msra.mxu0 0.0
        %6121 = vmatpush.msra.mxu0 0.0
        %6122 = vmatpush.msra.mxu0 0.0
        %6123 = vmatpush.msra.mxu0 0.0
        %6124 = vmatpush.msra.mxu0 0.0
        %6125 = vmatpush.msra.mxu0 %v6106
        %6126 = vmatpush.msra.mxu0 %v6105
        %6127 = vmatpush.msra.mxu0 %v6104
        %6128 = vmatpush.msra.mxu0 %v6103
        %6129 = vmatmul.f32.gmra.mxu0 %v6108
        %v6130 = vpop.f32.mrf.mxu0
        %v6131 = vadd.f32 0.0, %v6130
        %6132 = vmatmul.f32.gmra.mxu0 %v6111
        %v6133 = vpop.f32.mrf.mxu0
        %v6134 = vadd.f32 0.0, %v6133
        %6135 = vdwg.mxu0
        %v6136 = vadd.f32 %v5987, %v6131
        %v6137 = vadd.f32 %v5988, %v6134
        %v6138 = vadd.f32 %v5536, %v6136
        %v6139 = vadd.f32 %v5537, %v6137
        %s6140 = scalar_lea.vmem [#allocation25], 1
        %v6141 = vld [vmem:[%s6140] sm:$0x1]
        %v6143 = vperm.slane %v6141, 0
        %v6145 = vadd.f32 %v6138, %v6143
        %v6146 = vadd.f32 %v6139, %v6143
        %s6147 = scalar_lea.vmem [#allocation27], 1
        %v6148 = vld [vmem:[%s6147] sm:$0x1]
        %s6149 = scalar_lea.vmem [#allocation28], 1
        %v6150 = vld [vmem:[%s6149] sm:$0x1]
        %v6151 = vsel %vm4647, %v6145, 0.0
        %6152 = vadd.xlane.f32.xlu0 %v6151
        %v6153 = vpop.xlane.xlu0 %6152
        %v6154 = vsel %vm5251, %v6146, 0.0
        %6155 = vadd.xlane.f32.xlu0 %v6154
        %v6156 = vpop.xlane.xlu0 %6155
        %v6157 = vmul.f32 %v6153, %v5261
        %v6158 = vmul.f32 %v6156, %v5261
        %v6159 = vsub.f32 %v6145, %v6157
        %v6160 = vsub.f32 %v6146, %v6158
        %v6161 = vmul.f32 %v6159, %v6159
        %v6162 = vmul.f32 %v6160, %v6160
        %v6163 = vsel %vm4647, %v6161, 0.0
        %6164 = vadd.xlane.f32.xlu0 %v6163
        %v6165 = vpop.xlane.xlu0 %6164
        %v6166 = vsel %vm5251, %v6162, 0.0
        %6167 = vadd.xlane.f32.xlu0 %v6166
        %v6168 = vpop.xlane.xlu0 %6167
        %v6169 = vmul.f32 %v6165, %v5261
        %v6170 = vmul.f32 %v6168, %v5261
        %v6171 = vadd.f32 %v6169, 1e-05
        %v6172 = vadd.f32 %v6170, 1e-05
        %v6173 = vrsqrt.pop %v6171
        %v6174 = vmul.f32 %v6173, %v6171
        %v6175 = vmul.f32 %v6174, %v6173
        %v6176 = vmul.f32 0.5, %v6175
        %v6177 = vsub.f32 1.5, %v6176
        %v6178 = vmul.f32 %v6173, %v6177
        %vm6179 = vweird.f32 %v6171
        %vm6180 = vweird.f32 %v6173
        %vm6181 = vmor %vm6179, %vm6180
        %v6182 = vsel %vm6181, %v6173, %v6178
        %v6183 = vrsqrt.pop %v6172
        %v6184 = vmul.f32 %v6183, %v6172
        %v6185 = vmul.f32 %v6184, %v6183
        %v6186 = vmul.f32 0.5, %v6185
        %v6187 = vsub.f32 1.5, %v6186
        %v6188 = vmul.f32 %v6183, %v6187
        %vm6189 = vweird.f32 %v6172
        %vm6190 = vweird.f32 %v6183
        %vm6191 = vmor %vm6189, %vm6190
        %v6192 = vsel %vm6191, %v6183, %v6188
        %v6193 = vmul.f32 %v6159, %v6182
        %v6194 = vmul.f32 %v6160, %v6192
        %v6196 = vperm.slane %v6148, 0
        %v6198 = vmul.f32 %v6193, %v6196
        %v6199 = vmul.f32 %v6194, %v6196
        %v6201 = vperm.slane %v6150, 0
        %v6203 = vadd.f32 %v6198, %v6201
        %v6204 = vadd.f32 %v6199, %v6201
        %s6205 = scalar_lea.vmem [#allocation30], 32
        %v6206 = vld [vmem:[%s6205] sm:$0xff]
        %v6207 = vld [vmem:[%s6205 + $0x8] sm:$0xff]
        %v6208 = vld [vmem:[%s6205 + $0x10] sm:$0xff]
        %v6209 = vld [vmem:[%s6205 + $0x18] sm:$0xff]
        %s6210 = scalar_lea.vmem [#allocation31], 1
        %v6211 = vld [vmem:[%s6210] sm:$0x1]
        %v6213 = vperm.slane %v6211, 0
        %v6216 = vsel %vm4647, %v6203, 0
        %v6219 = vsel %vm4647, %v6204, 0
        %6221 = vmatpush.msra.mxu0 0.0
        %6222 = vmatpush.msra.mxu0 0.0
        %6223 = vmatpush.msra.mxu0 0.0
        %6224 = vmatpush.msra.mxu0 0.0
        %6225 = vmatpush.msra.mxu0 0.0
        %6226 = vmatpush.msra.mxu0 0.0
        %6227 = vmatpush.msra.mxu0 0.0
        %6228 = vmatpush.msra.mxu0 0.0
        %6229 = vmatpush.msra.mxu0 0.0
        %6230 = vmatpush.msra.mxu0 0.0
        %6231 = vmatpush.msra.mxu0 0.0
        %6232 = vmatpush.msra.mxu0 0.0
        %6233 = vmatpush.msra.mxu0 %v6209
        %6234 = vmatpush.msra.mxu0 %v6208
        %6235 = vmatpush.msra.mxu0 %v6207
        %6236 = vmatpush.msra.mxu0 %v6206
        %6237 = vmatmul.f32.gmra.mxu0 %v6216
        %v6238 = vpop.f32.mrf.mxu0
        %v6239 = vadd.f32 %v6213, %v6238
        %6240 = vmatmul.f32.gmra.mxu0 %v6219
        %v6241 = vpop.f32.mrf.mxu0
        %v6242 = vadd.f32 %v6213, %v6241
        %6243 = vdwg.mxu0
        %v6244 = vmul.f32 %v6239, 0.5
        %v6245 = vmul.f32 %v6242, 0.5
        %v6246 = vmul.f32 %v6239, 0.70710677
        %v6247 = vmul.f32 %v6242, 0.70710677
        %v6248 = vmul.f32 %v6246, %v6246
        %v6249 = vmin.f32 16.0, %v6248
        %v6250 = vmul.f32 %v6249, 2.1237322e-06
        %v6251 = vadd.f32 %v6250, 0.00028619796
        %v6252 = vmul.f32 %v6249, %v6251
        %v6253 = vadd.f32 %v6252, 0.0036580483
        %v6254 = vmul.f32 %v6249, %v6253
        %v6255 = vadd.f32 %v6254, 0.05243302
        %v6256 = vmul.f32 %v6249, %v6255
        %v6257 = vadd.f32 %v6256, 0.18741608
        %v6258 = vmul.f32 %v6249, %v6257
        %v6259 = vadd.f32 %v6258, 1.1283791
        %v6260 = vmul.f32 %v6246, %v6259
        %v6261 = vmul.f32 %v6249, 3.8918573e-05
        %v6262 = vadd.f32 %v6261, 0.001143296
        %v6263 = vmul.f32 %v6249, %v6262
        %v6264 = vadd.f32 %v6263, 0.014752088
        %v6265 = vmul.f32 %v6249, %v6264
        %v6266 = vadd.f32 %v6265, 0.112945676
        %v6267 = vmul.f32 %v6249, %v6266
        %v6268 = vadd.f32 %v6267, 0.4994258
        %v6269 = vmul.f32 %v6249, %v6268
        %v6270 = vadd.f32 %v6269, 1.0
        %v6271 = vrcp.pop %v6270
        %v6272 = vmul.f32 %v6270, %v6271
        %v6273 = vsub.f32 1.0, %v6272
        %v6274 = vmul.f32 %v6271, %v6273
        %v6275 = vadd.f32 %v6271, %v6274
        %vm6276 = vweird.f32 %v6270
        %vm6277 = vweird.f32 %v6271
        %vm6278 = vmor %vm6276, %vm6277
        %v6279 = vsel %vm6278, %v6271, %v6275
        %v6280 = vand.u32 2147483647, %v6270
        %vm6281 = vcmp.eq.f32.partialorder %v6280, 8.507059e+37
        %v6282 = vand.u32 %v6270, 2147483648
        %v6283 = vor.u32 1.1754944e-38, %v6282
        %v6284 = vsel %vm6281, %v6283, %v6279
        %v6285 = vmul.f32 %v6260, %v6284
        %v6286 = vmin.f32 %v6285, 1.0
        %v6287 = vmax.f32 %v6286, -1.0
        %v6288 = vmul.f32 %v6247, %v6247
        %v6289 = vmin.f32 16.0, %v6288
        %v6290 = vmul.f32 %v6289, 2.1237322e-06
        %v6291 = vadd.f32 %v6290, 0.00028619796
        %v6292 = vmul.f32 %v6289, %v6291
        %v6293 = vadd.f32 %v6292, 0.0036580483
        %v6294 = vmul.f32 %v6289, %v6293
        %v6295 = vadd.f32 %v6294, 0.05243302
        %v6296 = vmul.f32 %v6289, %v6295
        %v6297 = vadd.f32 %v6296, 0.18741608
        %v6298 = vmul.f32 %v6289, %v6297
        %v6299 = vadd.f32 %v6298, 1.1283791
        %v6300 = vmul.f32 %v6247, %v6299
        %v6301 = vmul.f32 %v6289, 3.8918573e-05
        %v6302 = vadd.f32 %v6301, 0.001143296
        %v6303 = vmul.f32 %v6289, %v6302
        %v6304 = vadd.f32 %v6303, 0.014752088
        %v6305 = vmul.f32 %v6289, %v6304
        %v6306 = vadd.f32 %v6305, 0.112945676
        %v6307 = vmul.f32 %v6289, %v6306
        %v6308 = vadd.f32 %v6307, 0.4994258
        %v6309 = vmul.f32 %v6289, %v6308
        %v6310 = vadd.f32 %v6309, 1.0
        %v6311 = vrcp.pop %v6310
        %v6312 = vmul.f32 %v6310, %v6311
        %v6313 = vsub.f32 1.0, %v6312
        %v6314 = vmul.f32 %v6311, %v6313
        %v6315 = vadd.f32 %v6311, %v6314
        %vm6316 = vweird.f32 %v6310
        %vm6317 = vweird.f32 %v6311
        %vm6318 = vmor %vm6316, %vm6317
        %v6319 = vsel %vm6318, %v6311, %v6315
        %v6320 = vand.u32 2147483647, %v6310
        %vm6321 = vcmp.eq.f32.partialorder %v6320, 8.507059e+37
        %v6322 = vand.u32 %v6310, 2147483648
        %v6323 = vor.u32 1.1754944e-38, %v6322
        %v6324 = vsel %vm6321, %v6323, %v6319
        %v6325 = vmul.f32 %v6300, %v6324
        %v6326 = vmin.f32 %v6325, 1.0
        %v6327 = vmax.f32 %v6326, -1.0
        %v6328 = vadd.f32 %v6287, 1.0
        %v6329 = vadd.f32 %v6327, 1.0
        %v6330 = vmul.f32 %v6244, %v6328
        %v6331 = vmul.f32 %v6245, %v6329
        %s6332 = scalar_lea.vmem %s20, 128
        %v6333 = vld [vmem:[%s6332] sm:$0xff]
        %v6334 = vld [vmem:[%s6332 + $0x8] sm:$0xff]
        %v6335 = vld [vmem:[%s6332 + $0x10] sm:$0xff]
        %v6336 = vld [vmem:[%s6332 + $0x18] sm:$0xff]
        %v6337 = vld [vmem:[%s6332 + $0x20] sm:$0xff]
        %v6338 = vld [vmem:[%s6332 + $0x28] sm:$0xff]
        %v6339 = vld [vmem:[%s6332 + $0x30] sm:$0xff]
        %v6340 = vld [vmem:[%s6332 + $0x38] sm:$0xff]
        %v6341 = vld [vmem:[%s6332 + $0x40] sm:$0xff]
        %v6342 = vld [vmem:[%s6332 + $0x48] sm:$0xff]
        %v6343 = vld [vmem:[%s6332 + $0x50] sm:$0xff]
        %v6344 = vld [vmem:[%s6332 + $0x58] sm:$0xff]
        %v6345 = vld [vmem:[%s6332 + $0x60] sm:$0xff]
        %v6346 = vld [vmem:[%s6332 + $0x68] sm:$0xff]
        %v6347 = vld [vmem:[%s6332 + $0x70] sm:$0xff]
        %v6348 = vld [vmem:[%s6332 + $0x78] sm:$0xff]
        %6349 = vmatpush.msra.mxu0 %v6348
        %6350 = vmatpush.msra.mxu0 %v6347
        %6351 = vmatpush.msra.mxu0 %v6346
        %6352 = vmatpush.msra.mxu0 %v6345
        %6353 = vmatpush.msra.mxu0 %v6344
        %6354 = vmatpush.msra.mxu0 %v6343
        %6355 = vmatpush.msra.mxu0 %v6342
        %6356 = vmatpush.msra.mxu0 %v6341
        %6357 = vmatpush.msra.mxu0 %v6340
        %6358 = vmatpush.msra.mxu0 %v6339
        %6359 = vmatpush.msra.mxu0 %v6338
        %6360 = vmatpush.msra.mxu0 %v6337
        %6361 = vmatpush.msra.mxu0 %v6336
        %6362 = vmatpush.msra.mxu0 %v6335
        %6363 = vmatpush.msra.mxu0 %v6334
        %6364 = vmatpush.msra.mxu0 %v6333
        %6365 = vmatmul.f32.gmra.mxu0 %v6330
        %v6366 = vpop.f32.mrf.mxu0
        %v6367 = vadd.f32 0.0, %v6366
        %6368 = vmatmul.f32.gmra.mxu0 %v6331
        %v6369 = vpop.f32.mrf.mxu0
        %v6370 = vadd.f32 0.0, %v6369
        %6371 = vdwg.mxu0
        %v6372 = vadd.f32 %v6203, %v6367
        %v6373 = vadd.f32 %v6204, %v6370
        %s6374 = scalar_lea.vmem [#allocation33], 1
        %v6375 = vld [vmem:[%s6374] sm:$0x1]
        %v6377 = vperm.slane %v6375, 0
        %v6379 = vadd.f32 %v6372, %v6377
        %v6380 = vadd.f32 %v6373, %v6377
        %s6381 = scalar_lea.vmem [#allocation34], 1
        %v6382 = vld [vmem:[%s6381] sm:$0x1]
        %s6383 = scalar_lea.vmem [#allocation36], 1
        %v6384 = vld [vmem:[%s6383] sm:$0x1]
        %v6385 = vsel %vm4647, %v6379, 0.0
        %6386 = vadd.xlane.f32.xlu0 %v6385
        %v6387 = vpop.xlane.xlu0 %6386
        %v6388 = vsel %vm5251, %v6380, 0.0
        %6389 = vadd.xlane.f32.xlu0 %v6388
        %v6390 = vpop.xlane.xlu0 %6389
        %v6391 = vmul.f32 %v6387, %v5261
        %v6392 = vmul.f32 %v6390, %v5261
        %v6393 = vsub.f32 %v6379, %v6391
        %v6394 = vsub.f32 %v6380, %v6392
        %v6395 = vmul.f32 %v6393, %v6393
        %v6396 = vmul.f32 %v6394, %v6394
        %v6397 = vsel %vm4647, %v6395, 0.0
        %6398 = vadd.xlane.f32.xlu0 %v6397
        %v6399 = vpop.xlane.xlu0 %6398
        %v6400 = vsel %vm5251, %v6396, 0.0
        %6401 = vadd.xlane.f32.xlu0 %v6400
        %v6402 = vpop.xlane.xlu0 %6401
        %v6403 = vmul.f32 %v6399, %v5261
        %v6404 = vmul.f32 %v6402, %v5261
        %v6405 = vadd.f32 %v6403, 1e-05
        %v6406 = vadd.f32 %v6404, 1e-05
        %v6407 = vrsqrt.pop %v6405
        %v6408 = vmul.f32 %v6407, %v6405
        %v6409 = vmul.f32 %v6408, %v6407
        %v6410 = vmul.f32 0.5, %v6409
        %v6411 = vsub.f32 1.5, %v6410
        %v6412 = vmul.f32 %v6407, %v6411
        %vm6413 = vweird.f32 %v6405
        %vm6414 = vweird.f32 %v6407
        %vm6415 = vmor %vm6413, %vm6414
        %v6416 = vsel %vm6415, %v6407, %v6412
        %v6417 = vrsqrt.pop %v6406
        %v6418 = vmul.f32 %v6417, %v6406
        %v6419 = vmul.f32 %v6418, %v6417
        %v6420 = vmul.f32 0.5, %v6419
        %v6421 = vsub.f32 1.5, %v6420
        %v6422 = vmul.f32 %v6417, %v6421
        %vm6423 = vweird.f32 %v6406
        %vm6424 = vweird.f32 %v6417
        %vm6425 = vmor %vm6423, %vm6424
        %v6426 = vsel %vm6425, %v6417, %v6422
        %v6427 = vmul.f32 %v6393, %v6416
        %v6428 = vmul.f32 %v6394, %v6426
        %v6430 = vperm.slane %v6382, 0
        %v6432 = vmul.f32 %v6427, %v6430
        %v6433 = vmul.f32 %v6428, %v6430
        %v6435 = vperm.slane %v6384, 0
        %v6437 = vadd.f32 %v6432, %v6435
        %v6438 = vadd.f32 %v6433, %v6435
        %6441 = vrot.lane.b32.xlu0 %v6437, 32
        %v6442 = vpop.permute.xlu0 %6441
        %6443 = vrot.lane.b32.xlu0 %v6438, 32
        %v6444 = vpop.permute.xlu0 %6443
        %v6447 = vsel %vm4647, %v5536, %v6442
        %v6448 = vsel %vm4647, %v5537, %v6444
        %vm6449 = vcmask 523265
        %6450 = vst.msk [vmem:[%s1070 - $0x1] sm:$0xfe] %vm6449, %v6447
        %vm6451 = vcmask 516096
        %6452 = vst.msk [vmem:[%s1070 + $0x7] sm:$0x1] %vm6451, %v6448
        %p6453 = scmp.lt.s32.totalorder %s46, 1
        %s6454 = scalar_select %p6453, %s46, 1
        %s6455 = smul.addr %s6454, 8
        %s6456 = scalar_lea.vmem %s24, %s6455
        // Predicated region
        $region201: #{vit_forward.1} parent=115 // pred_check
          %p6457 = pneg %p573
        $region202: #{vit_forward.1} parent=115 // pred_check_branch
          %6459 = sbr.rel (%p6457) target = $region204
        $region203: #{vit_forward.1} parent=115 // pred_region
          _
        $region204: #{vit_forward.1} parent=115 // pred_fallthru
          _
      $region116: #{vit_forward.1} parent=5 // pred_fallthru
        _
      %p6460 = scmp.le.s32.totalorder 2, %s41
      // Predicated region
      $region205: #{vit_forward.1} parent=5 // pred_check
        %p6461 = pneg %p6460
      $region206: #{vit_forward.1} parent=5 // pred_check_branch
        %6463 = sbr.rel (%p6461) target = $region208
      $region207: #{vit_forward.1} parent=5 // pred_region
        %s6464 = ssub.s32 %s41, 2
        // Predicated region
        $region209: #{vit_forward.1} parent=207 // pred_check
          %p6465 = pneg %p579
        $region210: #{vit_forward.1} parent=207 // pred_check_branch
          %6467 = sbr.rel (%p6465) target = $region212
        $region211: #{vit_forward.1} parent=207 // pred_region
          %p6468 = scmp.lt.s32.totalorder %s47, 1
          %s6469 = scalar_select %p6468, %s47, 1
          %s6470 = smul.addr %s6469, 8
          %s6471 = scalar_lea.vmem %s24, %s6470
        $region212: #{vit_forward.1} parent=207 // pred_fallthru
          _
      $region208: #{vit_forward.1} parent=5 // pred_fallthru
        _
    $region6: #{vit_forward.1} parent=1 // loop_footer
      %s45 = sadd.s32 1, %s41
    $region7: #{vit_forward.1} parent=1 // loop_footer_branch
      %40 = sbr.rel target = $region3
    $region8: #{vit_forward.1} parent=1 // loop_exit
      _
    %6472 = vsyncpa [#allocation6], 1
    %s6473 = scalar_lea.sflag [#allocation6], 1
    %6474 = vsyncpa %s6473, 1
    %6475 = vsyncpa [#allocation8], 1
    %6476 = vsyncpa [#allocation11], 1
    %6477 = vsyncpa [#allocation14], 1
    %6478 = vsyncpa [#allocation17], 1
    %6479 = vsyncpa [#allocation20], 1
    %6480 = vsyncpa [#allocation23], 1
    %6481 = vsyncpa [#allocation26], 1
    %6482 = vsyncpa [#allocation29], 1
    %6483 = vsyncpa [#allocation32], 1
    %6484 = vsyncpa [#allocation35], 1

</llo_original>
